<compile_context>
chip_gen: v7x
topology: tpu7x:2x2x1
jax: 0.10.0
libtpu: 0.0.40
codegen_flags: <defaults>
</compile_context>

<pallas_src>
import functools
import math

import numpy as np
import jax
import jax.numpy as jnp
from jax.experimental import pallas as pl
from jax.experimental.pallas import tpu as pltpu


# ----------------------------------------------------------------------------
# Setup-time structure (weight independent): gather matrices per kernel tap.
# ----------------------------------------------------------------------------
def _conv_out_size(n, k, s, p):
    return (n + 2 * p - k) // s + 1


def _deconv_out_size(n, k, s, p):
    return (n - 1) * s + k - 2 * p


def _conv_gather(H, W, k, s, p):
    """G[t] (H*W, OH*OW): (x_row @ G[t])[oh*OW+ow] = x[s*oh-p+i, s*ow-p+j] (0 if padded)."""
    OH, OW = _conv_out_size(H, k, s, p), _conv_out_size(W, k, s, p)
    G = np.zeros((k * k, H * W, OH * OW), np.float32)
    for i in range(k):
        for j in range(k):
            t = i * k + j
            for oh in range(OH):
                for ow in range(OW):
                    h, w = s * oh - p + i, s * ow - p + j
                    if 0 <= h < H and 0 <= w < W:
                        G[t, h * W + w, oh * OW + ow] = 1.0
    return G, OH, OW


def _deconv_gather(H, W, k, s, p):
    """ConvTranspose2d gather: output (oh,ow) receives x[h,w] iff oh = s*h - p + i."""
    OH, OW = _deconv_out_size(H, k, s, p), _deconv_out_size(W, k, s, p)
    G = np.zeros((k * k, H * W, OH * OW), np.float32)
    for i in range(k):
        for j in range(k):
            t = i * k + j
            for oh in range(OH):
                for ow in range(OW):
                    hn, wn = oh + p - i, ow + p - j
                    if hn % s or wn % s:
                        continue
                    h, w = hn // s, wn // s
                    if 0 <= h < H and 0 <= w < W:
                        G[t, h * W + w, oh * OW + ow] = 1.0
    return G, OH, OW


# ----------------------------------------------------------------------------
# The fused Pallas kernel (one grid step == one batch element).
# ----------------------------------------------------------------------------
def _conv_taps(a, g_ref, w_ref, b_ref, *, act, gather_first):
    """act( sum_t W_t @ (a @ G_t) + b ).   a: (C_in, HW_in)."""
    f32, bf16 = jnp.float32, jnp.bfloat16
    n_taps = g_ref.shape[0]
    a_b = a.astype(bf16)
    acc = None
    for t in range(n_taps):
        if gather_first:            # cheaper when C_in < C_out
            h = jnp.dot(a_b, g_ref[t], preferred_element_type=f32)
            y = jnp.dot(w_ref[t], h.astype(bf16), preferred_element_type=f32)
        else:                       # cheaper when C_out < C_in
            h = jnp.dot(w_ref[t], a_b, preferred_element_type=f32)
            y = jnp.dot(h.astype(bf16), g_ref[t], preferred_element_type=f32)
        acc = y if acc is None else acc + y
    acc = acc + b_ref[...]          # (C_out, 1) broadcast over lanes
    if act == "relu":
        acc = jnp.maximum(acc, 0.0)
    elif act == "sigmoid":
        acc = jax.nn.sigmoid(acc)
    return acc


def _autoencoder_kernel(x_ref,
                        g1_ref, w1_ref, b1_ref,
                        g2_ref, w2_ref, b2_ref,
                        wfe_ref, bfe_ref,
                        wfd_ref, bfd_ref,
                        gd1_ref, wd1_ref, bd1_ref,
                        gd2_ref, wd2_ref, bd2_ref,
                        o_ref,
                        dec_ref):
    f32, bf16 = jnp.float32, jnp.bfloat16

    # ------------------------ encoder ------------------------
    x = x_ref[...]                                        # (C_in, H*W) bf16
    h1 = _conv_taps(x,  g1_ref, w1_ref, b1_ref, act="relu", gather_first=True)
    h2 = _conv_taps(h1, g2_ref, w2_ref, b2_ref, act="relu", gather_first=True)

    # Flatten (channel-major, as torch) + Linear -> per-channel matmul sum.
    C2 = h2.shape[0]
    L = wfe_ref.shape[2]
    h2_b = h2.astype(bf16)
    lat = jnp.zeros((1, L), f32)
    for c in range(C2):
        lat = lat + jnp.dot(h2_b[c:c + 1, :], wfe_ref[c],
                            preferred_element_type=f32)
    lat = lat + bfe_ref[...]                              # (1, L), no activation

    # ------------------------ decoder ------------------------
    # Linear + ReLU + Unflatten, assembled row-by-row into VMEM scratch.
    lat_b = lat.astype(bf16)
    for c in range(C2):
        row = jnp.dot(lat_b, wfd_ref[c], preferred_element_type=f32) + bfd_ref[c]
        dec_ref[c:c + 1, :] = jnp.maximum(row, 0.0)       # (1, HW2)
    d = dec_ref[...]                                      # (C2, HW2)

    d1 = _conv_taps(d,  gd1_ref, wd1_ref, bd1_ref, act="relu",    gather_first=False)
    d2 = _conv_taps(d1, gd2_ref, wd2_ref, bd2_ref, act="sigmoid", gather_first=False)
    o_ref[...] = d2.astype(o_ref.dtype)                   # (C_in, H*W), lane-dense (256)


# ----------------------------------------------------------------------------
# Parameter init (PyTorch-style) and weight packing for the fused kernel.
# ----------------------------------------------------------------------------
def init_params(key, in_shape, filt, kernel_size, latent_dim, stride, padding):
    C, H, W = in_shape
    s1 = _conv_out_size(H, kernel_size, stride, padding)
    s2 = _conv_out_size(s1, kernel_size, stride, padding)
    flat = filt * 2 * s2 * s2

    def u(k_, shape, fan_in):
        b = 1.0 / math.sqrt(fan_in)
        return jax.random.uniform(k_, shape, jnp.float32, -b, b)

    ks = jax.random.split(key, 12)
    params = {
        "enc_conv1_w": u(ks[0], (filt, C, kernel_size, kernel_size), C * kernel_size ** 2),
        "enc_conv1_b": u(ks[1], (filt,), C * kernel_size ** 2),
        "enc_conv2_w": u(ks[2], (2 * filt, filt, kernel_size, kernel_size), filt * kernel_size ** 2),
        "enc_conv2_b": u(ks[3], (2 * filt,), filt * kernel_size ** 2),
        "enc_fc_w": u(ks[4], (latent_dim, flat), flat),
        "enc_fc_b": u(ks[5], (latent_dim,), flat),
        "dec_fc_w": u(ks[6], (flat, latent_dim), latent_dim),
        "dec_fc_b": u(ks[7], (flat,), latent_dim),
        "dec_deconv1_w": u(ks[8], (2 * filt, filt, kernel_size, kernel_size), 2 * filt * kernel_size ** 2),
        "dec_deconv1_b": u(ks[9], (filt,), 2 * filt * kernel_size ** 2),
        "dec_deconv2_w": u(ks[10], (filt, C, kernel_size - 1, kernel_size - 1), filt * (kernel_size - 1) ** 2),
        "dec_deconv2_b": u(ks[11], (C,), filt * (kernel_size - 1) ** 2),
    }
    meta = dict(in_shape=in_shape, filt=filt, k=kernel_size, stride=stride,
                padding=padding, latent=latent_dim, s1=s1, s2=s2, flat=flat)
    return params, meta


def pack_operands(params, meta):
    """One-time weight repacking (bf16 tap weights, gather matrices, fc slices)."""
    C, H, W = meta["in_shape"]
    k, s, p = meta["k"], meta["stride"], meta["padding"]
    filt, s1, s2, L = meta["filt"], meta["s1"], meta["s2"], meta["latent"]
    C2, HW2 = 2 * filt, s2 * s2
    bf = jnp.bfloat16

    g1, o1, _ = _conv_gather(H, W, k, s, p)
    g2, o2, _ = _conv_gather(s1, s1, k, s, p)
    gd1, od1, _ = _deconv_gather(s2, s2, k, s, 0)
    gd2, od2, _ = _deconv_gather(od1, od1, k - 1, s, 1)
    assert o1 == s1 and o2 == s2 and od2 == H, (o1, o2, od1, od2)

    def conv_taps_w(w):        # (C_out, C_in, kh, kw) -> (kh*kw, C_out, C_in)
        kh, kw = w.shape[2], w.shape[3]
        return jnp.transpose(w, (2, 3, 0, 1)).reshape(kh * kw, w.shape[0], w.shape[1])

    def deconv_taps_w(w):      # (C_in, C_out, kh, kw) -> (kh*kw, C_out, C_in)
        kh, kw = w.shape[2], w.shape[3]
        return jnp.transpose(w, (2, 3, 1, 0)).reshape(kh * kw, w.shape[1], w.shape[0])

    ops = dict(
        g1=jnp.asarray(g1, bf), w1=conv_taps_w(params["enc_conv1_w"]).astype(bf),
        b1=params["enc_conv1_b"].reshape(filt, 1),
        g2=jnp.asarray(g2, bf), w2=conv_taps_w(params["enc_conv2_w"]).astype(bf),
        b2=params["enc_conv2_b"].reshape(C2, 1),
        # encoder fc: (L, C2*HW2) -> per-channel (HW2, L) slices
        wfe=jnp.transpose(params["enc_fc_w"].reshape(L, C2, HW2), (1, 2, 0)).astype(bf),
        bfe=params["enc_fc_b"].reshape(1, L),
        # decoder fc + Unflatten: (C2*HW2, L) -> per-channel (L, HW2) slices
        wfd=jnp.transpose(params["dec_fc_w"].reshape(C2, HW2, L), (0, 2, 1)).astype(bf),
        bfd=params["dec_fc_b"].reshape(C2, 1, HW2),
        gd1=jnp.asarray(gd1, bf), wd1=deconv_taps_w(params["dec_deconv1_w"]).astype(bf),
        bd1=params["dec_deconv1_b"].reshape(filt, 1),
        gd2=jnp.asarray(gd2, bf), wd2=deconv_taps_w(params["dec_deconv2_w"]).astype(bf),
        bd2=params["dec_deconv2_b"].reshape(C, 1),
    )
    shapes = dict(C2=C2, HW2=HW2, L=L)
    return ops, shapes


_OPERAND_ORDER = ("g1", "w1", "b1", "g2", "w2", "b2", "wfe", "bfe", "wfd", "bfd",
                  "gd1", "wd1", "bd1", "gd2", "wd2", "bd2")


def _const_index_map(ndim):
    zeros = (0,) * ndim

    def imap(n):
        return zeros
    return imap


def conv_autoencoder_forward(x_nchw, ops, shapes):
    """Fused forward pass.  x_nchw: (N, C, H, W) f32 -> (N, C, H, W) f32."""
    N, C, H, W = x_nchw.shape
    HW = H * W
    # Boundary-only layout change: NCHW -> (N, C, H*W), bf16 for the MXU.
    x2d = x_nchw.reshape(N, C, HW).astype(jnp.bfloat16)

    operands = [ops[k] for k in _OPERAND_ORDER]
    in_specs = [pl.BlockSpec((None, C, HW), lambda n: (n, 0, 0))]
    in_specs += [pl.BlockSpec(a.shape, _const_index_map(a.ndim)) for a in operands]
    out_spec = pl.BlockSpec((None, C, HW), lambda n: (n, 0, 0))

    # Advisory cost estimate (per-tap matmuls + fc layers).
    flops = 0
    for gk, wk in (("g1", "w1"), ("g2", "w2"), ("gd1", "wd1"), ("gd2", "wd2")):
        taps, hin, hout = ops[gk].shape
        _, cout, cin = ops[wk].shape
        flops += taps * 2 * min(cin * hin * hout + cout * cin * hout,
                                cout * cin * hin + cout * hin * hout)
    C2, HW2, L = shapes["C2"], shapes["HW2"], shapes["L"]
    flops = (flops + 2 * 2 * C2 * HW2 * L) * N
    transcendentals = N * C * HW
    bytes_accessed = (int(x2d.size) * 2
                      + int(sum(int(a.size) * a.dtype.itemsize for a in operands))
                      + N * C * HW * 4)

    out = pl.pallas_call(
        _autoencoder_kernel,
        out_shape=jax.ShapeDtypeStruct((N, C, HW), jnp.float32),
        grid=(N,),
        in_specs=in_specs,
        out_specs=out_spec,
        scratch_shapes=[pltpu.VMEM((C2, HW2), jnp.float32)],
        compiler_params=pltpu.CompilerParams(
            dimension_semantics=("parallel",),        # megacore: batch across TCs (v7x)
            vmem_limit_bytes=32 * 1024 * 1024),
        cost_estimate=pl.CostEstimate(flops=int(flops),
                                      transcendentals=int(transcendentals),
                                      bytes_accessed=int(bytes_accessed)),
    )(x2d, *operands)
    return out.reshape(N, C, H, W)


# ----------------------------------------------------------------------------
# Pure-JAX f32 reference (previously validated im2col / zero-dilation path).
# ----------------------------------------------------------------------------
def _act_ref(x, act):
    if act == "relu":
        return jnp.maximum(x, 0.0)
    if act == "sigmoid":
        return jax.nn.sigmoid(x)
    return x


def _im2col_ref(x, kh, kw, stride, padding):
    N, C, H, W = x.shape
    xp = jnp.pad(x, ((0, 0), (0, 0), (padding, padding), (padding, padding)))
    OH = (H + 2 * padding - kh) // stride + 1
    OW = (W + 2 * padding - kw) // stride + 1
    cols = []
    for i in range(kh):
        for j in range(kw):
            cols.append(xp[:, :, i:i + stride * OH:stride, j:j + stride * OW:stride])
    cols = jnp.stack(cols, axis=2).transpose(0, 3, 4, 1, 2).reshape(N * OH * OW, C * kh * kw)
    return cols, OH, OW


def _conv2d_ref(x, w, b, stride, padding, act):
    C_out, C_in, kh, kw = w.shape
    cols, OH, OW = _im2col_ref(x, kh, kw, stride, padding)
    out = cols @ w.reshape(C_out, -1).T + b
    out = out.reshape(x.shape[0], OH, OW, C_out).transpose(0, 3, 1, 2)
    return _act_ref(out, act)


def _conv_transpose2d_ref(x, w, b, stride, padding, act):
    C_in, C_out, kh, kw = w.shape
    N, C, H, W = x.shape
    Hd, Wd = H + (H - 1) * (stride - 1), W + (W - 1) * (stride - 1)
    xd = jnp.zeros((N, C, Hd, Wd), x.dtype).at[:, :, ::stride, ::stride].set(x)
    ph, pw = kh - 1 - padding, kw - 1 - padding
    xdp = jnp.pad(xd, ((0, 0), (0, 0), (ph, ph), (pw, pw)))
    w_eq = jnp.flip(w, axis=(2, 3)).transpose(1, 0, 2, 3)
    return _conv2d_ref(xdp, w_eq, b, 1, 0, act)


def reference_forward(x, params, meta):
    s, p = meta["stride"], meta["padding"]
    filt, s2 = meta["filt"], meta["s2"]
    h = _conv2d_ref(x, params["enc_conv1_w"], params["enc_conv1_b"], s, p, "relu")
    h = _conv2d_ref(h, params["enc_conv2_w"], params["enc_conv2_b"], s, p, "relu")
    N = h.shape[0]
    lat = h.reshape(N, -1) @ params["enc_fc_w"].T + params["enc_fc_b"]
    d = jnp.maximum(lat @ params["dec_fc_w"].T + params["dec_fc_b"], 0.0)
    d = d.reshape(N, 2 * filt, s2, s2)
    d = _conv_transpose2d_ref(d, params["dec_deconv1_w"], params["dec_deconv1_b"], s, 0, "relu")
    d = _conv_transpose2d_ref(d, params["dec_deconv2_w"], params["dec_deconv2_b"], s, 1, "sigmoid")
    return d


# ----------------------------------------------------------------------------
if __name__ == "__main__":
    IN_SHAPE = (3, 16, 16)
    FILT = 8
    KSIZE = 3
    STRIDE = 2
    PAD = 1
    LATENT = 32
    BATCH = 2

    key = jax.random.PRNGKey(0)
    k_params, k_x = jax.random.split(key)
    params, meta = init_params(k_params, IN_SHAPE, FILT, KSIZE, LATENT, STRIDE, PAD)
    ops, shapes = pack_operands(params, meta)      # one-time weight repacking
    x = jax.random.normal(k_x, (BATCH,) + IN_SHAPE, dtype=jnp.float32)

    fwd = jax.jit(functools.partial(conv_autoencoder_forward, ops=ops, shapes=shapes))
    out = fwd(x)
    jax.block_until_ready(out)

    assert out.shape == (BATCH,) + IN_SHAPE, out.shape
    assert bool(jnp.all(jnp.isfinite(out))), "non-finite output"
    assert bool(jnp.all((out >= 0.0) & (out <= 1.0))), "sigmoid range violated"

    # Check against the pure-JAX f32 reference (bf16 MXU inputs, f32 accumulation).
    ref = reference_forward(x, params, meta)
    max_err = float(jnp.max(jnp.abs(out - ref)))
    assert max_err < 3e-2, f"mismatch vs reference: {max_err}"

    print("KERNEL_OK")
</pallas_src>

<mosaic_0001>
module attributes {stable_mosaic.version = 11 : i64} {
  func.func @_autoencoder_kernel(%arg0: i32, %arg1: memref<1x3x256xbf16, #tpu.memory_space<vmem>>, %arg2: memref<9x256x64xbf16, #tpu.memory_space<vmem>>, %arg3: memref<9x8x3xbf16, #tpu.memory_space<vmem>>, %arg4: memref<8x1xf32, #tpu.memory_space<vmem>>, %arg5: memref<9x64x16xbf16, #tpu.memory_space<vmem>>, %arg6: memref<9x16x8xbf16, #tpu.memory_space<vmem>>, %arg7: memref<16x1xf32, #tpu.memory_space<vmem>>, %arg8: memref<16x16x32xbf16, #tpu.memory_space<vmem>>, %arg9: memref<1x32xf32, #tpu.memory_space<vmem>>, %arg10: memref<16x32x16xbf16, #tpu.memory_space<vmem>>, %arg11: memref<16x1x16xf32, #tpu.memory_space<vmem>>, %arg12: memref<9x16x81xbf16, #tpu.memory_space<vmem>>, %arg13: memref<9x8x16xbf16, #tpu.memory_space<vmem>>, %arg14: memref<8x1xf32, #tpu.memory_space<vmem>>, %arg15: memref<4x81x256xbf16, #tpu.memory_space<vmem>>, %arg16: memref<4x3x8xbf16, #tpu.memory_space<vmem>>, %arg17: memref<3x1xf32, #tpu.memory_space<vmem>>, %arg18: memref<1x3x256xf32, #tpu.memory_space<vmem>>, %arg19: memref<16x16xf32, #tpu.memory_space<vmem>>) attributes {dimension_semantics = [#tpu.dimension_semantics<parallel>], iteration_bounds = array<i64: 2>, scalar_prefetch = 0 : i64, scratch_operands = 1 : i64, tpu.core_type = #tpu.core_type<tc>, window_params = [{transform_indices = @transform_0, window_bounds = array<i64: 1, 3, 256>}, {pipeline_mode = #tpu.pipeline_mode<synchronous>, transform_indices = @transform_1, window_bounds = array<i64: 9, 256, 64>}, {pipeline_mode = #tpu.pipeline_mode<synchronous>, transform_indices = @transform_2, window_bounds = array<i64: 9, 8, 3>}, {pipeline_mode = #tpu.pipeline_mode<synchronous>, transform_indices = @transform_3, window_bounds = array<i64: 8, 1>}, {pipeline_mode = #tpu.pipeline_mode<synchronous>, transform_indices = @transform_4, window_bounds = array<i64: 9, 64, 16>}, {pipeline_mode = #tpu.pipeline_mode<synchronous>, transform_indices = @transform_5, window_bounds = array<i64: 9, 16, 8>}, {pipeline_mode = #tpu.pipeline_mode<synchronous>, transform_indices = @transform_6, window_bounds = array<i64: 16, 1>}, {pipeline_mode = #tpu.pipeline_mode<synchronous>, transform_indices = @transform_7, window_bounds = array<i64: 16, 16, 32>}, {pipeline_mode = #tpu.pipeline_mode<synchronous>, transform_indices = @transform_8, window_bounds = array<i64: 1, 32>}, {pipeline_mode = #tpu.pipeline_mode<synchronous>, transform_indices = @transform_9, window_bounds = array<i64: 16, 32, 16>}, {pipeline_mode = #tpu.pipeline_mode<synchronous>, transform_indices = @transform_10, window_bounds = array<i64: 16, 1, 16>}, {pipeline_mode = #tpu.pipeline_mode<synchronous>, transform_indices = @transform_11, window_bounds = array<i64: 9, 16, 81>}, {pipeline_mode = #tpu.pipeline_mode<synchronous>, transform_indices = @transform_12, window_bounds = array<i64: 9, 8, 16>}, {pipeline_mode = #tpu.pipeline_mode<synchronous>, transform_indices = @transform_13, window_bounds = array<i64: 8, 1>}, {pipeline_mode = #tpu.pipeline_mode<synchronous>, transform_indices = @transform_14, window_bounds = array<i64: 4, 81, 256>}, {pipeline_mode = #tpu.pipeline_mode<synchronous>, transform_indices = @transform_15, window_bounds = array<i64: 4, 3, 8>}, {pipeline_mode = #tpu.pipeline_mode<synchronous>, transform_indices = @transform_16, window_bounds = array<i64: 3, 1>}, {transform_indices = @transform_17, window_bounds = array<i64: 1, 3, 256>}]} {
    %c0 = arith.constant 0 : index
    %c0_0 = arith.constant 0 : index
    %c0_1 = arith.constant 0 : index
    %0 = vector.load %arg1[%c0, %c0_0, %c0_1] : memref<1x3x256xbf16, #tpu.memory_space<vmem>>, vector<1x3x256xbf16>
    %1 = vector.shape_cast %0 : vector<1x3x256xbf16> to vector<3x256xbf16>
    %c0_2 = arith.constant 0 : index
    %c0_3 = arith.constant 0 : index
    %c0_4 = arith.constant 0 : index
    %2 = vector.load %arg2[%c0_2, %c0_3, %c0_4] : memref<9x256x64xbf16, #tpu.memory_space<vmem>>, vector<1x256x64xbf16>
    %3 = vector.shape_cast %2 : vector<1x256x64xbf16> to vector<256x64xbf16>
    %cst = arith.constant dense<0.000000e+00> : vector<3x64xf32>
    %4 = tpu.matmul %1, %3, %cst {dimension_numbers = #tpu.dot_dimension_numbers<[1], [0], [0], [1], [0, 0, 1, 1], [], []>} : vector<3x256xbf16>, vector<256x64xbf16>, vector<3x64xf32> -> vector<3x64xf32>
    %c0_5 = arith.constant 0 : index
    %c0_6 = arith.constant 0 : index
    %c0_7 = arith.constant 0 : index
    %5 = vector.load %arg3[%c0_5, %c0_6, %c0_7] : memref<9x8x3xbf16, #tpu.memory_space<vmem>>, vector<1x8x3xbf16>
    %6 = vector.shape_cast %5 : vector<1x8x3xbf16> to vector<8x3xbf16>
    %7 = arith.truncf %4 : vector<3x64xf32> to vector<3x64xbf16>
    %cst_8 = arith.constant dense<0.000000e+00> : vector<8x64xf32>
    %8 = tpu.matmul %6, %7, %cst_8 {dimension_numbers = #tpu.dot_dimension_numbers<[1], [0], [0], [1], [0, 0, 1, 1], [], []>} : vector<8x3xbf16>, vector<3x64xbf16>, vector<8x64xf32> -> vector<8x64xf32>
    %c1 = arith.constant 1 : index
    %c0_9 = arith.constant 0 : index
    %c0_10 = arith.constant 0 : index
    %9 = vector.load %arg2[%c1, %c0_9, %c0_10] : memref<9x256x64xbf16, #tpu.memory_space<vmem>>, vector<1x256x64xbf16>
    %10 = vector.shape_cast %9 : vector<1x256x64xbf16> to vector<256x64xbf16>
    %cst_11 = arith.constant dense<0.000000e+00> : vector<3x64xf32>
    %11 = tpu.matmul %1, %10, %cst_11 {dimension_numbers = #tpu.dot_dimension_numbers<[1], [0], [0], [1], [0, 0, 1, 1], [], []>} : vector<3x256xbf16>, vector<256x64xbf16>, vector<3x64xf32> -> vector<3x64xf32>
    %c1_12 = arith.constant 1 : index
    %c0_13 = arith.constant 0 : index
    %c0_14 = arith.constant 0 : index
    %12 = vector.load %arg3[%c1_12, %c0_13, %c0_14] : memref<9x8x3xbf16, #tpu.memory_space<vmem>>, vector<1x8x3xbf16>
    %13 = vector.shape_cast %12 : vector<1x8x3xbf16> to vector<8x3xbf16>
    %14 = arith.truncf %11 : vector<3x64xf32> to vector<3x64xbf16>
    %cst_15 = arith.constant dense<0.000000e+00> : vector<8x64xf32>
    %15 = tpu.matmul %13, %14, %cst_15 {dimension_numbers = #tpu.dot_dimension_numbers<[1], [0], [0], [1], [0, 0, 1, 1], [], []>} : vector<8x3xbf16>, vector<3x64xbf16>, vector<8x64xf32> -> vector<8x64xf32>
    %16 = arith.addf %8, %15 : vector<8x64xf32>
    %c2 = arith.constant 2 : index
    %c0_16 = arith.constant 0 : index
    %c0_17 = arith.constant 0 : index
    %17 = vector.load %arg2[%c2, %c0_16, %c0_17] : memref<9x256x64xbf16, #tpu.memory_space<vmem>>, vector<1x256x64xbf16>
    %18 = vector.shape_cast %17 : vector<1x256x64xbf16> to vector<256x64xbf16>
    %cst_18 = arith.constant dense<0.000000e+00> : vector<3x64xf32>
    %19 = tpu.matmul %1, %18, %cst_18 {dimension_numbers = #tpu.dot_dimension_numbers<[1], [0], [0], [1], [0, 0, 1, 1], [], []>} : vector<3x256xbf16>, vector<256x64xbf16>, vector<3x64xf32> -> vector<3x64xf32>
    %c2_19 = arith.constant 2 : index
    %c0_20 = arith.constant 0 : index
    %c0_21 = arith.constant 0 : index
    %20 = vector.load %arg3[%c2_19, %c0_20, %c0_21] : memref<9x8x3xbf16, #tpu.memory_space<vmem>>, vector<1x8x3xbf16>
    %21 = vector.shape_cast %20 : vector<1x8x3xbf16> to vector<8x3xbf16>
    %22 = arith.truncf %19 : vector<3x64xf32> to vector<3x64xbf16>
    %cst_22 = arith.constant dense<0.000000e+00> : vector<8x64xf32>
    %23 = tpu.matmul %21, %22, %cst_22 {dimension_numbers = #tpu.dot_dimension_numbers<[1], [0], [0], [1], [0, 0, 1, 1], [], []>} : vector<8x3xbf16>, vector<3x64xbf16>, vector<8x64xf32> -> vector<8x64xf32>
    %24 = arith.addf %16, %23 : vector<8x64xf32>
    %c3 = arith.constant 3 : index
    %c0_23 = arith.constant 0 : index
    %c0_24 = arith.constant 0 : index
    %25 = vector.load %arg2[%c3, %c0_23, %c0_24] : memref<9x256x64xbf16, #tpu.memory_space<vmem>>, vector<1x256x64xbf16>
    %26 = vector.shape_cast %25 : vector<1x256x64xbf16> to vector<256x64xbf16>
    %cst_25 = arith.constant dense<0.000000e+00> : vector<3x64xf32>
    %27 = tpu.matmul %1, %26, %cst_25 {dimension_numbers = #tpu.dot_dimension_numbers<[1], [0], [0], [1], [0, 0, 1, 1], [], []>} : vector<3x256xbf16>, vector<256x64xbf16>, vector<3x64xf32> -> vector<3x64xf32>
    %c3_26 = arith.constant 3 : index
    %c0_27 = arith.constant 0 : index
    %c0_28 = arith.constant 0 : index
    %28 = vector.load %arg3[%c3_26, %c0_27, %c0_28] : memref<9x8x3xbf16, #tpu.memory_space<vmem>>, vector<1x8x3xbf16>
    %29 = vector.shape_cast %28 : vector<1x8x3xbf16> to vector<8x3xbf16>
    %30 = arith.truncf %27 : vector<3x64xf32> to vector<3x64xbf16>
    %cst_29 = arith.constant dense<0.000000e+00> : vector<8x64xf32>
    %31 = tpu.matmul %29, %30, %cst_29 {dimension_numbers = #tpu.dot_dimension_numbers<[1], [0], [0], [1], [0, 0, 1, 1], [], []>} : vector<8x3xbf16>, vector<3x64xbf16>, vector<8x64xf32> -> vector<8x64xf32>
    %32 = arith.addf %24, %31 : vector<8x64xf32>
    %c4 = arith.constant 4 : index
    %c0_30 = arith.constant 0 : index
    %c0_31 = arith.constant 0 : index
    %33 = vector.load %arg2[%c4, %c0_30, %c0_31] : memref<9x256x64xbf16, #tpu.memory_space<vmem>>, vector<1x256x64xbf16>
    %34 = vector.shape_cast %33 : vector<1x256x64xbf16> to vector<256x64xbf16>
    %cst_32 = arith.constant dense<0.000000e+00> : vector<3x64xf32>
    %35 = tpu.matmul %1, %34, %cst_32 {dimension_numbers = #tpu.dot_dimension_numbers<[1], [0], [0], [1], [0, 0, 1, 1], [], []>} : vector<3x256xbf16>, vector<256x64xbf16>, vector<3x64xf32> -> vector<3x64xf32>
    %c4_33 = arith.constant 4 : index
    %c0_34 = arith.constant 0 : index
    %c0_35 = arith.constant 0 : index
    %36 = vector.load %arg3[%c4_33, %c0_34, %c0_35] : memref<9x8x3xbf16, #tpu.memory_space<vmem>>, vector<1x8x3xbf16>
    %37 = vector.shape_cast %36 : vector<1x8x3xbf16> to vector<8x3xbf16>
    %38 = arith.truncf %35 : vector<3x64xf32> to vector<3x64xbf16>
    %cst_36 = arith.constant dense<0.000000e+00> : vector<8x64xf32>
    %39 = tpu.matmul %37, %38, %cst_36 {dimension_numbers = #tpu.dot_dimension_numbers<[1], [0], [0], [1], [0, 0, 1, 1], [], []>} : vector<8x3xbf16>, vector<3x64xbf16>, vector<8x64xf32> -> vector<8x64xf32>
    %40 = arith.addf %32, %39 : vector<8x64xf32>
    %c5 = arith.constant 5 : index
    %c0_37 = arith.constant 0 : index
    %c0_38 = arith.constant 0 : index
    %41 = vector.load %arg2[%c5, %c0_37, %c0_38] : memref<9x256x64xbf16, #tpu.memory_space<vmem>>, vector<1x256x64xbf16>
    %42 = vector.shape_cast %41 : vector<1x256x64xbf16> to vector<256x64xbf16>
    %cst_39 = arith.constant dense<0.000000e+00> : vector<3x64xf32>
    %43 = tpu.matmul %1, %42, %cst_39 {dimension_numbers = #tpu.dot_dimension_numbers<[1], [0], [0], [1], [0, 0, 1, 1], [], []>} : vector<3x256xbf16>, vector<256x64xbf16>, vector<3x64xf32> -> vector<3x64xf32>
    %c5_40 = arith.constant 5 : index
    %c0_41 = arith.constant 0 : index
    %c0_42 = arith.constant 0 : index
    %44 = vector.load %arg3[%c5_40, %c0_41, %c0_42] : memref<9x8x3xbf16, #tpu.memory_space<vmem>>, vector<1x8x3xbf16>
    %45 = vector.shape_cast %44 : vector<1x8x3xbf16> to vector<8x3xbf16>
    %46 = arith.truncf %43 : vector<3x64xf32> to vector<3x64xbf16>
    %cst_43 = arith.constant dense<0.000000e+00> : vector<8x64xf32>
    %47 = tpu.matmul %45, %46, %cst_43 {dimension_numbers = #tpu.dot_dimension_numbers<[1], [0], [0], [1], [0, 0, 1, 1], [], []>} : vector<8x3xbf16>, vector<3x64xbf16>, vector<8x64xf32> -> vector<8x64xf32>
    %48 = arith.addf %40, %47 : vector<8x64xf32>
    %c6 = arith.constant 6 : index
    %c0_44 = arith.constant 0 : index
    %c0_45 = arith.constant 0 : index
    %49 = vector.load %arg2[%c6, %c0_44, %c0_45] : memref<9x256x64xbf16, #tpu.memory_space<vmem>>, vector<1x256x64xbf16>
    %50 = vector.shape_cast %49 : vector<1x256x64xbf16> to vector<256x64xbf16>
    %cst_46 = arith.constant dense<0.000000e+00> : vector<3x64xf32>
    %51 = tpu.matmul %1, %50, %cst_46 {dimension_numbers = #tpu.dot_dimension_numbers<[1], [0], [0], [1], [0, 0, 1, 1], [], []>} : vector<3x256xbf16>, vector<256x64xbf16>, vector<3x64xf32> -> vector<3x64xf32>
    %c6_47 = arith.constant 6 : index
    %c0_48 = arith.constant 0 : index
    %c0_49 = arith.constant 0 : index
    %52 = vector.load %arg3[%c6_47, %c0_48, %c0_49] : memref<9x8x3xbf16, #tpu.memory_space<vmem>>, vector<1x8x3xbf16>
    %53 = vector.shape_cast %52 : vector<1x8x3xbf16> to vector<8x3xbf16>
    %54 = arith.truncf %51 : vector<3x64xf32> to vector<3x64xbf16>
    %cst_50 = arith.constant dense<0.000000e+00> : vector<8x64xf32>
    %55 = tpu.matmul %53, %54, %cst_50 {dimension_numbers = #tpu.dot_dimension_numbers<[1], [0], [0], [1], [0, 0, 1, 1], [], []>} : vector<8x3xbf16>, vector<3x64xbf16>, vector<8x64xf32> -> vector<8x64xf32>
    %56 = arith.addf %48, %55 : vector<8x64xf32>
    %c7 = arith.constant 7 : index
    %c0_51 = arith.constant 0 : index
    %c0_52 = arith.constant 0 : index
    %57 = vector.load %arg2[%c7, %c0_51, %c0_52] : memref<9x256x64xbf16, #tpu.memory_space<vmem>>, vector<1x256x64xbf16>
    %58 = vector.shape_cast %57 : vector<1x256x64xbf16> to vector<256x64xbf16>
    %cst_53 = arith.constant dense<0.000000e+00> : vector<3x64xf32>
    %59 = tpu.matmul %1, %58, %cst_53 {dimension_numbers = #tpu.dot_dimension_numbers<[1], [0], [0], [1], [0, 0, 1, 1], [], []>} : vector<3x256xbf16>, vector<256x64xbf16>, vector<3x64xf32> -> vector<3x64xf32>
    %c7_54 = arith.constant 7 : index
    %c0_55 = arith.constant 0 : index
    %c0_56 = arith.constant 0 : index
    %60 = vector.load %arg3[%c7_54, %c0_55, %c0_56] : memref<9x8x3xbf16, #tpu.memory_space<vmem>>, vector<1x8x3xbf16>
    %61 = vector.shape_cast %60 : vector<1x8x3xbf16> to vector<8x3xbf16>
    %62 = arith.truncf %59 : vector<3x64xf32> to vector<3x64xbf16>
    %cst_57 = arith.constant dense<0.000000e+00> : vector<8x64xf32>
    %63 = tpu.matmul %61, %62, %cst_57 {dimension_numbers = #tpu.dot_dimension_numbers<[1], [0], [0], [1], [0, 0, 1, 1], [], []>} : vector<8x3xbf16>, vector<3x64xbf16>, vector<8x64xf32> -> vector<8x64xf32>
    %64 = arith.addf %56, %63 : vector<8x64xf32>
    %c8 = arith.constant 8 : index
    %c0_58 = arith.constant 0 : index
    %c0_59 = arith.constant 0 : index
    %65 = vector.load %arg2[%c8, %c0_58, %c0_59] : memref<9x256x64xbf16, #tpu.memory_space<vmem>>, vector<1x256x64xbf16>
    %66 = vector.shape_cast %65 : vector<1x256x64xbf16> to vector<256x64xbf16>
    %cst_60 = arith.constant dense<0.000000e+00> : vector<3x64xf32>
    %67 = tpu.matmul %1, %66, %cst_60 {dimension_numbers = #tpu.dot_dimension_numbers<[1], [0], [0], [1], [0, 0, 1, 1], [], []>} : vector<3x256xbf16>, vector<256x64xbf16>, vector<3x64xf32> -> vector<3x64xf32>
    %c8_61 = arith.constant 8 : index
    %c0_62 = arith.constant 0 : index
    %c0_63 = arith.constant 0 : index
    %68 = vector.load %arg3[%c8_61, %c0_62, %c0_63] : memref<9x8x3xbf16, #tpu.memory_space<vmem>>, vector<1x8x3xbf16>
    %69 = vector.shape_cast %68 : vector<1x8x3xbf16> to vector<8x3xbf16>
    %70 = arith.truncf %67 : vector<3x64xf32> to vector<3x64xbf16>
    %cst_64 = arith.constant dense<0.000000e+00> : vector<8x64xf32>
    %71 = tpu.matmul %69, %70, %cst_64 {dimension_numbers = #tpu.dot_dimension_numbers<[1], [0], [0], [1], [0, 0, 1, 1], [], []>} : vector<8x3xbf16>, vector<3x64xbf16>, vector<8x64xf32> -> vector<8x64xf32>
    %72 = arith.addf %64, %71 : vector<8x64xf32>
    %c0_65 = arith.constant 0 : index
    %c0_66 = arith.constant 0 : index
    %73 = vector.load %arg4[%c0_65, %c0_66] : memref<8x1xf32, #tpu.memory_space<vmem>>, vector<8x1xf32>
    %74 = vector.broadcast %73 : vector<8x1xf32> to vector<8x64xf32>
    %75 = arith.addf %72, %74 : vector<8x64xf32>
    %cst_67 = arith.constant 0.000000e+00 : f32
    %76 = vector.broadcast %cst_67 : f32 to vector<8x64xf32>
    %77 = arith.maximumf %75, %76 : vector<8x64xf32>
    %78 = arith.truncf %77 : vector<8x64xf32> to vector<8x64xbf16>
    %c0_68 = arith.constant 0 : index
    %c0_69 = arith.constant 0 : index
    %c0_70 = arith.constant 0 : index
    %79 = vector.load %arg5[%c0_68, %c0_69, %c0_70] : memref<9x64x16xbf16, #tpu.memory_space<vmem>>, vector<1x64x16xbf16>
    %80 = vector.shape_cast %79 : vector<1x64x16xbf16> to vector<64x16xbf16>
    %cst_71 = arith.constant dense<0.000000e+00> : vector<8x16xf32>
    %81 = tpu.matmul %78, %80, %cst_71 {dimension_numbers = #tpu.dot_dimension_numbers<[1], [0], [0], [1], [0, 0, 1, 1], [], []>} : vector<8x64xbf16>, vector<64x16xbf16>, vector<8x16xf32> -> vector<8x16xf32>
    %c0_72 = arith.constant 0 : index
    %c0_73 = arith.constant 0 : index
    %c0_74 = arith.constant 0 : index
    %82 = vector.load %arg6[%c0_72, %c0_73, %c0_74] : memref<9x16x8xbf16, #tpu.memory_space<vmem>>, vector<1x16x8xbf16>
    %83 = vector.shape_cast %82 : vector<1x16x8xbf16> to vector<16x8xbf16>
    %84 = arith.truncf %81 : vector<8x16xf32> to vector<8x16xbf16>
    %cst_75 = arith.constant dense<0.000000e+00> : vector<16x16xf32>
    %85 = tpu.matmul %83, %84, %cst_75 {dimension_numbers = #tpu.dot_dimension_numbers<[1], [0], [0], [1], [0, 0, 1, 1], [], []>} : vector<16x8xbf16>, vector<8x16xbf16>, vector<16x16xf32> -> vector<16x16xf32>
    %c1_76 = arith.constant 1 : index
    %c0_77 = arith.constant 0 : index
    %c0_78 = arith.constant 0 : index
    %86 = vector.load %arg5[%c1_76, %c0_77, %c0_78] : memref<9x64x16xbf16, #tpu.memory_space<vmem>>, vector<1x64x16xbf16>
    %87 = vector.shape_cast %86 : vector<1x64x16xbf16> to vector<64x16xbf16>
    %cst_79 = arith.constant dense<0.000000e+00> : vector<8x16xf32>
    %88 = tpu.matmul %78, %87, %cst_79 {dimension_numbers = #tpu.dot_dimension_numbers<[1], [0], [0], [1], [0, 0, 1, 1], [], []>} : vector<8x64xbf16>, vector<64x16xbf16>, vector<8x16xf32> -> vector<8x16xf32>
    %c1_80 = arith.constant 1 : index
    %c0_81 = arith.constant 0 : index
    %c0_82 = arith.constant 0 : index
    %89 = vector.load %arg6[%c1_80, %c0_81, %c0_82] : memref<9x16x8xbf16, #tpu.memory_space<vmem>>, vector<1x16x8xbf16>
    %90 = vector.shape_cast %89 : vector<1x16x8xbf16> to vector<16x8xbf16>
    %91 = arith.truncf %88 : vector<8x16xf32> to vector<8x16xbf16>
    %cst_83 = arith.constant dense<0.000000e+00> : vector<16x16xf32>
    %92 = tpu.matmul %90, %91, %cst_83 {dimension_numbers = #tpu.dot_dimension_numbers<[1], [0], [0], [1], [0, 0, 1, 1], [], []>} : vector<16x8xbf16>, vector<8x16xbf16>, vector<16x16xf32> -> vector<16x16xf32>
    %93 = arith.addf %85, %92 : vector<16x16xf32>
    %c2_84 = arith.constant 2 : index
    %c0_85 = arith.constant 0 : index
    %c0_86 = arith.constant 0 : index
    %94 = vector.load %arg5[%c2_84, %c0_85, %c0_86] : memref<9x64x16xbf16, #tpu.memory_space<vmem>>, vector<1x64x16xbf16>
    %95 = vector.shape_cast %94 : vector<1x64x16xbf16> to vector<64x16xbf16>
    %cst_87 = arith.constant dense<0.000000e+00> : vector<8x16xf32>
    %96 = tpu.matmul %78, %95, %cst_87 {dimension_numbers = #tpu.dot_dimension_numbers<[1], [0], [0], [1], [0, 0, 1, 1], [], []>} : vector<8x64xbf16>, vector<64x16xbf16>, vector<8x16xf32> -> vector<8x16xf32>
    %c2_88 = arith.constant 2 : index
    %c0_89 = arith.constant 0 : index
    %c0_90 = arith.constant 0 : index
    %97 = vector.load %arg6[%c2_88, %c0_89, %c0_90] : memref<9x16x8xbf16, #tpu.memory_space<vmem>>, vector<1x16x8xbf16>
    %98 = vector.shape_cast %97 : vector<1x16x8xbf16> to vector<16x8xbf16>
    %99 = arith.truncf %96 : vector<8x16xf32> to vector<8x16xbf16>
    %cst_91 = arith.constant dense<0.000000e+00> : vector<16x16xf32>
    %100 = tpu.matmul %98, %99, %cst_91 {dimension_numbers = #tpu.dot_dimension_numbers<[1], [0], [0], [1], [0, 0, 1, 1], [], []>} : vector<16x8xbf16>, vector<8x16xbf16>, vector<16x16xf32> -> vector<16x16xf32>
    %101 = arith.addf %93, %100 : vector<16x16xf32>
    %c3_92 = arith.constant 3 : index
    %c0_93 = arith.constant 0 : index
    %c0_94 = arith.constant 0 : index
    %102 = vector.load %arg5[%c3_92, %c0_93, %c0_94] : memref<9x64x16xbf16, #tpu.memory_space<vmem>>, vector<1x64x16xbf16>
    %103 = vector.shape_cast %102 : vector<1x64x16xbf16> to vector<64x16xbf16>
    %cst_95 = arith.constant dense<0.000000e+00> : vector<8x16xf32>
    %104 = tpu.matmul %78, %103, %cst_95 {dimension_numbers = #tpu.dot_dimension_numbers<[1], [0], [0], [1], [0, 0, 1, 1], [], []>} : vector<8x64xbf16>, vector<64x16xbf16>, vector<8x16xf32> -> vector<8x16xf32>
    %c3_96 = arith.constant 3 : index
    %c0_97 = arith.constant 0 : index
    %c0_98 = arith.constant 0 : index
    %105 = vector.load %arg6[%c3_96, %c0_97, %c0_98] : memref<9x16x8xbf16, #tpu.memory_space<vmem>>, vector<1x16x8xbf16>
    %106 = vector.shape_cast %105 : vector<1x16x8xbf16> to vector<16x8xbf16>
    %107 = arith.truncf %104 : vector<8x16xf32> to vector<8x16xbf16>
    %cst_99 = arith.constant dense<0.000000e+00> : vector<16x16xf32>
    %108 = tpu.matmul %106, %107, %cst_99 {dimension_numbers = #tpu.dot_dimension_numbers<[1], [0], [0], [1], [0, 0, 1, 1], [], []>} : vector<16x8xbf16>, vector<8x16xbf16>, vector<16x16xf32> -> vector<16x16xf32>
    %109 = arith.addf %101, %108 : vector<16x16xf32>
    %c4_100 = arith.constant 4 : index
    %c0_101 = arith.constant 0 : index
    %c0_102 = arith.constant 0 : index
    %110 = vector.load %arg5[%c4_100, %c0_101, %c0_102] : memref<9x64x16xbf16, #tpu.memory_space<vmem>>, vector<1x64x16xbf16>
    %111 = vector.shape_cast %110 : vector<1x64x16xbf16> to vector<64x16xbf16>
    %cst_103 = arith.constant dense<0.000000e+00> : vector<8x16xf32>
    %112 = tpu.matmul %78, %111, %cst_103 {dimension_numbers = #tpu.dot_dimension_numbers<[1], [0], [0], [1], [0, 0, 1, 1], [], []>} : vector<8x64xbf16>, vector<64x16xbf16>, vector<8x16xf32> -> vector<8x16xf32>
    %c4_104 = arith.constant 4 : index
    %c0_105 = arith.constant 0 : index
    %c0_106 = arith.constant 0 : index
    %113 = vector.load %arg6[%c4_104, %c0_105, %c0_106] : memref<9x16x8xbf16, #tpu.memory_space<vmem>>, vector<1x16x8xbf16>
    %114 = vector.shape_cast %113 : vector<1x16x8xbf16> to vector<16x8xbf16>
    %115 = arith.truncf %112 : vector<8x16xf32> to vector<8x16xbf16>
    %cst_107 = arith.constant dense<0.000000e+00> : vector<16x16xf32>
    %116 = tpu.matmul %114, %115, %cst_107 {dimension_numbers = #tpu.dot_dimension_numbers<[1], [0], [0], [1], [0, 0, 1, 1], [], []>} : vector<16x8xbf16>, vector<8x16xbf16>, vector<16x16xf32> -> vector<16x16xf32>
    %117 = arith.addf %109, %116 : vector<16x16xf32>
    %c5_108 = arith.constant 5 : index
    %c0_109 = arith.constant 0 : index
    %c0_110 = arith.constant 0 : index
    %118 = vector.load %arg5[%c5_108, %c0_109, %c0_110] : memref<9x64x16xbf16, #tpu.memory_space<vmem>>, vector<1x64x16xbf16>
    %119 = vector.shape_cast %118 : vector<1x64x16xbf16> to vector<64x16xbf16>
    %cst_111 = arith.constant dense<0.000000e+00> : vector<8x16xf32>
    %120 = tpu.matmul %78, %119, %cst_111 {dimension_numbers = #tpu.dot_dimension_numbers<[1], [0], [0], [1], [0, 0, 1, 1], [], []>} : vector<8x64xbf16>, vector<64x16xbf16>, vector<8x16xf32> -> vector<8x16xf32>
    %c5_112 = arith.constant 5 : index
    %c0_113 = arith.constant 0 : index
    %c0_114 = arith.constant 0 : index
    %121 = vector.load %arg6[%c5_112, %c0_113, %c0_114] : memref<9x16x8xbf16, #tpu.memory_space<vmem>>, vector<1x16x8xbf16>
    %122 = vector.shape_cast %121 : vector<1x16x8xbf16> to vector<16x8xbf16>
    %123 = arith.truncf %120 : vector<8x16xf32> to vector<8x16xbf16>
    %cst_115 = arith.constant dense<0.000000e+00> : vector<16x16xf32>
    %124 = tpu.matmul %122, %123, %cst_115 {dimension_numbers = #tpu.dot_dimension_numbers<[1], [0], [0], [1], [0, 0, 1, 1], [], []>} : vector<16x8xbf16>, vector<8x16xbf16>, vector<16x16xf32> -> vector<16x16xf32>
    %125 = arith.addf %117, %124 : vector<16x16xf32>
    %c6_116 = arith.constant 6 : index
    %c0_117 = arith.constant 0 : index
    %c0_118 = arith.constant 0 : index
    %126 = vector.load %arg5[%c6_116, %c0_117, %c0_118] : memref<9x64x16xbf16, #tpu.memory_space<vmem>>, vector<1x64x16xbf16>
    %127 = vector.shape_cast %126 : vector<1x64x16xbf16> to vector<64x16xbf16>
    %cst_119 = arith.constant dense<0.000000e+00> : vector<8x16xf32>
    %128 = tpu.matmul %78, %127, %cst_119 {dimension_numbers = #tpu.dot_dimension_numbers<[1], [0], [0], [1], [0, 0, 1, 1], [], []>} : vector<8x64xbf16>, vector<64x16xbf16>, vector<8x16xf32> -> vector<8x16xf32>
    %c6_120 = arith.constant 6 : index
    %c0_121 = arith.constant 0 : index
    %c0_122 = arith.constant 0 : index
    %129 = vector.load %arg6[%c6_120, %c0_121, %c0_122] : memref<9x16x8xbf16, #tpu.memory_space<vmem>>, vector<1x16x8xbf16>
    %130 = vector.shape_cast %129 : vector<1x16x8xbf16> to vector<16x8xbf16>
    %131 = arith.truncf %128 : vector<8x16xf32> to vector<8x16xbf16>
    %cst_123 = arith.constant dense<0.000000e+00> : vector<16x16xf32>
    %132 = tpu.matmul %130, %131, %cst_123 {dimension_numbers = #tpu.dot_dimension_numbers<[1], [0], [0], [1], [0, 0, 1, 1], [], []>} : vector<16x8xbf16>, vector<8x16xbf16>, vector<16x16xf32> -> vector<16x16xf32>
    %133 = arith.addf %125, %132 : vector<16x16xf32>
    %c7_124 = arith.constant 7 : index
    %c0_125 = arith.constant 0 : index
    %c0_126 = arith.constant 0 : index
    %134 = vector.load %arg5[%c7_124, %c0_125, %c0_126] : memref<9x64x16xbf16, #tpu.memory_space<vmem>>, vector<1x64x16xbf16>
    %135 = vector.shape_cast %134 : vector<1x64x16xbf16> to vector<64x16xbf16>
    %cst_127 = arith.constant dense<0.000000e+00> : vector<8x16xf32>
    %136 = tpu.matmul %78, %135, %cst_127 {dimension_numbers = #tpu.dot_dimension_numbers<[1], [0], [0], [1], [0, 0, 1, 1], [], []>} : vector<8x64xbf16>, vector<64x16xbf16>, vector<8x16xf32> -> vector<8x16xf32>
    %c7_128 = arith.constant 7 : index
    %c0_129 = arith.constant 0 : index
    %c0_130 = arith.constant 0 : index
    %137 = vector.load %arg6[%c7_128, %c0_129, %c0_130] : memref<9x16x8xbf16, #tpu.memory_space<vmem>>, vector<1x16x8xbf16>
    %138 = vector.shape_cast %137 : vector<1x16x8xbf16> to vector<16x8xbf16>
    %139 = arith.truncf %136 : vector<8x16xf32> to vector<8x16xbf16>
    %cst_131 = arith.constant dense<0.000000e+00> : vector<16x16xf32>
    %140 = tpu.matmul %138, %139, %cst_131 {dimension_numbers = #tpu.dot_dimension_numbers<[1], [0], [0], [1], [0, 0, 1, 1], [], []>} : vector<16x8xbf16>, vector<8x16xbf16>, vector<16x16xf32> -> vector<16x16xf32>
    %141 = arith.addf %133, %140 : vector<16x16xf32>
    %c8_132 = arith.constant 8 : index
    %c0_133 = arith.constant 0 : index
    %c0_134 = arith.constant 0 : index
    %142 = vector.load %arg5[%c8_132, %c0_133, %c0_134] : memref<9x64x16xbf16, #tpu.memory_space<vmem>>, vector<1x64x16xbf16>
    %143 = vector.shape_cast %142 : vector<1x64x16xbf16> to vector<64x16xbf16>
    %cst_135 = arith.constant dense<0.000000e+00> : vector<8x16xf32>
    %144 = tpu.matmul %78, %143, %cst_135 {dimension_numbers = #tpu.dot_dimension_numbers<[1], [0], [0], [1], [0, 0, 1, 1], [], []>} : vector<8x64xbf16>, vector<64x16xbf16>, vector<8x16xf32> -> vector<8x16xf32>
    %c8_136 = arith.constant 8 : index
    %c0_137 = arith.constant 0 : index
    %c0_138 = arith.constant 0 : index
    %145 = vector.load %arg6[%c8_136, %c0_137, %c0_138] : memref<9x16x8xbf16, #tpu.memory_space<vmem>>, vector<1x16x8xbf16>
    %146 = vector.shape_cast %145 : vector<1x16x8xbf16> to vector<16x8xbf16>
    %147 = arith.truncf %144 : vector<8x16xf32> to vector<8x16xbf16>
    %cst_139 = arith.constant dense<0.000000e+00> : vector<16x16xf32>
    %148 = tpu.matmul %146, %147, %cst_139 {dimension_numbers = #tpu.dot_dimension_numbers<[1], [0], [0], [1], [0, 0, 1, 1], [], []>} : vector<16x8xbf16>, vector<8x16xbf16>, vector<16x16xf32> -> vector<16x16xf32>
    %149 = arith.addf %141, %148 : vector<16x16xf32>
    %c0_140 = arith.constant 0 : index
    %c0_141 = arith.constant 0 : index
    %150 = vector.load %arg7[%c0_140, %c0_141] : memref<16x1xf32, #tpu.memory_space<vmem>>, vector<16x1xf32>
    %151 = vector.broadcast %150 : vector<16x1xf32> to vector<16x16xf32>
    %152 = arith.addf %149, %151 : vector<16x16xf32>
    %cst_142 = arith.constant 0.000000e+00 : f32
    %153 = vector.broadcast %cst_142 : f32 to vector<16x16xf32>
    %154 = arith.maximumf %152, %153 : vector<16x16xf32>
    %155 = arith.truncf %154 : vector<16x16xf32> to vector<16x16xbf16>
    %cst_143 = arith.constant 0.000000e+00 : f32
    %156 = vector.broadcast %cst_143 : f32 to vector<1x32xf32>
    %157 = vector.extract_strided_slice %155 {offsets = [0, 0], sizes = [1, 16], strides = [1, 1]} : vector<16x16xbf16> to vector<1x16xbf16>
    %c0_144 = arith.constant 0 : index
    %c0_145 = arith.constant 0 : index
    %c0_146 = arith.constant 0 : index
    %158 = vector.load %arg8[%c0_144, %c0_145, %c0_146] : memref<16x16x32xbf16, #tpu.memory_space<vmem>>, vector<1x16x32xbf16>
    %159 = vector.shape_cast %158 : vector<1x16x32xbf16> to vector<16x32xbf16>
    %cst_147 = arith.constant dense<0.000000e+00> : vector<1x32xf32>
    %160 = tpu.matmul %157, %159, %cst_147 {dimension_numbers = #tpu.dot_dimension_numbers<[1], [0], [0], [1], [0, 0, 1, 1], [], []>} : vector<1x16xbf16>, vector<16x32xbf16>, vector<1x32xf32> -> vector<1x32xf32>
    %161 = arith.addf %156, %160 : vector<1x32xf32>
    %162 = vector.extract_strided_slice %155 {offsets = [1, 0], sizes = [1, 16], strides = [1, 1]} : vector<16x16xbf16> to vector<1x16xbf16>
    %c1_148 = arith.constant 1 : index
    %c0_149 = arith.constant 0 : index
    %c0_150 = arith.constant 0 : index
    %163 = vector.load %arg8[%c1_148, %c0_149, %c0_150] : memref<16x16x32xbf16, #tpu.memory_space<vmem>>, vector<1x16x32xbf16>
    %164 = vector.shape_cast %163 : vector<1x16x32xbf16> to vector<16x32xbf16>
    %cst_151 = arith.constant dense<0.000000e+00> : vector<1x32xf32>
    %165 = tpu.matmul %162, %164, %cst_151 {dimension_numbers = #tpu.dot_dimension_numbers<[1], [0], [0], [1], [0, 0, 1, 1], [], []>} : vector<1x16xbf16>, vector<16x32xbf16>, vector<1x32xf32> -> vector<1x32xf32>
    %166 = arith.addf %161, %165 : vector<1x32xf32>
    %167 = vector.extract_strided_slice %155 {offsets = [2, 0], sizes = [1, 16], strides = [1, 1]} : vector<16x16xbf16> to vector<1x16xbf16>
    %c2_152 = arith.constant 2 : index
    %c0_153 = arith.constant 0 : index
    %c0_154 = arith.constant 0 : index
    %168 = vector.load %arg8[%c2_152, %c0_153, %c0_154] : memref<16x16x32xbf16, #tpu.memory_space<vmem>>, vector<1x16x32xbf16>
    %169 = vector.shape_cast %168 : vector<1x16x32xbf16> to vector<16x32xbf16>
    %cst_155 = arith.constant dense<0.000000e+00> : vector<1x32xf32>
    %170 = tpu.matmul %167, %169, %cst_155 {dimension_numbers = #tpu.dot_dimension_numbers<[1], [0], [0], [1], [0, 0, 1, 1], [], []>} : vector<1x16xbf16>, vector<16x32xbf16>, vector<1x32xf32> -> vector<1x32xf32>
    %171 = arith.addf %166, %170 : vector<1x32xf32>
    %172 = vector.extract_strided_slice %155 {offsets = [3, 0], sizes = [1, 16], strides = [1, 1]} : vector<16x16xbf16> to vector<1x16xbf16>
    %c3_156 = arith.constant 3 : index
    %c0_157 = arith.constant 0 : index
    %c0_158 = arith.constant 0 : index
    %173 = vector.load %arg8[%c3_156, %c0_157, %c0_158] : memref<16x16x32xbf16, #tpu.memory_space<vmem>>, vector<1x16x32xbf16>
    %174 = vector.shape_cast %173 : vector<1x16x32xbf16> to vector<16x32xbf16>
    %cst_159 = arith.constant dense<0.000000e+00> : vector<1x32xf32>
    %175 = tpu.matmul %172, %174, %cst_159 {dimension_numbers = #tpu.dot_dimension_numbers<[1], [0], [0], [1], [0, 0, 1, 1], [], []>} : vector<1x16xbf16>, vector<16x32xbf16>, vector<1x32xf32> -> vector<1x32xf32>
    %176 = arith.addf %171, %175 : vector<1x32xf32>
    %177 = vector.extract_strided_slice %155 {offsets = [4, 0], sizes = [1, 16], strides = [1, 1]} : vector<16x16xbf16> to vector<1x16xbf16>
    %c4_160 = arith.constant 4 : index
    %c0_161 = arith.constant 0 : index
    %c0_162 = arith.constant 0 : index
    %178 = vector.load %arg8[%c4_160, %c0_161, %c0_162] : memref<16x16x32xbf16, #tpu.memory_space<vmem>>, vector<1x16x32xbf16>
    %179 = vector.shape_cast %178 : vector<1x16x32xbf16> to vector<16x32xbf16>
    %cst_163 = arith.constant dense<0.000000e+00> : vector<1x32xf32>
    %180 = tpu.matmul %177, %179, %cst_163 {dimension_numbers = #tpu.dot_dimension_numbers<[1], [0], [0], [1], [0, 0, 1, 1], [], []>} : vector<1x16xbf16>, vector<16x32xbf16>, vector<1x32xf32> -> vector<1x32xf32>
    %181 = arith.addf %176, %180 : vector<1x32xf32>
    %182 = vector.extract_strided_slice %155 {offsets = [5, 0], sizes = [1, 16], strides = [1, 1]} : vector<16x16xbf16> to vector<1x16xbf16>
    %c5_164 = arith.constant 5 : index
    %c0_165 = arith.constant 0 : index
    %c0_166 = arith.constant 0 : index
    %183 = vector.load %arg8[%c5_164, %c0_165, %c0_166] : memref<16x16x32xbf16, #tpu.memory_space<vmem>>, vector<1x16x32xbf16>
    %184 = vector.shape_cast %183 : vector<1x16x32xbf16> to vector<16x32xbf16>
    %cst_167 = arith.constant dense<0.000000e+00> : vector<1x32xf32>
    %185 = tpu.matmul %182, %184, %cst_167 {dimension_numbers = #tpu.dot_dimension_numbers<[1], [0], [0], [1], [0, 0, 1, 1], [], []>} : vector<1x16xbf16>, vector<16x32xbf16>, vector<1x32xf32> -> vector<1x32xf32>
    %186 = arith.addf %181, %185 : vector<1x32xf32>
    %187 = vector.extract_strided_slice %155 {offsets = [6, 0], sizes = [1, 16], strides = [1, 1]} : vector<16x16xbf16> to vector<1x16xbf16>
    %c6_168 = arith.constant 6 : index
    %c0_169 = arith.constant 0 : index
    %c0_170 = arith.constant 0 : index
    %188 = vector.load %arg8[%c6_168, %c0_169, %c0_170] : memref<16x16x32xbf16, #tpu.memory_space<vmem>>, vector<1x16x32xbf16>
    %189 = vector.shape_cast %188 : vector<1x16x32xbf16> to vector<16x32xbf16>
    %cst_171 = arith.constant dense<0.000000e+00> : vector<1x32xf32>
    %190 = tpu.matmul %187, %189, %cst_171 {dimension_numbers = #tpu.dot_dimension_numbers<[1], [0], [0], [1], [0, 0, 1, 1], [], []>} : vector<1x16xbf16>, vector<16x32xbf16>, vector<1x32xf32> -> vector<1x32xf32>
    %191 = arith.addf %186, %190 : vector<1x32xf32>
    %192 = vector.extract_strided_slice %155 {offsets = [7, 0], sizes = [1, 16], strides = [1, 1]} : vector<16x16xbf16> to vector<1x16xbf16>
    %c7_172 = arith.constant 7 : index
    %c0_173 = arith.constant 0 : index
    %c0_174 = arith.constant 0 : index
    %193 = vector.load %arg8[%c7_172, %c0_173, %c0_174] : memref<16x16x32xbf16, #tpu.memory_space<vmem>>, vector<1x16x32xbf16>
    %194 = vector.shape_cast %193 : vector<1x16x32xbf16> to vector<16x32xbf16>
    %cst_175 = arith.constant dense<0.000000e+00> : vector<1x32xf32>
    %195 = tpu.matmul %192, %194, %cst_175 {dimension_numbers = #tpu.dot_dimension_numbers<[1], [0], [0], [1], [0, 0, 1, 1], [], []>} : vector<1x16xbf16>, vector<16x32xbf16>, vector<1x32xf32> -> vector<1x32xf32>
    %196 = arith.addf %191, %195 : vector<1x32xf32>
    %197 = vector.extract_strided_slice %155 {offsets = [8, 0], sizes = [1, 16], strides = [1, 1]} : vector<16x16xbf16> to vector<1x16xbf16>
    %c8_176 = arith.constant 8 : index
    %c0_177 = arith.constant 0 : index
    %c0_178 = arith.constant 0 : index
    %198 = vector.load %arg8[%c8_176, %c0_177, %c0_178] : memref<16x16x32xbf16, #tpu.memory_space<vmem>>, vector<1x16x32xbf16>
    %199 = vector.shape_cast %198 : vector<1x16x32xbf16> to vector<16x32xbf16>
    %cst_179 = arith.constant dense<0.000000e+00> : vector<1x32xf32>
    %200 = tpu.matmul %197, %199, %cst_179 {dimension_numbers = #tpu.dot_dimension_numbers<[1], [0], [0], [1], [0, 0, 1, 1], [], []>} : vector<1x16xbf16>, vector<16x32xbf16>, vector<1x32xf32> -> vector<1x32xf32>
    %201 = arith.addf %196, %200 : vector<1x32xf32>
    %202 = vector.extract_strided_slice %155 {offsets = [9, 0], sizes = [1, 16], strides = [1, 1]} : vector<16x16xbf16> to vector<1x16xbf16>
    %c9 = arith.constant 9 : index
    %c0_180 = arith.constant 0 : index
    %c0_181 = arith.constant 0 : index
    %203 = vector.load %arg8[%c9, %c0_180, %c0_181] : memref<16x16x32xbf16, #tpu.memory_space<vmem>>, vector<1x16x32xbf16>
    %204 = vector.shape_cast %203 : vector<1x16x32xbf16> to vector<16x32xbf16>
    %cst_182 = arith.constant dense<0.000000e+00> : vector<1x32xf32>
    %205 = tpu.matmul %202, %204, %cst_182 {dimension_numbers = #tpu.dot_dimension_numbers<[1], [0], [0], [1], [0, 0, 1, 1], [], []>} : vector<1x16xbf16>, vector<16x32xbf16>, vector<1x32xf32> -> vector<1x32xf32>
    %206 = arith.addf %201, %205 : vector<1x32xf32>
    %207 = vector.extract_strided_slice %155 {offsets = [10, 0], sizes = [1, 16], strides = [1, 1]} : vector<16x16xbf16> to vector<1x16xbf16>
    %c10 = arith.constant 10 : index
    %c0_183 = arith.constant 0 : index
    %c0_184 = arith.constant 0 : index
    %208 = vector.load %arg8[%c10, %c0_183, %c0_184] : memref<16x16x32xbf16, #tpu.memory_space<vmem>>, vector<1x16x32xbf16>
    %209 = vector.shape_cast %208 : vector<1x16x32xbf16> to vector<16x32xbf16>
    %cst_185 = arith.constant dense<0.000000e+00> : vector<1x32xf32>
    %210 = tpu.matmul %207, %209, %cst_185 {dimension_numbers = #tpu.dot_dimension_numbers<[1], [0], [0], [1], [0, 0, 1, 1], [], []>} : vector<1x16xbf16>, vector<16x32xbf16>, vector<1x32xf32> -> vector<1x32xf32>
    %211 = arith.addf %206, %210 : vector<1x32xf32>
    %212 = vector.extract_strided_slice %155 {offsets = [11, 0], sizes = [1, 16], strides = [1, 1]} : vector<16x16xbf16> to vector<1x16xbf16>
    %c11 = arith.constant 11 : index
    %c0_186 = arith.constant 0 : index
    %c0_187 = arith.constant 0 : index
    %213 = vector.load %arg8[%c11, %c0_186, %c0_187] : memref<16x16x32xbf16, #tpu.memory_space<vmem>>, vector<1x16x32xbf16>
    %214 = vector.shape_cast %213 : vector<1x16x32xbf16> to vector<16x32xbf16>
    %cst_188 = arith.constant dense<0.000000e+00> : vector<1x32xf32>
    %215 = tpu.matmul %212, %214, %cst_188 {dimension_numbers = #tpu.dot_dimension_numbers<[1], [0], [0], [1], [0, 0, 1, 1], [], []>} : vector<1x16xbf16>, vector<16x32xbf16>, vector<1x32xf32> -> vector<1x32xf32>
    %216 = arith.addf %211, %215 : vector<1x32xf32>
    %217 = vector.extract_strided_slice %155 {offsets = [12, 0], sizes = [1, 16], strides = [1, 1]} : vector<16x16xbf16> to vector<1x16xbf16>
    %c12 = arith.constant 12 : index
    %c0_189 = arith.constant 0 : index
    %c0_190 = arith.constant 0 : index
    %218 = vector.load %arg8[%c12, %c0_189, %c0_190] : memref<16x16x32xbf16, #tpu.memory_space<vmem>>, vector<1x16x32xbf16>
    %219 = vector.shape_cast %218 : vector<1x16x32xbf16> to vector<16x32xbf16>
    %cst_191 = arith.constant dense<0.000000e+00> : vector<1x32xf32>
    %220 = tpu.matmul %217, %219, %cst_191 {dimension_numbers = #tpu.dot_dimension_numbers<[1], [0], [0], [1], [0, 0, 1, 1], [], []>} : vector<1x16xbf16>, vector<16x32xbf16>, vector<1x32xf32> -> vector<1x32xf32>
    %221 = arith.addf %216, %220 : vector<1x32xf32>
    %222 = vector.extract_strided_slice %155 {offsets = [13, 0], sizes = [1, 16], strides = [1, 1]} : vector<16x16xbf16> to vector<1x16xbf16>
    %c13 = arith.constant 13 : index
    %c0_192 = arith.constant 0 : index
    %c0_193 = arith.constant 0 : index
    %223 = vector.load %arg8[%c13, %c0_192, %c0_193] : memref<16x16x32xbf16, #tpu.memory_space<vmem>>, vector<1x16x32xbf16>
    %224 = vector.shape_cast %223 : vector<1x16x32xbf16> to vector<16x32xbf16>
    %cst_194 = arith.constant dense<0.000000e+00> : vector<1x32xf32>
    %225 = tpu.matmul %222, %224, %cst_194 {dimension_numbers = #tpu.dot_dimension_numbers<[1], [0], [0], [1], [0, 0, 1, 1], [], []>} : vector<1x16xbf16>, vector<16x32xbf16>, vector<1x32xf32> -> vector<1x32xf32>
    %226 = arith.addf %221, %225 : vector<1x32xf32>
    %227 = vector.extract_strided_slice %155 {offsets = [14, 0], sizes = [1, 16], strides = [1, 1]} : vector<16x16xbf16> to vector<1x16xbf16>
    %c14 = arith.constant 14 : index
    %c0_195 = arith.constant 0 : index
    %c0_196 = arith.constant 0 : index
    %228 = vector.load %arg8[%c14, %c0_195, %c0_196] : memref<16x16x32xbf16, #tpu.memory_space<vmem>>, vector<1x16x32xbf16>
    %229 = vector.shape_cast %228 : vector<1x16x32xbf16> to vector<16x32xbf16>
    %cst_197 = arith.constant dense<0.000000e+00> : vector<1x32xf32>
    %230 = tpu.matmul %227, %229, %cst_197 {dimension_numbers = #tpu.dot_dimension_numbers<[1], [0], [0], [1], [0, 0, 1, 1], [], []>} : vector<1x16xbf16>, vector<16x32xbf16>, vector<1x32xf32> -> vector<1x32xf32>
    %231 = arith.addf %226, %230 : vector<1x32xf32>
    %232 = vector.extract_strided_slice %155 {offsets = [15, 0], sizes = [1, 16], strides = [1, 1]} : vector<16x16xbf16> to vector<1x16xbf16>
    %c15 = arith.constant 15 : index
    %c0_198 = arith.constant 0 : index
    %c0_199 = arith.constant 0 : index
    %233 = vector.load %arg8[%c15, %c0_198, %c0_199] : memref<16x16x32xbf16, #tpu.memory_space<vmem>>, vector<1x16x32xbf16>
    %234 = vector.shape_cast %233 : vector<1x16x32xbf16> to vector<16x32xbf16>
    %cst_200 = arith.constant dense<0.000000e+00> : vector<1x32xf32>
    %235 = tpu.matmul %232, %234, %cst_200 {dimension_numbers = #tpu.dot_dimension_numbers<[1], [0], [0], [1], [0, 0, 1, 1], [], []>} : vector<1x16xbf16>, vector<16x32xbf16>, vector<1x32xf32> -> vector<1x32xf32>
    %236 = arith.addf %231, %235 : vector<1x32xf32>
    %c0_201 = arith.constant 0 : index
    %c0_202 = arith.constant 0 : index
    %237 = vector.load %arg9[%c0_201, %c0_202] : memref<1x32xf32, #tpu.memory_space<vmem>>, vector<1x32xf32>
    %238 = arith.addf %236, %237 : vector<1x32xf32>
    %239 = arith.truncf %238 : vector<1x32xf32> to vector<1x32xbf16>
    %c0_203 = arith.constant 0 : index
    %c0_204 = arith.constant 0 : index
    %c0_205 = arith.constant 0 : index
    %240 = vector.load %arg10[%c0_203, %c0_204, %c0_205] : memref<16x32x16xbf16, #tpu.memory_space<vmem>>, vector<1x32x16xbf16>
    %241 = vector.shape_cast %240 : vector<1x32x16xbf16> to vector<32x16xbf16>
    %cst_206 = arith.constant dense<0.000000e+00> : vector<1x16xf32>
    %242 = tpu.matmul %239, %241, %cst_206 {dimension_numbers = #tpu.dot_dimension_numbers<[1], [0], [0], [1], [0, 0, 1, 1], [], []>} : vector<1x32xbf16>, vector<32x16xbf16>, vector<1x16xf32> -> vector<1x16xf32>
    %c0_207 = arith.constant 0 : index
    %c0_208 = arith.constant 0 : index
    %c0_209 = arith.constant 0 : index
    %243 = vector.load %arg11[%c0_207, %c0_208, %c0_209] : memref<16x1x16xf32, #tpu.memory_space<vmem>>, vector<1x1x16xf32>
    %244 = vector.shape_cast %243 : vector<1x1x16xf32> to vector<1x16xf32>
    %245 = arith.addf %242, %244 : vector<1x16xf32>
    %cst_210 = arith.constant 0.000000e+00 : f32
    %246 = vector.broadcast %cst_210 : f32 to vector<1x16xf32>
    %247 = arith.maximumf %245, %246 : vector<1x16xf32>
    %c0_211 = arith.constant 0 : index
    %c0_212 = arith.constant 0 : index
    %248 = vector.load %arg19[%c0_211, %c0_212] : memref<16x16xf32, #tpu.memory_space<vmem>>, vector<1x16xf32>
    tpu.vector_store %arg19[%c0_211, %c0_212], %247 {strides = array<i32>} : memref<16x16xf32, #tpu.memory_space<vmem>>, vector<1x16xf32>,
    %c1_213 = arith.constant 1 : index
    %c0_214 = arith.constant 0 : index
    %c0_215 = arith.constant 0 : index
    %249 = vector.load %arg10[%c1_213, %c0_214, %c0_215] : memref<16x32x16xbf16, #tpu.memory_space<vmem>>, vector<1x32x16xbf16>
    %250 = vector.shape_cast %249 : vector<1x32x16xbf16> to vector<32x16xbf16>
    %cst_216 = arith.constant dense<0.000000e+00> : vector<1x16xf32>
    %251 = tpu.matmul %239, %250, %cst_216 {dimension_numbers = #tpu.dot_dimension_numbers<[1], [0], [0], [1], [0, 0, 1, 1], [], []>} : vector<1x32xbf16>, vector<32x16xbf16>, vector<1x16xf32> -> vector<1x16xf32>
    %c1_217 = arith.constant 1 : index
    %c0_218 = arith.constant 0 : index
    %c0_219 = arith.constant 0 : index
    %252 = vector.load %arg11[%c1_217, %c0_218, %c0_219] : memref<16x1x16xf32, #tpu.memory_space<vmem>>, vector<1x1x16xf32>
    %253 = vector.shape_cast %252 : vector<1x1x16xf32> to vector<1x16xf32>
    %254 = arith.addf %251, %253 : vector<1x16xf32>
    %cst_220 = arith.constant 0.000000e+00 : f32
    %255 = vector.broadcast %cst_220 : f32 to vector<1x16xf32>
    %256 = arith.maximumf %254, %255 : vector<1x16xf32>
    %c1_221 = arith.constant 1 : index
    %c0_222 = arith.constant 0 : index
    %257 = vector.load %arg19[%c1_221, %c0_222] : memref<16x16xf32, #tpu.memory_space<vmem>>, vector<1x16xf32>
    tpu.vector_store %arg19[%c1_221, %c0_222], %256 {strides = array<i32>} : memref<16x16xf32, #tpu.memory_space<vmem>>, vector<1x16xf32>,
    %c2_223 = arith.constant 2 : index
    %c0_224 = arith.constant 0 : index
    %c0_225 = arith.constant 0 : index
    %258 = vector.load %arg10[%c2_223, %c0_224, %c0_225] : memref<16x32x16xbf16, #tpu.memory_space<vmem>>, vector<1x32x16xbf16>
    %259 = vector.shape_cast %258 : vector<1x32x16xbf16> to vector<32x16xbf16>
    %cst_226 = arith.constant dense<0.000000e+00> : vector<1x16xf32>
    %260 = tpu.matmul %239, %259, %cst_226 {dimension_numbers = #tpu.dot_dimension_numbers<[1], [0], [0], [1], [0, 0, 1, 1], [], []>} : vector<1x32xbf16>, vector<32x16xbf16>, vector<1x16xf32> -> vector<1x16xf32>
    %c2_227 = arith.constant 2 : index
    %c0_228 = arith.constant 0 : index
    %c0_229 = arith.constant 0 : index
    %261 = vector.load %arg11[%c2_227, %c0_228, %c0_229] : memref<16x1x16xf32, #tpu.memory_space<vmem>>, vector<1x1x16xf32>
    %262 = vector.shape_cast %261 : vector<1x1x16xf32> to vector<1x16xf32>
    %263 = arith.addf %260, %262 : vector<1x16xf32>
    %cst_230 = arith.constant 0.000000e+00 : f32
    %264 = vector.broadcast %cst_230 : f32 to vector<1x16xf32>
    %265 = arith.maximumf %263, %264 : vector<1x16xf32>
    %c2_231 = arith.constant 2 : index
    %c0_232 = arith.constant 0 : index
    %266 = vector.load %arg19[%c2_231, %c0_232] : memref<16x16xf32, #tpu.memory_space<vmem>>, vector<1x16xf32>
    tpu.vector_store %arg19[%c2_231, %c0_232], %265 {strides = array<i32>} : memref<16x16xf32, #tpu.memory_space<vmem>>, vector<1x16xf32>,
    %c3_233 = arith.constant 3 : index
    %c0_234 = arith.constant 0 : index
    %c0_235 = arith.constant 0 : index
    %267 = vector.load %arg10[%c3_233, %c0_234, %c0_235] : memref<16x32x16xbf16, #tpu.memory_space<vmem>>, vector<1x32x16xbf16>
    %268 = vector.shape_cast %267 : vector<1x32x16xbf16> to vector<32x16xbf16>
    %cst_236 = arith.constant dense<0.000000e+00> : vector<1x16xf32>
    %269 = tpu.matmul %239, %268, %cst_236 {dimension_numbers = #tpu.dot_dimension_numbers<[1], [0], [0], [1], [0, 0, 1, 1], [], []>} : vector<1x32xbf16>, vector<32x16xbf16>, vector<1x16xf32> -> vector<1x16xf32>
    %c3_237 = arith.constant 3 : index
    %c0_238 = arith.constant 0 : index
    %c0_239 = arith.constant 0 : index
    %270 = vector.load %arg11[%c3_237, %c0_238, %c0_239] : memref<16x1x16xf32, #tpu.memory_space<vmem>>, vector<1x1x16xf32>
    %271 = vector.shape_cast %270 : vector<1x1x16xf32> to vector<1x16xf32>
    %272 = arith.addf %269, %271 : vector<1x16xf32>
    %cst_240 = arith.constant 0.000000e+00 : f32
    %273 = vector.broadcast %cst_240 : f32 to vector<1x16xf32>
    %274 = arith.maximumf %272, %273 : vector<1x16xf32>
    %c3_241 = arith.constant 3 : index
    %c0_242 = arith.constant 0 : index
    %275 = vector.load %arg19[%c3_241, %c0_242] : memref<16x16xf32, #tpu.memory_space<vmem>>, vector<1x16xf32>
    tpu.vector_store %arg19[%c3_241, %c0_242], %274 {strides = array<i32>} : memref<16x16xf32, #tpu.memory_space<vmem>>, vector<1x16xf32>,
    %c4_243 = arith.constant 4 : index
    %c0_244 = arith.constant 0 : index
    %c0_245 = arith.constant 0 : index
    %276 = vector.load %arg10[%c4_243, %c0_244, %c0_245] : memref<16x32x16xbf16, #tpu.memory_space<vmem>>, vector<1x32x16xbf16>
    %277 = vector.shape_cast %276 : vector<1x32x16xbf16> to vector<32x16xbf16>
    %cst_246 = arith.constant dense<0.000000e+00> : vector<1x16xf32>
    %278 = tpu.matmul %239, %277, %cst_246 {dimension_numbers = #tpu.dot_dimension_numbers<[1], [0], [0], [1], [0, 0, 1, 1], [], []>} : vector<1x32xbf16>, vector<32x16xbf16>, vector<1x16xf32> -> vector<1x16xf32>
    %c4_247 = arith.constant 4 : index
    %c0_248 = arith.constant 0 : index
    %c0_249 = arith.constant 0 : index
    %279 = vector.load %arg11[%c4_247, %c0_248, %c0_249] : memref<16x1x16xf32, #tpu.memory_space<vmem>>, vector<1x1x16xf32>
    %280 = vector.shape_cast %279 : vector<1x1x16xf32> to vector<1x16xf32>
    %281 = arith.addf %278, %280 : vector<1x16xf32>
    %cst_250 = arith.constant 0.000000e+00 : f32
    %282 = vector.broadcast %cst_250 : f32 to vector<1x16xf32>
    %283 = arith.maximumf %281, %282 : vector<1x16xf32>
    %c4_251 = arith.constant 4 : index
    %c0_252 = arith.constant 0 : index
    %284 = vector.load %arg19[%c4_251, %c0_252] : memref<16x16xf32, #tpu.memory_space<vmem>>, vector<1x16xf32>
    tpu.vector_store %arg19[%c4_251, %c0_252], %283 {strides = array<i32>} : memref<16x16xf32, #tpu.memory_space<vmem>>, vector<1x16xf32>,
    %c5_253 = arith.constant 5 : index
    %c0_254 = arith.constant 0 : index
    %c0_255 = arith.constant 0 : index
    %285 = vector.load %arg10[%c5_253, %c0_254, %c0_255] : memref<16x32x16xbf16, #tpu.memory_space<vmem>>, vector<1x32x16xbf16>
    %286 = vector.shape_cast %285 : vector<1x32x16xbf16> to vector<32x16xbf16>
    %cst_256 = arith.constant dense<0.000000e+00> : vector<1x16xf32>
    %287 = tpu.matmul %239, %286, %cst_256 {dimension_numbers = #tpu.dot_dimension_numbers<[1], [0], [0], [1], [0, 0, 1, 1], [], []>} : vector<1x32xbf16>, vector<32x16xbf16>, vector<1x16xf32> -> vector<1x16xf32>
    %c5_257 = arith.constant 5 : index
    %c0_258 = arith.constant 0 : index
    %c0_259 = arith.constant 0 : index
    %288 = vector.load %arg11[%c5_257, %c0_258, %c0_259] : memref<16x1x16xf32, #tpu.memory_space<vmem>>, vector<1x1x16xf32>
    %289 = vector.shape_cast %288 : vector<1x1x16xf32> to vector<1x16xf32>
    %290 = arith.addf %287, %289 : vector<1x16xf32>
    %cst_260 = arith.constant 0.000000e+00 : f32
    %291 = vector.broadcast %cst_260 : f32 to vector<1x16xf32>
    %292 = arith.maximumf %290, %291 : vector<1x16xf32>
    %c5_261 = arith.constant 5 : index
    %c0_262 = arith.constant 0 : index
    %293 = vector.load %arg19[%c5_261, %c0_262] : memref<16x16xf32, #tpu.memory_space<vmem>>, vector<1x16xf32>
    tpu.vector_store %arg19[%c5_261, %c0_262], %292 {strides = array<i32>} : memref<16x16xf32, #tpu.memory_space<vmem>>, vector<1x16xf32>,
    %c6_263 = arith.constant 6 : index
    %c0_264 = arith.constant 0 : index
    %c0_265 = arith.constant 0 : index
    %294 = vector.load %arg10[%c6_263, %c0_264, %c0_265] : memref<16x32x16xbf16, #tpu.memory_space<vmem>>, vector<1x32x16xbf16>
    %295 = vector.shape_cast %294 : vector<1x32x16xbf16> to vector<32x16xbf16>
    %cst_266 = arith.constant dense<0.000000e+00> : vector<1x16xf32>
    %296 = tpu.matmul %239, %295, %cst_266 {dimension_numbers = #tpu.dot_dimension_numbers<[1], [0], [0], [1], [0, 0, 1, 1], [], []>} : vector<1x32xbf16>, vector<32x16xbf16>, vector<1x16xf32> -> vector<1x16xf32>
    %c6_267 = arith.constant 6 : index
    %c0_268 = arith.constant 0 : index
    %c0_269 = arith.constant 0 : index
    %297 = vector.load %arg11[%c6_267, %c0_268, %c0_269] : memref<16x1x16xf32, #tpu.memory_space<vmem>>, vector<1x1x16xf32>
    %298 = vector.shape_cast %297 : vector<1x1x16xf32> to vector<1x16xf32>
    %299 = arith.addf %296, %298 : vector<1x16xf32>
    %cst_270 = arith.constant 0.000000e+00 : f32
    %300 = vector.broadcast %cst_270 : f32 to vector<1x16xf32>
    %301 = arith.maximumf %299, %300 : vector<1x16xf32>
    %c6_271 = arith.constant 6 : index
    %c0_272 = arith.constant 0 : index
    %302 = vector.load %arg19[%c6_271, %c0_272] : memref<16x16xf32, #tpu.memory_space<vmem>>, vector<1x16xf32>
    tpu.vector_store %arg19[%c6_271, %c0_272], %301 {strides = array<i32>} : memref<16x16xf32, #tpu.memory_space<vmem>>, vector<1x16xf32>,
    %c7_273 = arith.constant 7 : index
    %c0_274 = arith.constant 0 : index
    %c0_275 = arith.constant 0 : index
    %303 = vector.load %arg10[%c7_273, %c0_274, %c0_275] : memref<16x32x16xbf16, #tpu.memory_space<vmem>>, vector<1x32x16xbf16>
    %304 = vector.shape_cast %303 : vector<1x32x16xbf16> to vector<32x16xbf16>
    %cst_276 = arith.constant dense<0.000000e+00> : vector<1x16xf32>
    %305 = tpu.matmul %239, %304, %cst_276 {dimension_numbers = #tpu.dot_dimension_numbers<[1], [0], [0], [1], [0, 0, 1, 1], [], []>} : vector<1x32xbf16>, vector<32x16xbf16>, vector<1x16xf32> -> vector<1x16xf32>
    %c7_277 = arith.constant 7 : index
    %c0_278 = arith.constant 0 : index
    %c0_279 = arith.constant 0 : index
    %306 = vector.load %arg11[%c7_277, %c0_278, %c0_279] : memref<16x1x16xf32, #tpu.memory_space<vmem>>, vector<1x1x16xf32>
    %307 = vector.shape_cast %306 : vector<1x1x16xf32> to vector<1x16xf32>
    %308 = arith.addf %305, %307 : vector<1x16xf32>
    %cst_280 = arith.constant 0.000000e+00 : f32
    %309 = vector.broadcast %cst_280 : f32 to vector<1x16xf32>
    %310 = arith.maximumf %308, %309 : vector<1x16xf32>
    %c7_281 = arith.constant 7 : index
    %c0_282 = arith.constant 0 : index
    %311 = vector.load %arg19[%c7_281, %c0_282] : memref<16x16xf32, #tpu.memory_space<vmem>>, vector<1x16xf32>
    tpu.vector_store %arg19[%c7_281, %c0_282], %310 {strides = array<i32>} : memref<16x16xf32, #tpu.memory_space<vmem>>, vector<1x16xf32>,
    %c8_283 = arith.constant 8 : index
    %c0_284 = arith.constant 0 : index
    %c0_285 = arith.constant 0 : index
    %312 = vector.load %arg10[%c8_283, %c0_284, %c0_285] : memref<16x32x16xbf16, #tpu.memory_space<vmem>>, vector<1x32x16xbf16>
    %313 = vector.shape_cast %312 : vector<1x32x16xbf16> to vector<32x16xbf16>
    %cst_286 = arith.constant dense<0.000000e+00> : vector<1x16xf32>
    %314 = tpu.matmul %239, %313, %cst_286 {dimension_numbers = #tpu.dot_dimension_numbers<[1], [0], [0], [1], [0, 0, 1, 1], [], []>} : vector<1x32xbf16>, vector<32x16xbf16>, vector<1x16xf32> -> vector<1x16xf32>
    %c8_287 = arith.constant 8 : index
    %c0_288 = arith.constant 0 : index
    %c0_289 = arith.constant 0 : index
    %315 = vector.load %arg11[%c8_287, %c0_288, %c0_289] : memref<16x1x16xf32, #tpu.memory_space<vmem>>, vector<1x1x16xf32>
    %316 = vector.shape_cast %315 : vector<1x1x16xf32> to vector<1x16xf32>
    %317 = arith.addf %314, %316 : vector<1x16xf32>
    %cst_290 = arith.constant 0.000000e+00 : f32
    %318 = vector.broadcast %cst_290 : f32 to vector<1x16xf32>
    %319 = arith.maximumf %317, %318 : vector<1x16xf32>
    %c8_291 = arith.constant 8 : index
    %c0_292 = arith.constant 0 : index
    %320 = vector.load %arg19[%c8_291, %c0_292] : memref<16x16xf32, #tpu.memory_space<vmem>>, vector<1x16xf32>
    tpu.vector_store %arg19[%c8_291, %c0_292], %319 {strides = array<i32>} : memref<16x16xf32, #tpu.memory_space<vmem>>, vector<1x16xf32>,
    %c9_293 = arith.constant 9 : index
    %c0_294 = arith.constant 0 : index
    %c0_295 = arith.constant 0 : index
    %321 = vector.load %arg10[%c9_293, %c0_294, %c0_295] : memref<16x32x16xbf16, #tpu.memory_space<vmem>>, vector<1x32x16xbf16>
    %322 = vector.shape_cast %321 : vector<1x32x16xbf16> to vector<32x16xbf16>
    %cst_296 = arith.constant dense<0.000000e+00> : vector<1x16xf32>
    %323 = tpu.matmul %239, %322, %cst_296 {dimension_numbers = #tpu.dot_dimension_numbers<[1], [0], [0], [1], [0, 0, 1, 1], [], []>} : vector<1x32xbf16>, vector<32x16xbf16>, vector<1x16xf32> -> vector<1x16xf32>
    %c9_297 = arith.constant 9 : index
    %c0_298 = arith.constant 0 : index
    %c0_299 = arith.constant 0 : index
    %324 = vector.load %arg11[%c9_297, %c0_298, %c0_299] : memref<16x1x16xf32, #tpu.memory_space<vmem>>, vector<1x1x16xf32>
    %325 = vector.shape_cast %324 : vector<1x1x16xf32> to vector<1x16xf32>
    %326 = arith.addf %323, %325 : vector<1x16xf32>
    %cst_300 = arith.constant 0.000000e+00 : f32
    %327 = vector.broadcast %cst_300 : f32 to vector<1x16xf32>
    %328 = arith.maximumf %326, %327 : vector<1x16xf32>
    %c9_301 = arith.constant 9 : index
    %c0_302 = arith.constant 0 : index
    %329 = vector.load %arg19[%c9_301, %c0_302] : memref<16x16xf32, #tpu.memory_space<vmem>>, vector<1x16xf32>
    tpu.vector_store %arg19[%c9_301, %c0_302], %328 {strides = array<i32>} : memref<16x16xf32, #tpu.memory_space<vmem>>, vector<1x16xf32>,
    %c10_303 = arith.constant 10 : index
    %c0_304 = arith.constant 0 : index
    %c0_305 = arith.constant 0 : index
    %330 = vector.load %arg10[%c10_303, %c0_304, %c0_305] : memref<16x32x16xbf16, #tpu.memory_space<vmem>>, vector<1x32x16xbf16>
    %331 = vector.shape_cast %330 : vector<1x32x16xbf16> to vector<32x16xbf16>
    %cst_306 = arith.constant dense<0.000000e+00> : vector<1x16xf32>
    %332 = tpu.matmul %239, %331, %cst_306 {dimension_numbers = #tpu.dot_dimension_numbers<[1], [0], [0], [1], [0, 0, 1, 1], [], []>} : vector<1x32xbf16>, vector<32x16xbf16>, vector<1x16xf32> -> vector<1x16xf32>
    %c10_307 = arith.constant 10 : index
    %c0_308 = arith.constant 0 : index
    %c0_309 = arith.constant 0 : index
    %333 = vector.load %arg11[%c10_307, %c0_308, %c0_309] : memref<16x1x16xf32, #tpu.memory_space<vmem>>, vector<1x1x16xf32>
    %334 = vector.shape_cast %333 : vector<1x1x16xf32> to vector<1x16xf32>
    %335 = arith.addf %332, %334 : vector<1x16xf32>
    %cst_310 = arith.constant 0.000000e+00 : f32
    %336 = vector.broadcast %cst_310 : f32 to vector<1x16xf32>
    %337 = arith.maximumf %335, %336 : vector<1x16xf32>
    %c10_311 = arith.constant 10 : index
    %c0_312 = arith.constant 0 : index
    %338 = vector.load %arg19[%c10_311, %c0_312] : memref<16x16xf32, #tpu.memory_space<vmem>>, vector<1x16xf32>
    tpu.vector_store %arg19[%c10_311, %c0_312], %337 {strides = array<i32>} : memref<16x16xf32, #tpu.memory_space<vmem>>, vector<1x16xf32>,
    %c11_313 = arith.constant 11 : index
    %c0_314 = arith.constant 0 : index
    %c0_315 = arith.constant 0 : index
    %339 = vector.load %arg10[%c11_313, %c0_314, %c0_315] : memref<16x32x16xbf16, #tpu.memory_space<vmem>>, vector<1x32x16xbf16>
    %340 = vector.shape_cast %339 : vector<1x32x16xbf16> to vector<32x16xbf16>
    %cst_316 = arith.constant dense<0.000000e+00> : vector<1x16xf32>
    %341 = tpu.matmul %239, %340, %cst_316 {dimension_numbers = #tpu.dot_dimension_numbers<[1], [0], [0], [1], [0, 0, 1, 1], [], []>} : vector<1x32xbf16>, vector<32x16xbf16>, vector<1x16xf32> -> vector<1x16xf32>
    %c11_317 = arith.constant 11 : index
    %c0_318 = arith.constant 0 : index
    %c0_319 = arith.constant 0 : index
    %342 = vector.load %arg11[%c11_317, %c0_318, %c0_319] : memref<16x1x16xf32, #tpu.memory_space<vmem>>, vector<1x1x16xf32>
    %343 = vector.shape_cast %342 : vector<1x1x16xf32> to vector<1x16xf32>
    %344 = arith.addf %341, %343 : vector<1x16xf32>
    %cst_320 = arith.constant 0.000000e+00 : f32
    %345 = vector.broadcast %cst_320 : f32 to vector<1x16xf32>
    %346 = arith.maximumf %344, %345 : vector<1x16xf32>
    %c11_321 = arith.constant 11 : index
    %c0_322 = arith.constant 0 : index
    %347 = vector.load %arg19[%c11_321, %c0_322] : memref<16x16xf32, #tpu.memory_space<vmem>>, vector<1x16xf32>
    tpu.vector_store %arg19[%c11_321, %c0_322], %346 {strides = array<i32>} : memref<16x16xf32, #tpu.memory_space<vmem>>, vector<1x16xf32>,
    %c12_323 = arith.constant 12 : index
    %c0_324 = arith.constant 0 : index
    %c0_325 = arith.constant 0 : index
    %348 = vector.load %arg10[%c12_323, %c0_324, %c0_325] : memref<16x32x16xbf16, #tpu.memory_space<vmem>>, vector<1x32x16xbf16>
    %349 = vector.shape_cast %348 : vector<1x32x16xbf16> to vector<32x16xbf16>
    %cst_326 = arith.constant dense<0.000000e+00> : vector<1x16xf32>
    %350 = tpu.matmul %239, %349, %cst_326 {dimension_numbers = #tpu.dot_dimension_numbers<[1], [0], [0], [1], [0, 0, 1, 1], [], []>} : vector<1x32xbf16>, vector<32x16xbf16>, vector<1x16xf32> -> vector<1x16xf32>
    %c12_327 = arith.constant 12 : index
    %c0_328 = arith.constant 0 : index
    %c0_329 = arith.constant 0 : index
    %351 = vector.load %arg11[%c12_327, %c0_328, %c0_329] : memref<16x1x16xf32, #tpu.memory_space<vmem>>, vector<1x1x16xf32>
    %352 = vector.shape_cast %351 : vector<1x1x16xf32> to vector<1x16xf32>
    %353 = arith.addf %350, %352 : vector<1x16xf32>
    %cst_330 = arith.constant 0.000000e+00 : f32
    %354 = vector.broadcast %cst_330 : f32 to vector<1x16xf32>
    %355 = arith.maximumf %353, %354 : vector<1x16xf32>
    %c12_331 = arith.constant 12 : index
    %c0_332 = arith.constant 0 : index
    %356 = vector.load %arg19[%c12_331, %c0_332] : memref<16x16xf32, #tpu.memory_space<vmem>>, vector<1x16xf32>
    tpu.vector_store %arg19[%c12_331, %c0_332], %355 {strides = array<i32>} : memref<16x16xf32, #tpu.memory_space<vmem>>, vector<1x16xf32>,
    %c13_333 = arith.constant 13 : index
    %c0_334 = arith.constant 0 : index
    %c0_335 = arith.constant 0 : index
    %357 = vector.load %arg10[%c13_333, %c0_334, %c0_335] : memref<16x32x16xbf16, #tpu.memory_space<vmem>>, vector<1x32x16xbf16>
    %358 = vector.shape_cast %357 : vector<1x32x16xbf16> to vector<32x16xbf16>
    %cst_336 = arith.constant dense<0.000000e+00> : vector<1x16xf32>
    %359 = tpu.matmul %239, %358, %cst_336 {dimension_numbers = #tpu.dot_dimension_numbers<[1], [0], [0], [1], [0, 0, 1, 1], [], []>} : vector<1x32xbf16>, vector<32x16xbf16>, vector<1x16xf32> -> vector<1x16xf32>
    %c13_337 = arith.constant 13 : index
    %c0_338 = arith.constant 0 : index
    %c0_339 = arith.constant 0 : index
    %360 = vector.load %arg11[%c13_337, %c0_338, %c0_339] : memref<16x1x16xf32, #tpu.memory_space<vmem>>, vector<1x1x16xf32>
    %361 = vector.shape_cast %360 : vector<1x1x16xf32> to vector<1x16xf32>
    %362 = arith.addf %359, %361 : vector<1x16xf32>
    %cst_340 = arith.constant 0.000000e+00 : f32
    %363 = vector.broadcast %cst_340 : f32 to vector<1x16xf32>
    %364 = arith.maximumf %362, %363 : vector<1x16xf32>
    %c13_341 = arith.constant 13 : index
    %c0_342 = arith.constant 0 : index
    %365 = vector.load %arg19[%c13_341, %c0_342] : memref<16x16xf32, #tpu.memory_space<vmem>>, vector<1x16xf32>
    tpu.vector_store %arg19[%c13_341, %c0_342], %364 {strides = array<i32>} : memref<16x16xf32, #tpu.memory_space<vmem>>, vector<1x16xf32>,
    %c14_343 = arith.constant 14 : index
    %c0_344 = arith.constant 0 : index
    %c0_345 = arith.constant 0 : index
    %366 = vector.load %arg10[%c14_343, %c0_344, %c0_345] : memref<16x32x16xbf16, #tpu.memory_space<vmem>>, vector<1x32x16xbf16>
    %367 = vector.shape_cast %366 : vector<1x32x16xbf16> to vector<32x16xbf16>
    %cst_346 = arith.constant dense<0.000000e+00> : vector<1x16xf32>
    %368 = tpu.matmul %239, %367, %cst_346 {dimension_numbers = #tpu.dot_dimension_numbers<[1], [0], [0], [1], [0, 0, 1, 1], [], []>} : vector<1x32xbf16>, vector<32x16xbf16>, vector<1x16xf32> -> vector<1x16xf32>
    %c14_347 = arith.constant 14 : index
    %c0_348 = arith.constant 0 : index
    %c0_349 = arith.constant 0 : index
    %369 = vector.load %arg11[%c14_347, %c0_348, %c0_349] : memref<16x1x16xf32, #tpu.memory_space<vmem>>, vector<1x1x16xf32>
    %370 = vector.shape_cast %369 : vector<1x1x16xf32> to vector<1x16xf32>
    %371 = arith.addf %368, %370 : vector<1x16xf32>
    %cst_350 = arith.constant 0.000000e+00 : f32
    %372 = vector.broadcast %cst_350 : f32 to vector<1x16xf32>
    %373 = arith.maximumf %371, %372 : vector<1x16xf32>
    %c14_351 = arith.constant 14 : index
    %c0_352 = arith.constant 0 : index
    %374 = vector.load %arg19[%c14_351, %c0_352] : memref<16x16xf32, #tpu.memory_space<vmem>>, vector<1x16xf32>
    tpu.vector_store %arg19[%c14_351, %c0_352], %373 {strides = array<i32>} : memref<16x16xf32, #tpu.memory_space<vmem>>, vector<1x16xf32>,
    %c15_353 = arith.constant 15 : index
    %c0_354 = arith.constant 0 : index
    %c0_355 = arith.constant 0 : index
    %375 = vector.load %arg10[%c15_353, %c0_354, %c0_355] : memref<16x32x16xbf16, #tpu.memory_space<vmem>>, vector<1x32x16xbf16>
    %376 = vector.shape_cast %375 : vector<1x32x16xbf16> to vector<32x16xbf16>
    %cst_356 = arith.constant dense<0.000000e+00> : vector<1x16xf32>
    %377 = tpu.matmul %239, %376, %cst_356 {dimension_numbers = #tpu.dot_dimension_numbers<[1], [0], [0], [1], [0, 0, 1, 1], [], []>} : vector<1x32xbf16>, vector<32x16xbf16>, vector<1x16xf32> -> vector<1x16xf32>
    %c15_357 = arith.constant 15 : index
    %c0_358 = arith.constant 0 : index
    %c0_359 = arith.constant 0 : index
    %378 = vector.load %arg11[%c15_357, %c0_358, %c0_359] : memref<16x1x16xf32, #tpu.memory_space<vmem>>, vector<1x1x16xf32>
    %379 = vector.shape_cast %378 : vector<1x1x16xf32> to vector<1x16xf32>
    %380 = arith.addf %377, %379 : vector<1x16xf32>
    %cst_360 = arith.constant 0.000000e+00 : f32
    %381 = vector.broadcast %cst_360 : f32 to vector<1x16xf32>
    %382 = arith.maximumf %380, %381 : vector<1x16xf32>
    %c15_361 = arith.constant 15 : index
    %c0_362 = arith.constant 0 : index
    %383 = vector.load %arg19[%c15_361, %c0_362] : memref<16x16xf32, #tpu.memory_space<vmem>>, vector<1x16xf32>
    tpu.vector_store %arg19[%c15_361, %c0_362], %382 {strides = array<i32>} : memref<16x16xf32, #tpu.memory_space<vmem>>, vector<1x16xf32>,
    %c0_363 = arith.constant 0 : index
    %c0_364 = arith.constant 0 : index
    %384 = vector.load %arg19[%c0_363, %c0_364] : memref<16x16xf32, #tpu.memory_space<vmem>>, vector<16x16xf32>
    %385 = arith.truncf %384 : vector<16x16xf32> to vector<16x16xbf16>
    %c0_365 = arith.constant 0 : index
    %c0_366 = arith.constant 0 : index
    %c0_367 = arith.constant 0 : index
    %386 = vector.load %arg13[%c0_365, %c0_366, %c0_367] : memref<9x8x16xbf16, #tpu.memory_space<vmem>>, vector<1x8x16xbf16>
    %387 = vector.shape_cast %386 : vector<1x8x16xbf16> to vector<8x16xbf16>
    %cst_368 = arith.constant dense<0.000000e+00> : vector<8x16xf32>
    %388 = tpu.matmul %387, %385, %cst_368 {dimension_numbers = #tpu.dot_dimension_numbers<[1], [0], [0], [1], [0, 0, 1, 1], [], []>} : vector<8x16xbf16>, vector<16x16xbf16>, vector<8x16xf32> -> vector<8x16xf32>
    %389 = arith.truncf %388 : vector<8x16xf32> to vector<8x16xbf16>
    %c0_369 = arith.constant 0 : index
    %c0_370 = arith.constant 0 : index
    %c0_371 = arith.constant 0 : index
    %390 = vector.load %arg12[%c0_369, %c0_370, %c0_371] : memref<9x16x81xbf16, #tpu.memory_space<vmem>>, vector<1x16x81xbf16>
    %391 = vector.shape_cast %390 : vector<1x16x81xbf16> to vector<16x81xbf16>
    %cst_372 = arith.constant dense<0.000000e+00> : vector<8x81xf32>
    %392 = tpu.matmul %389, %391, %cst_372 {dimension_numbers = #tpu.dot_dimension_numbers<[1], [0], [0], [1], [0, 0, 1, 1], [], []>} : vector<8x16xbf16>, vector<16x81xbf16>, vector<8x81xf32> -> vector<8x81xf32>
    %c1_373 = arith.constant 1 : index
    %c0_374 = arith.constant 0 : index
    %c0_375 = arith.constant 0 : index
    %393 = vector.load %arg13[%c1_373, %c0_374, %c0_375] : memref<9x8x16xbf16, #tpu.memory_space<vmem>>, vector<1x8x16xbf16>
    %394 = vector.shape_cast %393 : vector<1x8x16xbf16> to vector<8x16xbf16>
    %cst_376 = arith.constant dense<0.000000e+00> : vector<8x16xf32>
    %395 = tpu.matmul %394, %385, %cst_376 {dimension_numbers = #tpu.dot_dimension_numbers<[1], [0], [0], [1], [0, 0, 1, 1], [], []>} : vector<8x16xbf16>, vector<16x16xbf16>, vector<8x16xf32> -> vector<8x16xf32>
    %396 = arith.truncf %395 : vector<8x16xf32> to vector<8x16xbf16>
    %c1_377 = arith.constant 1 : index
    %c0_378 = arith.constant 0 : index
    %c0_379 = arith.constant 0 : index
    %397 = vector.load %arg12[%c1_377, %c0_378, %c0_379] : memref<9x16x81xbf16, #tpu.memory_space<vmem>>, vector<1x16x81xbf16>
    %398 = vector.shape_cast %397 : vector<1x16x81xbf16> to vector<16x81xbf16>
    %cst_380 = arith.constant dense<0.000000e+00> : vector<8x81xf32>
    %399 = tpu.matmul %396, %398, %cst_380 {dimension_numbers = #tpu.dot_dimension_numbers<[1], [0], [0], [1], [0, 0, 1, 1], [], []>} : vector<8x16xbf16>, vector<16x81xbf16>, vector<8x81xf32> -> vector<8x81xf32>
    %400 = arith.addf %392, %399 : vector<8x81xf32>
    %c2_381 = arith.constant 2 : index
    %c0_382 = arith.constant 0 : index
    %c0_383 = arith.constant 0 : index
    %401 = vector.load %arg13[%c2_381, %c0_382, %c0_383] : memref<9x8x16xbf16, #tpu.memory_space<vmem>>, vector<1x8x16xbf16>
    %402 = vector.shape_cast %401 : vector<1x8x16xbf16> to vector<8x16xbf16>
    %cst_384 = arith.constant dense<0.000000e+00> : vector<8x16xf32>
    %403 = tpu.matmul %402, %385, %cst_384 {dimension_numbers = #tpu.dot_dimension_numbers<[1], [0], [0], [1], [0, 0, 1, 1], [], []>} : vector<8x16xbf16>, vector<16x16xbf16>, vector<8x16xf32> -> vector<8x16xf32>
    %404 = arith.truncf %403 : vector<8x16xf32> to vector<8x16xbf16>
    %c2_385 = arith.constant 2 : index
    %c0_386 = arith.constant 0 : index
    %c0_387 = arith.constant 0 : index
    %405 = vector.load %arg12[%c2_385, %c0_386, %c0_387] : memref<9x16x81xbf16, #tpu.memory_space<vmem>>, vector<1x16x81xbf16>
    %406 = vector.shape_cast %405 : vector<1x16x81xbf16> to vector<16x81xbf16>
    %cst_388 = arith.constant dense<0.000000e+00> : vector<8x81xf32>
    %407 = tpu.matmul %404, %406, %cst_388 {dimension_numbers = #tpu.dot_dimension_numbers<[1], [0], [0], [1], [0, 0, 1, 1], [], []>} : vector<8x16xbf16>, vector<16x81xbf16>, vector<8x81xf32> -> vector<8x81xf32>
    %408 = arith.addf %400, %407 : vector<8x81xf32>
    %c3_389 = arith.constant 3 : index
    %c0_390 = arith.constant 0 : index
    %c0_391 = arith.constant 0 : index
    %409 = vector.load %arg13[%c3_389, %c0_390, %c0_391] : memref<9x8x16xbf16, #tpu.memory_space<vmem>>, vector<1x8x16xbf16>
    %410 = vector.shape_cast %409 : vector<1x8x16xbf16> to vector<8x16xbf16>
    %cst_392 = arith.constant dense<0.000000e+00> : vector<8x16xf32>
    %411 = tpu.matmul %410, %385, %cst_392 {dimension_numbers = #tpu.dot_dimension_numbers<[1], [0], [0], [1], [0, 0, 1, 1], [], []>} : vector<8x16xbf16>, vector<16x16xbf16>, vector<8x16xf32> -> vector<8x16xf32>
    %412 = arith.truncf %411 : vector<8x16xf32> to vector<8x16xbf16>
    %c3_393 = arith.constant 3 : index
    %c0_394 = arith.constant 0 : index
    %c0_395 = arith.constant 0 : index
    %413 = vector.load %arg12[%c3_393, %c0_394, %c0_395] : memref<9x16x81xbf16, #tpu.memory_space<vmem>>, vector<1x16x81xbf16>
    %414 = vector.shape_cast %413 : vector<1x16x81xbf16> to vector<16x81xbf16>
    %cst_396 = arith.constant dense<0.000000e+00> : vector<8x81xf32>
    %415 = tpu.matmul %412, %414, %cst_396 {dimension_numbers = #tpu.dot_dimension_numbers<[1], [0], [0], [1], [0, 0, 1, 1], [], []>} : vector<8x16xbf16>, vector<16x81xbf16>, vector<8x81xf32> -> vector<8x81xf32>
    %416 = arith.addf %408, %415 : vector<8x81xf32>
    %c4_397 = arith.constant 4 : index
    %c0_398 = arith.constant 0 : index
    %c0_399 = arith.constant 0 : index
    %417 = vector.load %arg13[%c4_397, %c0_398, %c0_399] : memref<9x8x16xbf16, #tpu.memory_space<vmem>>, vector<1x8x16xbf16>
    %418 = vector.shape_cast %417 : vector<1x8x16xbf16> to vector<8x16xbf16>
    %cst_400 = arith.constant dense<0.000000e+00> : vector<8x16xf32>
    %419 = tpu.matmul %418, %385, %cst_400 {dimension_numbers = #tpu.dot_dimension_numbers<[1], [0], [0], [1], [0, 0, 1, 1], [], []>} : vector<8x16xbf16>, vector<16x16xbf16>, vector<8x16xf32> -> vector<8x16xf32>
    %420 = arith.truncf %419 : vector<8x16xf32> to vector<8x16xbf16>
    %c4_401 = arith.constant 4 : index
    %c0_402 = arith.constant 0 : index
    %c0_403 = arith.constant 0 : index
    %421 = vector.load %arg12[%c4_401, %c0_402, %c0_403] : memref<9x16x81xbf16, #tpu.memory_space<vmem>>, vector<1x16x81xbf16>
    %422 = vector.shape_cast %421 : vector<1x16x81xbf16> to vector<16x81xbf16>
    %cst_404 = arith.constant dense<0.000000e+00> : vector<8x81xf32>
    %423 = tpu.matmul %420, %422, %cst_404 {dimension_numbers = #tpu.dot_dimension_numbers<[1], [0], [0], [1], [0, 0, 1, 1], [], []>} : vector<8x16xbf16>, vector<16x81xbf16>, vector<8x81xf32> -> vector<8x81xf32>
    %424 = arith.addf %416, %423 : vector<8x81xf32>
    %c5_405 = arith.constant 5 : index
    %c0_406 = arith.constant 0 : index
    %c0_407 = arith.constant 0 : index
    %425 = vector.load %arg13[%c5_405, %c0_406, %c0_407] : memref<9x8x16xbf16, #tpu.memory_space<vmem>>, vector<1x8x16xbf16>
    %426 = vector.shape_cast %425 : vector<1x8x16xbf16> to vector<8x16xbf16>
    %cst_408 = arith.constant dense<0.000000e+00> : vector<8x16xf32>
    %427 = tpu.matmul %426, %385, %cst_408 {dimension_numbers = #tpu.dot_dimension_numbers<[1], [0], [0], [1], [0, 0, 1, 1], [], []>} : vector<8x16xbf16>, vector<16x16xbf16>, vector<8x16xf32> -> vector<8x16xf32>
    %428 = arith.truncf %427 : vector<8x16xf32> to vector<8x16xbf16>
    %c5_409 = arith.constant 5 : index
    %c0_410 = arith.constant 0 : index
    %c0_411 = arith.constant 0 : index
    %429 = vector.load %arg12[%c5_409, %c0_410, %c0_411] : memref<9x16x81xbf16, #tpu.memory_space<vmem>>, vector<1x16x81xbf16>
    %430 = vector.shape_cast %429 : vector<1x16x81xbf16> to vector<16x81xbf16>
    %cst_412 = arith.constant dense<0.000000e+00> : vector<8x81xf32>
    %431 = tpu.matmul %428, %430, %cst_412 {dimension_numbers = #tpu.dot_dimension_numbers<[1], [0], [0], [1], [0, 0, 1, 1], [], []>} : vector<8x16xbf16>, vector<16x81xbf16>, vector<8x81xf32> -> vector<8x81xf32>
    %432 = arith.addf %424, %431 : vector<8x81xf32>
    %c6_413 = arith.constant 6 : index
    %c0_414 = arith.constant 0 : index
    %c0_415 = arith.constant 0 : index
    %433 = vector.load %arg13[%c6_413, %c0_414, %c0_415] : memref<9x8x16xbf16, #tpu.memory_space<vmem>>, vector<1x8x16xbf16>
    %434 = vector.shape_cast %433 : vector<1x8x16xbf16> to vector<8x16xbf16>
    %cst_416 = arith.constant dense<0.000000e+00> : vector<8x16xf32>
    %435 = tpu.matmul %434, %385, %cst_416 {dimension_numbers = #tpu.dot_dimension_numbers<[1], [0], [0], [1], [0, 0, 1, 1], [], []>} : vector<8x16xbf16>, vector<16x16xbf16>, vector<8x16xf32> -> vector<8x16xf32>
    %436 = arith.truncf %435 : vector<8x16xf32> to vector<8x16xbf16>
    %c6_417 = arith.constant 6 : index
    %c0_418 = arith.constant 0 : index
    %c0_419 = arith.constant 0 : index
    %437 = vector.load %arg12[%c6_417, %c0_418, %c0_419] : memref<9x16x81xbf16, #tpu.memory_space<vmem>>, vector<1x16x81xbf16>
    %438 = vector.shape_cast %437 : vector<1x16x81xbf16> to vector<16x81xbf16>
    %cst_420 = arith.constant dense<0.000000e+00> : vector<8x81xf32>
    %439 = tpu.matmul %436, %438, %cst_420 {dimension_numbers = #tpu.dot_dimension_numbers<[1], [0], [0], [1], [0, 0, 1, 1], [], []>} : vector<8x16xbf16>, vector<16x81xbf16>, vector<8x81xf32> -> vector<8x81xf32>
    %440 = arith.addf %432, %439 : vector<8x81xf32>
    %c7_421 = arith.constant 7 : index
    %c0_422 = arith.constant 0 : index
    %c0_423 = arith.constant 0 : index
    %441 = vector.load %arg13[%c7_421, %c0_422, %c0_423] : memref<9x8x16xbf16, #tpu.memory_space<vmem>>, vector<1x8x16xbf16>
    %442 = vector.shape_cast %441 : vector<1x8x16xbf16> to vector<8x16xbf16>
    %cst_424 = arith.constant dense<0.000000e+00> : vector<8x16xf32>
    %443 = tpu.matmul %442, %385, %cst_424 {dimension_numbers = #tpu.dot_dimension_numbers<[1], [0], [0], [1], [0, 0, 1, 1], [], []>} : vector<8x16xbf16>, vector<16x16xbf16>, vector<8x16xf32> -> vector<8x16xf32>
    %444 = arith.truncf %443 : vector<8x16xf32> to vector<8x16xbf16>
    %c7_425 = arith.constant 7 : index
    %c0_426 = arith.constant 0 : index
    %c0_427 = arith.constant 0 : index
    %445 = vector.load %arg12[%c7_425, %c0_426, %c0_427] : memref<9x16x81xbf16, #tpu.memory_space<vmem>>, vector<1x16x81xbf16>
    %446 = vector.shape_cast %445 : vector<1x16x81xbf16> to vector<16x81xbf16>
    %cst_428 = arith.constant dense<0.000000e+00> : vector<8x81xf32>
    %447 = tpu.matmul %444, %446, %cst_428 {dimension_numbers = #tpu.dot_dimension_numbers<[1], [0], [0], [1], [0, 0, 1, 1], [], []>} : vector<8x16xbf16>, vector<16x81xbf16>, vector<8x81xf32> -> vector<8x81xf32>
    %448 = arith.addf %440, %447 : vector<8x81xf32>
    %c8_429 = arith.constant 8 : index
    %c0_430 = arith.constant 0 : index
    %c0_431 = arith.constant 0 : index
    %449 = vector.load %arg13[%c8_429, %c0_430, %c0_431] : memref<9x8x16xbf16, #tpu.memory_space<vmem>>, vector<1x8x16xbf16>
    %450 = vector.shape_cast %449 : vector<1x8x16xbf16> to vector<8x16xbf16>
    %cst_432 = arith.constant dense<0.000000e+00> : vector<8x16xf32>
    %451 = tpu.matmul %450, %385, %cst_432 {dimension_numbers = #tpu.dot_dimension_numbers<[1], [0], [0], [1], [0, 0, 1, 1], [], []>} : vector<8x16xbf16>, vector<16x16xbf16>, vector<8x16xf32> -> vector<8x16xf32>
    %452 = arith.truncf %451 : vector<8x16xf32> to vector<8x16xbf16>
    %c8_433 = arith.constant 8 : index
    %c0_434 = arith.constant 0 : index
    %c0_435 = arith.constant 0 : index
    %453 = vector.load %arg12[%c8_433, %c0_434, %c0_435] : memref<9x16x81xbf16, #tpu.memory_space<vmem>>, vector<1x16x81xbf16>
    %454 = vector.shape_cast %453 : vector<1x16x81xbf16> to vector<16x81xbf16>
    %cst_436 = arith.constant dense<0.000000e+00> : vector<8x81xf32>
    %455 = tpu.matmul %452, %454, %cst_436 {dimension_numbers = #tpu.dot_dimension_numbers<[1], [0], [0], [1], [0, 0, 1, 1], [], []>} : vector<8x16xbf16>, vector<16x81xbf16>, vector<8x81xf32> -> vector<8x81xf32>
    %456 = arith.addf %448, %455 : vector<8x81xf32>
    %c0_437 = arith.constant 0 : index
    %c0_438 = arith.constant 0 : index
    %457 = vector.load %arg14[%c0_437, %c0_438] : memref<8x1xf32, #tpu.memory_space<vmem>>, vector<8x1xf32>
    %458 = vector.broadcast %457 : vector<8x1xf32> to vector<8x81xf32>
    %459 = arith.addf %456, %458 : vector<8x81xf32>
    %cst_439 = arith.constant 0.000000e+00 : f32
    %460 = vector.broadcast %cst_439 : f32 to vector<8x81xf32>
    %461 = arith.maximumf %459, %460 : vector<8x81xf32>
    %462 = arith.truncf %461 : vector<8x81xf32> to vector<8x81xbf16>
    %c0_440 = arith.constant 0 : index
    %c0_441 = arith.constant 0 : index
    %c0_442 = arith.constant 0 : index
    %463 = vector.load %arg16[%c0_440, %c0_441, %c0_442] : memref<4x3x8xbf16, #tpu.memory_space<vmem>>, vector<1x3x8xbf16>
    %464 = vector.shape_cast %463 : vector<1x3x8xbf16> to vector<3x8xbf16>
    %cst_443 = arith.constant dense<0.000000e+00> : vector<3x81xf32>
    %465 = tpu.matmul %464, %462, %cst_443 {dimension_numbers = #tpu.dot_dimension_numbers<[1], [0], [0], [1], [0, 0, 1, 1], [], []>} : vector<3x8xbf16>, vector<8x81xbf16>, vector<3x81xf32> -> vector<3x81xf32>
    %466 = arith.truncf %465 : vector<3x81xf32> to vector<3x81xbf16>
    %c0_444 = arith.constant 0 : index
    %c0_445 = arith.constant 0 : index
    %c0_446 = arith.constant 0 : index
    %467 = vector.load %arg15[%c0_444, %c0_445, %c0_446] : memref<4x81x256xbf16, #tpu.memory_space<vmem>>, vector<1x81x256xbf16>
    %468 = vector.shape_cast %467 : vector<1x81x256xbf16> to vector<81x256xbf16>
    %cst_447 = arith.constant dense<0.000000e+00> : vector<3x256xf32>
    %469 = tpu.matmul %466, %468, %cst_447 {dimension_numbers = #tpu.dot_dimension_numbers<[1], [0], [0], [1], [0, 0, 1, 1], [], []>} : vector<3x81xbf16>, vector<81x256xbf16>, vector<3x256xf32> -> vector<3x256xf32>
    %c1_448 = arith.constant 1 : index
    %c0_449 = arith.constant 0 : index
    %c0_450 = arith.constant 0 : index
    %470 = vector.load %arg16[%c1_448, %c0_449, %c0_450] : memref<4x3x8xbf16, #tpu.memory_space<vmem>>, vector<1x3x8xbf16>
    %471 = vector.shape_cast %470 : vector<1x3x8xbf16> to vector<3x8xbf16>
    %cst_451 = arith.constant dense<0.000000e+00> : vector<3x81xf32>
    %472 = tpu.matmul %471, %462, %cst_451 {dimension_numbers = #tpu.dot_dimension_numbers<[1], [0], [0], [1], [0, 0, 1, 1], [], []>} : vector<3x8xbf16>, vector<8x81xbf16>, vector<3x81xf32> -> vector<3x81xf32>
    %473 = arith.truncf %472 : vector<3x81xf32> to vector<3x81xbf16>
    %c1_452 = arith.constant 1 : index
    %c0_453 = arith.constant 0 : index
    %c0_454 = arith.constant 0 : index
    %474 = vector.load %arg15[%c1_452, %c0_453, %c0_454] : memref<4x81x256xbf16, #tpu.memory_space<vmem>>, vector<1x81x256xbf16>
    %475 = vector.shape_cast %474 : vector<1x81x256xbf16> to vector<81x256xbf16>
    %cst_455 = arith.constant dense<0.000000e+00> : vector<3x256xf32>
    %476 = tpu.matmul %473, %475, %cst_455 {dimension_numbers = #tpu.dot_dimension_numbers<[1], [0], [0], [1], [0, 0, 1, 1], [], []>} : vector<3x81xbf16>, vector<81x256xbf16>, vector<3x256xf32> -> vector<3x256xf32>
    %477 = arith.addf %469, %476 : vector<3x256xf32>
    %c2_456 = arith.constant 2 : index
    %c0_457 = arith.constant 0 : index
    %c0_458 = arith.constant 0 : index
    %478 = vector.load %arg16[%c2_456, %c0_457, %c0_458] : memref<4x3x8xbf16, #tpu.memory_space<vmem>>, vector<1x3x8xbf16>
    %479 = vector.shape_cast %478 : vector<1x3x8xbf16> to vector<3x8xbf16>
    %cst_459 = arith.constant dense<0.000000e+00> : vector<3x81xf32>
    %480 = tpu.matmul %479, %462, %cst_459 {dimension_numbers = #tpu.dot_dimension_numbers<[1], [0], [0], [1], [0, 0, 1, 1], [], []>} : vector<3x8xbf16>, vector<8x81xbf16>, vector<3x81xf32> -> vector<3x81xf32>
    %481 = arith.truncf %480 : vector<3x81xf32> to vector<3x81xbf16>
    %c2_460 = arith.constant 2 : index
    %c0_461 = arith.constant 0 : index
    %c0_462 = arith.constant 0 : index
    %482 = vector.load %arg15[%c2_460, %c0_461, %c0_462] : memref<4x81x256xbf16, #tpu.memory_space<vmem>>, vector<1x81x256xbf16>
    %483 = vector.shape_cast %482 : vector<1x81x256xbf16> to vector<81x256xbf16>
    %cst_463 = arith.constant dense<0.000000e+00> : vector<3x256xf32>
    %484 = tpu.matmul %481, %483, %cst_463 {dimension_numbers = #tpu.dot_dimension_numbers<[1], [0], [0], [1], [0, 0, 1, 1], [], []>} : vector<3x81xbf16>, vector<81x256xbf16>, vector<3x256xf32> -> vector<3x256xf32>
    %485 = arith.addf %477, %484 : vector<3x256xf32>
    %c3_464 = arith.constant 3 : index
    %c0_465 = arith.constant 0 : index
    %c0_466 = arith.constant 0 : index
    %486 = vector.load %arg16[%c3_464, %c0_465, %c0_466] : memref<4x3x8xbf16, #tpu.memory_space<vmem>>, vector<1x3x8xbf16>
    %487 = vector.shape_cast %486 : vector<1x3x8xbf16> to vector<3x8xbf16>
    %cst_467 = arith.constant dense<0.000000e+00> : vector<3x81xf32>
    %488 = tpu.matmul %487, %462, %cst_467 {dimension_numbers = #tpu.dot_dimension_numbers<[1], [0], [0], [1], [0, 0, 1, 1], [], []>} : vector<3x8xbf16>, vector<8x81xbf16>, vector<3x81xf32> -> vector<3x81xf32>
    %489 = arith.truncf %488 : vector<3x81xf32> to vector<3x81xbf16>
    %c3_468 = arith.constant 3 : index
    %c0_469 = arith.constant 0 : index
    %c0_470 = arith.constant 0 : index
    %490 = vector.load %arg15[%c3_468, %c0_469, %c0_470] : memref<4x81x256xbf16, #tpu.memory_space<vmem>>, vector<1x81x256xbf16>
    %491 = vector.shape_cast %490 : vector<1x81x256xbf16> to vector<81x256xbf16>
    %cst_471 = arith.constant dense<0.000000e+00> : vector<3x256xf32>
    %492 = tpu.matmul %489, %491, %cst_471 {dimension_numbers = #tpu.dot_dimension_numbers<[1], [0], [0], [1], [0, 0, 1, 1], [], []>} : vector<3x81xbf16>, vector<81x256xbf16>, vector<3x256xf32> -> vector<3x256xf32>
    %493 = arith.addf %485, %492 : vector<3x256xf32>
    %c0_472 = arith.constant 0 : index
    %c0_473 = arith.constant 0 : index
    %494 = vector.load %arg17[%c0_472, %c0_473] : memref<3x1xf32, #tpu.memory_space<vmem>>, vector<3x1xf32>
    %495 = vector.broadcast %494 : vector<3x1xf32> to vector<3x256xf32>
    %496 = arith.addf %493, %495 : vector<3x256xf32>
    %497 = arith.negf %496 : vector<3x256xf32>
    %498 = math.exp %497 : vector<3x256xf32>
    %cst_474 = arith.constant 1.000000e+00 : f32
    %499 = vector.broadcast %cst_474 : f32 to vector<3x256xf32>
    %500 = arith.addf %499, %498 : vector<3x256xf32>
    %501 = arith.divf %499, %500 : vector<3x256xf32>
    %c0_475 = arith.constant 0 : index
    %c0_476 = arith.constant 0 : index
    %c0_477 = arith.constant 0 : index
    %502 = vector.load %arg18[%c0_475, %c0_476, %c0_477] : memref<1x3x256xf32, #tpu.memory_space<vmem>>, vector<1x3x256xf32>
    %503 = vector.shape_cast %502 : vector<1x3x256xf32> to vector<3x256xf32>
    %504 = vector.shape_cast %501 : vector<3x256xf32> to vector<1x3x256xf32>
    tpu.vector_store %arg18[%c0_475, %c0_476, %c0_477], %504 {strides = array<i32>} : memref<1x3x256xf32, #tpu.memory_space<vmem>>, vector<1x3x256xf32>,
    return
  }
  func.func @transform_0(%arg0: i32) -> (i32, i32, i32) {
    %c0_i32 = arith.constant 0 : i32
    %c0_i32_0 = arith.constant 0 : i32
    %c0_i32_1 = arith.constant 0 : i32
    return %arg0, %c0_i32, %c0_i32_0 : i32, i32, i32
  }
  func.func @transform_1(%arg0: i32) -> (i32, i32, i32) {
    %c0_i32 = arith.constant 0 : i32
    %c0_i32_0 = arith.constant 0 : i32
    %c0_i32_1 = arith.constant 0 : i32
    %c0_i32_2 = arith.constant 0 : i32
    return %c0_i32, %c0_i32_0, %c0_i32_1 : i32, i32, i32
  }
  func.func @transform_2(%arg0: i32) -> (i32, i32, i32) {
    %c0_i32 = arith.constant 0 : i32
    %c0_i32_0 = arith.constant 0 : i32
    %c0_i32_1 = arith.constant 0 : i32
    %c0_i32_2 = arith.constant 0 : i32
    return %c0_i32, %c0_i32_0, %c0_i32_1 : i32, i32, i32
  }
  func.func @transform_3(%arg0: i32) -> (i32, i32) {
    %c0_i32 = arith.constant 0 : i32
    %c0_i32_0 = arith.constant 0 : i32
    %c0_i32_1 = arith.constant 0 : i32
    return %c0_i32, %c0_i32_0 : i32, i32
  }
  func.func @transform_4(%arg0: i32) -> (i32, i32, i32) {
    %c0_i32 = arith.constant 0 : i32
    %c0_i32_0 = arith.constant 0 : i32
    %c0_i32_1 = arith.constant 0 : i32
    %c0_i32_2 = arith.constant 0 : i32
    return %c0_i32, %c0_i32_0, %c0_i32_1 : i32, i32, i32
  }
  func.func @transform_5(%arg0: i32) -> (i32, i32, i32) {
    %c0_i32 = arith.constant 0 : i32
    %c0_i32_0 = arith.constant 0 : i32
    %c0_i32_1 = arith.constant 0 : i32
    %c0_i32_2 = arith.constant 0 : i32
    return %c0_i32, %c0_i32_0, %c0_i32_1 : i32, i32, i32
  }
  func.func @transform_6(%arg0: i32) -> (i32, i32) {
    %c0_i32 = arith.constant 0 : i32
    %c0_i32_0 = arith.constant 0 : i32
    %c0_i32_1 = arith.constant 0 : i32
    return %c0_i32, %c0_i32_0 : i32, i32
  }
  func.func @transform_7(%arg0: i32) -> (i32, i32, i32) {
    %c0_i32 = arith.constant 0 : i32
    %c0_i32_0 = arith.constant 0 : i32
    %c0_i32_1 = arith.constant 0 : i32
    %c0_i32_2 = arith.constant 0 : i32
    return %c0_i32, %c0_i32_0, %c0_i32_1 : i32, i32, i32
  }
  func.func @transform_8(%arg0: i32) -> (i32, i32) {
    %c0_i32 = arith.constant 0 : i32
    %c0_i32_0 = arith.constant 0 : i32
    %c0_i32_1 = arith.constant 0 : i32
    return %c0_i32, %c0_i32_0 : i32, i32
  }
  func.func @transform_9(%arg0: i32) -> (i32, i32, i32) {
    %c0_i32 = arith.constant 0 : i32
    %c0_i32_0 = arith.constant 0 : i32
    %c0_i32_1 = arith.constant 0 : i32
    %c0_i32_2 = arith.constant 0 : i32
    return %c0_i32, %c0_i32_0, %c0_i32_1 : i32, i32, i32
  }
  func.func @transform_10(%arg0: i32) -> (i32, i32, i32) {
    %c0_i32 = arith.constant 0 : i32
    %c0_i32_0 = arith.constant 0 : i32
    %c0_i32_1 = arith.constant 0 : i32
    %c0_i32_2 = arith.constant 0 : i32
    return %c0_i32, %c0_i32_0, %c0_i32_1 : i32, i32, i32
  }
  func.func @transform_11(%arg0: i32) -> (i32, i32, i32) {
    %c0_i32 = arith.constant 0 : i32
    %c0_i32_0 = arith.constant 0 : i32
    %c0_i32_1 = arith.constant 0 : i32
    %c0_i32_2 = arith.constant 0 : i32
    return %c0_i32, %c0_i32_0, %c0_i32_1 : i32, i32, i32
  }
  func.func @transform_12(%arg0: i32) -> (i32, i32, i32) {
    %c0_i32 = arith.constant 0 : i32
    %c0_i32_0 = arith.constant 0 : i32
    %c0_i32_1 = arith.constant 0 : i32
    %c0_i32_2 = arith.constant 0 : i32
    return %c0_i32, %c0_i32_0, %c0_i32_1 : i32, i32, i32
  }
  func.func @transform_13(%arg0: i32) -> (i32, i32) {
    %c0_i32 = arith.constant 0 : i32
    %c0_i32_0 = arith.constant 0 : i32
    %c0_i32_1 = arith.constant 0 : i32
    return %c0_i32, %c0_i32_0 : i32, i32
  }
  func.func @transform_14(%arg0: i32) -> (i32, i32, i32) {
    %c0_i32 = arith.constant 0 : i32
    %c0_i32_0 = arith.constant 0 : i32
    %c0_i32_1 = arith.constant 0 : i32
    %c0_i32_2 = arith.constant 0 : i32
    return %c0_i32, %c0_i32_0, %c0_i32_1 : i32, i32, i32
  }
  func.func @transform_15(%arg0: i32) -> (i32, i32, i32) {
    %c0_i32 = arith.constant 0 : i32
    %c0_i32_0 = arith.constant 0 : i32
    %c0_i32_1 = arith.constant 0 : i32
    %c0_i32_2 = arith.constant 0 : i32
    return %c0_i32, %c0_i32_0, %c0_i32_1 : i32, i32, i32
  }
  func.func @transform_16(%arg0: i32) -> (i32, i32) {
    %c0_i32 = arith.constant 0 : i32
    %c0_i32_0 = arith.constant 0 : i32
    %c0_i32_1 = arith.constant 0 : i32
    return %c0_i32, %c0_i32_0 : i32, i32
  }
  func.func @transform_17(%arg0: i32) -> (i32, i32, i32) {
    %c0_i32 = arith.constant 0 : i32
    %c0_i32_0 = arith.constant 0 : i32
    %c0_i32_1 = arith.constant 0 : i32
    return %arg0, %c0_i32, %c0_i32_0 : i32, i32, i32
  }
}

</mosaic_0001>

<llo_original>
// kernel: conv_autoencoder_forward.1
$region0: #{conv_autoencoder_forward.1}
  #allocation0 [shape = 'u32[]', space=smem, size = 0x4, offset = 0x4, fixed_abs, tag = 'smem constant byte address 0x4 - core index']
  #allocation1 [shape = 'u32[144,128]{1,0:T(1,128)}', space=vmem, size = 0x12000, scoped, tag = 'internal scratch']
  #allocation2 [shape = 'f32[16,16]{1,0:T(8,128)}', space=vmem, size = 0x2000, scoped, tag = 'scratch operand']
  %s0 = inlined_call_operand.vmem [shape: bf16[2,3,256], index: 0, kind: input, shape index: {}]
  %s1 = inlined_call_operand.hbm [shape: bf16[9,256,64], index: 1, kind: input, shape index: {}]
  %s2 = inlined_call_operand.hbm [shape: bf16[9,8,3], index: 2, kind: input, shape index: {}]
  %s3 = inlined_call_operand.hbm [shape: f32[8,1], index: 3, kind: input, shape index: {}]
  %s4 = inlined_call_operand.hbm [shape: bf16[9,64,16], index: 4, kind: input, shape index: {}]
  %s5 = inlined_call_operand.hbm [shape: bf16[9,16,8], index: 5, kind: input, shape index: {}]
  %s6 = inlined_call_operand.hbm [shape: f32[16,1], index: 6, kind: input, shape index: {}]
  %s7 = inlined_call_operand.hbm [shape: bf16[16,16,32], index: 7, kind: input, shape index: {}]
  %s8 = inlined_call_operand.vmem [shape: f32[1,32], index: 8, kind: input, shape index: {}]
  %s9 = inlined_call_operand.vmem [shape: bf16[16,32,16], index: 9, kind: input, shape index: {}]
  %s10 = inlined_call_operand.vmem [shape: f32[16,1,16], index: 10, kind: input, shape index: {}]
  %s11 = inlined_call_operand.hbm [shape: bf16[9,16,81], index: 11, kind: input, shape index: {}]
  %s12 = inlined_call_operand.hbm [shape: bf16[9,8,16], index: 12, kind: input, shape index: {}]
  %s13 = inlined_call_operand.hbm [shape: f32[8,1], index: 13, kind: input, shape index: {}]
  %s14 = inlined_call_operand.hbm [shape: bf16[4,81,256], index: 14, kind: input, shape index: {}]
  %s15 = inlined_call_operand.hbm [shape: bf16[4,3,8], index: 15, kind: input, shape index: {}]
  %s16 = inlined_call_operand.vmem [shape: f32[3,1], index: 16, kind: input, shape index: {}]
  %s17 = inlined_call_operand.vmem [shape: f32[2,3,256], index: 17, kind: output, shape index: {}]
  %s18 = sld [smem:[#allocation0]]
  $region149: #{conv_autoencoder_forward.1} parent=0
    _
  %s20 = ssub.s32 1, %s18
  %s21 = scalar_select 0, %s20, %s18
  $region1: #{conv_autoencoder_forward.1} parent=0
    #allocation3 [shape = 'u8[589824]{0}', space=vmem, size = 0x90000, scoped, tag = 'input window, operand 1, single buffered']
    #allocation4 [shape = 's32[2]{0}', space=sflag, size = 0x8, scoped, tag = 'scoped memory for conv_autoencoder_forward.1']
    #allocation5 [shape = 'u8[18432]{0}', space=vmem, size = 0x4800, scoped, tag = 'input window, operand 2, single buffered']
    #allocation6 [shape = 's32[1]{0}', space=sflag, size = 0x4, scoped, tag = 'scoped memory for conv_autoencoder_forward.1']
    #allocation7 [shape = 'u8[4096]{0}', space=vmem, size = 0x1000, scoped, tag = 'input window, operand 3, single buffered']
    #allocation8 [shape = 'u8[147456]{0}', space=vmem, size = 0x24000, scoped, tag = 'input window, operand 4, single buffered']
    #allocation9 [shape = 's32[1]{0}', space=sflag, size = 0x4, scoped, tag = 'scoped memory for conv_autoencoder_forward.1']
    #allocation10 [shape = 'u8[36864]{0}', space=vmem, size = 0x9000, scoped, tag = 'input window, operand 5, single buffered']
    #allocation11 [shape = 'u8[8192]{0}', space=vmem, size = 0x2000, scoped, tag = 'input window, operand 6, single buffered']
    #allocation12 [shape = 's32[1]{0}', space=sflag, size = 0x4, scoped, tag = 'scoped memory for conv_autoencoder_forward.1']
    #allocation13 [shape = 'u8[65536]{0}', space=vmem, size = 0x10000, scoped, tag = 'input window, operand 7, single buffered']
    #allocation14 [shape = 'u8[36864]{0}', space=vmem, size = 0x9000, scoped, tag = 'input window, operand 11, single buffered']
    #allocation15 [shape = 's32[1]{0}', space=sflag, size = 0x4, scoped, tag = 'scoped memory for conv_autoencoder_forward.1']
    #allocation16 [shape = 'u8[18432]{0}', space=vmem, size = 0x4800, scoped, tag = 'input window, operand 12, single buffered']
    #allocation17 [shape = 'u8[4096]{0}', space=vmem, size = 0x1000, scoped, tag = 'input window, operand 13, single buffered']
    #allocation18 [shape = 's32[1]{0}', space=sflag, size = 0x4, scoped, tag = 'scoped memory for conv_autoencoder_forward.1']
    #allocation19 [shape = 'u8[180224]{0}', space=vmem, size = 0x2c000, scoped, tag = 'input window, operand 14, single buffered']
    #allocation20 [shape = 'u8[4096]{0}', space=vmem, size = 0x1000, scoped, tag = 'input window, operand 15, single buffered']
    #allocation21 [shape = 's32[1]{0}', space=sflag, size = 0x4, scoped, tag = 'scoped memory for conv_autoencoder_forward.1']
    %22 = vsyncpa [#allocation4], 0
    %23 = vsyncpa [#allocation6], 0
    %24 = vsyncpa [#allocation9], 0
    %25 = vsyncpa [#allocation12], 0
    %26 = vsyncpa [#allocation15], 0
    %27 = vsyncpa [#allocation18], 0
    %28 = vsyncpa [#allocation21], 0
    loop: start=0, step=1, limit=4
    $region2: #{conv_autoencoder_forward.1} parent=1 // loop_pre_header
      _
    $region3: #{conv_autoencoder_forward.1} parent=1 // loop_header
      %s30 = sphi 0, %s34
      %p31 = scmp.ge.s32.totalorder %s30, 4
      %s40 = sphi 0, %s42
      %s43 = sphi 0, %s40
      %s44 = sphi 0, %s43
      %s60 = sphi 0, %s44
      %s64 = sphi 0, %s64
      %s66 = sphi 0, %s64
      %s67 = sphi 0, %s66
      %s81 = sphi 0, %s67
      %s85 = sphi 0, %s85
      %s87 = sphi 0, %s85
      %s88 = sphi 0, %s87
      %s102 = sphi 0, %s88
      %s106 = sphi 0, %s106
      %s108 = sphi 0, %s106
      %s109 = sphi 0, %s108
      %s123 = sphi 0, %s109
      %s127 = sphi 0, %s127
      %s129 = sphi 0, %s127
      %s130 = sphi 0, %s129
      %s144 = sphi 0, %s130
      %s148 = sphi 0, %s148
      %s150 = sphi 0, %s148
      %s151 = sphi 0, %s150
      %s165 = sphi 0, %s151
      %s169 = sphi 0, %s169
      %s171 = sphi 0, %s169
      %s172 = sphi 0, %s171
      %s186 = sphi 0, %s172
      %s190 = sphi 0, %s190
      %s192 = sphi 0, %s190
      %s193 = sphi 0, %s192
      %s207 = sphi 0, %s193
      %s211 = sphi 0, %s211
      %s213 = sphi 0, %s211
      %s214 = sphi 0, %s213
      %s228 = sphi 0, %s214
      %s232 = sphi 0, %s232
      %s234 = sphi 0, %s232
      %s235 = sphi 0, %s234
      %s249 = sphi 0, %s235
      %s253 = sphi 0, %s253
      %s255 = sphi 0, %s253
      %s256 = sphi 0, %s255
      %s270 = sphi 0, %s256
      %s274 = sphi 0, %s274
      %s276 = sphi 0, %s274
      %s277 = sphi 0, %s276
      %s291 = sphi 0, %s277
      %s295 = sphi 0, %s295
      %s297 = sphi 0, %s295
      %s298 = sphi 0, %s297
      %s312 = sphi 0, %s298
      %s316 = sphi 0, %s316
      %s318 = sphi 0, %s316
      %s319 = sphi 0, %s318
      %s333 = sphi 0, %s319
      %s337 = sphi 0, %s337
      %s339 = sphi 0, %s337
      %s340 = sphi 0, %s339
      %s354 = sphi 0, %s340
      %s358 = sphi 0, %s358
      %s360 = sphi 0, %s358
      %s361 = sphi 0, %s360
      %s375 = sphi 0, %s361
      %s379 = sphi 0, %s379
      %s381 = sphi 0, %s379
      %s382 = sphi 0, %s381
      %s396 = sphi 0, %s382
      %s402 = sphi 0, %s404
      %s405 = sphi 0, %s402
      %s406 = sphi 0, %s405
      %s422 = sphi 0, %s406
    $region4: #{conv_autoencoder_forward.1} parent=1 // loop_header_branch
      %33 = sbr.rel (%p31) target = $region8
    $region5: #{conv_autoencoder_forward.1} parent=1 // loop_body
      %s35 = ssub.s32 %s30, 1
      %s36 = ssub.s32 %s30, 2
      %s37 = sadd.s32 %s30, 1
      %s38 = ssub.s32 %s30, %s37
      %p39 = scmp.eq.s32.totalorder %s38, 0
      %s41 = sadd.s32 %s40, 1
      %s42 = scalar_select %p39, %s40, %s41
      %p45 = pneg %p39
      %p46 = scmp.eq.s32.totalorder %s30, 1
      %p47 = por %p45, %p46
      %p48 = scmp.ne.s32.totalorder %s40, %s43
      %p49 = scmp.eq.s32.totalorder %s30, 0
      %p50 = por %p48, %p49
      %p51 = scmp.ne.s32.totalorder %s40, %s43
      %p52 = scmp.eq.s32.totalorder %s35, 1
      %p53 = por %p51, %p52
      %p54 = scmp.ne.s32.totalorder %s43, %s44
      %p55 = scmp.eq.s32.totalorder %s35, 0
      %p56 = por %p54, %p55
      %p57 = scmp.ne.s32.totalorder %s43, %s44
      %p58 = scmp.eq.s32.totalorder %s36, 1
      %p59 = por %p57, %p58
      %p61 = scmp.ne.s32.totalorder %s44, %s60
      %p62 = scmp.eq.s32.totalorder %s36, 0
      %p63 = por %p61, %p62
      %s65 = sadd.s32 %s64, 1
      %p68 = scmp.eq.s32.totalorder %s30, 1
      %p69 = scmp.ne.s32.totalorder %s64, %s66
      %p70 = scmp.eq.s32.totalorder %s30, 0
      %p71 = por %p69, %p70
      %p72 = scmp.ne.s32.totalorder %s64, %s66
      %p73 = scmp.eq.s32.totalorder %s35, 1
      %p74 = por %p72, %p73
      %p75 = scmp.ne.s32.totalorder %s66, %s67
      %p76 = scmp.eq.s32.totalorder %s35, 0
      %p77 = por %p75, %p76
      %p78 = scmp.ne.s32.totalorder %s66, %s67
      %p79 = scmp.eq.s32.totalorder %s36, 1
      %p80 = por %p78, %p79
      %p82 = scmp.ne.s32.totalorder %s67, %s81
      %p83 = scmp.eq.s32.totalorder %s36, 0
      %p84 = por %p82, %p83
      %s86 = sadd.s32 %s85, 1
      %p89 = scmp.eq.s32.totalorder %s30, 1
      %p90 = scmp.ne.s32.totalorder %s85, %s87
      %p91 = scmp.eq.s32.totalorder %s30, 0
      %p92 = por %p90, %p91
      %p93 = scmp.ne.s32.totalorder %s85, %s87
      %p94 = scmp.eq.s32.totalorder %s35, 1
      %p95 = por %p93, %p94
      %p96 = scmp.ne.s32.totalorder %s87, %s88
      %p97 = scmp.eq.s32.totalorder %s35, 0
      %p98 = por %p96, %p97
      %p99 = scmp.ne.s32.totalorder %s87, %s88
      %p100 = scmp.eq.s32.totalorder %s36, 1
      %p101 = por %p99, %p100
      %p103 = scmp.ne.s32.totalorder %s88, %s102
      %p104 = scmp.eq.s32.totalorder %s36, 0
      %p105 = por %p103, %p104
      %s107 = sadd.s32 %s106, 1
      %p110 = scmp.eq.s32.totalorder %s30, 1
      %p111 = scmp.ne.s32.totalorder %s106, %s108
      %p112 = scmp.eq.s32.totalorder %s30, 0
      %p113 = por %p111, %p112
      %p114 = scmp.ne.s32.totalorder %s106, %s108
      %p115 = scmp.eq.s32.totalorder %s35, 1
      %p116 = por %p114, %p115
      %p117 = scmp.ne.s32.totalorder %s108, %s109
      %p118 = scmp.eq.s32.totalorder %s35, 0
      %p119 = por %p117, %p118
      %p120 = scmp.ne.s32.totalorder %s108, %s109
      %p121 = scmp.eq.s32.totalorder %s36, 1
      %p122 = por %p120, %p121
      %p124 = scmp.ne.s32.totalorder %s109, %s123
      %p125 = scmp.eq.s32.totalorder %s36, 0
      %p126 = por %p124, %p125
      %s128 = sadd.s32 %s127, 1
      %p131 = scmp.eq.s32.totalorder %s30, 1
      %p132 = scmp.ne.s32.totalorder %s127, %s129
      %p133 = scmp.eq.s32.totalorder %s30, 0
      %p134 = por %p132, %p133
      %p135 = scmp.ne.s32.totalorder %s127, %s129
      %p136 = scmp.eq.s32.totalorder %s35, 1
      %p137 = por %p135, %p136
      %p138 = scmp.ne.s32.totalorder %s129, %s130
      %p139 = scmp.eq.s32.totalorder %s35, 0
      %p140 = por %p138, %p139
      %p141 = scmp.ne.s32.totalorder %s129, %s130
      %p142 = scmp.eq.s32.totalorder %s36, 1
      %p143 = por %p141, %p142
      %p145 = scmp.ne.s32.totalorder %s130, %s144
      %p146 = scmp.eq.s32.totalorder %s36, 0
      %p147 = por %p145, %p146
      %s149 = sadd.s32 %s148, 1
      %p152 = scmp.eq.s32.totalorder %s30, 1
      %p153 = scmp.ne.s32.totalorder %s148, %s150
      %p154 = scmp.eq.s32.totalorder %s30, 0
      %p155 = por %p153, %p154
      %p156 = scmp.ne.s32.totalorder %s148, %s150
      %p157 = scmp.eq.s32.totalorder %s35, 1
      %p158 = por %p156, %p157
      %p159 = scmp.ne.s32.totalorder %s150, %s151
      %p160 = scmp.eq.s32.totalorder %s35, 0
      %p161 = por %p159, %p160
      %p162 = scmp.ne.s32.totalorder %s150, %s151
      %p163 = scmp.eq.s32.totalorder %s36, 1
      %p164 = por %p162, %p163
      %p166 = scmp.ne.s32.totalorder %s151, %s165
      %p167 = scmp.eq.s32.totalorder %s36, 0
      %p168 = por %p166, %p167
      %s170 = sadd.s32 %s169, 1
      %p173 = scmp.eq.s32.totalorder %s30, 1
      %p174 = scmp.ne.s32.totalorder %s169, %s171
      %p175 = scmp.eq.s32.totalorder %s30, 0
      %p176 = por %p174, %p175
      %p177 = scmp.ne.s32.totalorder %s169, %s171
      %p178 = scmp.eq.s32.totalorder %s35, 1
      %p179 = por %p177, %p178
      %p180 = scmp.ne.s32.totalorder %s171, %s172
      %p181 = scmp.eq.s32.totalorder %s35, 0
      %p182 = por %p180, %p181
      %p183 = scmp.ne.s32.totalorder %s171, %s172
      %p184 = scmp.eq.s32.totalorder %s36, 1
      %p185 = por %p183, %p184
      %p187 = scmp.ne.s32.totalorder %s172, %s186
      %p188 = scmp.eq.s32.totalorder %s36, 0
      %p189 = por %p187, %p188
      %s191 = sadd.s32 %s190, 1
      %p194 = scmp.eq.s32.totalorder %s30, 1
      %p195 = scmp.ne.s32.totalorder %s190, %s192
      %p196 = scmp.eq.s32.totalorder %s30, 0
      %p197 = por %p195, %p196
      %p198 = scmp.ne.s32.totalorder %s190, %s192
      %p199 = scmp.eq.s32.totalorder %s35, 1
      %p200 = por %p198, %p199
      %p201 = scmp.ne.s32.totalorder %s192, %s193
      %p202 = scmp.eq.s32.totalorder %s35, 0
      %p203 = por %p201, %p202
      %p204 = scmp.ne.s32.totalorder %s192, %s193
      %p205 = scmp.eq.s32.totalorder %s36, 1
      %p206 = por %p204, %p205
      %p208 = scmp.ne.s32.totalorder %s193, %s207
      %p209 = scmp.eq.s32.totalorder %s36, 0
      %p210 = por %p208, %p209
      %s212 = sadd.s32 %s211, 1
      %p215 = scmp.eq.s32.totalorder %s30, 1
      %p216 = scmp.ne.s32.totalorder %s211, %s213
      %p217 = scmp.eq.s32.totalorder %s30, 0
      %p218 = por %p216, %p217
      %p219 = scmp.ne.s32.totalorder %s211, %s213
      %p220 = scmp.eq.s32.totalorder %s35, 1
      %p221 = por %p219, %p220
      %p222 = scmp.ne.s32.totalorder %s213, %s214
      %p223 = scmp.eq.s32.totalorder %s35, 0
      %p224 = por %p222, %p223
      %p225 = scmp.ne.s32.totalorder %s213, %s214
      %p226 = scmp.eq.s32.totalorder %s36, 1
      %p227 = por %p225, %p226
      %p229 = scmp.ne.s32.totalorder %s214, %s228
      %p230 = scmp.eq.s32.totalorder %s36, 0
      %p231 = por %p229, %p230
      %s233 = sadd.s32 %s232, 1
      %p236 = scmp.eq.s32.totalorder %s30, 1
      %p237 = scmp.ne.s32.totalorder %s232, %s234
      %p238 = scmp.eq.s32.totalorder %s30, 0
      %p239 = por %p237, %p238
      %p240 = scmp.ne.s32.totalorder %s232, %s234
      %p241 = scmp.eq.s32.totalorder %s35, 1
      %p242 = por %p240, %p241
      %p243 = scmp.ne.s32.totalorder %s234, %s235
      %p244 = scmp.eq.s32.totalorder %s35, 0
      %p245 = por %p243, %p244
      %p246 = scmp.ne.s32.totalorder %s234, %s235
      %p247 = scmp.eq.s32.totalorder %s36, 1
      %p248 = por %p246, %p247
      %p250 = scmp.ne.s32.totalorder %s235, %s249
      %p251 = scmp.eq.s32.totalorder %s36, 0
      %p252 = por %p250, %p251
      %s254 = sadd.s32 %s253, 1
      %p257 = scmp.eq.s32.totalorder %s30, 1
      %p258 = scmp.ne.s32.totalorder %s253, %s255
      %p259 = scmp.eq.s32.totalorder %s30, 0
      %p260 = por %p258, %p259
      %p261 = scmp.ne.s32.totalorder %s253, %s255
      %p262 = scmp.eq.s32.totalorder %s35, 1
      %p263 = por %p261, %p262
      %p264 = scmp.ne.s32.totalorder %s255, %s256
      %p265 = scmp.eq.s32.totalorder %s35, 0
      %p266 = por %p264, %p265
      %p267 = scmp.ne.s32.totalorder %s255, %s256
      %p268 = scmp.eq.s32.totalorder %s36, 1
      %p269 = por %p267, %p268
      %p271 = scmp.ne.s32.totalorder %s256, %s270
      %p272 = scmp.eq.s32.totalorder %s36, 0
      %p273 = por %p271, %p272
      %s275 = sadd.s32 %s274, 1
      %p278 = scmp.eq.s32.totalorder %s30, 1
      %p279 = scmp.ne.s32.totalorder %s274, %s276
      %p280 = scmp.eq.s32.totalorder %s30, 0
      %p281 = por %p279, %p280
      %p282 = scmp.ne.s32.totalorder %s274, %s276
      %p283 = scmp.eq.s32.totalorder %s35, 1
      %p284 = por %p282, %p283
      %p285 = scmp.ne.s32.totalorder %s276, %s277
      %p286 = scmp.eq.s32.totalorder %s35, 0
      %p287 = por %p285, %p286
      %p288 = scmp.ne.s32.totalorder %s276, %s277
      %p289 = scmp.eq.s32.totalorder %s36, 1
      %p290 = por %p288, %p289
      %p292 = scmp.ne.s32.totalorder %s277, %s291
      %p293 = scmp.eq.s32.totalorder %s36, 0
      %p294 = por %p292, %p293
      %s296 = sadd.s32 %s295, 1
      %p299 = scmp.eq.s32.totalorder %s30, 1
      %p300 = scmp.ne.s32.totalorder %s295, %s297
      %p301 = scmp.eq.s32.totalorder %s30, 0
      %p302 = por %p300, %p301
      %p303 = scmp.ne.s32.totalorder %s295, %s297
      %p304 = scmp.eq.s32.totalorder %s35, 1
      %p305 = por %p303, %p304
      %p306 = scmp.ne.s32.totalorder %s297, %s298
      %p307 = scmp.eq.s32.totalorder %s35, 0
      %p308 = por %p306, %p307
      %p309 = scmp.ne.s32.totalorder %s297, %s298
      %p310 = scmp.eq.s32.totalorder %s36, 1
      %p311 = por %p309, %p310
      %p313 = scmp.ne.s32.totalorder %s298, %s312
      %p314 = scmp.eq.s32.totalorder %s36, 0
      %p315 = por %p313, %p314
      %s317 = sadd.s32 %s316, 1
      %p320 = scmp.eq.s32.totalorder %s30, 1
      %p321 = scmp.ne.s32.totalorder %s316, %s318
      %p322 = scmp.eq.s32.totalorder %s30, 0
      %p323 = por %p321, %p322
      %p324 = scmp.ne.s32.totalorder %s316, %s318
      %p325 = scmp.eq.s32.totalorder %s35, 1
      %p326 = por %p324, %p325
      %p327 = scmp.ne.s32.totalorder %s318, %s319
      %p328 = scmp.eq.s32.totalorder %s35, 0
      %p329 = por %p327, %p328
      %p330 = scmp.ne.s32.totalorder %s318, %s319
      %p331 = scmp.eq.s32.totalorder %s36, 1
      %p332 = por %p330, %p331
      %p334 = scmp.ne.s32.totalorder %s319, %s333
      %p335 = scmp.eq.s32.totalorder %s36, 0
      %p336 = por %p334, %p335
      %s338 = sadd.s32 %s337, 1
      %p341 = scmp.eq.s32.totalorder %s30, 1
      %p342 = scmp.ne.s32.totalorder %s337, %s339
      %p343 = scmp.eq.s32.totalorder %s30, 0
      %p344 = por %p342, %p343
      %p345 = scmp.ne.s32.totalorder %s337, %s339
      %p346 = scmp.eq.s32.totalorder %s35, 1
      %p347 = por %p345, %p346
      %p348 = scmp.ne.s32.totalorder %s339, %s340
      %p349 = scmp.eq.s32.totalorder %s35, 0
      %p350 = por %p348, %p349
      %p351 = scmp.ne.s32.totalorder %s339, %s340
      %p352 = scmp.eq.s32.totalorder %s36, 1
      %p353 = por %p351, %p352
      %p355 = scmp.ne.s32.totalorder %s340, %s354
      %p356 = scmp.eq.s32.totalorder %s36, 0
      %p357 = por %p355, %p356
      %s359 = sadd.s32 %s358, 1
      %p362 = scmp.eq.s32.totalorder %s30, 1
      %p363 = scmp.ne.s32.totalorder %s358, %s360
      %p364 = scmp.eq.s32.totalorder %s30, 0
      %p365 = por %p363, %p364
      %p366 = scmp.ne.s32.totalorder %s358, %s360
      %p367 = scmp.eq.s32.totalorder %s35, 1
      %p368 = por %p366, %p367
      %p369 = scmp.ne.s32.totalorder %s360, %s361
      %p370 = scmp.eq.s32.totalorder %s35, 0
      %p371 = por %p369, %p370
      %p372 = scmp.ne.s32.totalorder %s360, %s361
      %p373 = scmp.eq.s32.totalorder %s36, 1
      %p374 = por %p372, %p373
      %p376 = scmp.ne.s32.totalorder %s361, %s375
      %p377 = scmp.eq.s32.totalorder %s36, 0
      %p378 = por %p376, %p377
      %s380 = sadd.s32 %s379, 1
      %p383 = scmp.eq.s32.totalorder %s30, 1
      %p384 = scmp.ne.s32.totalorder %s379, %s381
      %p385 = scmp.eq.s32.totalorder %s30, 0
      %p386 = por %p384, %p385
      %p387 = scmp.ne.s32.totalorder %s379, %s381
      %p388 = scmp.eq.s32.totalorder %s35, 1
      %p389 = por %p387, %p388
      %p390 = scmp.ne.s32.totalorder %s381, %s382
      %p391 = scmp.eq.s32.totalorder %s35, 0
      %p392 = por %p390, %p391
      %p393 = scmp.ne.s32.totalorder %s381, %s382
      %p394 = scmp.eq.s32.totalorder %s36, 1
      %p395 = por %p393, %p394
      %p397 = scmp.ne.s32.totalorder %s382, %s396
      %p398 = scmp.eq.s32.totalorder %s36, 0
      %p399 = por %p397, %p398
      %s400 = ssub.s32 %s30, %s37
      %p401 = scmp.eq.s32.totalorder %s400, 0
      %s403 = sadd.s32 %s402, 1
      %s404 = scalar_select %p401, %s402, %s403
      %p407 = pneg %p401
      %p408 = scmp.eq.s32.totalorder %s30, 1
      %p409 = por %p407, %p408
      %p410 = scmp.ne.s32.totalorder %s402, %s405
      %p411 = scmp.eq.s32.totalorder %s30, 0
      %p412 = por %p410, %p411
      %p413 = scmp.ne.s32.totalorder %s402, %s405
      %p414 = scmp.eq.s32.totalorder %s35, 1
      %p415 = por %p413, %p414
      %p416 = scmp.ne.s32.totalorder %s405, %s406
      %p417 = scmp.eq.s32.totalorder %s35, 0
      %p418 = por %p416, %p417
      %p419 = scmp.ne.s32.totalorder %s405, %s406
      %p420 = scmp.eq.s32.totalorder %s36, 1
      %p421 = por %p419, %p420
      %p423 = scmp.ne.s32.totalorder %s406, %s422
      %p424 = scmp.eq.s32.totalorder %s36, 0
      %p425 = por %p423, %p424
      %p426 = scmp.le.s32.totalorder 1, %s30
      %p427 = scmp.lt.s32.totalorder %s30, 3
      %p428 = pnand %p426, %p427
      %p429 = pneg %p428
      // Predicated region
      $region9: #{conv_autoencoder_forward.1} parent=5 // pred_check
        _
      $region10: #{conv_autoencoder_forward.1} parent=5 // pred_check_branch
        %431 = sbr.rel (%p428) target = $region12
      $region11: #{conv_autoencoder_forward.1} parent=5 // pred_region
        %s432 = ssub.s32 %s30, 1
        // Predicated region
        $region13: #{conv_autoencoder_forward.1} parent=11 // pred_check
          %p433 = pneg %p77
        $region14: #{conv_autoencoder_forward.1} parent=11 // pred_check_branch
          %435 = sbr.rel (%p433) target = $region16
        $region15: #{conv_autoencoder_forward.1} parent=11 // pred_region
          %s437 = ssub.s32 18432, 18432
          %438 = vsyncadd [#allocation4], %s437
          %s439 = sshll.u32 [#allocation3], 4
          %s440 = int_to_ptr.vmem [resolvable:$true] %s439
          %445 = dma.hbm_to_vmem [thread:$0]  %s1, 18432, %s440, [#allocation4], 64, 64, 4
        $region16: #{conv_autoencoder_forward.1} parent=11 // pred_fallthru
          _
        // Predicated region
        $region17: #{conv_autoencoder_forward.1} parent=11 // pred_check
          %p446 = pneg %p98
        $region18: #{conv_autoencoder_forward.1} parent=11 // pred_check_branch
          %448 = sbr.rel (%p446) target = $region20
        $region19: #{conv_autoencoder_forward.1} parent=11 // pred_region
          %s450 = ssub.s32 576, 576
          %451 = vsyncadd [#allocation6], %s450
          %s452 = sshll.u32 [#allocation5], 4
          %s453 = int_to_ptr.vmem [resolvable:$true] %s452
          %458 = dma.hbm_to_vmem [thread:$0]  %s2, 576, %s453, [#allocation6], 64, 64, 4
        $region20: #{conv_autoencoder_forward.1} parent=11 // pred_fallthru
          _
        // Predicated region
        $region21: #{conv_autoencoder_forward.1} parent=11 // pred_check
          %p459 = pneg %p119
        $region22: #{conv_autoencoder_forward.1} parent=11 // pred_check_branch
          %461 = sbr.rel (%p459) target = $region24
        $region23: #{conv_autoencoder_forward.1} parent=11 // pred_region
          %s463 = ssub.s32 128, 128
          %464 = vsyncadd [#allocation6], %s463
          %s466 = sshll.u32 [#allocation7], 4
          %s467 = int_to_ptr.vmem [resolvable:$true] %s466
          %469 = dma.hbm_to_vmem [thread:$0]  %s3, 128, %s467, [#allocation6]
        $region24: #{conv_autoencoder_forward.1} parent=11 // pred_fallthru
          _
        // Predicated region
        $region25: #{conv_autoencoder_forward.1} parent=11 // pred_check
          %p470 = pneg %p140
        $region26: #{conv_autoencoder_forward.1} parent=11 // pred_check_branch
          %472 = sbr.rel (%p470) target = $region28
        $region27: #{conv_autoencoder_forward.1} parent=11 // pred_region
          %s474 = ssub.s32 4608, 4608
          %475 = vsyncadd [#allocation9], %s474
          %s476 = sshll.u32 [#allocation8], 4
          %s477 = int_to_ptr.vmem [resolvable:$true] %s476
          %482 = dma.hbm_to_vmem [thread:$0]  %s4, 4608, %s477, [#allocation9], 64, 64, 4
        $region28: #{conv_autoencoder_forward.1} parent=11 // pred_fallthru
          _
        // Predicated region
        $region29: #{conv_autoencoder_forward.1} parent=11 // pred_check
          %p483 = pneg %p161
        $region30: #{conv_autoencoder_forward.1} parent=11 // pred_check_branch
          %485 = sbr.rel (%p483) target = $region32
        $region31: #{conv_autoencoder_forward.1} parent=11 // pred_region
          %s487 = ssub.s32 1152, 1152
          %488 = vsyncadd [#allocation9], %s487
          %s489 = sshll.u32 [#allocation10], 4
          %s490 = int_to_ptr.vmem [resolvable:$true] %s489
          %495 = dma.hbm_to_vmem [thread:$0]  %s5, 1152, %s490, [#allocation9], 64, 64, 4
        $region32: #{conv_autoencoder_forward.1} parent=11 // pred_fallthru
          _
        // Predicated region
        $region33: #{conv_autoencoder_forward.1} parent=11 // pred_check
          %p496 = pneg %p182
        $region34: #{conv_autoencoder_forward.1} parent=11 // pred_check_branch
          %498 = sbr.rel (%p496) target = $region36
        $region35: #{conv_autoencoder_forward.1} parent=11 // pred_region
          %s500 = ssub.s32 256, 256
          %501 = vsyncadd [#allocation12], %s500
          %s502 = sshll.u32 [#allocation11], 4
          %s503 = int_to_ptr.vmem [resolvable:$true] %s502
          %508 = dma.hbm_to_vmem [thread:$0]  %s6, 256, %s503, [#allocation12], 128, 128, 8
        $region36: #{conv_autoencoder_forward.1} parent=11 // pred_fallthru
          _
        // Predicated region
        $region37: #{conv_autoencoder_forward.1} parent=11 // pred_check
          %p509 = pneg %p203
        $region38: #{conv_autoencoder_forward.1} parent=11 // pred_check_branch
          %511 = sbr.rel (%p509) target = $region40
        $region39: #{conv_autoencoder_forward.1} parent=11 // pred_region
          %s513 = ssub.s32 2048, 2048
          %514 = vsyncadd [#allocation12], %s513
          %s515 = sshll.u32 [#allocation13], 4
          %s516 = int_to_ptr.vmem [resolvable:$true] %s515
          %521 = dma.hbm_to_vmem [thread:$0]  %s7, 2048, %s516, [#allocation12], 64, 64, 4
        $region40: #{conv_autoencoder_forward.1} parent=11 // pred_fallthru
          _
        // Predicated region
        $region41: #{conv_autoencoder_forward.1} parent=11 // pred_check
          %p522 = pneg %p224
        $region42: #{conv_autoencoder_forward.1} parent=11 // pred_check_branch
          %524 = sbr.rel (%p522) target = $region44
        $region43: #{conv_autoencoder_forward.1} parent=11 // pred_region
          _
        $region44: #{conv_autoencoder_forward.1} parent=11 // pred_fallthru
          _
        // Predicated region
        $region45: #{conv_autoencoder_forward.1} parent=11 // pred_check
          %p525 = pneg %p245
        $region46: #{conv_autoencoder_forward.1} parent=11 // pred_check_branch
          %527 = sbr.rel (%p525) target = $region48
        $region47: #{conv_autoencoder_forward.1} parent=11 // pred_region
          _
        $region48: #{conv_autoencoder_forward.1} parent=11 // pred_fallthru
          _
        // Predicated region
        $region49: #{conv_autoencoder_forward.1} parent=11 // pred_check
          %p528 = pneg %p266
        $region50: #{conv_autoencoder_forward.1} parent=11 // pred_check_branch
          %530 = sbr.rel (%p528) target = $region52
        $region51: #{conv_autoencoder_forward.1} parent=11 // pred_region
          _
        $region52: #{conv_autoencoder_forward.1} parent=11 // pred_fallthru
          _
        // Predicated region
        $region53: #{conv_autoencoder_forward.1} parent=11 // pred_check
          %p531 = pneg %p287
        $region54: #{conv_autoencoder_forward.1} parent=11 // pred_check_branch
          %533 = sbr.rel (%p531) target = $region56
        $region55: #{conv_autoencoder_forward.1} parent=11 // pred_region
          %s535 = ssub.s32 1152, 1152
          %536 = vsyncadd [#allocation15], %s535
          %s537 = sshll.u32 [#allocation14], 4
          %s538 = int_to_ptr.vmem [resolvable:$true] %s537
          %543 = dma.hbm_to_vmem [thread:$0]  %s11, 1152, %s538, [#allocation15], 64, 64, 4
        $region56: #{conv_autoencoder_forward.1} parent=11 // pred_fallthru
          _
        // Predicated region
        $region57: #{conv_autoencoder_forward.1} parent=11 // pred_check
          %p544 = pneg %p308
        $region58: #{conv_autoencoder_forward.1} parent=11 // pred_check_branch
          %546 = sbr.rel (%p544) target = $region60
        $region59: #{conv_autoencoder_forward.1} parent=11 // pred_region
          %s548 = ssub.s32 576, 576
          %549 = vsyncadd [#allocation15], %s548
          %s550 = sshll.u32 [#allocation16], 4
          %s551 = int_to_ptr.vmem [resolvable:$true] %s550
          %556 = dma.hbm_to_vmem [thread:$0]  %s12, 576, %s551, [#allocation15], 64, 64, 4
        $region60: #{conv_autoencoder_forward.1} parent=11 // pred_fallthru
          _
        // Predicated region
        $region61: #{conv_autoencoder_forward.1} parent=11 // pred_check
          %p557 = pneg %p329
        $region62: #{conv_autoencoder_forward.1} parent=11 // pred_check_branch
          %559 = sbr.rel (%p557) target = $region64
        $region63: #{conv_autoencoder_forward.1} parent=11 // pred_region
          %s561 = ssub.s32 128, 128
          %562 = vsyncadd [#allocation18], %s561
          %s564 = sshll.u32 [#allocation17], 4
          %s565 = int_to_ptr.vmem [resolvable:$true] %s564
          %567 = dma.hbm_to_vmem [thread:$0]  %s13, 128, %s565, [#allocation18]
        $region64: #{conv_autoencoder_forward.1} parent=11 // pred_fallthru
          _
        // Predicated region
        $region65: #{conv_autoencoder_forward.1} parent=11 // pred_check
          %p568 = pneg %p350
        $region66: #{conv_autoencoder_forward.1} parent=11 // pred_check_branch
          %570 = sbr.rel (%p568) target = $region68
        $region67: #{conv_autoencoder_forward.1} parent=11 // pred_region
          %s572 = ssub.s32 5632, 5632
          %573 = vsyncadd [#allocation18], %s572
          %s574 = sshll.u32 [#allocation19], 4
          %s575 = int_to_ptr.vmem [resolvable:$true] %s574
          %580 = dma.hbm_to_vmem [thread:$0]  %s14, 5632, %s575, [#allocation18], 128, 128, 8
        $region68: #{conv_autoencoder_forward.1} parent=11 // pred_fallthru
          _
        // Predicated region
        $region69: #{conv_autoencoder_forward.1} parent=11 // pred_check
          %p581 = pneg %p371
        $region70: #{conv_autoencoder_forward.1} parent=11 // pred_check_branch
          %583 = sbr.rel (%p581) target = $region72
        $region71: #{conv_autoencoder_forward.1} parent=11 // pred_region
          %s585 = ssub.s32 128, 128
          %586 = vsyncadd [#allocation21], %s585
          %s587 = sshll.u32 [#allocation20], 4
          %s588 = int_to_ptr.vmem [resolvable:$true] %s587
          %593 = dma.hbm_to_vmem [thread:$0]  %s15, 128, %s588, [#allocation21], 32, 32, 2
        $region72: #{conv_autoencoder_forward.1} parent=11 // pred_fallthru
          _
        // Predicated region
        $region73: #{conv_autoencoder_forward.1} parent=11 // pred_check
          %p594 = pneg %p392
        $region74: #{conv_autoencoder_forward.1} parent=11 // pred_check_branch
          %596 = sbr.rel (%p594) target = $region76
        $region75: #{conv_autoencoder_forward.1} parent=11 // pred_region
          _
        $region76: #{conv_autoencoder_forward.1} parent=11 // pred_fallthru
          _
      $region12: #{conv_autoencoder_forward.1} parent=5 // pred_fallthru
        _
      %p597 = scmp.lt.s32.totalorder %s30, 2
      // Predicated region
      $region77: #{conv_autoencoder_forward.1} parent=5 // pred_check
        %p598 = pneg %p597
      $region78: #{conv_autoencoder_forward.1} parent=5 // pred_check_branch
        %600 = sbr.rel (%p598) target = $region80
      $region79: #{conv_autoencoder_forward.1} parent=5 // pred_region
        // Predicated region
        $region81: #{conv_autoencoder_forward.1} parent=79 // pred_check
          %p601 = pneg %p50
        $region82: #{conv_autoencoder_forward.1} parent=79 // pred_check_branch
          %603 = sbr.rel (%p601) target = $region84
        $region83: #{conv_autoencoder_forward.1} parent=79 // pred_region
          %p604 = scmp.lt.s32.totalorder %s30, 1
          %s605 = scalar_select %p604, %s30, 1
          %s606 = smul.addr %s605, 2
          %s607 = smul.addr %s606, 2
          %s608 = scalar_lea.vmem %s0, %s607
        $region84: #{conv_autoencoder_forward.1} parent=79 // pred_fallthru
          _
      $region80: #{conv_autoencoder_forward.1} parent=5 // pred_fallthru
        _
      %p609 = scmp.le.s32.totalorder 1, %s30
      %p610 = scmp.lt.s32.totalorder %s30, 3
      %p611 = pnand %p609, %p610
      %p612 = pneg %p611
      // Predicated region
      $region85: #{conv_autoencoder_forward.1} parent=5 // pred_check
        _
      $region86: #{conv_autoencoder_forward.1} parent=5 // pred_check_branch
        %614 = sbr.rel (%p611) target = $region88
      $region87: #{conv_autoencoder_forward.1} parent=5 // pred_region
        %s615 = ssub.s32 %s30, 1
        // Predicated region
        $region89: #{conv_autoencoder_forward.1} parent=87 // pred_check
          %p616 = pneg %p77
        $region90: #{conv_autoencoder_forward.1} parent=87 // pred_check_branch
          %618 = sbr.rel (%p616) target = $region92
        $region91: #{conv_autoencoder_forward.1} parent=87 // pred_region
          %619 = dma.done [#allocation4], 18432
        $region92: #{conv_autoencoder_forward.1} parent=87 // pred_fallthru
          _
        // Predicated region
        $region93: #{conv_autoencoder_forward.1} parent=87 // pred_check
          %p620 = pneg %p98
        $region94: #{conv_autoencoder_forward.1} parent=87 // pred_check_branch
          %622 = sbr.rel (%p620) target = $region96
        $region95: #{conv_autoencoder_forward.1} parent=87 // pred_region
          %623 = dma.done [#allocation6], 576
        $region96: #{conv_autoencoder_forward.1} parent=87 // pred_fallthru
          _
        // Predicated region
        $region97: #{conv_autoencoder_forward.1} parent=87 // pred_check
          %p624 = pneg %p119
        $region98: #{conv_autoencoder_forward.1} parent=87 // pred_check_branch
          %626 = sbr.rel (%p624) target = $region100
        $region99: #{conv_autoencoder_forward.1} parent=87 // pred_region
          %627 = dma.done [#allocation6], 128
        $region100: #{conv_autoencoder_forward.1} parent=87 // pred_fallthru
          _
        // Predicated region
        $region101: #{conv_autoencoder_forward.1} parent=87 // pred_check
          %p628 = pneg %p140
        $region102: #{conv_autoencoder_forward.1} parent=87 // pred_check_branch
          %630 = sbr.rel (%p628) target = $region104
        $region103: #{conv_autoencoder_forward.1} parent=87 // pred_region
          %631 = dma.done [#allocation9], 4608
        $region104: #{conv_autoencoder_forward.1} parent=87 // pred_fallthru
          _
        // Predicated region
        $region105: #{conv_autoencoder_forward.1} parent=87 // pred_check
          %p632 = pneg %p161
        $region106: #{conv_autoencoder_forward.1} parent=87 // pred_check_branch
          %634 = sbr.rel (%p632) target = $region108
        $region107: #{conv_autoencoder_forward.1} parent=87 // pred_region
          %635 = dma.done [#allocation9], 1152
        $region108: #{conv_autoencoder_forward.1} parent=87 // pred_fallthru
          _
        // Predicated region
        $region109: #{conv_autoencoder_forward.1} parent=87 // pred_check
          %p636 = pneg %p182
        $region110: #{conv_autoencoder_forward.1} parent=87 // pred_check_branch
          %638 = sbr.rel (%p636) target = $region112
        $region111: #{conv_autoencoder_forward.1} parent=87 // pred_region
          %639 = dma.done [#allocation12], 256
        $region112: #{conv_autoencoder_forward.1} parent=87 // pred_fallthru
          _
        // Predicated region
        $region113: #{conv_autoencoder_forward.1} parent=87 // pred_check
          %p640 = pneg %p203
        $region114: #{conv_autoencoder_forward.1} parent=87 // pred_check_branch
          %642 = sbr.rel (%p640) target = $region116
        $region115: #{conv_autoencoder_forward.1} parent=87 // pred_region
          %643 = dma.done [#allocation12], 2048
        $region116: #{conv_autoencoder_forward.1} parent=87 // pred_fallthru
          _
        // Predicated region
        $region117: #{conv_autoencoder_forward.1} parent=87 // pred_check
          %p644 = pneg %p287
        $region118: #{conv_autoencoder_forward.1} parent=87 // pred_check_branch
          %646 = sbr.rel (%p644) target = $region120
        $region119: #{conv_autoencoder_forward.1} parent=87 // pred_region
          %647 = dma.done [#allocation15], 1152
        $region120: #{conv_autoencoder_forward.1} parent=87 // pred_fallthru
          _
        // Predicated region
        $region121: #{conv_autoencoder_forward.1} parent=87 // pred_check
          %p648 = pneg %p308
        $region122: #{conv_autoencoder_forward.1} parent=87 // pred_check_branch
          %650 = sbr.rel (%p648) target = $region124
        $region123: #{conv_autoencoder_forward.1} parent=87 // pred_region
          %651 = dma.done [#allocation15], 576
        $region124: #{conv_autoencoder_forward.1} parent=87 // pred_fallthru
          _
        // Predicated region
        $region125: #{conv_autoencoder_forward.1} parent=87 // pred_check
          %p652 = pneg %p329
        $region126: #{conv_autoencoder_forward.1} parent=87 // pred_check_branch
          %654 = sbr.rel (%p652) target = $region128
        $region127: #{conv_autoencoder_forward.1} parent=87 // pred_region
          %655 = dma.done [#allocation18], 128
        $region128: #{conv_autoencoder_forward.1} parent=87 // pred_fallthru
          _
        // Predicated region
        $region129: #{conv_autoencoder_forward.1} parent=87 // pred_check
          %p656 = pneg %p350
        $region130: #{conv_autoencoder_forward.1} parent=87 // pred_check_branch
          %658 = sbr.rel (%p656) target = $region132
        $region131: #{conv_autoencoder_forward.1} parent=87 // pred_region
          %659 = dma.done [#allocation18], 5632
        $region132: #{conv_autoencoder_forward.1} parent=87 // pred_fallthru
          _
        // Predicated region
        $region133: #{conv_autoencoder_forward.1} parent=87 // pred_check
          %p660 = pneg %p371
        $region134: #{conv_autoencoder_forward.1} parent=87 // pred_check_branch
          %662 = sbr.rel (%p660) target = $region136
        $region135: #{conv_autoencoder_forward.1} parent=87 // pred_region
          %663 = dma.done [#allocation21], 128
        $region136: #{conv_autoencoder_forward.1} parent=87 // pred_fallthru
          _
        %p664 = scmp.lt.s32.totalorder %s35, 1
        %s665 = scalar_select %p664, %s35, 1
        %s666 = smul.addr %s665, 2
        %s667 = smul.addr %s666, 2
        %s668 = scalar_lea.vmem %s0, %s667
        %p669 = pneg %p56
        %p670 = pneg %p53
        %p671 = pneg %p77
        %p672 = pneg %p74
        %p673 = pneg %p98
        %p674 = pneg %p95
        %p675 = pneg %p119
        %p676 = pneg %p116
        %p677 = pneg %p140
        %p678 = pneg %p137
        %p679 = pneg %p161
        %p680 = pneg %p158
        %p681 = pneg %p182
        %p682 = pneg %p179
        %p683 = pneg %p203
        %p684 = pneg %p200
        %p685 = pneg %p224
        %p686 = pneg %p221
        %p687 = pneg %p245
        %p688 = pneg %p242
        %p689 = pneg %p266
        %p690 = pneg %p263
        %p691 = pneg %p287
        %p692 = pneg %p284
        %p693 = pneg %p308
        %p694 = pneg %p305
        %p695 = pneg %p329
        %p696 = pneg %p326
        %p697 = pneg %p350
        %p698 = pneg %p347
        %p699 = pneg %p371
        %p700 = pneg %p368
        %p701 = pneg %p392
        %p702 = pneg %p389
        %p703 = pneg %p418
        %p704 = pneg %p415
        %p705 = scmp.lt.s32.totalorder %s35, 1
        %s706 = scalar_select %p705, %s35, 1
        %s707 = smul.addr %s706, 2
        %s708 = smul.addr %s707, 4
        %s709 = scalar_lea.vmem %s17, %s708
        %p710 = scmp.lt.s32.totalorder %s35, 1
        %s711 = scalar_select %p710, %s35, 1
        %s712 = smul.addr %s711, 2
        %s713 = smul.addr %s712, 2
        %s714 = scalar_lea.vmem %s0, %s713
        %p715 = scmp.lt.s32.totalorder %s35, 1
        %s716 = scalar_select %p715, %s35, 1
        %s717 = smul.addr %s716, 2
        %s718 = smul.addr %s717, 4
        %s719 = scalar_lea.vmem %s17, %s718
        %v721 = vld [vmem:[%s714] sm:$0xf]
        %v722 = vld [vmem:[#allocation3] sm:$0xf]
        %v723 = vld [vmem:[#allocation3 + $0x4] sm:$0xf]
        %v724 = vld [vmem:[#allocation3 + $0x8] sm:$0xf]
        %v725 = vld [vmem:[#allocation3 + $0xc] sm:$0xf]
        %v726 = vld [vmem:[#allocation3 + $0x10] sm:$0xf]
        %v727 = vld [vmem:[#allocation3 + $0x14] sm:$0xf]
        %v728 = vld [vmem:[#allocation3 + $0x18] sm:$0xf]
        %v729 = vld [vmem:[#allocation3 + $0x1c] sm:$0xf]
        %v730 = vld [vmem:[#allocation3 + $0x20] sm:$0xf]
        %v731 = vld [vmem:[#allocation3 + $0x24] sm:$0xf]
        %v732 = vld [vmem:[#allocation3 + $0x28] sm:$0xf]
        %v733 = vld [vmem:[#allocation3 + $0x2c] sm:$0xf]
        %v734 = vld [vmem:[#allocation3 + $0x30] sm:$0xf]
        %v735 = vld [vmem:[#allocation3 + $0x34] sm:$0xf]
        %v736 = vld [vmem:[#allocation3 + $0x38] sm:$0xf]
        %v737 = vld [vmem:[#allocation3 + $0x3c] sm:$0xf]
        %v738 = vld [vmem:[#allocation3 + $0x40] sm:$0xf]
        %v739 = vld [vmem:[#allocation3 + $0x44] sm:$0xf]
        %v740 = vld [vmem:[#allocation3 + $0x48] sm:$0xf]
        %v741 = vld [vmem:[#allocation3 + $0x4c] sm:$0xf]
        %v742 = vld [vmem:[#allocation3 + $0x50] sm:$0xf]
        %v743 = vld [vmem:[#allocation3 + $0x54] sm:$0xf]
        %v744 = vld [vmem:[#allocation3 + $0x58] sm:$0xf]
        %v745 = vld [vmem:[#allocation3 + $0x5c] sm:$0xf]
        %v746 = vld [vmem:[#allocation3 + $0x60] sm:$0xf]
        %v747 = vld [vmem:[#allocation3 + $0x64] sm:$0xf]
        %v748 = vld [vmem:[#allocation3 + $0x68] sm:$0xf]
        %v749 = vld [vmem:[#allocation3 + $0x6c] sm:$0xf]
        %v750 = vld [vmem:[#allocation3 + $0x70] sm:$0xf]
        %v751 = vld [vmem:[#allocation3 + $0x74] sm:$0xf]
        %v752 = vld [vmem:[#allocation3 + $0x78] sm:$0xf]
        %v753 = vld [vmem:[#allocation3 + $0x7c] sm:$0xf]
        %v756 = vunpack.c.l.s4 1983009808
        %v757 = vunpack.c.0.s8 %v756
        %v758 = vlaneseq
        %v759 = vshrl.u32 %v758, 7
        %v760 = vsub.s32 %v757, %v759
        %v761 = vrot.slane %v721, %v760
        %v762 = vcombine.high %v761, %v761
        %v797 = vunpack.c.l.b16 %v722
        %v798 = vunpack.c.l.b16 %v723
        %v799 = vunpack.c.l.b16 %v724
        %v800 = vunpack.c.l.b16 %v725
        %v801 = vunpack.c.l.b16 %v726
        %v802 = vunpack.c.l.b16 %v727
        %v803 = vunpack.c.l.b16 %v728
        %v804 = vunpack.c.l.b16 %v729
        %v805 = vunpack.c.l.b16 %v730
        %v806 = vunpack.c.l.b16 %v731
        %v807 = vunpack.c.l.b16 %v732
        %v808 = vunpack.c.l.b16 %v733
        %v809 = vunpack.c.l.b16 %v734
        %v810 = vunpack.c.l.b16 %v735
        %v811 = vunpack.c.l.b16 %v736
        %v812 = vunpack.c.l.b16 %v737
        %v813 = vunpack.c.l.b16 %v738
        %v814 = vunpack.c.l.b16 %v739
        %v815 = vunpack.c.l.b16 %v740
        %v816 = vunpack.c.l.b16 %v741
        %v817 = vunpack.c.l.b16 %v742
        %v818 = vunpack.c.l.b16 %v743
        %v819 = vunpack.c.l.b16 %v744
        %v820 = vunpack.c.l.b16 %v745
        %v821 = vunpack.c.l.b16 %v746
        %v822 = vunpack.c.l.b16 %v747
        %v823 = vunpack.c.l.b16 %v748
        %v824 = vunpack.c.l.b16 %v749
        %v825 = vunpack.c.l.b16 %v750
        %v826 = vunpack.c.l.b16 %v751
        %v827 = vunpack.c.l.b16 %v752
        %v828 = vunpack.c.l.b16 %v753
        %v829 = vpack.c.b16 %v798, %v797
        %v830 = vpack.c.b16 %v800, %v799
        %v831 = vpack.c.b16 %v802, %v801
        %v832 = vpack.c.b16 %v804, %v803
        %v833 = vpack.c.b16 %v806, %v805
        %v834 = vpack.c.b16 %v808, %v807
        %v835 = vpack.c.b16 %v810, %v809
        %v836 = vpack.c.b16 %v812, %v811
        %v837 = vpack.c.b16 %v814, %v813
        %v838 = vpack.c.b16 %v816, %v815
        %v839 = vpack.c.b16 %v818, %v817
        %v840 = vpack.c.b16 %v820, %v819
        %v841 = vpack.c.b16 %v822, %v821
        %v842 = vpack.c.b16 %v824, %v823
        %v843 = vpack.c.b16 %v826, %v825
        %v844 = vpack.c.b16 %v828, %v827
        %861 = vmatprep.subr.bf16.mxu0 0
        %862 = vmatpush1.bf16.msra.mxu0 %v829
        %863 = vmatprep.subr.bf16.mxu0 0
        %864 = vmatpush1.bf16.msra.mxu0 %v830
        %865 = vmatprep.subr.bf16.mxu0 0
        %866 = vmatpush1.bf16.msra.mxu0 %v831
        %867 = vmatprep.subr.bf16.mxu0 0
        %868 = vmatpush1.bf16.msra.mxu0 %v832
        %869 = vmatprep.subr.bf16.mxu0 0
        %870 = vmatpush1.bf16.msra.mxu0 %v833
        %871 = vmatprep.subr.bf16.mxu0 0
        %872 = vmatpush1.bf16.msra.mxu0 %v834
        %873 = vmatprep.subr.bf16.mxu0 0
        %874 = vmatpush1.bf16.msra.mxu0 %v835
        %875 = vmatprep.subr.bf16.mxu0 0
        %876 = vmatpush1.bf16.msra.mxu0 %v836
        %877 = vmatprep.subr.bf16.mxu0 0
        %878 = vmatpush1.bf16.msra.mxu0 %v837
        %879 = vmatprep.subr.bf16.mxu0 0
        %880 = vmatpush1.bf16.msra.mxu0 %v838
        %881 = vmatprep.subr.bf16.mxu0 0
        %882 = vmatpush1.bf16.msra.mxu0 %v839
        %883 = vmatprep.subr.bf16.mxu0 0
        %884 = vmatpush1.bf16.msra.mxu0 %v840
        %885 = vmatprep.subr.bf16.mxu0 0
        %886 = vmatpush1.bf16.msra.mxu0 %v841
        %887 = vmatprep.subr.bf16.mxu0 0
        %888 = vmatpush1.bf16.msra.mxu0 %v842
        %889 = vmatprep.subr.bf16.mxu0 0
        %890 = vmatpush1.bf16.msra.mxu0 %v843
        %891 = vmatprep.subr.bf16.mxu0 0
        %892 = vmatpush1.bf16.msra.mxu0 %v844
        %893 = vmatprep.mubr.bf16.mxu0 %v762
        %894 = vmatmul.mubr.bf16.gmra.mrb[0].mxu0 %v761
        %v895 = vpop.f32.mrb[0].mxu0
        %v896 = vadd.f32 0.0, %v895
        %v897 = vpop.f32.mrb[0].mxu0
        %v898 = vpop.f32.mrb[0].mxu0
        %v899 = vpop.f32.mrb[0].mxu0
        %900 = vdwg.mxu0
        %v901 = vld [vmem:[#allocation5] sm:$0xf]
        %v902 = vpack.c.bf16 %v896, %v896
        %s903 = scalar_lea.vmem [#allocation3], 128
        %v904 = vld [vmem:[%s903] sm:$0xf]
        %v905 = vld [vmem:[%s903 + $0x4] sm:$0xf]
        %v906 = vld [vmem:[%s903 + $0x8] sm:$0xf]
        %v907 = vld [vmem:[%s903 + $0xc] sm:$0xf]
        %v908 = vld [vmem:[%s903 + $0x10] sm:$0xf]
        %v909 = vld [vmem:[%s903 + $0x14] sm:$0xf]
        %v910 = vld [vmem:[%s903 + $0x18] sm:$0xf]
        %v911 = vld [vmem:[%s903 + $0x1c] sm:$0xf]
        %v912 = vld [vmem:[%s903 + $0x20] sm:$0xf]
        %v913 = vld [vmem:[%s903 + $0x24] sm:$0xf]
        %v914 = vld [vmem:[%s903 + $0x28] sm:$0xf]
        %v915 = vld [vmem:[%s903 + $0x2c] sm:$0xf]
        %v916 = vld [vmem:[%s903 + $0x30] sm:$0xf]
        %v917 = vld [vmem:[%s903 + $0x34] sm:$0xf]
        %v918 = vld [vmem:[%s903 + $0x38] sm:$0xf]
        %v919 = vld [vmem:[%s903 + $0x3c] sm:$0xf]
        %v920 = vld [vmem:[%s903 + $0x40] sm:$0xf]
        %v921 = vld [vmem:[%s903 + $0x44] sm:$0xf]
        %v922 = vld [vmem:[%s903 + $0x48] sm:$0xf]
        %v923 = vld [vmem:[%s903 + $0x4c] sm:$0xf]
        %v924 = vld [vmem:[%s903 + $0x50] sm:$0xf]
        %v925 = vld [vmem:[%s903 + $0x54] sm:$0xf]
        %v926 = vld [vmem:[%s903 + $0x58] sm:$0xf]
        %v927 = vld [vmem:[%s903 + $0x5c] sm:$0xf]
        %v928 = vld [vmem:[%s903 + $0x60] sm:$0xf]
        %v929 = vld [vmem:[%s903 + $0x64] sm:$0xf]
        %v930 = vld [vmem:[%s903 + $0x68] sm:$0xf]
        %v931 = vld [vmem:[%s903 + $0x6c] sm:$0xf]
        %v932 = vld [vmem:[%s903 + $0x70] sm:$0xf]
        %v933 = vld [vmem:[%s903 + $0x74] sm:$0xf]
        %v934 = vld [vmem:[%s903 + $0x78] sm:$0xf]
        %v935 = vld [vmem:[%s903 + $0x7c] sm:$0xf]
        %v968 = vunpack.c.l.b16 %v904
        %v969 = vunpack.c.l.b16 %v905
        %v970 = vunpack.c.l.b16 %v906
        %v971 = vunpack.c.l.b16 %v907
        %v972 = vunpack.c.l.b16 %v908
        %v973 = vunpack.c.l.b16 %v909
        %v974 = vunpack.c.l.b16 %v910
        %v975 = vunpack.c.l.b16 %v911
        %v976 = vunpack.c.l.b16 %v912
        %v977 = vunpack.c.l.b16 %v913
        %v978 = vunpack.c.l.b16 %v914
        %v979 = vunpack.c.l.b16 %v915
        %v980 = vunpack.c.l.b16 %v916
        %v981 = vunpack.c.l.b16 %v917
        %v982 = vunpack.c.l.b16 %v918
        %v983 = vunpack.c.l.b16 %v919
        %v984 = vunpack.c.l.b16 %v920
        %v985 = vunpack.c.l.b16 %v921
        %v986 = vunpack.c.l.b16 %v922
        %v987 = vunpack.c.l.b16 %v923
        %v988 = vunpack.c.l.b16 %v924
        %v989 = vunpack.c.l.b16 %v925
        %v990 = vunpack.c.l.b16 %v926
        %v991 = vunpack.c.l.b16 %v927
        %v992 = vunpack.c.l.b16 %v928
        %v993 = vunpack.c.l.b16 %v929
        %v994 = vunpack.c.l.b16 %v930
        %v995 = vunpack.c.l.b16 %v931
        %v996 = vunpack.c.l.b16 %v932
        %v997 = vunpack.c.l.b16 %v933
        %v998 = vunpack.c.l.b16 %v934
        %v999 = vunpack.c.l.b16 %v935
        %v1000 = vpack.c.b16 %v969, %v968
        %v1001 = vpack.c.b16 %v971, %v970
        %v1002 = vpack.c.b16 %v973, %v972
        %v1003 = vpack.c.b16 %v975, %v974
        %v1004 = vpack.c.b16 %v977, %v976
        %v1005 = vpack.c.b16 %v979, %v978
        %v1006 = vpack.c.b16 %v981, %v980
        %v1007 = vpack.c.b16 %v983, %v982
        %v1008 = vpack.c.b16 %v985, %v984
        %v1009 = vpack.c.b16 %v987, %v986
        %v1010 = vpack.c.b16 %v989, %v988
        %v1011 = vpack.c.b16 %v991, %v990
        %v1012 = vpack.c.b16 %v993, %v992
        %v1013 = vpack.c.b16 %v995, %v994
        %v1014 = vpack.c.b16 %v997, %v996
        %v1015 = vpack.c.b16 %v999, %v998
        %1032 = vmatprep.subr.bf16.mxu0 0
        %1033 = vmatpush1.bf16.msra.mxu0 %v1000
        %1034 = vmatprep.subr.bf16.mxu0 0
        %1035 = vmatpush1.bf16.msra.mxu0 %v1001
        %1036 = vmatprep.subr.bf16.mxu0 0
        %1037 = vmatpush1.bf16.msra.mxu0 %v1002
        %1038 = vmatprep.subr.bf16.mxu0 0
        %1039 = vmatpush1.bf16.msra.mxu0 %v1003
        %1040 = vmatprep.subr.bf16.mxu0 0
        %1041 = vmatpush1.bf16.msra.mxu0 %v1004
        %1042 = vmatprep.subr.bf16.mxu0 0
        %1043 = vmatpush1.bf16.msra.mxu0 %v1005
        %1044 = vmatprep.subr.bf16.mxu0 0
        %1045 = vmatpush1.bf16.msra.mxu0 %v1006
        %1046 = vmatprep.subr.bf16.mxu0 0
        %1047 = vmatpush1.bf16.msra.mxu0 %v1007
        %1048 = vmatprep.subr.bf16.mxu0 0
        %1049 = vmatpush1.bf16.msra.mxu0 %v1008
        %1050 = vmatprep.subr.bf16.mxu0 0
        %1051 = vmatpush1.bf16.msra.mxu0 %v1009
        %1052 = vmatprep.subr.bf16.mxu0 0
        %1053 = vmatpush1.bf16.msra.mxu0 %v1010
        %1054 = vmatprep.subr.bf16.mxu0 0
        %1055 = vmatpush1.bf16.msra.mxu0 %v1011
        %1056 = vmatprep.subr.bf16.mxu0 0
        %1057 = vmatpush1.bf16.msra.mxu0 %v1012
        %1058 = vmatprep.subr.bf16.mxu0 0
        %1059 = vmatpush1.bf16.msra.mxu0 %v1013
        %1060 = vmatprep.subr.bf16.mxu0 0
        %1061 = vmatpush1.bf16.msra.mxu0 %v1014
        %1062 = vmatprep.subr.bf16.mxu0 0
        %1063 = vmatpush1.bf16.msra.mxu0 %v1015
        %1064 = vmatprep.mubr.bf16.mxu0 %v762
        %1065 = vmatmul.mubr.bf16.gmra.mrb[0].mxu0 %v761
        %v1066 = vpop.f32.mrb[0].mxu0
        %v1067 = vadd.f32 0.0, %v1066
        %v1068 = vpop.f32.mrb[0].mxu0
        %v1069 = vpop.f32.mrb[0].mxu0
        %v1070 = vpop.f32.mrb[0].mxu0
        %1071 = vdwg.mxu0
        %s1072 = scalar_lea.vmem [#allocation5], 4
        %v1073 = vld [vmem:[%s1072] sm:$0xf]
        %v1074 = vpack.c.bf16 %v1067, %v1067
        %vm1075 = vcmask 23552
        %v1077 = vsel %vm1075, %v1073, 0
        %vm1079 = vcmask 1040384
        %vm1080 = vcmask 1041408
        %v1081 = vsel %vm1079, 4294967295, 65535
        %v1082 = vsel %vm1080, %v1081, 0
        %v1084 = vand.u32 %v1074, %v1082
        %1086 = vmatprep.subr.bf16.mxu0 0
        %1087 = vmatpush1.bf16.msra.mxu0 %v1084
        %1088 = vmatprep.subr.bf16.mxu0 0
        %1089 = vmatpush1.bf16.msra.mxu0 0
        %1090 = vmatprep.subr.bf16.mxu0 0
        %1091 = vmatpush1.bf16.msra.mxu0 0
        %1092 = vmatprep.subr.bf16.mxu0 0
        %1093 = vmatpush1.bf16.msra.mxu0 0
        %1094 = vmatprep.subr.bf16.mxu0 0
        %1095 = vmatpush1.bf16.msra.mxu0 0
        %1096 = vmatprep.subr.bf16.mxu0 0
        %1097 = vmatpush1.bf16.msra.mxu0 0
        %1098 = vmatprep.subr.bf16.mxu0 0
        %1099 = vmatpush1.bf16.msra.mxu0 0
        %1100 = vmatprep.subr.bf16.mxu0 0
        %1101 = vmatpush1.bf16.msra.mxu0 0
        %1102 = vmatprep.subr.bf16.mxu0 0
        %1103 = vmatpush1.bf16.msra.mxu0 0
        %1104 = vmatprep.subr.bf16.mxu0 0
        %1105 = vmatpush1.bf16.msra.mxu0 0
        %1106 = vmatprep.subr.bf16.mxu0 0
        %1107 = vmatpush1.bf16.msra.mxu0 0
        %1108 = vmatprep.subr.bf16.mxu0 0
        %1109 = vmatpush1.bf16.msra.mxu0 0
        %1110 = vmatprep.subr.bf16.mxu0 0
        %1111 = vmatpush1.bf16.msra.mxu0 0
        %1112 = vmatprep.subr.bf16.mxu0 0
        %1113 = vmatpush1.bf16.msra.mxu0 0
        %1114 = vmatprep.subr.bf16.mxu0 0
        %1115 = vmatpush1.bf16.msra.mxu0 0
        %1116 = vmatprep.subr.bf16.mxu0 0
        %1117 = vmatpush1.bf16.msra.mxu0 0
        %1118 = vmatprep.mubr.bf16.mxu0 0
        %1119 = vmatmul.mubr.bf16.gmra.mrb[0].mxu0 %v1077
        %v1120 = vpop.f32.mrb[0].mxu0
        %v1121 = vadd.f32 0.0, %v1120
        %v1122 = vpop.f32.mrb[0].mxu0
        %v1123 = vpop.f32.mrb[0].mxu0
        %v1124 = vpop.f32.mrb[0].mxu0
        %1125 = vdwg.mxu0
        %v1127 = vsel %vm1075, %v901, 0
        %v1130 = vand.u32 %v902, %v1082
        %1132 = vmatprep.subr.bf16.mxu0 0
        %1133 = vmatpush1.bf16.msra.mxu0 %v1130
        %1134 = vmatprep.subr.bf16.mxu0 0
        %1135 = vmatpush1.bf16.msra.mxu0 0
        %1136 = vmatprep.subr.bf16.mxu0 0
        %1137 = vmatpush1.bf16.msra.mxu0 0
        %1138 = vmatprep.subr.bf16.mxu0 0
        %1139 = vmatpush1.bf16.msra.mxu0 0
        %1140 = vmatprep.subr.bf16.mxu0 0
        %1141 = vmatpush1.bf16.msra.mxu0 0
        %1142 = vmatprep.subr.bf16.mxu0 0
        %1143 = vmatpush1.bf16.msra.mxu0 0
        %1144 = vmatprep.subr.bf16.mxu0 0
        %1145 = vmatpush1.bf16.msra.mxu0 0
        %1146 = vmatprep.subr.bf16.mxu0 0
        %1147 = vmatpush1.bf16.msra.mxu0 0
        %1148 = vmatprep.subr.bf16.mxu0 0
        %1149 = vmatpush1.bf16.msra.mxu0 0
        %1150 = vmatprep.subr.bf16.mxu0 0
        %1151 = vmatpush1.bf16.msra.mxu0 0
        %1152 = vmatprep.subr.bf16.mxu0 0
        %1153 = vmatpush1.bf16.msra.mxu0 0
        %1154 = vmatprep.subr.bf16.mxu0 0
        %1155 = vmatpush1.bf16.msra.mxu0 0
        %1156 = vmatprep.subr.bf16.mxu0 0
        %1157 = vmatpush1.bf16.msra.mxu0 0
        %1158 = vmatprep.subr.bf16.mxu0 0
        %1159 = vmatpush1.bf16.msra.mxu0 0
        %1160 = vmatprep.subr.bf16.mxu0 0
        %1161 = vmatpush1.bf16.msra.mxu0 0
        %1162 = vmatprep.subr.bf16.mxu0 0
        %1163 = vmatpush1.bf16.msra.mxu0 0
        %1164 = vmatprep.mubr.bf16.mxu0 0
        %1165 = vmatmul.mubr.bf16.gmra.mrb[0].mxu0 %v1127
        %v1166 = vpop.f32.mrb[0].mxu0
        %v1167 = vadd.f32 %v1121, %v1166
        %v1168 = vpop.f32.mrb[0].mxu0
        %v1169 = vpop.f32.mrb[0].mxu0
        %v1170 = vpop.f32.mrb[0].mxu0
        %1171 = vdwg.mxu0
        %s1172 = scalar_lea.vmem [#allocation3], 256
        %v1173 = vld [vmem:[%s1172] sm:$0xf]
        %v1174 = vld [vmem:[%s1172 + $0x4] sm:$0xf]
        %v1175 = vld [vmem:[%s1172 + $0x8] sm:$0xf]
        %v1176 = vld [vmem:[%s1172 + $0xc] sm:$0xf]
        %v1177 = vld [vmem:[%s1172 + $0x10] sm:$0xf]
        %v1178 = vld [vmem:[%s1172 + $0x14] sm:$0xf]
        %v1179 = vld [vmem:[%s1172 + $0x18] sm:$0xf]
        %v1180 = vld [vmem:[%s1172 + $0x1c] sm:$0xf]
        %v1181 = vld [vmem:[%s1172 + $0x20] sm:$0xf]
        %v1182 = vld [vmem:[%s1172 + $0x24] sm:$0xf]
        %v1183 = vld [vmem:[%s1172 + $0x28] sm:$0xf]
        %v1184 = vld [vmem:[%s1172 + $0x2c] sm:$0xf]
        %v1185 = vld [vmem:[%s1172 + $0x30] sm:$0xf]
        %v1186 = vld [vmem:[%s1172 + $0x34] sm:$0xf]
        %v1187 = vld [vmem:[%s1172 + $0x38] sm:$0xf]
        %v1188 = vld [vmem:[%s1172 + $0x3c] sm:$0xf]
        %v1189 = vld [vmem:[%s1172 + $0x40] sm:$0xf]
        %v1190 = vld [vmem:[%s1172 + $0x44] sm:$0xf]
        %v1191 = vld [vmem:[%s1172 + $0x48] sm:$0xf]
        %v1192 = vld [vmem:[%s1172 + $0x4c] sm:$0xf]
        %v1193 = vld [vmem:[%s1172 + $0x50] sm:$0xf]
        %v1194 = vld [vmem:[%s1172 + $0x54] sm:$0xf]
        %v1195 = vld [vmem:[%s1172 + $0x58] sm:$0xf]
        %v1196 = vld [vmem:[%s1172 + $0x5c] sm:$0xf]
        %v1197 = vld [vmem:[%s1172 + $0x60] sm:$0xf]
        %v1198 = vld [vmem:[%s1172 + $0x64] sm:$0xf]
        %v1199 = vld [vmem:[%s1172 + $0x68] sm:$0xf]
        %v1200 = vld [vmem:[%s1172 + $0x6c] sm:$0xf]
        %v1201 = vld [vmem:[%s1172 + $0x70] sm:$0xf]
        %v1202 = vld [vmem:[%s1172 + $0x74] sm:$0xf]
        %v1203 = vld [vmem:[%s1172 + $0x78] sm:$0xf]
        %v1204 = vld [vmem:[%s1172 + $0x7c] sm:$0xf]
        %v1237 = vunpack.c.l.b16 %v1173
        %v1238 = vunpack.c.l.b16 %v1174
        %v1239 = vunpack.c.l.b16 %v1175
        %v1240 = vunpack.c.l.b16 %v1176
        %v1241 = vunpack.c.l.b16 %v1177
        %v1242 = vunpack.c.l.b16 %v1178
        %v1243 = vunpack.c.l.b16 %v1179
        %v1244 = vunpack.c.l.b16 %v1180
        %v1245 = vunpack.c.l.b16 %v1181
        %v1246 = vunpack.c.l.b16 %v1182
        %v1247 = vunpack.c.l.b16 %v1183
        %v1248 = vunpack.c.l.b16 %v1184
        %v1249 = vunpack.c.l.b16 %v1185
        %v1250 = vunpack.c.l.b16 %v1186
        %v1251 = vunpack.c.l.b16 %v1187
        %v1252 = vunpack.c.l.b16 %v1188
        %v1253 = vunpack.c.l.b16 %v1189
        %v1254 = vunpack.c.l.b16 %v1190
        %v1255 = vunpack.c.l.b16 %v1191
        %v1256 = vunpack.c.l.b16 %v1192
        %v1257 = vunpack.c.l.b16 %v1193
        %v1258 = vunpack.c.l.b16 %v1194
        %v1259 = vunpack.c.l.b16 %v1195
        %v1260 = vunpack.c.l.b16 %v1196
        %v1261 = vunpack.c.l.b16 %v1197
        %v1262 = vunpack.c.l.b16 %v1198
        %v1263 = vunpack.c.l.b16 %v1199
        %v1264 = vunpack.c.l.b16 %v1200
        %v1265 = vunpack.c.l.b16 %v1201
        %v1266 = vunpack.c.l.b16 %v1202
        %v1267 = vunpack.c.l.b16 %v1203
        %v1268 = vunpack.c.l.b16 %v1204
        %v1269 = vpack.c.b16 %v1238, %v1237
        %v1270 = vpack.c.b16 %v1240, %v1239
        %v1271 = vpack.c.b16 %v1242, %v1241
        %v1272 = vpack.c.b16 %v1244, %v1243
        %v1273 = vpack.c.b16 %v1246, %v1245
        %v1274 = vpack.c.b16 %v1248, %v1247
        %v1275 = vpack.c.b16 %v1250, %v1249
        %v1276 = vpack.c.b16 %v1252, %v1251
        %v1277 = vpack.c.b16 %v1254, %v1253
        %v1278 = vpack.c.b16 %v1256, %v1255
        %v1279 = vpack.c.b16 %v1258, %v1257
        %v1280 = vpack.c.b16 %v1260, %v1259
        %v1281 = vpack.c.b16 %v1262, %v1261
        %v1282 = vpack.c.b16 %v1264, %v1263
        %v1283 = vpack.c.b16 %v1266, %v1265
        %v1284 = vpack.c.b16 %v1268, %v1267
        %1301 = vmatprep.subr.bf16.mxu0 0
        %1302 = vmatpush1.bf16.msra.mxu0 %v1269
        %1303 = vmatprep.subr.bf16.mxu0 0
        %1304 = vmatpush1.bf16.msra.mxu0 %v1270
        %1305 = vmatprep.subr.bf16.mxu0 0
        %1306 = vmatpush1.bf16.msra.mxu0 %v1271
        %1307 = vmatprep.subr.bf16.mxu0 0
        %1308 = vmatpush1.bf16.msra.mxu0 %v1272
        %1309 = vmatprep.subr.bf16.mxu0 0
        %1310 = vmatpush1.bf16.msra.mxu0 %v1273
        %1311 = vmatprep.subr.bf16.mxu0 0
        %1312 = vmatpush1.bf16.msra.mxu0 %v1274
        %1313 = vmatprep.subr.bf16.mxu0 0
        %1314 = vmatpush1.bf16.msra.mxu0 %v1275
        %1315 = vmatprep.subr.bf16.mxu0 0
        %1316 = vmatpush1.bf16.msra.mxu0 %v1276
        %1317 = vmatprep.subr.bf16.mxu0 0
        %1318 = vmatpush1.bf16.msra.mxu0 %v1277
        %1319 = vmatprep.subr.bf16.mxu0 0
        %1320 = vmatpush1.bf16.msra.mxu0 %v1278
        %1321 = vmatprep.subr.bf16.mxu0 0
        %1322 = vmatpush1.bf16.msra.mxu0 %v1279
        %1323 = vmatprep.subr.bf16.mxu0 0
        %1324 = vmatpush1.bf16.msra.mxu0 %v1280
        %1325 = vmatprep.subr.bf16.mxu0 0
        %1326 = vmatpush1.bf16.msra.mxu0 %v1281
        %1327 = vmatprep.subr.bf16.mxu0 0
        %1328 = vmatpush1.bf16.msra.mxu0 %v1282
        %1329 = vmatprep.subr.bf16.mxu0 0
        %1330 = vmatpush1.bf16.msra.mxu0 %v1283
        %1331 = vmatprep.subr.bf16.mxu0 0
        %1332 = vmatpush1.bf16.msra.mxu0 %v1284
        %1333 = vmatprep.mubr.bf16.mxu0 %v762
        %1334 = vmatmul.mubr.bf16.gmra.mrb[0].mxu0 %v761
        %v1335 = vpop.f32.mrb[0].mxu0
        %v1336 = vadd.f32 0.0, %v1335
        %v1337 = vpop.f32.mrb[0].mxu0
        %v1338 = vpop.f32.mrb[0].mxu0
        %v1339 = vpop.f32.mrb[0].mxu0
        %1340 = vdwg.mxu0
        %s1341 = scalar_lea.vmem [#allocation5], 8
        %v1342 = vld [vmem:[%s1341] sm:$0xf]
        %v1343 = vpack.c.bf16 %v1336, %v1336
        %v1345 = vsel %vm1075, %v1342, 0
        %v1348 = vand.u32 %v1343, %v1082
        %1350 = vmatprep.subr.bf16.mxu0 0
        %1351 = vmatpush1.bf16.msra.mxu0 %v1348
        %1352 = vmatprep.subr.bf16.mxu0 0
        %1353 = vmatpush1.bf16.msra.mxu0 0
        %1354 = vmatprep.subr.bf16.mxu0 0
        %1355 = vmatpush1.bf16.msra.mxu0 0
        %1356 = vmatprep.subr.bf16.mxu0 0
        %1357 = vmatpush1.bf16.msra.mxu0 0
        %1358 = vmatprep.subr.bf16.mxu0 0
        %1359 = vmatpush1.bf16.msra.mxu0 0
        %1360 = vmatprep.subr.bf16.mxu0 0
        %1361 = vmatpush1.bf16.msra.mxu0 0
        %1362 = vmatprep.subr.bf16.mxu0 0
        %1363 = vmatpush1.bf16.msra.mxu0 0
        %1364 = vmatprep.subr.bf16.mxu0 0
        %1365 = vmatpush1.bf16.msra.mxu0 0
        %1366 = vmatprep.subr.bf16.mxu0 0
        %1367 = vmatpush1.bf16.msra.mxu0 0
        %1368 = vmatprep.subr.bf16.mxu0 0
        %1369 = vmatpush1.bf16.msra.mxu0 0
        %1370 = vmatprep.subr.bf16.mxu0 0
        %1371 = vmatpush1.bf16.msra.mxu0 0
        %1372 = vmatprep.subr.bf16.mxu0 0
        %1373 = vmatpush1.bf16.msra.mxu0 0
        %1374 = vmatprep.subr.bf16.mxu0 0
        %1375 = vmatpush1.bf16.msra.mxu0 0
        %1376 = vmatprep.subr.bf16.mxu0 0
        %1377 = vmatpush1.bf16.msra.mxu0 0
        %1378 = vmatprep.subr.bf16.mxu0 0
        %1379 = vmatpush1.bf16.msra.mxu0 0
        %1380 = vmatprep.subr.bf16.mxu0 0
        %1381 = vmatpush1.bf16.msra.mxu0 0
        %1382 = vmatprep.mubr.bf16.mxu0 0
        %1383 = vmatmul.mubr.bf16.gmra.mrb[0].mxu0 %v1345
        %v1384 = vpop.f32.mrb[0].mxu0
        %v1385 = vadd.f32 0.0, %v1384
        %v1386 = vpop.f32.mrb[0].mxu0
        %v1387 = vpop.f32.mrb[0].mxu0
        %v1388 = vpop.f32.mrb[0].mxu0
        %1389 = vdwg.mxu0
        %v1390 = vadd.f32 %v1167, %v1385
        %s1391 = scalar_lea.vmem [#allocation3], 384
        %v1392 = vld [vmem:[%s1391] sm:$0xf]
        %v1393 = vld [vmem:[%s1391 + $0x4] sm:$0xf]
        %v1394 = vld [vmem:[%s1391 + $0x8] sm:$0xf]
        %v1395 = vld [vmem:[%s1391 + $0xc] sm:$0xf]
        %v1396 = vld [vmem:[%s1391 + $0x10] sm:$0xf]
        %v1397 = vld [vmem:[%s1391 + $0x14] sm:$0xf]
        %v1398 = vld [vmem:[%s1391 + $0x18] sm:$0xf]
        %v1399 = vld [vmem:[%s1391 + $0x1c] sm:$0xf]
        %v1400 = vld [vmem:[%s1391 + $0x20] sm:$0xf]
        %v1401 = vld [vmem:[%s1391 + $0x24] sm:$0xf]
        %v1402 = vld [vmem:[%s1391 + $0x28] sm:$0xf]
        %v1403 = vld [vmem:[%s1391 + $0x2c] sm:$0xf]
        %v1404 = vld [vmem:[%s1391 + $0x30] sm:$0xf]
        %v1405 = vld [vmem:[%s1391 + $0x34] sm:$0xf]
        %v1406 = vld [vmem:[%s1391 + $0x38] sm:$0xf]
        %v1407 = vld [vmem:[%s1391 + $0x3c] sm:$0xf]
        %v1408 = vld [vmem:[%s1391 + $0x40] sm:$0xf]
        %v1409 = vld [vmem:[%s1391 + $0x44] sm:$0xf]
        %v1410 = vld [vmem:[%s1391 + $0x48] sm:$0xf]
        %v1411 = vld [vmem:[%s1391 + $0x4c] sm:$0xf]
        %v1412 = vld [vmem:[%s1391 + $0x50] sm:$0xf]
        %v1413 = vld [vmem:[%s1391 + $0x54] sm:$0xf]
        %v1414 = vld [vmem:[%s1391 + $0x58] sm:$0xf]
        %v1415 = vld [vmem:[%s1391 + $0x5c] sm:$0xf]
        %v1416 = vld [vmem:[%s1391 + $0x60] sm:$0xf]
        %v1417 = vld [vmem:[%s1391 + $0x64] sm:$0xf]
        %v1418 = vld [vmem:[%s1391 + $0x68] sm:$0xf]
        %v1419 = vld [vmem:[%s1391 + $0x6c] sm:$0xf]
        %v1420 = vld [vmem:[%s1391 + $0x70] sm:$0xf]
        %v1421 = vld [vmem:[%s1391 + $0x74] sm:$0xf]
        %v1422 = vld [vmem:[%s1391 + $0x78] sm:$0xf]
        %v1423 = vld [vmem:[%s1391 + $0x7c] sm:$0xf]
        %v1456 = vunpack.c.l.b16 %v1392
        %v1457 = vunpack.c.l.b16 %v1393
        %v1458 = vunpack.c.l.b16 %v1394
        %v1459 = vunpack.c.l.b16 %v1395
        %v1460 = vunpack.c.l.b16 %v1396
        %v1461 = vunpack.c.l.b16 %v1397
        %v1462 = vunpack.c.l.b16 %v1398
        %v1463 = vunpack.c.l.b16 %v1399
        %v1464 = vunpack.c.l.b16 %v1400
        %v1465 = vunpack.c.l.b16 %v1401
        %v1466 = vunpack.c.l.b16 %v1402
        %v1467 = vunpack.c.l.b16 %v1403
        %v1468 = vunpack.c.l.b16 %v1404
        %v1469 = vunpack.c.l.b16 %v1405
        %v1470 = vunpack.c.l.b16 %v1406
        %v1471 = vunpack.c.l.b16 %v1407
        %v1472 = vunpack.c.l.b16 %v1408
        %v1473 = vunpack.c.l.b16 %v1409
        %v1474 = vunpack.c.l.b16 %v1410
        %v1475 = vunpack.c.l.b16 %v1411
        %v1476 = vunpack.c.l.b16 %v1412
        %v1477 = vunpack.c.l.b16 %v1413
        %v1478 = vunpack.c.l.b16 %v1414
        %v1479 = vunpack.c.l.b16 %v1415
        %v1480 = vunpack.c.l.b16 %v1416
        %v1481 = vunpack.c.l.b16 %v1417
        %v1482 = vunpack.c.l.b16 %v1418
        %v1483 = vunpack.c.l.b16 %v1419
        %v1484 = vunpack.c.l.b16 %v1420
        %v1485 = vunpack.c.l.b16 %v1421
        %v1486 = vunpack.c.l.b16 %v1422
        %v1487 = vunpack.c.l.b16 %v1423
        %v1488 = vpack.c.b16 %v1457, %v1456
        %v1489 = vpack.c.b16 %v1459, %v1458
        %v1490 = vpack.c.b16 %v1461, %v1460
        %v1491 = vpack.c.b16 %v1463, %v1462
        %v1492 = vpack.c.b16 %v1465, %v1464
        %v1493 = vpack.c.b16 %v1467, %v1466
        %v1494 = vpack.c.b16 %v1469, %v1468
        %v1495 = vpack.c.b16 %v1471, %v1470
        %v1496 = vpack.c.b16 %v1473, %v1472
        %v1497 = vpack.c.b16 %v1475, %v1474
        %v1498 = vpack.c.b16 %v1477, %v1476
        %v1499 = vpack.c.b16 %v1479, %v1478
        %v1500 = vpack.c.b16 %v1481, %v1480
        %v1501 = vpack.c.b16 %v1483, %v1482
        %v1502 = vpack.c.b16 %v1485, %v1484
        %v1503 = vpack.c.b16 %v1487, %v1486
        %1520 = vmatprep.subr.bf16.mxu0 0
        %1521 = vmatpush1.bf16.msra.mxu0 %v1488
        %1522 = vmatprep.subr.bf16.mxu0 0
        %1523 = vmatpush1.bf16.msra.mxu0 %v1489
        %1524 = vmatprep.subr.bf16.mxu0 0
        %1525 = vmatpush1.bf16.msra.mxu0 %v1490
        %1526 = vmatprep.subr.bf16.mxu0 0
        %1527 = vmatpush1.bf16.msra.mxu0 %v1491
        %1528 = vmatprep.subr.bf16.mxu0 0
        %1529 = vmatpush1.bf16.msra.mxu0 %v1492
        %1530 = vmatprep.subr.bf16.mxu0 0
        %1531 = vmatpush1.bf16.msra.mxu0 %v1493
        %1532 = vmatprep.subr.bf16.mxu0 0
        %1533 = vmatpush1.bf16.msra.mxu0 %v1494
        %1534 = vmatprep.subr.bf16.mxu0 0
        %1535 = vmatpush1.bf16.msra.mxu0 %v1495
        %1536 = vmatprep.subr.bf16.mxu0 0
        %1537 = vmatpush1.bf16.msra.mxu0 %v1496
        %1538 = vmatprep.subr.bf16.mxu0 0
        %1539 = vmatpush1.bf16.msra.mxu0 %v1497
        %1540 = vmatprep.subr.bf16.mxu0 0
        %1541 = vmatpush1.bf16.msra.mxu0 %v1498
        %1542 = vmatprep.subr.bf16.mxu0 0
        %1543 = vmatpush1.bf16.msra.mxu0 %v1499
        %1544 = vmatprep.subr.bf16.mxu0 0
        %1545 = vmatpush1.bf16.msra.mxu0 %v1500
        %1546 = vmatprep.subr.bf16.mxu0 0
        %1547 = vmatpush1.bf16.msra.mxu0 %v1501
        %1548 = vmatprep.subr.bf16.mxu0 0
        %1549 = vmatpush1.bf16.msra.mxu0 %v1502
        %1550 = vmatprep.subr.bf16.mxu0 0
        %1551 = vmatpush1.bf16.msra.mxu0 %v1503
        %1552 = vmatprep.mubr.bf16.mxu0 %v762
        %1553 = vmatmul.mubr.bf16.gmra.mrb[0].mxu0 %v761
        %v1554 = vpop.f32.mrb[0].mxu0
        %v1555 = vadd.f32 0.0, %v1554
        %v1556 = vpop.f32.mrb[0].mxu0
        %v1557 = vpop.f32.mrb[0].mxu0
        %v1558 = vpop.f32.mrb[0].mxu0
        %1559 = vdwg.mxu0
        %s1560 = scalar_lea.vmem [#allocation5], 12
        %v1561 = vld [vmem:[%s1560] sm:$0xf]
        %v1562 = vpack.c.bf16 %v1555, %v1555
        %v1564 = vsel %vm1075, %v1561, 0
        %v1567 = vand.u32 %v1562, %v1082
        %1569 = vmatprep.subr.bf16.mxu0 0
        %1570 = vmatpush1.bf16.msra.mxu0 %v1567
        %1571 = vmatprep.subr.bf16.mxu0 0
        %1572 = vmatpush1.bf16.msra.mxu0 0
        %1573 = vmatprep.subr.bf16.mxu0 0
        %1574 = vmatpush1.bf16.msra.mxu0 0
        %1575 = vmatprep.subr.bf16.mxu0 0
        %1576 = vmatpush1.bf16.msra.mxu0 0
        %1577 = vmatprep.subr.bf16.mxu0 0
        %1578 = vmatpush1.bf16.msra.mxu0 0
        %1579 = vmatprep.subr.bf16.mxu0 0
        %1580 = vmatpush1.bf16.msra.mxu0 0
        %1581 = vmatprep.subr.bf16.mxu0 0
        %1582 = vmatpush1.bf16.msra.mxu0 0
        %1583 = vmatprep.subr.bf16.mxu0 0
        %1584 = vmatpush1.bf16.msra.mxu0 0
        %1585 = vmatprep.subr.bf16.mxu0 0
        %1586 = vmatpush1.bf16.msra.mxu0 0
        %1587 = vmatprep.subr.bf16.mxu0 0
        %1588 = vmatpush1.bf16.msra.mxu0 0
        %1589 = vmatprep.subr.bf16.mxu0 0
        %1590 = vmatpush1.bf16.msra.mxu0 0
        %1591 = vmatprep.subr.bf16.mxu0 0
        %1592 = vmatpush1.bf16.msra.mxu0 0
        %1593 = vmatprep.subr.bf16.mxu0 0
        %1594 = vmatpush1.bf16.msra.mxu0 0
        %1595 = vmatprep.subr.bf16.mxu0 0
        %1596 = vmatpush1.bf16.msra.mxu0 0
        %1597 = vmatprep.subr.bf16.mxu0 0
        %1598 = vmatpush1.bf16.msra.mxu0 0
        %1599 = vmatprep.subr.bf16.mxu0 0
        %1600 = vmatpush1.bf16.msra.mxu0 0
        %1601 = vmatprep.mubr.bf16.mxu0 0
        %1602 = vmatmul.mubr.bf16.gmra.mrb[0].mxu0 %v1564
        %v1603 = vpop.f32.mrb[0].mxu0
        %v1604 = vadd.f32 0.0, %v1603
        %v1605 = vpop.f32.mrb[0].mxu0
        %v1606 = vpop.f32.mrb[0].mxu0
        %v1607 = vpop.f32.mrb[0].mxu0
        %1608 = vdwg.mxu0
        %v1609 = vadd.f32 %v1390, %v1604
        %s1610 = scalar_lea.vmem [#allocation3], 512
        %v1611 = vld [vmem:[%s1610] sm:$0xf]
        %v1612 = vld [vmem:[%s1610 + $0x4] sm:$0xf]
        %v1613 = vld [vmem:[%s1610 + $0x8] sm:$0xf]
        %v1614 = vld [vmem:[%s1610 + $0xc] sm:$0xf]
        %v1615 = vld [vmem:[%s1610 + $0x10] sm:$0xf]
        %v1616 = vld [vmem:[%s1610 + $0x14] sm:$0xf]
        %v1617 = vld [vmem:[%s1610 + $0x18] sm:$0xf]
        %v1618 = vld [vmem:[%s1610 + $0x1c] sm:$0xf]
        %v1619 = vld [vmem:[%s1610 + $0x20] sm:$0xf]
        %v1620 = vld [vmem:[%s1610 + $0x24] sm:$0xf]
        %v1621 = vld [vmem:[%s1610 + $0x28] sm:$0xf]
        %v1622 = vld [vmem:[%s1610 + $0x2c] sm:$0xf]
        %v1623 = vld [vmem:[%s1610 + $0x30] sm:$0xf]
        %v1624 = vld [vmem:[%s1610 + $0x34] sm:$0xf]
        %v1625 = vld [vmem:[%s1610 + $0x38] sm:$0xf]
        %v1626 = vld [vmem:[%s1610 + $0x3c] sm:$0xf]
        %v1627 = vld [vmem:[%s1610 + $0x40] sm:$0xf]
        %v1628 = vld [vmem:[%s1610 + $0x44] sm:$0xf]
        %v1629 = vld [vmem:[%s1610 + $0x48] sm:$0xf]
        %v1630 = vld [vmem:[%s1610 + $0x4c] sm:$0xf]
        %v1631 = vld [vmem:[%s1610 + $0x50] sm:$0xf]
        %v1632 = vld [vmem:[%s1610 + $0x54] sm:$0xf]
        %v1633 = vld [vmem:[%s1610 + $0x58] sm:$0xf]
        %v1634 = vld [vmem:[%s1610 + $0x5c] sm:$0xf]
        %v1635 = vld [vmem:[%s1610 + $0x60] sm:$0xf]
        %v1636 = vld [vmem:[%s1610 + $0x64] sm:$0xf]
        %v1637 = vld [vmem:[%s1610 + $0x68] sm:$0xf]
        %v1638 = vld [vmem:[%s1610 + $0x6c] sm:$0xf]
        %v1639 = vld [vmem:[%s1610 + $0x70] sm:$0xf]
        %v1640 = vld [vmem:[%s1610 + $0x74] sm:$0xf]
        %v1641 = vld [vmem:[%s1610 + $0x78] sm:$0xf]
        %v1642 = vld [vmem:[%s1610 + $0x7c] sm:$0xf]
        %v1675 = vunpack.c.l.b16 %v1611
        %v1676 = vunpack.c.l.b16 %v1612
        %v1677 = vunpack.c.l.b16 %v1613
        %v1678 = vunpack.c.l.b16 %v1614
        %v1679 = vunpack.c.l.b16 %v1615
        %v1680 = vunpack.c.l.b16 %v1616
        %v1681 = vunpack.c.l.b16 %v1617
        %v1682 = vunpack.c.l.b16 %v1618
        %v1683 = vunpack.c.l.b16 %v1619
        %v1684 = vunpack.c.l.b16 %v1620
        %v1685 = vunpack.c.l.b16 %v1621
        %v1686 = vunpack.c.l.b16 %v1622
        %v1687 = vunpack.c.l.b16 %v1623
        %v1688 = vunpack.c.l.b16 %v1624
        %v1689 = vunpack.c.l.b16 %v1625
        %v1690 = vunpack.c.l.b16 %v1626
        %v1691 = vunpack.c.l.b16 %v1627
        %v1692 = vunpack.c.l.b16 %v1628
        %v1693 = vunpack.c.l.b16 %v1629
        %v1694 = vunpack.c.l.b16 %v1630
        %v1695 = vunpack.c.l.b16 %v1631
        %v1696 = vunpack.c.l.b16 %v1632
        %v1697 = vunpack.c.l.b16 %v1633
        %v1698 = vunpack.c.l.b16 %v1634
        %v1699 = vunpack.c.l.b16 %v1635
        %v1700 = vunpack.c.l.b16 %v1636
        %v1701 = vunpack.c.l.b16 %v1637
        %v1702 = vunpack.c.l.b16 %v1638
        %v1703 = vunpack.c.l.b16 %v1639
        %v1704 = vunpack.c.l.b16 %v1640
        %v1705 = vunpack.c.l.b16 %v1641
        %v1706 = vunpack.c.l.b16 %v1642
        %v1707 = vpack.c.b16 %v1676, %v1675
        %v1708 = vpack.c.b16 %v1678, %v1677
        %v1709 = vpack.c.b16 %v1680, %v1679
        %v1710 = vpack.c.b16 %v1682, %v1681
        %v1711 = vpack.c.b16 %v1684, %v1683
        %v1712 = vpack.c.b16 %v1686, %v1685
        %v1713 = vpack.c.b16 %v1688, %v1687
        %v1714 = vpack.c.b16 %v1690, %v1689
        %v1715 = vpack.c.b16 %v1692, %v1691
        %v1716 = vpack.c.b16 %v1694, %v1693
        %v1717 = vpack.c.b16 %v1696, %v1695
        %v1718 = vpack.c.b16 %v1698, %v1697
        %v1719 = vpack.c.b16 %v1700, %v1699
        %v1720 = vpack.c.b16 %v1702, %v1701
        %v1721 = vpack.c.b16 %v1704, %v1703
        %v1722 = vpack.c.b16 %v1706, %v1705
        %1739 = vmatprep.subr.bf16.mxu0 0
        %1740 = vmatpush1.bf16.msra.mxu0 %v1707
        %1741 = vmatprep.subr.bf16.mxu0 0
        %1742 = vmatpush1.bf16.msra.mxu0 %v1708
        %1743 = vmatprep.subr.bf16.mxu0 0
        %1744 = vmatpush1.bf16.msra.mxu0 %v1709
        %1745 = vmatprep.subr.bf16.mxu0 0
        %1746 = vmatpush1.bf16.msra.mxu0 %v1710
        %1747 = vmatprep.subr.bf16.mxu0 0
        %1748 = vmatpush1.bf16.msra.mxu0 %v1711
        %1749 = vmatprep.subr.bf16.mxu0 0
        %1750 = vmatpush1.bf16.msra.mxu0 %v1712
        %1751 = vmatprep.subr.bf16.mxu0 0
        %1752 = vmatpush1.bf16.msra.mxu0 %v1713
        %1753 = vmatprep.subr.bf16.mxu0 0
        %1754 = vmatpush1.bf16.msra.mxu0 %v1714
        %1755 = vmatprep.subr.bf16.mxu0 0
        %1756 = vmatpush1.bf16.msra.mxu0 %v1715
        %1757 = vmatprep.subr.bf16.mxu0 0
        %1758 = vmatpush1.bf16.msra.mxu0 %v1716
        %1759 = vmatprep.subr.bf16.mxu0 0
        %1760 = vmatpush1.bf16.msra.mxu0 %v1717
        %1761 = vmatprep.subr.bf16.mxu0 0
        %1762 = vmatpush1.bf16.msra.mxu0 %v1718
        %1763 = vmatprep.subr.bf16.mxu0 0
        %1764 = vmatpush1.bf16.msra.mxu0 %v1719
        %1765 = vmatprep.subr.bf16.mxu0 0
        %1766 = vmatpush1.bf16.msra.mxu0 %v1720
        %1767 = vmatprep.subr.bf16.mxu0 0
        %1768 = vmatpush1.bf16.msra.mxu0 %v1721
        %1769 = vmatprep.subr.bf16.mxu0 0
        %1770 = vmatpush1.bf16.msra.mxu0 %v1722
        %1771 = vmatprep.mubr.bf16.mxu0 %v762
        %1772 = vmatmul.mubr.bf16.gmra.mrb[0].mxu0 %v761
        %v1773 = vpop.f32.mrb[0].mxu0
        %v1774 = vadd.f32 0.0, %v1773
        %v1775 = vpop.f32.mrb[0].mxu0
        %v1776 = vpop.f32.mrb[0].mxu0
        %v1777 = vpop.f32.mrb[0].mxu0
        %1778 = vdwg.mxu0
        %s1779 = scalar_lea.vmem [#allocation5], 16
        %v1780 = vld [vmem:[%s1779] sm:$0xf]
        %v1781 = vpack.c.bf16 %v1774, %v1774
        %v1783 = vsel %vm1075, %v1780, 0
        %v1786 = vand.u32 %v1781, %v1082
        %1788 = vmatprep.subr.bf16.mxu0 0
        %1789 = vmatpush1.bf16.msra.mxu0 %v1786
        %1790 = vmatprep.subr.bf16.mxu0 0
        %1791 = vmatpush1.bf16.msra.mxu0 0
        %1792 = vmatprep.subr.bf16.mxu0 0
        %1793 = vmatpush1.bf16.msra.mxu0 0
        %1794 = vmatprep.subr.bf16.mxu0 0
        %1795 = vmatpush1.bf16.msra.mxu0 0
        %1796 = vmatprep.subr.bf16.mxu0 0
        %1797 = vmatpush1.bf16.msra.mxu0 0
        %1798 = vmatprep.subr.bf16.mxu0 0
        %1799 = vmatpush1.bf16.msra.mxu0 0
        %1800 = vmatprep.subr.bf16.mxu0 0
        %1801 = vmatpush1.bf16.msra.mxu0 0
        %1802 = vmatprep.subr.bf16.mxu0 0
        %1803 = vmatpush1.bf16.msra.mxu0 0
        %1804 = vmatprep.subr.bf16.mxu0 0
        %1805 = vmatpush1.bf16.msra.mxu0 0
        %1806 = vmatprep.subr.bf16.mxu0 0
        %1807 = vmatpush1.bf16.msra.mxu0 0
        %1808 = vmatprep.subr.bf16.mxu0 0
        %1809 = vmatpush1.bf16.msra.mxu0 0
        %1810 = vmatprep.subr.bf16.mxu0 0
        %1811 = vmatpush1.bf16.msra.mxu0 0
        %1812 = vmatprep.subr.bf16.mxu0 0
        %1813 = vmatpush1.bf16.msra.mxu0 0
        %1814 = vmatprep.subr.bf16.mxu0 0
        %1815 = vmatpush1.bf16.msra.mxu0 0
        %1816 = vmatprep.subr.bf16.mxu0 0
        %1817 = vmatpush1.bf16.msra.mxu0 0
        %1818 = vmatprep.subr.bf16.mxu0 0
        %1819 = vmatpush1.bf16.msra.mxu0 0
        %1820 = vmatprep.mubr.bf16.mxu0 0
        %1821 = vmatmul.mubr.bf16.gmra.mrb[0].mxu0 %v1783
        %v1822 = vpop.f32.mrb[0].mxu0
        %v1823 = vadd.f32 0.0, %v1822
        %v1824 = vpop.f32.mrb[0].mxu0
        %v1825 = vpop.f32.mrb[0].mxu0
        %v1826 = vpop.f32.mrb[0].mxu0
        %1827 = vdwg.mxu0
        %v1828 = vadd.f32 %v1609, %v1823
        %s1829 = scalar_lea.vmem [#allocation3], 640
        %v1830 = vld [vmem:[%s1829] sm:$0xf]
        %v1831 = vld [vmem:[%s1829 + $0x4] sm:$0xf]
        %v1832 = vld [vmem:[%s1829 + $0x8] sm:$0xf]
        %v1833 = vld [vmem:[%s1829 + $0xc] sm:$0xf]
        %v1834 = vld [vmem:[%s1829 + $0x10] sm:$0xf]
        %v1835 = vld [vmem:[%s1829 + $0x14] sm:$0xf]
        %v1836 = vld [vmem:[%s1829 + $0x18] sm:$0xf]
        %v1837 = vld [vmem:[%s1829 + $0x1c] sm:$0xf]
        %v1838 = vld [vmem:[%s1829 + $0x20] sm:$0xf]
        %v1839 = vld [vmem:[%s1829 + $0x24] sm:$0xf]
        %v1840 = vld [vmem:[%s1829 + $0x28] sm:$0xf]
        %v1841 = vld [vmem:[%s1829 + $0x2c] sm:$0xf]
        %v1842 = vld [vmem:[%s1829 + $0x30] sm:$0xf]
        %v1843 = vld [vmem:[%s1829 + $0x34] sm:$0xf]
        %v1844 = vld [vmem:[%s1829 + $0x38] sm:$0xf]
        %v1845 = vld [vmem:[%s1829 + $0x3c] sm:$0xf]
        %v1846 = vld [vmem:[%s1829 + $0x40] sm:$0xf]
        %v1847 = vld [vmem:[%s1829 + $0x44] sm:$0xf]
        %v1848 = vld [vmem:[%s1829 + $0x48] sm:$0xf]
        %v1849 = vld [vmem:[%s1829 + $0x4c] sm:$0xf]
        %v1850 = vld [vmem:[%s1829 + $0x50] sm:$0xf]
        %v1851 = vld [vmem:[%s1829 + $0x54] sm:$0xf]
        %v1852 = vld [vmem:[%s1829 + $0x58] sm:$0xf]
        %v1853 = vld [vmem:[%s1829 + $0x5c] sm:$0xf]
        %v1854 = vld [vmem:[%s1829 + $0x60] sm:$0xf]
        %v1855 = vld [vmem:[%s1829 + $0x64] sm:$0xf]
        %v1856 = vld [vmem:[%s1829 + $0x68] sm:$0xf]
        %v1857 = vld [vmem:[%s1829 + $0x6c] sm:$0xf]
        %v1858 = vld [vmem:[%s1829 + $0x70] sm:$0xf]
        %v1859 = vld [vmem:[%s1829 + $0x74] sm:$0xf]
        %v1860 = vld [vmem:[%s1829 + $0x78] sm:$0xf]
        %v1861 = vld [vmem:[%s1829 + $0x7c] sm:$0xf]
        %v1894 = vunpack.c.l.b16 %v1830
        %v1895 = vunpack.c.l.b16 %v1831
        %v1896 = vunpack.c.l.b16 %v1832
        %v1897 = vunpack.c.l.b16 %v1833
        %v1898 = vunpack.c.l.b16 %v1834
        %v1899 = vunpack.c.l.b16 %v1835
        %v1900 = vunpack.c.l.b16 %v1836
        %v1901 = vunpack.c.l.b16 %v1837
        %v1902 = vunpack.c.l.b16 %v1838
        %v1903 = vunpack.c.l.b16 %v1839
        %v1904 = vunpack.c.l.b16 %v1840
        %v1905 = vunpack.c.l.b16 %v1841
        %v1906 = vunpack.c.l.b16 %v1842
        %v1907 = vunpack.c.l.b16 %v1843
        %v1908 = vunpack.c.l.b16 %v1844
        %v1909 = vunpack.c.l.b16 %v1845
        %v1910 = vunpack.c.l.b16 %v1846
        %v1911 = vunpack.c.l.b16 %v1847
        %v1912 = vunpack.c.l.b16 %v1848
        %v1913 = vunpack.c.l.b16 %v1849
        %v1914 = vunpack.c.l.b16 %v1850
        %v1915 = vunpack.c.l.b16 %v1851
        %v1916 = vunpack.c.l.b16 %v1852
        %v1917 = vunpack.c.l.b16 %v1853
        %v1918 = vunpack.c.l.b16 %v1854
        %v1919 = vunpack.c.l.b16 %v1855
        %v1920 = vunpack.c.l.b16 %v1856
        %v1921 = vunpack.c.l.b16 %v1857
        %v1922 = vunpack.c.l.b16 %v1858
        %v1923 = vunpack.c.l.b16 %v1859
        %v1924 = vunpack.c.l.b16 %v1860
        %v1925 = vunpack.c.l.b16 %v1861
        %v1926 = vpack.c.b16 %v1895, %v1894
        %v1927 = vpack.c.b16 %v1897, %v1896
        %v1928 = vpack.c.b16 %v1899, %v1898
        %v1929 = vpack.c.b16 %v1901, %v1900
        %v1930 = vpack.c.b16 %v1903, %v1902
        %v1931 = vpack.c.b16 %v1905, %v1904
        %v1932 = vpack.c.b16 %v1907, %v1906
        %v1933 = vpack.c.b16 %v1909, %v1908
        %v1934 = vpack.c.b16 %v1911, %v1910
        %v1935 = vpack.c.b16 %v1913, %v1912
        %v1936 = vpack.c.b16 %v1915, %v1914
        %v1937 = vpack.c.b16 %v1917, %v1916
        %v1938 = vpack.c.b16 %v1919, %v1918
        %v1939 = vpack.c.b16 %v1921, %v1920
        %v1940 = vpack.c.b16 %v1923, %v1922
        %v1941 = vpack.c.b16 %v1925, %v1924
        %1958 = vmatprep.subr.bf16.mxu0 0
        %1959 = vmatpush1.bf16.msra.mxu0 %v1926
        %1960 = vmatprep.subr.bf16.mxu0 0
        %1961 = vmatpush1.bf16.msra.mxu0 %v1927
        %1962 = vmatprep.subr.bf16.mxu0 0
        %1963 = vmatpush1.bf16.msra.mxu0 %v1928
        %1964 = vmatprep.subr.bf16.mxu0 0
        %1965 = vmatpush1.bf16.msra.mxu0 %v1929
        %1966 = vmatprep.subr.bf16.mxu0 0
        %1967 = vmatpush1.bf16.msra.mxu0 %v1930
        %1968 = vmatprep.subr.bf16.mxu0 0
        %1969 = vmatpush1.bf16.msra.mxu0 %v1931
        %1970 = vmatprep.subr.bf16.mxu0 0
        %1971 = vmatpush1.bf16.msra.mxu0 %v1932
        %1972 = vmatprep.subr.bf16.mxu0 0
        %1973 = vmatpush1.bf16.msra.mxu0 %v1933
        %1974 = vmatprep.subr.bf16.mxu0 0
        %1975 = vmatpush1.bf16.msra.mxu0 %v1934
        %1976 = vmatprep.subr.bf16.mxu0 0
        %1977 = vmatpush1.bf16.msra.mxu0 %v1935
        %1978 = vmatprep.subr.bf16.mxu0 0
        %1979 = vmatpush1.bf16.msra.mxu0 %v1936
        %1980 = vmatprep.subr.bf16.mxu0 0
        %1981 = vmatpush1.bf16.msra.mxu0 %v1937
        %1982 = vmatprep.subr.bf16.mxu0 0
        %1983 = vmatpush1.bf16.msra.mxu0 %v1938
        %1984 = vmatprep.subr.bf16.mxu0 0
        %1985 = vmatpush1.bf16.msra.mxu0 %v1939
        %1986 = vmatprep.subr.bf16.mxu0 0
        %1987 = vmatpush1.bf16.msra.mxu0 %v1940
        %1988 = vmatprep.subr.bf16.mxu0 0
        %1989 = vmatpush1.bf16.msra.mxu0 %v1941
        %1990 = vmatprep.mubr.bf16.mxu0 %v762
        %1991 = vmatmul.mubr.bf16.gmra.mrb[0].mxu0 %v761
        %v1992 = vpop.f32.mrb[0].mxu0
        %v1993 = vadd.f32 0.0, %v1992
        %v1994 = vpop.f32.mrb[0].mxu0
        %v1995 = vpop.f32.mrb[0].mxu0
        %v1996 = vpop.f32.mrb[0].mxu0
        %1997 = vdwg.mxu0
        %s1998 = scalar_lea.vmem [#allocation5], 20
        %v1999 = vld [vmem:[%s1998] sm:$0xf]
        %v2000 = vpack.c.bf16 %v1993, %v1993
        %v2002 = vsel %vm1075, %v1999, 0
        %v2005 = vand.u32 %v2000, %v1082
        %2007 = vmatprep.subr.bf16.mxu0 0
        %2008 = vmatpush1.bf16.msra.mxu0 %v2005
        %2009 = vmatprep.subr.bf16.mxu0 0
        %2010 = vmatpush1.bf16.msra.mxu0 0
        %2011 = vmatprep.subr.bf16.mxu0 0
        %2012 = vmatpush1.bf16.msra.mxu0 0
        %2013 = vmatprep.subr.bf16.mxu0 0
        %2014 = vmatpush1.bf16.msra.mxu0 0
        %2015 = vmatprep.subr.bf16.mxu0 0
        %2016 = vmatpush1.bf16.msra.mxu0 0
        %2017 = vmatprep.subr.bf16.mxu0 0
        %2018 = vmatpush1.bf16.msra.mxu0 0
        %2019 = vmatprep.subr.bf16.mxu0 0
        %2020 = vmatpush1.bf16.msra.mxu0 0
        %2021 = vmatprep.subr.bf16.mxu0 0
        %2022 = vmatpush1.bf16.msra.mxu0 0
        %2023 = vmatprep.subr.bf16.mxu0 0
        %2024 = vmatpush1.bf16.msra.mxu0 0
        %2025 = vmatprep.subr.bf16.mxu0 0
        %2026 = vmatpush1.bf16.msra.mxu0 0
        %2027 = vmatprep.subr.bf16.mxu0 0
        %2028 = vmatpush1.bf16.msra.mxu0 0
        %2029 = vmatprep.subr.bf16.mxu0 0
        %2030 = vmatpush1.bf16.msra.mxu0 0
        %2031 = vmatprep.subr.bf16.mxu0 0
        %2032 = vmatpush1.bf16.msra.mxu0 0
        %2033 = vmatprep.subr.bf16.mxu0 0
        %2034 = vmatpush1.bf16.msra.mxu0 0
        %2035 = vmatprep.subr.bf16.mxu0 0
        %2036 = vmatpush1.bf16.msra.mxu0 0
        %2037 = vmatprep.subr.bf16.mxu0 0
        %2038 = vmatpush1.bf16.msra.mxu0 0
        %2039 = vmatprep.mubr.bf16.mxu0 0
        %2040 = vmatmul.mubr.bf16.gmra.mrb[0].mxu0 %v2002
        %v2041 = vpop.f32.mrb[0].mxu0
        %v2042 = vadd.f32 0.0, %v2041
        %v2043 = vpop.f32.mrb[0].mxu0
        %v2044 = vpop.f32.mrb[0].mxu0
        %v2045 = vpop.f32.mrb[0].mxu0
        %2046 = vdwg.mxu0
        %v2047 = vadd.f32 %v1828, %v2042
        %s2048 = scalar_lea.vmem [#allocation3], 768
        %v2049 = vld [vmem:[%s2048] sm:$0xf]
        %v2050 = vld [vmem:[%s2048 + $0x4] sm:$0xf]
        %v2051 = vld [vmem:[%s2048 + $0x8] sm:$0xf]
        %v2052 = vld [vmem:[%s2048 + $0xc] sm:$0xf]
        %v2053 = vld [vmem:[%s2048 + $0x10] sm:$0xf]
        %v2054 = vld [vmem:[%s2048 + $0x14] sm:$0xf]
        %v2055 = vld [vmem:[%s2048 + $0x18] sm:$0xf]
        %v2056 = vld [vmem:[%s2048 + $0x1c] sm:$0xf]
        %v2057 = vld [vmem:[%s2048 + $0x20] sm:$0xf]
        %v2058 = vld [vmem:[%s2048 + $0x24] sm:$0xf]
        %v2059 = vld [vmem:[%s2048 + $0x28] sm:$0xf]
        %v2060 = vld [vmem:[%s2048 + $0x2c] sm:$0xf]
        %v2061 = vld [vmem:[%s2048 + $0x30] sm:$0xf]
        %v2062 = vld [vmem:[%s2048 + $0x34] sm:$0xf]
        %v2063 = vld [vmem:[%s2048 + $0x38] sm:$0xf]
        %v2064 = vld [vmem:[%s2048 + $0x3c] sm:$0xf]
        %v2065 = vld [vmem:[%s2048 + $0x40] sm:$0xf]
        %v2066 = vld [vmem:[%s2048 + $0x44] sm:$0xf]
        %v2067 = vld [vmem:[%s2048 + $0x48] sm:$0xf]
        %v2068 = vld [vmem:[%s2048 + $0x4c] sm:$0xf]
        %v2069 = vld [vmem:[%s2048 + $0x50] sm:$0xf]
        %v2070 = vld [vmem:[%s2048 + $0x54] sm:$0xf]
        %v2071 = vld [vmem:[%s2048 + $0x58] sm:$0xf]
        %v2072 = vld [vmem:[%s2048 + $0x5c] sm:$0xf]
        %v2073 = vld [vmem:[%s2048 + $0x60] sm:$0xf]
        %v2074 = vld [vmem:[%s2048 + $0x64] sm:$0xf]
        %v2075 = vld [vmem:[%s2048 + $0x68] sm:$0xf]
        %v2076 = vld [vmem:[%s2048 + $0x6c] sm:$0xf]
        %v2077 = vld [vmem:[%s2048 + $0x70] sm:$0xf]
        %v2078 = vld [vmem:[%s2048 + $0x74] sm:$0xf]
        %v2079 = vld [vmem:[%s2048 + $0x78] sm:$0xf]
        %v2080 = vld [vmem:[%s2048 + $0x7c] sm:$0xf]
        %v2113 = vunpack.c.l.b16 %v2049
        %v2114 = vunpack.c.l.b16 %v2050
        %v2115 = vunpack.c.l.b16 %v2051
        %v2116 = vunpack.c.l.b16 %v2052
        %v2117 = vunpack.c.l.b16 %v2053
        %v2118 = vunpack.c.l.b16 %v2054
        %v2119 = vunpack.c.l.b16 %v2055
        %v2120 = vunpack.c.l.b16 %v2056
        %v2121 = vunpack.c.l.b16 %v2057
        %v2122 = vunpack.c.l.b16 %v2058
        %v2123 = vunpack.c.l.b16 %v2059
        %v2124 = vunpack.c.l.b16 %v2060
        %v2125 = vunpack.c.l.b16 %v2061
        %v2126 = vunpack.c.l.b16 %v2062
        %v2127 = vunpack.c.l.b16 %v2063
        %v2128 = vunpack.c.l.b16 %v2064
        %v2129 = vunpack.c.l.b16 %v2065
        %v2130 = vunpack.c.l.b16 %v2066
        %v2131 = vunpack.c.l.b16 %v2067
        %v2132 = vunpack.c.l.b16 %v2068
        %v2133 = vunpack.c.l.b16 %v2069
        %v2134 = vunpack.c.l.b16 %v2070
        %v2135 = vunpack.c.l.b16 %v2071
        %v2136 = vunpack.c.l.b16 %v2072
        %v2137 = vunpack.c.l.b16 %v2073
        %v2138 = vunpack.c.l.b16 %v2074
        %v2139 = vunpack.c.l.b16 %v2075
        %v2140 = vunpack.c.l.b16 %v2076
        %v2141 = vunpack.c.l.b16 %v2077
        %v2142 = vunpack.c.l.b16 %v2078
        %v2143 = vunpack.c.l.b16 %v2079
        %v2144 = vunpack.c.l.b16 %v2080
        %v2145 = vpack.c.b16 %v2114, %v2113
        %v2146 = vpack.c.b16 %v2116, %v2115
        %v2147 = vpack.c.b16 %v2118, %v2117
        %v2148 = vpack.c.b16 %v2120, %v2119
        %v2149 = vpack.c.b16 %v2122, %v2121
        %v2150 = vpack.c.b16 %v2124, %v2123
        %v2151 = vpack.c.b16 %v2126, %v2125
        %v2152 = vpack.c.b16 %v2128, %v2127
        %v2153 = vpack.c.b16 %v2130, %v2129
        %v2154 = vpack.c.b16 %v2132, %v2131
        %v2155 = vpack.c.b16 %v2134, %v2133
        %v2156 = vpack.c.b16 %v2136, %v2135
        %v2157 = vpack.c.b16 %v2138, %v2137
        %v2158 = vpack.c.b16 %v2140, %v2139
        %v2159 = vpack.c.b16 %v2142, %v2141
        %v2160 = vpack.c.b16 %v2144, %v2143
        %2177 = vmatprep.subr.bf16.mxu0 0
        %2178 = vmatpush1.bf16.msra.mxu0 %v2145
        %2179 = vmatprep.subr.bf16.mxu0 0
        %2180 = vmatpush1.bf16.msra.mxu0 %v2146
        %2181 = vmatprep.subr.bf16.mxu0 0
        %2182 = vmatpush1.bf16.msra.mxu0 %v2147
        %2183 = vmatprep.subr.bf16.mxu0 0
        %2184 = vmatpush1.bf16.msra.mxu0 %v2148
        %2185 = vmatprep.subr.bf16.mxu0 0
        %2186 = vmatpush1.bf16.msra.mxu0 %v2149
        %2187 = vmatprep.subr.bf16.mxu0 0
        %2188 = vmatpush1.bf16.msra.mxu0 %v2150
        %2189 = vmatprep.subr.bf16.mxu0 0
        %2190 = vmatpush1.bf16.msra.mxu0 %v2151
        %2191 = vmatprep.subr.bf16.mxu0 0
        %2192 = vmatpush1.bf16.msra.mxu0 %v2152
        %2193 = vmatprep.subr.bf16.mxu0 0
        %2194 = vmatpush1.bf16.msra.mxu0 %v2153
        %2195 = vmatprep.subr.bf16.mxu0 0
        %2196 = vmatpush1.bf16.msra.mxu0 %v2154
        %2197 = vmatprep.subr.bf16.mxu0 0
        %2198 = vmatpush1.bf16.msra.mxu0 %v2155
        %2199 = vmatprep.subr.bf16.mxu0 0
        %2200 = vmatpush1.bf16.msra.mxu0 %v2156
        %2201 = vmatprep.subr.bf16.mxu0 0
        %2202 = vmatpush1.bf16.msra.mxu0 %v2157
        %2203 = vmatprep.subr.bf16.mxu0 0
        %2204 = vmatpush1.bf16.msra.mxu0 %v2158
        %2205 = vmatprep.subr.bf16.mxu0 0
        %2206 = vmatpush1.bf16.msra.mxu0 %v2159
        %2207 = vmatprep.subr.bf16.mxu0 0
        %2208 = vmatpush1.bf16.msra.mxu0 %v2160
        %2209 = vmatprep.mubr.bf16.mxu0 %v762
        %2210 = vmatmul.mubr.bf16.gmra.mrb[0].mxu0 %v761
        %v2211 = vpop.f32.mrb[0].mxu0
        %v2212 = vadd.f32 0.0, %v2211
        %v2213 = vpop.f32.mrb[0].mxu0
        %v2214 = vpop.f32.mrb[0].mxu0
        %v2215 = vpop.f32.mrb[0].mxu0
        %2216 = vdwg.mxu0
        %s2217 = scalar_lea.vmem [#allocation5], 24
        %v2218 = vld [vmem:[%s2217] sm:$0xf]
        %v2219 = vpack.c.bf16 %v2212, %v2212
        %v2221 = vsel %vm1075, %v2218, 0
        %v2224 = vand.u32 %v2219, %v1082
        %2226 = vmatprep.subr.bf16.mxu0 0
        %2227 = vmatpush1.bf16.msra.mxu0 %v2224
        %2228 = vmatprep.subr.bf16.mxu0 0
        %2229 = vmatpush1.bf16.msra.mxu0 0
        %2230 = vmatprep.subr.bf16.mxu0 0
        %2231 = vmatpush1.bf16.msra.mxu0 0
        %2232 = vmatprep.subr.bf16.mxu0 0
        %2233 = vmatpush1.bf16.msra.mxu0 0
        %2234 = vmatprep.subr.bf16.mxu0 0
        %2235 = vmatpush1.bf16.msra.mxu0 0
        %2236 = vmatprep.subr.bf16.mxu0 0
        %2237 = vmatpush1.bf16.msra.mxu0 0
        %2238 = vmatprep.subr.bf16.mxu0 0
        %2239 = vmatpush1.bf16.msra.mxu0 0
        %2240 = vmatprep.subr.bf16.mxu0 0
        %2241 = vmatpush1.bf16.msra.mxu0 0
        %2242 = vmatprep.subr.bf16.mxu0 0
        %2243 = vmatpush1.bf16.msra.mxu0 0
        %2244 = vmatprep.subr.bf16.mxu0 0
        %2245 = vmatpush1.bf16.msra.mxu0 0
        %2246 = vmatprep.subr.bf16.mxu0 0
        %2247 = vmatpush1.bf16.msra.mxu0 0
        %2248 = vmatprep.subr.bf16.mxu0 0
        %2249 = vmatpush1.bf16.msra.mxu0 0
        %2250 = vmatprep.subr.bf16.mxu0 0
        %2251 = vmatpush1.bf16.msra.mxu0 0
        %2252 = vmatprep.subr.bf16.mxu0 0
        %2253 = vmatpush1.bf16.msra.mxu0 0
        %2254 = vmatprep.subr.bf16.mxu0 0
        %2255 = vmatpush1.bf16.msra.mxu0 0
        %2256 = vmatprep.subr.bf16.mxu0 0
        %2257 = vmatpush1.bf16.msra.mxu0 0
        %2258 = vmatprep.mubr.bf16.mxu0 0
        %2259 = vmatmul.mubr.bf16.gmra.mrb[0].mxu0 %v2221
        %v2260 = vpop.f32.mrb[0].mxu0
        %v2261 = vadd.f32 0.0, %v2260
        %v2262 = vpop.f32.mrb[0].mxu0
        %v2263 = vpop.f32.mrb[0].mxu0
        %v2264 = vpop.f32.mrb[0].mxu0
        %2265 = vdwg.mxu0
        %v2266 = vadd.f32 %v2047, %v2261
        %s2267 = scalar_lea.vmem [#allocation3], 896
        %v2268 = vld [vmem:[%s2267] sm:$0xf]
        %v2269 = vld [vmem:[%s2267 + $0x4] sm:$0xf]
        %v2270 = vld [vmem:[%s2267 + $0x8] sm:$0xf]
        %v2271 = vld [vmem:[%s2267 + $0xc] sm:$0xf]
        %v2272 = vld [vmem:[%s2267 + $0x10] sm:$0xf]
        %v2273 = vld [vmem:[%s2267 + $0x14] sm:$0xf]
        %v2274 = vld [vmem:[%s2267 + $0x18] sm:$0xf]
        %v2275 = vld [vmem:[%s2267 + $0x1c] sm:$0xf]
        %v2276 = vld [vmem:[%s2267 + $0x20] sm:$0xf]
        %v2277 = vld [vmem:[%s2267 + $0x24] sm:$0xf]
        %v2278 = vld [vmem:[%s2267 + $0x28] sm:$0xf]
        %v2279 = vld [vmem:[%s2267 + $0x2c] sm:$0xf]
        %v2280 = vld [vmem:[%s2267 + $0x30] sm:$0xf]
        %v2281 = vld [vmem:[%s2267 + $0x34] sm:$0xf]
        %v2282 = vld [vmem:[%s2267 + $0x38] sm:$0xf]
        %v2283 = vld [vmem:[%s2267 + $0x3c] sm:$0xf]
        %v2284 = vld [vmem:[%s2267 + $0x40] sm:$0xf]
        %v2285 = vld [vmem:[%s2267 + $0x44] sm:$0xf]
        %v2286 = vld [vmem:[%s2267 + $0x48] sm:$0xf]
        %v2287 = vld [vmem:[%s2267 + $0x4c] sm:$0xf]
        %v2288 = vld [vmem:[%s2267 + $0x50] sm:$0xf]
        %v2289 = vld [vmem:[%s2267 + $0x54] sm:$0xf]
        %v2290 = vld [vmem:[%s2267 + $0x58] sm:$0xf]
        %v2291 = vld [vmem:[%s2267 + $0x5c] sm:$0xf]
        %v2292 = vld [vmem:[%s2267 + $0x60] sm:$0xf]
        %v2293 = vld [vmem:[%s2267 + $0x64] sm:$0xf]
        %v2294 = vld [vmem:[%s2267 + $0x68] sm:$0xf]
        %v2295 = vld [vmem:[%s2267 + $0x6c] sm:$0xf]
        %v2296 = vld [vmem:[%s2267 + $0x70] sm:$0xf]
        %v2297 = vld [vmem:[%s2267 + $0x74] sm:$0xf]
        %v2298 = vld [vmem:[%s2267 + $0x78] sm:$0xf]
        %v2299 = vld [vmem:[%s2267 + $0x7c] sm:$0xf]
        %v2332 = vunpack.c.l.b16 %v2268
        %v2333 = vunpack.c.l.b16 %v2269
        %v2334 = vunpack.c.l.b16 %v2270
        %v2335 = vunpack.c.l.b16 %v2271
        %v2336 = vunpack.c.l.b16 %v2272
        %v2337 = vunpack.c.l.b16 %v2273
        %v2338 = vunpack.c.l.b16 %v2274
        %v2339 = vunpack.c.l.b16 %v2275
        %v2340 = vunpack.c.l.b16 %v2276
        %v2341 = vunpack.c.l.b16 %v2277
        %v2342 = vunpack.c.l.b16 %v2278
        %v2343 = vunpack.c.l.b16 %v2279
        %v2344 = vunpack.c.l.b16 %v2280
        %v2345 = vunpack.c.l.b16 %v2281
        %v2346 = vunpack.c.l.b16 %v2282
        %v2347 = vunpack.c.l.b16 %v2283
        %v2348 = vunpack.c.l.b16 %v2284
        %v2349 = vunpack.c.l.b16 %v2285
        %v2350 = vunpack.c.l.b16 %v2286
        %v2351 = vunpack.c.l.b16 %v2287
        %v2352 = vunpack.c.l.b16 %v2288
        %v2353 = vunpack.c.l.b16 %v2289
        %v2354 = vunpack.c.l.b16 %v2290
        %v2355 = vunpack.c.l.b16 %v2291
        %v2356 = vunpack.c.l.b16 %v2292
        %v2357 = vunpack.c.l.b16 %v2293
        %v2358 = vunpack.c.l.b16 %v2294
        %v2359 = vunpack.c.l.b16 %v2295
        %v2360 = vunpack.c.l.b16 %v2296
        %v2361 = vunpack.c.l.b16 %v2297
        %v2362 = vunpack.c.l.b16 %v2298
        %v2363 = vunpack.c.l.b16 %v2299
        %v2364 = vpack.c.b16 %v2333, %v2332
        %v2365 = vpack.c.b16 %v2335, %v2334
        %v2366 = vpack.c.b16 %v2337, %v2336
        %v2367 = vpack.c.b16 %v2339, %v2338
        %v2368 = vpack.c.b16 %v2341, %v2340
        %v2369 = vpack.c.b16 %v2343, %v2342
        %v2370 = vpack.c.b16 %v2345, %v2344
        %v2371 = vpack.c.b16 %v2347, %v2346
        %v2372 = vpack.c.b16 %v2349, %v2348
        %v2373 = vpack.c.b16 %v2351, %v2350
        %v2374 = vpack.c.b16 %v2353, %v2352
        %v2375 = vpack.c.b16 %v2355, %v2354
        %v2376 = vpack.c.b16 %v2357, %v2356
        %v2377 = vpack.c.b16 %v2359, %v2358
        %v2378 = vpack.c.b16 %v2361, %v2360
        %v2379 = vpack.c.b16 %v2363, %v2362
        %2396 = vmatprep.subr.bf16.mxu0 0
        %2397 = vmatpush1.bf16.msra.mxu0 %v2364
        %2398 = vmatprep.subr.bf16.mxu0 0
        %2399 = vmatpush1.bf16.msra.mxu0 %v2365
        %2400 = vmatprep.subr.bf16.mxu0 0
        %2401 = vmatpush1.bf16.msra.mxu0 %v2366
        %2402 = vmatprep.subr.bf16.mxu0 0
        %2403 = vmatpush1.bf16.msra.mxu0 %v2367
        %2404 = vmatprep.subr.bf16.mxu0 0
        %2405 = vmatpush1.bf16.msra.mxu0 %v2368
        %2406 = vmatprep.subr.bf16.mxu0 0
        %2407 = vmatpush1.bf16.msra.mxu0 %v2369
        %2408 = vmatprep.subr.bf16.mxu0 0
        %2409 = vmatpush1.bf16.msra.mxu0 %v2370
        %2410 = vmatprep.subr.bf16.mxu0 0
        %2411 = vmatpush1.bf16.msra.mxu0 %v2371
        %2412 = vmatprep.subr.bf16.mxu0 0
        %2413 = vmatpush1.bf16.msra.mxu0 %v2372
        %2414 = vmatprep.subr.bf16.mxu0 0
        %2415 = vmatpush1.bf16.msra.mxu0 %v2373
        %2416 = vmatprep.subr.bf16.mxu0 0
        %2417 = vmatpush1.bf16.msra.mxu0 %v2374
        %2418 = vmatprep.subr.bf16.mxu0 0
        %2419 = vmatpush1.bf16.msra.mxu0 %v2375
        %2420 = vmatprep.subr.bf16.mxu0 0
        %2421 = vmatpush1.bf16.msra.mxu0 %v2376
        %2422 = vmatprep.subr.bf16.mxu0 0
        %2423 = vmatpush1.bf16.msra.mxu0 %v2377
        %2424 = vmatprep.subr.bf16.mxu0 0
        %2425 = vmatpush1.bf16.msra.mxu0 %v2378
        %2426 = vmatprep.subr.bf16.mxu0 0
        %2427 = vmatpush1.bf16.msra.mxu0 %v2379
        %2428 = vmatprep.mubr.bf16.mxu0 %v762
        %2429 = vmatmul.mubr.bf16.gmra.mrb[0].mxu0 %v761
        %v2430 = vpop.f32.mrb[0].mxu0
        %v2431 = vadd.f32 0.0, %v2430
        %v2432 = vpop.f32.mrb[0].mxu0
        %v2433 = vpop.f32.mrb[0].mxu0
        %v2434 = vpop.f32.mrb[0].mxu0
        %2435 = vdwg.mxu0
        %s2436 = scalar_lea.vmem [#allocation5], 28
        %v2437 = vld [vmem:[%s2436] sm:$0xf]
        %v2438 = vpack.c.bf16 %v2431, %v2431
        %v2440 = vsel %vm1075, %v2437, 0
        %v2443 = vand.u32 %v2438, %v1082
        %2445 = vmatprep.subr.bf16.mxu0 0
        %2446 = vmatpush1.bf16.msra.mxu0 %v2443
        %2447 = vmatprep.subr.bf16.mxu0 0
        %2448 = vmatpush1.bf16.msra.mxu0 0
        %2449 = vmatprep.subr.bf16.mxu0 0
        %2450 = vmatpush1.bf16.msra.mxu0 0
        %2451 = vmatprep.subr.bf16.mxu0 0
        %2452 = vmatpush1.bf16.msra.mxu0 0
        %2453 = vmatprep.subr.bf16.mxu0 0
        %2454 = vmatpush1.bf16.msra.mxu0 0
        %2455 = vmatprep.subr.bf16.mxu0 0
        %2456 = vmatpush1.bf16.msra.mxu0 0
        %2457 = vmatprep.subr.bf16.mxu0 0
        %2458 = vmatpush1.bf16.msra.mxu0 0
        %2459 = vmatprep.subr.bf16.mxu0 0
        %2460 = vmatpush1.bf16.msra.mxu0 0
        %2461 = vmatprep.subr.bf16.mxu0 0
        %2462 = vmatpush1.bf16.msra.mxu0 0
        %2463 = vmatprep.subr.bf16.mxu0 0
        %2464 = vmatpush1.bf16.msra.mxu0 0
        %2465 = vmatprep.subr.bf16.mxu0 0
        %2466 = vmatpush1.bf16.msra.mxu0 0
        %2467 = vmatprep.subr.bf16.mxu0 0
        %2468 = vmatpush1.bf16.msra.mxu0 0
        %2469 = vmatprep.subr.bf16.mxu0 0
        %2470 = vmatpush1.bf16.msra.mxu0 0
        %2471 = vmatprep.subr.bf16.mxu0 0
        %2472 = vmatpush1.bf16.msra.mxu0 0
        %2473 = vmatprep.subr.bf16.mxu0 0
        %2474 = vmatpush1.bf16.msra.mxu0 0
        %2475 = vmatprep.subr.bf16.mxu0 0
        %2476 = vmatpush1.bf16.msra.mxu0 0
        %2477 = vmatprep.mubr.bf16.mxu0 0
        %2478 = vmatmul.mubr.bf16.gmra.mrb[0].mxu0 %v2440
        %v2479 = vpop.f32.mrb[0].mxu0
        %v2480 = vadd.f32 0.0, %v2479
        %v2481 = vpop.f32.mrb[0].mxu0
        %v2482 = vpop.f32.mrb[0].mxu0
        %v2483 = vpop.f32.mrb[0].mxu0
        %2484 = vdwg.mxu0
        %v2485 = vadd.f32 %v2266, %v2480
        %s2486 = scalar_lea.vmem [#allocation3], 1024
        %v2487 = vld [vmem:[%s2486] sm:$0xf]
        %v2488 = vld [vmem:[%s2486 + $0x4] sm:$0xf]
        %v2489 = vld [vmem:[%s2486 + $0x8] sm:$0xf]
        %v2490 = vld [vmem:[%s2486 + $0xc] sm:$0xf]
        %v2491 = vld [vmem:[%s2486 + $0x10] sm:$0xf]
        %v2492 = vld [vmem:[%s2486 + $0x14] sm:$0xf]
        %v2493 = vld [vmem:[%s2486 + $0x18] sm:$0xf]
        %v2494 = vld [vmem:[%s2486 + $0x1c] sm:$0xf]
        %v2495 = vld [vmem:[%s2486 + $0x20] sm:$0xf]
        %v2496 = vld [vmem:[%s2486 + $0x24] sm:$0xf]
        %v2497 = vld [vmem:[%s2486 + $0x28] sm:$0xf]
        %v2498 = vld [vmem:[%s2486 + $0x2c] sm:$0xf]
        %v2499 = vld [vmem:[%s2486 + $0x30] sm:$0xf]
        %v2500 = vld [vmem:[%s2486 + $0x34] sm:$0xf]
        %v2501 = vld [vmem:[%s2486 + $0x38] sm:$0xf]
        %v2502 = vld [vmem:[%s2486 + $0x3c] sm:$0xf]
        %v2503 = vld [vmem:[%s2486 + $0x40] sm:$0xf]
        %v2504 = vld [vmem:[%s2486 + $0x44] sm:$0xf]
        %v2505 = vld [vmem:[%s2486 + $0x48] sm:$0xf]
        %v2506 = vld [vmem:[%s2486 + $0x4c] sm:$0xf]
        %v2507 = vld [vmem:[%s2486 + $0x50] sm:$0xf]
        %v2508 = vld [vmem:[%s2486 + $0x54] sm:$0xf]
        %v2509 = vld [vmem:[%s2486 + $0x58] sm:$0xf]
        %v2510 = vld [vmem:[%s2486 + $0x5c] sm:$0xf]
        %v2511 = vld [vmem:[%s2486 + $0x60] sm:$0xf]
        %v2512 = vld [vmem:[%s2486 + $0x64] sm:$0xf]
        %v2513 = vld [vmem:[%s2486 + $0x68] sm:$0xf]
        %v2514 = vld [vmem:[%s2486 + $0x6c] sm:$0xf]
        %v2515 = vld [vmem:[%s2486 + $0x70] sm:$0xf]
        %v2516 = vld [vmem:[%s2486 + $0x74] sm:$0xf]
        %v2517 = vld [vmem:[%s2486 + $0x78] sm:$0xf]
        %v2518 = vld [vmem:[%s2486 + $0x7c] sm:$0xf]
        %v2551 = vunpack.c.l.b16 %v2487
        %v2552 = vunpack.c.l.b16 %v2488
        %v2553 = vunpack.c.l.b16 %v2489
        %v2554 = vunpack.c.l.b16 %v2490
        %v2555 = vunpack.c.l.b16 %v2491
        %v2556 = vunpack.c.l.b16 %v2492
        %v2557 = vunpack.c.l.b16 %v2493
        %v2558 = vunpack.c.l.b16 %v2494
        %v2559 = vunpack.c.l.b16 %v2495
        %v2560 = vunpack.c.l.b16 %v2496
        %v2561 = vunpack.c.l.b16 %v2497
        %v2562 = vunpack.c.l.b16 %v2498
        %v2563 = vunpack.c.l.b16 %v2499
        %v2564 = vunpack.c.l.b16 %v2500
        %v2565 = vunpack.c.l.b16 %v2501
        %v2566 = vunpack.c.l.b16 %v2502
        %v2567 = vunpack.c.l.b16 %v2503
        %v2568 = vunpack.c.l.b16 %v2504
        %v2569 = vunpack.c.l.b16 %v2505
        %v2570 = vunpack.c.l.b16 %v2506
        %v2571 = vunpack.c.l.b16 %v2507
        %v2572 = vunpack.c.l.b16 %v2508
        %v2573 = vunpack.c.l.b16 %v2509
        %v2574 = vunpack.c.l.b16 %v2510
        %v2575 = vunpack.c.l.b16 %v2511
        %v2576 = vunpack.c.l.b16 %v2512
        %v2577 = vunpack.c.l.b16 %v2513
        %v2578 = vunpack.c.l.b16 %v2514
        %v2579 = vunpack.c.l.b16 %v2515
        %v2580 = vunpack.c.l.b16 %v2516
        %v2581 = vunpack.c.l.b16 %v2517
        %v2582 = vunpack.c.l.b16 %v2518
        %v2583 = vpack.c.b16 %v2552, %v2551
        %v2584 = vpack.c.b16 %v2554, %v2553
        %v2585 = vpack.c.b16 %v2556, %v2555
        %v2586 = vpack.c.b16 %v2558, %v2557
        %v2587 = vpack.c.b16 %v2560, %v2559
        %v2588 = vpack.c.b16 %v2562, %v2561
        %v2589 = vpack.c.b16 %v2564, %v2563
        %v2590 = vpack.c.b16 %v2566, %v2565
        %v2591 = vpack.c.b16 %v2568, %v2567
        %v2592 = vpack.c.b16 %v2570, %v2569
        %v2593 = vpack.c.b16 %v2572, %v2571
        %v2594 = vpack.c.b16 %v2574, %v2573
        %v2595 = vpack.c.b16 %v2576, %v2575
        %v2596 = vpack.c.b16 %v2578, %v2577
        %v2597 = vpack.c.b16 %v2580, %v2579
        %v2598 = vpack.c.b16 %v2582, %v2581
        %2615 = vmatprep.subr.bf16.mxu0 0
        %2616 = vmatpush1.bf16.msra.mxu0 %v2583
        %2617 = vmatprep.subr.bf16.mxu0 0
        %2618 = vmatpush1.bf16.msra.mxu0 %v2584
        %2619 = vmatprep.subr.bf16.mxu0 0
        %2620 = vmatpush1.bf16.msra.mxu0 %v2585
        %2621 = vmatprep.subr.bf16.mxu0 0
        %2622 = vmatpush1.bf16.msra.mxu0 %v2586
        %2623 = vmatprep.subr.bf16.mxu0 0
        %2624 = vmatpush1.bf16.msra.mxu0 %v2587
        %2625 = vmatprep.subr.bf16.mxu0 0
        %2626 = vmatpush1.bf16.msra.mxu0 %v2588
        %2627 = vmatprep.subr.bf16.mxu0 0
        %2628 = vmatpush1.bf16.msra.mxu0 %v2589
        %2629 = vmatprep.subr.bf16.mxu0 0
        %2630 = vmatpush1.bf16.msra.mxu0 %v2590
        %2631 = vmatprep.subr.bf16.mxu0 0
        %2632 = vmatpush1.bf16.msra.mxu0 %v2591
        %2633 = vmatprep.subr.bf16.mxu0 0
        %2634 = vmatpush1.bf16.msra.mxu0 %v2592
        %2635 = vmatprep.subr.bf16.mxu0 0
        %2636 = vmatpush1.bf16.msra.mxu0 %v2593
        %2637 = vmatprep.subr.bf16.mxu0 0
        %2638 = vmatpush1.bf16.msra.mxu0 %v2594
        %2639 = vmatprep.subr.bf16.mxu0 0
        %2640 = vmatpush1.bf16.msra.mxu0 %v2595
        %2641 = vmatprep.subr.bf16.mxu0 0
        %2642 = vmatpush1.bf16.msra.mxu0 %v2596
        %2643 = vmatprep.subr.bf16.mxu0 0
        %2644 = vmatpush1.bf16.msra.mxu0 %v2597
        %2645 = vmatprep.subr.bf16.mxu0 0
        %2646 = vmatpush1.bf16.msra.mxu0 %v2598
        %2647 = vmatprep.mubr.bf16.mxu0 %v762
        %2648 = vmatmul.mubr.bf16.gmra.mrb[0].mxu0 %v761
        %v2649 = vpop.f32.mrb[0].mxu0
        %v2650 = vadd.f32 0.0, %v2649
        %v2651 = vpop.f32.mrb[0].mxu0
        %v2652 = vpop.f32.mrb[0].mxu0
        %v2653 = vpop.f32.mrb[0].mxu0
        %2654 = vdwg.mxu0
        %s2655 = scalar_lea.vmem [#allocation5], 32
        %v2656 = vld [vmem:[%s2655] sm:$0xf]
        %v2657 = vpack.c.bf16 %v2650, %v2650
        %v2659 = vsel %vm1075, %v2656, 0
        %v2662 = vand.u32 %v2657, %v1082
        %2664 = vmatprep.subr.bf16.mxu0 0
        %2665 = vmatpush1.bf16.msra.mxu0 %v2662
        %2666 = vmatprep.subr.bf16.mxu0 0
        %2667 = vmatpush1.bf16.msra.mxu0 0
        %2668 = vmatprep.subr.bf16.mxu0 0
        %2669 = vmatpush1.bf16.msra.mxu0 0
        %2670 = vmatprep.subr.bf16.mxu0 0
        %2671 = vmatpush1.bf16.msra.mxu0 0
        %2672 = vmatprep.subr.bf16.mxu0 0
        %2673 = vmatpush1.bf16.msra.mxu0 0
        %2674 = vmatprep.subr.bf16.mxu0 0
        %2675 = vmatpush1.bf16.msra.mxu0 0
        %2676 = vmatprep.subr.bf16.mxu0 0
        %2677 = vmatpush1.bf16.msra.mxu0 0
        %2678 = vmatprep.subr.bf16.mxu0 0
        %2679 = vmatpush1.bf16.msra.mxu0 0
        %2680 = vmatprep.subr.bf16.mxu0 0
        %2681 = vmatpush1.bf16.msra.mxu0 0
        %2682 = vmatprep.subr.bf16.mxu0 0
        %2683 = vmatpush1.bf16.msra.mxu0 0
        %2684 = vmatprep.subr.bf16.mxu0 0
        %2685 = vmatpush1.bf16.msra.mxu0 0
        %2686 = vmatprep.subr.bf16.mxu0 0
        %2687 = vmatpush1.bf16.msra.mxu0 0
        %2688 = vmatprep.subr.bf16.mxu0 0
        %2689 = vmatpush1.bf16.msra.mxu0 0
        %2690 = vmatprep.subr.bf16.mxu0 0
        %2691 = vmatpush1.bf16.msra.mxu0 0
        %2692 = vmatprep.subr.bf16.mxu0 0
        %2693 = vmatpush1.bf16.msra.mxu0 0
        %2694 = vmatprep.subr.bf16.mxu0 0
        %2695 = vmatpush1.bf16.msra.mxu0 0
        %2696 = vmatprep.mubr.bf16.mxu0 0
        %2697 = vmatmul.mubr.bf16.gmra.mrb[0].mxu0 %v2659
        %v2698 = vpop.f32.mrb[0].mxu0
        %v2699 = vadd.f32 0.0, %v2698
        %v2700 = vpop.f32.mrb[0].mxu0
        %v2701 = vpop.f32.mrb[0].mxu0
        %v2702 = vpop.f32.mrb[0].mxu0
        %2703 = vdwg.mxu0
        %v2704 = vadd.f32 %v2485, %v2699
        %v2705 = vld [vmem:[#allocation7] sm:$0xff]
        %2707 = vset.pattern.permute.xlu0 0
        %2708 = vperm.xlu0 %2707, %v2705
        %v2709 = vpop.permute.xlu0 %2708
        %v2711 = vadd.f32 %v2704, %v2709
        %v2712 = vmax.f32 %v2711, 0.0
        %v2713 = vpack.c.bf16 %v2712, %v2712
        %v2714 = vld [vmem:[#allocation8] sm:$0xf]
        %v2715 = vld [vmem:[#allocation8 + $0x4] sm:$0xf]
        %v2716 = vld [vmem:[#allocation8 + $0x8] sm:$0xf]
        %v2717 = vld [vmem:[#allocation8 + $0xc] sm:$0xf]
        %v2718 = vld [vmem:[#allocation8 + $0x10] sm:$0xf]
        %v2719 = vld [vmem:[#allocation8 + $0x14] sm:$0xf]
        %v2720 = vld [vmem:[#allocation8 + $0x18] sm:$0xf]
        %v2721 = vld [vmem:[#allocation8 + $0x1c] sm:$0xf]
        %v2730 = vunpack.c.l.b16 %v2714
        %v2731 = vunpack.c.l.b16 %v2715
        %v2732 = vunpack.c.l.b16 %v2716
        %v2733 = vunpack.c.l.b16 %v2717
        %v2734 = vunpack.c.l.b16 %v2718
        %v2735 = vunpack.c.l.b16 %v2719
        %v2736 = vunpack.c.l.b16 %v2720
        %v2737 = vunpack.c.l.b16 %v2721
        %v2738 = vpack.c.b16 %v2731, %v2730
        %v2739 = vpack.c.b16 %v2733, %v2732
        %v2740 = vpack.c.b16 %v2735, %v2734
        %v2741 = vpack.c.b16 %v2737, %v2736
        %vm2746 = vcmask 523264
        %v2748 = vsel %vm2746, %v2713, 0
        %2750 = vmatprep.subr.bf16.mxu0 0
        %2751 = vmatpush1.bf16.msra.mxu0 %v2738
        %2752 = vmatprep.subr.bf16.mxu0 0
        %2753 = vmatpush1.bf16.msra.mxu0 %v2739
        %2754 = vmatprep.subr.bf16.mxu0 0
        %2755 = vmatpush1.bf16.msra.mxu0 %v2740
        %2756 = vmatprep.subr.bf16.mxu0 0
        %2757 = vmatpush1.bf16.msra.mxu0 %v2741
        %2758 = vmatprep.subr.bf16.mxu0 0
        %2759 = vmatpush1.bf16.msra.mxu0 0
        %2760 = vmatprep.subr.bf16.mxu0 0
        %2761 = vmatpush1.bf16.msra.mxu0 0
        %2762 = vmatprep.subr.bf16.mxu0 0
        %2763 = vmatpush1.bf16.msra.mxu0 0
        %2764 = vmatprep.subr.bf16.mxu0 0
        %2765 = vmatpush1.bf16.msra.mxu0 0
        %2766 = vmatprep.subr.bf16.mxu0 0
        %2767 = vmatpush1.bf16.msra.mxu0 0
        %2768 = vmatprep.subr.bf16.mxu0 0
        %2769 = vmatpush1.bf16.msra.mxu0 0
        %2770 = vmatprep.subr.bf16.mxu0 0
        %2771 = vmatpush1.bf16.msra.mxu0 0
        %2772 = vmatprep.subr.bf16.mxu0 0
        %2773 = vmatpush1.bf16.msra.mxu0 0
        %2774 = vmatprep.subr.bf16.mxu0 0
        %2775 = vmatpush1.bf16.msra.mxu0 0
        %2776 = vmatprep.subr.bf16.mxu0 0
        %2777 = vmatpush1.bf16.msra.mxu0 0
        %2778 = vmatprep.subr.bf16.mxu0 0
        %2779 = vmatpush1.bf16.msra.mxu0 0
        %2780 = vmatprep.subr.bf16.mxu0 0
        %2781 = vmatpush1.bf16.msra.mxu0 0
        %2782 = vmatprep.mubr.bf16.mxu0 0
        %2783 = vmatmul.mubr.bf16.gmra.mrb[0].mxu0 %v2748
        %v2784 = vpop.f32.mrb[0].mxu0
        %v2785 = vadd.f32 0.0, %v2784
        %v2786 = vpop.f32.mrb[0].mxu0
        %v2787 = vpop.f32.mrb[0].mxu0
        %v2788 = vpop.f32.mrb[0].mxu0
        %2789 = vdwg.mxu0
        %v2790 = vld [vmem:[#allocation10] sm:$0xf]
        %v2791 = vld [vmem:[#allocation10 + $0x4] sm:$0xf]
        %v2792 = vpack.c.bf16 %v2785, %v2785
        %s2793 = scalar_lea.vmem [#allocation8], 32
        %v2794 = vld [vmem:[%s2793] sm:$0xf]
        %v2795 = vld [vmem:[%s2793 + $0x4] sm:$0xf]
        %v2796 = vld [vmem:[%s2793 + $0x8] sm:$0xf]
        %v2797 = vld [vmem:[%s2793 + $0xc] sm:$0xf]
        %v2798 = vld [vmem:[%s2793 + $0x10] sm:$0xf]
        %v2799 = vld [vmem:[%s2793 + $0x14] sm:$0xf]
        %v2800 = vld [vmem:[%s2793 + $0x18] sm:$0xf]
        %v2801 = vld [vmem:[%s2793 + $0x1c] sm:$0xf]
        %v2810 = vunpack.c.l.b16 %v2794
        %v2811 = vunpack.c.l.b16 %v2795
        %v2812 = vunpack.c.l.b16 %v2796
        %v2813 = vunpack.c.l.b16 %v2797
        %v2814 = vunpack.c.l.b16 %v2798
        %v2815 = vunpack.c.l.b16 %v2799
        %v2816 = vunpack.c.l.b16 %v2800
        %v2817 = vunpack.c.l.b16 %v2801
        %v2818 = vpack.c.b16 %v2811, %v2810
        %v2819 = vpack.c.b16 %v2813, %v2812
        %v2820 = vpack.c.b16 %v2815, %v2814
        %v2821 = vpack.c.b16 %v2817, %v2816
        %2826 = vmatprep.subr.bf16.mxu0 0
        %2827 = vmatpush1.bf16.msra.mxu0 %v2818
        %2828 = vmatprep.subr.bf16.mxu0 0
        %2829 = vmatpush1.bf16.msra.mxu0 %v2819
        %2830 = vmatprep.subr.bf16.mxu0 0
        %2831 = vmatpush1.bf16.msra.mxu0 %v2820
        %2832 = vmatprep.subr.bf16.mxu0 0
        %2833 = vmatpush1.bf16.msra.mxu0 %v2821
        %2834 = vmatprep.subr.bf16.mxu0 0
        %2835 = vmatpush1.bf16.msra.mxu0 0
        %2836 = vmatprep.subr.bf16.mxu0 0
        %2837 = vmatpush1.bf16.msra.mxu0 0
        %2838 = vmatprep.subr.bf16.mxu0 0
        %2839 = vmatpush1.bf16.msra.mxu0 0
        %2840 = vmatprep.subr.bf16.mxu0 0
        %2841 = vmatpush1.bf16.msra.mxu0 0
        %2842 = vmatprep.subr.bf16.mxu0 0
        %2843 = vmatpush1.bf16.msra.mxu0 0
        %2844 = vmatprep.subr.bf16.mxu0 0
        %2845 = vmatpush1.bf16.msra.mxu0 0
        %2846 = vmatprep.subr.bf16.mxu0 0
        %2847 = vmatpush1.bf16.msra.mxu0 0
        %2848 = vmatprep.subr.bf16.mxu0 0
        %2849 = vmatpush1.bf16.msra.mxu0 0
        %2850 = vmatprep.subr.bf16.mxu0 0
        %2851 = vmatpush1.bf16.msra.mxu0 0
        %2852 = vmatprep.subr.bf16.mxu0 0
        %2853 = vmatpush1.bf16.msra.mxu0 0
        %2854 = vmatprep.subr.bf16.mxu0 0
        %2855 = vmatpush1.bf16.msra.mxu0 0
        %2856 = vmatprep.subr.bf16.mxu0 0
        %2857 = vmatpush1.bf16.msra.mxu0 0
        %2858 = vmatprep.mubr.bf16.mxu0 0
        %2859 = vmatmul.mubr.bf16.gmra.mrb[0].mxu0 %v2748
        %v2860 = vpop.f32.mrb[0].mxu0
        %v2861 = vadd.f32 0.0, %v2860
        %v2862 = vpop.f32.mrb[0].mxu0
        %v2863 = vpop.f32.mrb[0].mxu0
        %v2864 = vpop.f32.mrb[0].mxu0
        %2865 = vdwg.mxu0
        %s2866 = scalar_lea.vmem [#allocation10], 8
        %v2867 = vld [vmem:[%s2866] sm:$0xf]
        %v2868 = vld [vmem:[%s2866 + $0x4] sm:$0xf]
        %v2869 = vpack.c.bf16 %v2861, %v2861
        %v2872 = vunpack.c.l.b16 %v2867
        %v2873 = vunpack.c.l.b16 %v2868
        %v2874 = vpack.c.b16 %v2873, %v2872
        %vm2875 = vcmask 64512
        %v2877 = vsel %vm2875, %v2874, 0
        %vm2879 = vcmask 1043456
        %v2881 = vsel %vm2879, %v2869, 0
        %2883 = vmatprep.subr.bf16.mxu0 0
        %2884 = vmatpush1.bf16.msra.mxu0 %v2881
        %2885 = vmatprep.subr.bf16.mxu0 0
        %2886 = vmatpush1.bf16.msra.mxu0 0
        %2887 = vmatprep.subr.bf16.mxu0 0
        %2888 = vmatpush1.bf16.msra.mxu0 0
        %2889 = vmatprep.subr.bf16.mxu0 0
        %2890 = vmatpush1.bf16.msra.mxu0 0
        %2891 = vmatprep.subr.bf16.mxu0 0
        %2892 = vmatpush1.bf16.msra.mxu0 0
        %2893 = vmatprep.subr.bf16.mxu0 0
        %2894 = vmatpush1.bf16.msra.mxu0 0
        %2895 = vmatprep.subr.bf16.mxu0 0
        %2896 = vmatpush1.bf16.msra.mxu0 0
        %2897 = vmatprep.subr.bf16.mxu0 0
        %2898 = vmatpush1.bf16.msra.mxu0 0
        %2899 = vmatprep.subr.bf16.mxu0 0
        %2900 = vmatpush1.bf16.msra.mxu0 0
        %2901 = vmatprep.subr.bf16.mxu0 0
        %2902 = vmatpush1.bf16.msra.mxu0 0
        %2903 = vmatprep.subr.bf16.mxu0 0
        %2904 = vmatpush1.bf16.msra.mxu0 0
        %2905 = vmatprep.subr.bf16.mxu0 0
        %2906 = vmatpush1.bf16.msra.mxu0 0
        %2907 = vmatprep.subr.bf16.mxu0 0
        %2908 = vmatpush1.bf16.msra.mxu0 0
        %2909 = vmatprep.subr.bf16.mxu0 0
        %2910 = vmatpush1.bf16.msra.mxu0 0
        %2911 = vmatprep.subr.bf16.mxu0 0
        %2912 = vmatpush1.bf16.msra.mxu0 0
        %2913 = vmatprep.subr.bf16.mxu0 0
        %2914 = vmatpush1.bf16.msra.mxu0 0
        %2915 = vmatprep.mubr.bf16.mxu0 0
        %2916 = vmatmul.mubr.bf16.gmra.mrb[0].mxu0 %v2877
        %v2917 = vpop.f32.mrb[0].mxu0
        %v2918 = vadd.f32 0.0, %v2917
        %v2919 = vpop.f32.mrb[0].mxu0
        %v2920 = vpop.f32.mrb[0].mxu0
        %v2921 = vadd.f32 0.0, %v2920
        %v2922 = vpop.f32.mrb[0].mxu0
        %2923 = vdwg.mxu0
        %v2926 = vunpack.c.l.b16 %v2790
        %v2927 = vunpack.c.l.b16 %v2791
        %v2928 = vpack.c.b16 %v2927, %v2926
        %v2930 = vsel %vm2875, %v2928, 0
        %v2933 = vsel %vm2879, %v2792, 0
        %2935 = vmatprep.subr.bf16.mxu0 0
        %2936 = vmatpush1.bf16.msra.mxu0 %v2933
        %2937 = vmatprep.subr.bf16.mxu0 0
        %2938 = vmatpush1.bf16.msra.mxu0 0
        %2939 = vmatprep.subr.bf16.mxu0 0
        %2940 = vmatpush1.bf16.msra.mxu0 0
        %2941 = vmatprep.subr.bf16.mxu0 0
        %2942 = vmatpush1.bf16.msra.mxu0 0
        %2943 = vmatprep.subr.bf16.mxu0 0
        %2944 = vmatpush1.bf16.msra.mxu0 0
        %2945 = vmatprep.subr.bf16.mxu0 0
        %2946 = vmatpush1.bf16.msra.mxu0 0
        %2947 = vmatprep.subr.bf16.mxu0 0
        %2948 = vmatpush1.bf16.msra.mxu0 0
        %2949 = vmatprep.subr.bf16.mxu0 0
        %2950 = vmatpush1.bf16.msra.mxu0 0
        %2951 = vmatprep.subr.bf16.mxu0 0
        %2952 = vmatpush1.bf16.msra.mxu0 0
        %2953 = vmatprep.subr.bf16.mxu0 0
        %2954 = vmatpush1.bf16.msra.mxu0 0
        %2955 = vmatprep.subr.bf16.mxu0 0
        %2956 = vmatpush1.bf16.msra.mxu0 0
        %2957 = vmatprep.subr.bf16.mxu0 0
        %2958 = vmatpush1.bf16.msra.mxu0 0
        %2959 = vmatprep.subr.bf16.mxu0 0
        %2960 = vmatpush1.bf16.msra.mxu0 0
        %2961 = vmatprep.subr.bf16.mxu0 0
        %2962 = vmatpush1.bf16.msra.mxu0 0
        %2963 = vmatprep.subr.bf16.mxu0 0
        %2964 = vmatpush1.bf16.msra.mxu0 0
        %2965 = vmatprep.subr.bf16.mxu0 0
        %2966 = vmatpush1.bf16.msra.mxu0 0
        %2967 = vmatprep.mubr.bf16.mxu0 0
        %2968 = vmatmul.mubr.bf16.gmra.mrb[0].mxu0 %v2930
        %v2969 = vpop.f32.mrb[0].mxu0
        %v2970 = vadd.f32 %v2918, %v2969
        %v2971 = vpop.f32.mrb[0].mxu0
        %v2972 = vpop.f32.mrb[0].mxu0
        %v2973 = vadd.f32 %v2921, %v2972
        %v2974 = vpop.f32.mrb[0].mxu0
        %2975 = vdwg.mxu0
        %s2976 = scalar_lea.vmem [#allocation8], 64
        %v2977 = vld [vmem:[%s2976] sm:$0xf]
        %v2978 = vld [vmem:[%s2976 + $0x4] sm:$0xf]
        %v2979 = vld [vmem:[%s2976 + $0x8] sm:$0xf]
        %v2980 = vld [vmem:[%s2976 + $0xc] sm:$0xf]
        %v2981 = vld [vmem:[%s2976 + $0x10] sm:$0xf]
        %v2982 = vld [vmem:[%s2976 + $0x14] sm:$0xf]
        %v2983 = vld [vmem:[%s2976 + $0x18] sm:$0xf]
        %v2984 = vld [vmem:[%s2976 + $0x1c] sm:$0xf]
        %v2993 = vunpack.c.l.b16 %v2977
        %v2994 = vunpack.c.l.b16 %v2978
        %v2995 = vunpack.c.l.b16 %v2979
        %v2996 = vunpack.c.l.b16 %v2980
        %v2997 = vunpack.c.l.b16 %v2981
        %v2998 = vunpack.c.l.b16 %v2982
        %v2999 = vunpack.c.l.b16 %v2983
        %v3000 = vunpack.c.l.b16 %v2984
        %v3001 = vpack.c.b16 %v2994, %v2993
        %v3002 = vpack.c.b16 %v2996, %v2995
        %v3003 = vpack.c.b16 %v2998, %v2997
        %v3004 = vpack.c.b16 %v3000, %v2999
        %3009 = vmatprep.subr.bf16.mxu0 0
        %3010 = vmatpush1.bf16.msra.mxu0 %v3001
        %3011 = vmatprep.subr.bf16.mxu0 0
        %3012 = vmatpush1.bf16.msra.mxu0 %v3002
        %3013 = vmatprep.subr.bf16.mxu0 0
        %3014 = vmatpush1.bf16.msra.mxu0 %v3003
        %3015 = vmatprep.subr.bf16.mxu0 0
        %3016 = vmatpush1.bf16.msra.mxu0 %v3004
        %3017 = vmatprep.subr.bf16.mxu0 0
        %3018 = vmatpush1.bf16.msra.mxu0 0
        %3019 = vmatprep.subr.bf16.mxu0 0
        %3020 = vmatpush1.bf16.msra.mxu0 0
        %3021 = vmatprep.subr.bf16.mxu0 0
        %3022 = vmatpush1.bf16.msra.mxu0 0
        %3023 = vmatprep.subr.bf16.mxu0 0
        %3024 = vmatpush1.bf16.msra.mxu0 0
        %3025 = vmatprep.subr.bf16.mxu0 0
        %3026 = vmatpush1.bf16.msra.mxu0 0
        %3027 = vmatprep.subr.bf16.mxu0 0
        %3028 = vmatpush1.bf16.msra.mxu0 0
        %3029 = vmatprep.subr.bf16.mxu0 0
        %3030 = vmatpush1.bf16.msra.mxu0 0
        %3031 = vmatprep.subr.bf16.mxu0 0
        %3032 = vmatpush1.bf16.msra.mxu0 0
        %3033 = vmatprep.subr.bf16.mxu0 0
        %3034 = vmatpush1.bf16.msra.mxu0 0
        %3035 = vmatprep.subr.bf16.mxu0 0
        %3036 = vmatpush1.bf16.msra.mxu0 0
        %3037 = vmatprep.subr.bf16.mxu0 0
        %3038 = vmatpush1.bf16.msra.mxu0 0
        %3039 = vmatprep.subr.bf16.mxu0 0
        %3040 = vmatpush1.bf16.msra.mxu0 0
        %3041 = vmatprep.mubr.bf16.mxu0 0
        %3042 = vmatmul.mubr.bf16.gmra.mrb[0].mxu0 %v2748
        %v3043 = vpop.f32.mrb[0].mxu0
        %v3044 = vadd.f32 0.0, %v3043
        %v3045 = vpop.f32.mrb[0].mxu0
        %v3046 = vpop.f32.mrb[0].mxu0
        %v3047 = vpop.f32.mrb[0].mxu0
        %3048 = vdwg.mxu0
        %s3049 = scalar_lea.vmem [#allocation10], 16
        %v3050 = vld [vmem:[%s3049] sm:$0xf]
        %v3051 = vld [vmem:[%s3049 + $0x4] sm:$0xf]
        %v3052 = vpack.c.bf16 %v3044, %v3044
        %v3055 = vunpack.c.l.b16 %v3050
        %v3056 = vunpack.c.l.b16 %v3051
        %v3057 = vpack.c.b16 %v3056, %v3055
        %v3059 = vsel %vm2875, %v3057, 0
        %v3062 = vsel %vm2879, %v3052, 0
        %3064 = vmatprep.subr.bf16.mxu0 0
        %3065 = vmatpush1.bf16.msra.mxu0 %v3062
        %3066 = vmatprep.subr.bf16.mxu0 0
        %3067 = vmatpush1.bf16.msra.mxu0 0
        %3068 = vmatprep.subr.bf16.mxu0 0
        %3069 = vmatpush1.bf16.msra.mxu0 0
        %3070 = vmatprep.subr.bf16.mxu0 0
        %3071 = vmatpush1.bf16.msra.mxu0 0
        %3072 = vmatprep.subr.bf16.mxu0 0
        %3073 = vmatpush1.bf16.msra.mxu0 0
        %3074 = vmatprep.subr.bf16.mxu0 0
        %3075 = vmatpush1.bf16.msra.mxu0 0
        %3076 = vmatprep.subr.bf16.mxu0 0
        %3077 = vmatpush1.bf16.msra.mxu0 0
        %3078 = vmatprep.subr.bf16.mxu0 0
        %3079 = vmatpush1.bf16.msra.mxu0 0
        %3080 = vmatprep.subr.bf16.mxu0 0
        %3081 = vmatpush1.bf16.msra.mxu0 0
        %3082 = vmatprep.subr.bf16.mxu0 0
        %3083 = vmatpush1.bf16.msra.mxu0 0
        %3084 = vmatprep.subr.bf16.mxu0 0
        %3085 = vmatpush1.bf16.msra.mxu0 0
        %3086 = vmatprep.subr.bf16.mxu0 0
        %3087 = vmatpush1.bf16.msra.mxu0 0
        %3088 = vmatprep.subr.bf16.mxu0 0
        %3089 = vmatpush1.bf16.msra.mxu0 0
        %3090 = vmatprep.subr.bf16.mxu0 0
        %3091 = vmatpush1.bf16.msra.mxu0 0
        %3092 = vmatprep.subr.bf16.mxu0 0
        %3093 = vmatpush1.bf16.msra.mxu0 0
        %3094 = vmatprep.subr.bf16.mxu0 0
        %3095 = vmatpush1.bf16.msra.mxu0 0
        %3096 = vmatprep.mubr.bf16.mxu0 0
        %3097 = vmatmul.mubr.bf16.gmra.mrb[0].mxu0 %v3059
        %v3098 = vpop.f32.mrb[0].mxu0
        %v3099 = vadd.f32 0.0, %v3098
        %v3100 = vpop.f32.mrb[0].mxu0
        %v3101 = vpop.f32.mrb[0].mxu0
        %v3102 = vadd.f32 0.0, %v3101
        %v3103 = vpop.f32.mrb[0].mxu0
        %3104 = vdwg.mxu0
        %v3105 = vadd.f32 %v2970, %v3099
        %v3106 = vadd.f32 %v2973, %v3102
        %s3107 = scalar_lea.vmem [#allocation8], 96
        %v3108 = vld [vmem:[%s3107] sm:$0xf]
        %v3109 = vld [vmem:[%s3107 + $0x4] sm:$0xf]
        %v3110 = vld [vmem:[%s3107 + $0x8] sm:$0xf]
        %v3111 = vld [vmem:[%s3107 + $0xc] sm:$0xf]
        %v3112 = vld [vmem:[%s3107 + $0x10] sm:$0xf]
        %v3113 = vld [vmem:[%s3107 + $0x14] sm:$0xf]
        %v3114 = vld [vmem:[%s3107 + $0x18] sm:$0xf]
        %v3115 = vld [vmem:[%s3107 + $0x1c] sm:$0xf]
        %v3124 = vunpack.c.l.b16 %v3108
        %v3125 = vunpack.c.l.b16 %v3109
        %v3126 = vunpack.c.l.b16 %v3110
        %v3127 = vunpack.c.l.b16 %v3111
        %v3128 = vunpack.c.l.b16 %v3112
        %v3129 = vunpack.c.l.b16 %v3113
        %v3130 = vunpack.c.l.b16 %v3114
        %v3131 = vunpack.c.l.b16 %v3115
        %v3132 = vpack.c.b16 %v3125, %v3124
        %v3133 = vpack.c.b16 %v3127, %v3126
        %v3134 = vpack.c.b16 %v3129, %v3128
        %v3135 = vpack.c.b16 %v3131, %v3130
        %3140 = vmatprep.subr.bf16.mxu0 0
        %3141 = vmatpush1.bf16.msra.mxu0 %v3132
        %3142 = vmatprep.subr.bf16.mxu0 0
        %3143 = vmatpush1.bf16.msra.mxu0 %v3133
        %3144 = vmatprep.subr.bf16.mxu0 0
        %3145 = vmatpush1.bf16.msra.mxu0 %v3134
        %3146 = vmatprep.subr.bf16.mxu0 0
        %3147 = vmatpush1.bf16.msra.mxu0 %v3135
        %3148 = vmatprep.subr.bf16.mxu0 0
        %3149 = vmatpush1.bf16.msra.mxu0 0
        %3150 = vmatprep.subr.bf16.mxu0 0
        %3151 = vmatpush1.bf16.msra.mxu0 0
        %3152 = vmatprep.subr.bf16.mxu0 0
        %3153 = vmatpush1.bf16.msra.mxu0 0
        %3154 = vmatprep.subr.bf16.mxu0 0
        %3155 = vmatpush1.bf16.msra.mxu0 0
        %3156 = vmatprep.subr.bf16.mxu0 0
        %3157 = vmatpush1.bf16.msra.mxu0 0
        %3158 = vmatprep.subr.bf16.mxu0 0
        %3159 = vmatpush1.bf16.msra.mxu0 0
        %3160 = vmatprep.subr.bf16.mxu0 0
        %3161 = vmatpush1.bf16.msra.mxu0 0
        %3162 = vmatprep.subr.bf16.mxu0 0
        %3163 = vmatpush1.bf16.msra.mxu0 0
        %3164 = vmatprep.subr.bf16.mxu0 0
        %3165 = vmatpush1.bf16.msra.mxu0 0
        %3166 = vmatprep.subr.bf16.mxu0 0
        %3167 = vmatpush1.bf16.msra.mxu0 0
        %3168 = vmatprep.subr.bf16.mxu0 0
        %3169 = vmatpush1.bf16.msra.mxu0 0
        %3170 = vmatprep.subr.bf16.mxu0 0
        %3171 = vmatpush1.bf16.msra.mxu0 0
        %3172 = vmatprep.mubr.bf16.mxu0 0
        %3173 = vmatmul.mubr.bf16.gmra.mrb[0].mxu0 %v2748
        %v3174 = vpop.f32.mrb[0].mxu0
        %v3175 = vadd.f32 0.0, %v3174
        %v3176 = vpop.f32.mrb[0].mxu0
        %v3177 = vpop.f32.mrb[0].mxu0
        %v3178 = vpop.f32.mrb[0].mxu0
        %3179 = vdwg.mxu0
        %s3180 = scalar_lea.vmem [#allocation10], 24
        %v3181 = vld [vmem:[%s3180] sm:$0xf]
        %v3182 = vld [vmem:[%s3180 + $0x4] sm:$0xf]
        %v3183 = vpack.c.bf16 %v3175, %v3175
        %v3186 = vunpack.c.l.b16 %v3181
        %v3187 = vunpack.c.l.b16 %v3182
        %v3188 = vpack.c.b16 %v3187, %v3186
        %v3190 = vsel %vm2875, %v3188, 0
        %v3193 = vsel %vm2879, %v3183, 0
        %3195 = vmatprep.subr.bf16.mxu0 0
        %3196 = vmatpush1.bf16.msra.mxu0 %v3193
        %3197 = vmatprep.subr.bf16.mxu0 0
        %3198 = vmatpush1.bf16.msra.mxu0 0
        %3199 = vmatprep.subr.bf16.mxu0 0
        %3200 = vmatpush1.bf16.msra.mxu0 0
        %3201 = vmatprep.subr.bf16.mxu0 0
        %3202 = vmatpush1.bf16.msra.mxu0 0
        %3203 = vmatprep.subr.bf16.mxu0 0
        %3204 = vmatpush1.bf16.msra.mxu0 0
        %3205 = vmatprep.subr.bf16.mxu0 0
        %3206 = vmatpush1.bf16.msra.mxu0 0
        %3207 = vmatprep.subr.bf16.mxu0 0
        %3208 = vmatpush1.bf16.msra.mxu0 0
        %3209 = vmatprep.subr.bf16.mxu0 0
        %3210 = vmatpush1.bf16.msra.mxu0 0
        %3211 = vmatprep.subr.bf16.mxu0 0
        %3212 = vmatpush1.bf16.msra.mxu0 0
        %3213 = vmatprep.subr.bf16.mxu0 0
        %3214 = vmatpush1.bf16.msra.mxu0 0
        %3215 = vmatprep.subr.bf16.mxu0 0
        %3216 = vmatpush1.bf16.msra.mxu0 0
        %3217 = vmatprep.subr.bf16.mxu0 0
        %3218 = vmatpush1.bf16.msra.mxu0 0
        %3219 = vmatprep.subr.bf16.mxu0 0
        %3220 = vmatpush1.bf16.msra.mxu0 0
        %3221 = vmatprep.subr.bf16.mxu0 0
        %3222 = vmatpush1.bf16.msra.mxu0 0
        %3223 = vmatprep.subr.bf16.mxu0 0
        %3224 = vmatpush1.bf16.msra.mxu0 0
        %3225 = vmatprep.subr.bf16.mxu0 0
        %3226 = vmatpush1.bf16.msra.mxu0 0
        %3227 = vmatprep.mubr.bf16.mxu0 0
        %3228 = vmatmul.mubr.bf16.gmra.mrb[0].mxu0 %v3190
        %v3229 = vpop.f32.mrb[0].mxu0
        %v3230 = vadd.f32 0.0, %v3229
        %v3231 = vpop.f32.mrb[0].mxu0
        %v3232 = vpop.f32.mrb[0].mxu0
        %v3233 = vadd.f32 0.0, %v3232
        %v3234 = vpop.f32.mrb[0].mxu0
        %3235 = vdwg.mxu0
        %v3236 = vadd.f32 %v3105, %v3230
        %v3237 = vadd.f32 %v3106, %v3233
        %s3238 = scalar_lea.vmem [#allocation8], 128
        %v3239 = vld [vmem:[%s3238] sm:$0xf]
        %v3240 = vld [vmem:[%s3238 + $0x4] sm:$0xf]
        %v3241 = vld [vmem:[%s3238 + $0x8] sm:$0xf]
        %v3242 = vld [vmem:[%s3238 + $0xc] sm:$0xf]
        %v3243 = vld [vmem:[%s3238 + $0x10] sm:$0xf]
        %v3244 = vld [vmem:[%s3238 + $0x14] sm:$0xf]
        %v3245 = vld [vmem:[%s3238 + $0x18] sm:$0xf]
        %v3246 = vld [vmem:[%s3238 + $0x1c] sm:$0xf]
        %v3255 = vunpack.c.l.b16 %v3239
        %v3256 = vunpack.c.l.b16 %v3240
        %v3257 = vunpack.c.l.b16 %v3241
        %v3258 = vunpack.c.l.b16 %v3242
        %v3259 = vunpack.c.l.b16 %v3243
        %v3260 = vunpack.c.l.b16 %v3244
        %v3261 = vunpack.c.l.b16 %v3245
        %v3262 = vunpack.c.l.b16 %v3246
        %v3263 = vpack.c.b16 %v3256, %v3255
        %v3264 = vpack.c.b16 %v3258, %v3257
        %v3265 = vpack.c.b16 %v3260, %v3259
        %v3266 = vpack.c.b16 %v3262, %v3261
        %3271 = vmatprep.subr.bf16.mxu0 0
        %3272 = vmatpush1.bf16.msra.mxu0 %v3263
        %3273 = vmatprep.subr.bf16.mxu0 0
        %3274 = vmatpush1.bf16.msra.mxu0 %v3264
        %3275 = vmatprep.subr.bf16.mxu0 0
        %3276 = vmatpush1.bf16.msra.mxu0 %v3265
        %3277 = vmatprep.subr.bf16.mxu0 0
        %3278 = vmatpush1.bf16.msra.mxu0 %v3266
        %3279 = vmatprep.subr.bf16.mxu0 0
        %3280 = vmatpush1.bf16.msra.mxu0 0
        %3281 = vmatprep.subr.bf16.mxu0 0
        %3282 = vmatpush1.bf16.msra.mxu0 0
        %3283 = vmatprep.subr.bf16.mxu0 0
        %3284 = vmatpush1.bf16.msra.mxu0 0
        %3285 = vmatprep.subr.bf16.mxu0 0
        %3286 = vmatpush1.bf16.msra.mxu0 0
        %3287 = vmatprep.subr.bf16.mxu0 0
        %3288 = vmatpush1.bf16.msra.mxu0 0
        %3289 = vmatprep.subr.bf16.mxu0 0
        %3290 = vmatpush1.bf16.msra.mxu0 0
        %3291 = vmatprep.subr.bf16.mxu0 0
        %3292 = vmatpush1.bf16.msra.mxu0 0
        %3293 = vmatprep.subr.bf16.mxu0 0
        %3294 = vmatpush1.bf16.msra.mxu0 0
        %3295 = vmatprep.subr.bf16.mxu0 0
        %3296 = vmatpush1.bf16.msra.mxu0 0
        %3297 = vmatprep.subr.bf16.mxu0 0
        %3298 = vmatpush1.bf16.msra.mxu0 0
        %3299 = vmatprep.subr.bf16.mxu0 0
        %3300 = vmatpush1.bf16.msra.mxu0 0
        %3301 = vmatprep.subr.bf16.mxu0 0
        %3302 = vmatpush1.bf16.msra.mxu0 0
        %3303 = vmatprep.mubr.bf16.mxu0 0
        %3304 = vmatmul.mubr.bf16.gmra.mrb[0].mxu0 %v2748
        %v3305 = vpop.f32.mrb[0].mxu0
        %v3306 = vadd.f32 0.0, %v3305
        %v3307 = vpop.f32.mrb[0].mxu0
        %v3308 = vpop.f32.mrb[0].mxu0
        %v3309 = vpop.f32.mrb[0].mxu0
        %3310 = vdwg.mxu0
        %s3311 = scalar_lea.vmem [#allocation10], 32
        %v3312 = vld [vmem:[%s3311] sm:$0xf]
        %v3313 = vld [vmem:[%s3311 + $0x4] sm:$0xf]
        %v3314 = vpack.c.bf16 %v3306, %v3306
        %v3317 = vunpack.c.l.b16 %v3312
        %v3318 = vunpack.c.l.b16 %v3313
        %v3319 = vpack.c.b16 %v3318, %v3317
        %v3321 = vsel %vm2875, %v3319, 0
        %v3324 = vsel %vm2879, %v3314, 0
        %3326 = vmatprep.subr.bf16.mxu0 0
        %3327 = vmatpush1.bf16.msra.mxu0 %v3324
        %3328 = vmatprep.subr.bf16.mxu0 0
        %3329 = vmatpush1.bf16.msra.mxu0 0
        %3330 = vmatprep.subr.bf16.mxu0 0
        %3331 = vmatpush1.bf16.msra.mxu0 0
        %3332 = vmatprep.subr.bf16.mxu0 0
        %3333 = vmatpush1.bf16.msra.mxu0 0
        %3334 = vmatprep.subr.bf16.mxu0 0
        %3335 = vmatpush1.bf16.msra.mxu0 0
        %3336 = vmatprep.subr.bf16.mxu0 0
        %3337 = vmatpush1.bf16.msra.mxu0 0
        %3338 = vmatprep.subr.bf16.mxu0 0
        %3339 = vmatpush1.bf16.msra.mxu0 0
        %3340 = vmatprep.subr.bf16.mxu0 0
        %3341 = vmatpush1.bf16.msra.mxu0 0
        %3342 = vmatprep.subr.bf16.mxu0 0
        %3343 = vmatpush1.bf16.msra.mxu0 0
        %3344 = vmatprep.subr.bf16.mxu0 0
        %3345 = vmatpush1.bf16.msra.mxu0 0
        %3346 = vmatprep.subr.bf16.mxu0 0
        %3347 = vmatpush1.bf16.msra.mxu0 0
        %3348 = vmatprep.subr.bf16.mxu0 0
        %3349 = vmatpush1.bf16.msra.mxu0 0
        %3350 = vmatprep.subr.bf16.mxu0 0
        %3351 = vmatpush1.bf16.msra.mxu0 0
        %3352 = vmatprep.subr.bf16.mxu0 0
        %3353 = vmatpush1.bf16.msra.mxu0 0
        %3354 = vmatprep.subr.bf16.mxu0 0
        %3355 = vmatpush1.bf16.msra.mxu0 0
        %3356 = vmatprep.subr.bf16.mxu0 0
        %3357 = vmatpush1.bf16.msra.mxu0 0
        %3358 = vmatprep.mubr.bf16.mxu0 0
        %3359 = vmatmul.mubr.bf16.gmra.mrb[0].mxu0 %v3321
        %v3360 = vpop.f32.mrb[0].mxu0
        %v3361 = vadd.f32 0.0, %v3360
        %v3362 = vpop.f32.mrb[0].mxu0
        %v3363 = vpop.f32.mrb[0].mxu0
        %v3364 = vadd.f32 0.0, %v3363
        %v3365 = vpop.f32.mrb[0].mxu0
        %3366 = vdwg.mxu0
        %v3367 = vadd.f32 %v3236, %v3361
        %v3368 = vadd.f32 %v3237, %v3364
        %s3369 = scalar_lea.vmem [#allocation8], 160
        %v3370 = vld [vmem:[%s3369] sm:$0xf]
        %v3371 = vld [vmem:[%s3369 + $0x4] sm:$0xf]
        %v3372 = vld [vmem:[%s3369 + $0x8] sm:$0xf]
        %v3373 = vld [vmem:[%s3369 + $0xc] sm:$0xf]
        %v3374 = vld [vmem:[%s3369 + $0x10] sm:$0xf]
        %v3375 = vld [vmem:[%s3369 + $0x14] sm:$0xf]
        %v3376 = vld [vmem:[%s3369 + $0x18] sm:$0xf]
        %v3377 = vld [vmem:[%s3369 + $0x1c] sm:$0xf]
        %v3386 = vunpack.c.l.b16 %v3370
        %v3387 = vunpack.c.l.b16 %v3371
        %v3388 = vunpack.c.l.b16 %v3372
        %v3389 = vunpack.c.l.b16 %v3373
        %v3390 = vunpack.c.l.b16 %v3374
        %v3391 = vunpack.c.l.b16 %v3375
        %v3392 = vunpack.c.l.b16 %v3376
        %v3393 = vunpack.c.l.b16 %v3377
        %v3394 = vpack.c.b16 %v3387, %v3386
        %v3395 = vpack.c.b16 %v3389, %v3388
        %v3396 = vpack.c.b16 %v3391, %v3390
        %v3397 = vpack.c.b16 %v3393, %v3392
        %3402 = vmatprep.subr.bf16.mxu0 0
        %3403 = vmatpush1.bf16.msra.mxu0 %v3394
        %3404 = vmatprep.subr.bf16.mxu0 0
        %3405 = vmatpush1.bf16.msra.mxu0 %v3395
        %3406 = vmatprep.subr.bf16.mxu0 0
        %3407 = vmatpush1.bf16.msra.mxu0 %v3396
        %3408 = vmatprep.subr.bf16.mxu0 0
        %3409 = vmatpush1.bf16.msra.mxu0 %v3397
        %3410 = vmatprep.subr.bf16.mxu0 0
        %3411 = vmatpush1.bf16.msra.mxu0 0
        %3412 = vmatprep.subr.bf16.mxu0 0
        %3413 = vmatpush1.bf16.msra.mxu0 0
        %3414 = vmatprep.subr.bf16.mxu0 0
        %3415 = vmatpush1.bf16.msra.mxu0 0
        %3416 = vmatprep.subr.bf16.mxu0 0
        %3417 = vmatpush1.bf16.msra.mxu0 0
        %3418 = vmatprep.subr.bf16.mxu0 0
        %3419 = vmatpush1.bf16.msra.mxu0 0
        %3420 = vmatprep.subr.bf16.mxu0 0
        %3421 = vmatpush1.bf16.msra.mxu0 0
        %3422 = vmatprep.subr.bf16.mxu0 0
        %3423 = vmatpush1.bf16.msra.mxu0 0
        %3424 = vmatprep.subr.bf16.mxu0 0
        %3425 = vmatpush1.bf16.msra.mxu0 0
        %3426 = vmatprep.subr.bf16.mxu0 0
        %3427 = vmatpush1.bf16.msra.mxu0 0
        %3428 = vmatprep.subr.bf16.mxu0 0
        %3429 = vmatpush1.bf16.msra.mxu0 0
        %3430 = vmatprep.subr.bf16.mxu0 0
        %3431 = vmatpush1.bf16.msra.mxu0 0
        %3432 = vmatprep.subr.bf16.mxu0 0
        %3433 = vmatpush1.bf16.msra.mxu0 0
        %3434 = vmatprep.mubr.bf16.mxu0 0
        %3435 = vmatmul.mubr.bf16.gmra.mrb[0].mxu0 %v2748
        %v3436 = vpop.f32.mrb[0].mxu0
        %v3437 = vadd.f32 0.0, %v3436
        %v3438 = vpop.f32.mrb[0].mxu0
        %v3439 = vpop.f32.mrb[0].mxu0
        %v3440 = vpop.f32.mrb[0].mxu0
        %3441 = vdwg.mxu0
        %s3442 = scalar_lea.vmem [#allocation10], 40
        %v3443 = vld [vmem:[%s3442] sm:$0xf]
        %v3444 = vld [vmem:[%s3442 + $0x4] sm:$0xf]
        %v3445 = vpack.c.bf16 %v3437, %v3437
        %v3448 = vunpack.c.l.b16 %v3443
        %v3449 = vunpack.c.l.b16 %v3444
        %v3450 = vpack.c.b16 %v3449, %v3448
        %v3452 = vsel %vm2875, %v3450, 0
        %v3455 = vsel %vm2879, %v3445, 0
        %3457 = vmatprep.subr.bf16.mxu0 0
        %3458 = vmatpush1.bf16.msra.mxu0 %v3455
        %3459 = vmatprep.subr.bf16.mxu0 0
        %3460 = vmatpush1.bf16.msra.mxu0 0
        %3461 = vmatprep.subr.bf16.mxu0 0
        %3462 = vmatpush1.bf16.msra.mxu0 0
        %3463 = vmatprep.subr.bf16.mxu0 0
        %3464 = vmatpush1.bf16.msra.mxu0 0
        %3465 = vmatprep.subr.bf16.mxu0 0
        %3466 = vmatpush1.bf16.msra.mxu0 0
        %3467 = vmatprep.subr.bf16.mxu0 0
        %3468 = vmatpush1.bf16.msra.mxu0 0
        %3469 = vmatprep.subr.bf16.mxu0 0
        %3470 = vmatpush1.bf16.msra.mxu0 0
        %3471 = vmatprep.subr.bf16.mxu0 0
        %3472 = vmatpush1.bf16.msra.mxu0 0
        %3473 = vmatprep.subr.bf16.mxu0 0
        %3474 = vmatpush1.bf16.msra.mxu0 0
        %3475 = vmatprep.subr.bf16.mxu0 0
        %3476 = vmatpush1.bf16.msra.mxu0 0
        %3477 = vmatprep.subr.bf16.mxu0 0
        %3478 = vmatpush1.bf16.msra.mxu0 0
        %3479 = vmatprep.subr.bf16.mxu0 0
        %3480 = vmatpush1.bf16.msra.mxu0 0
        %3481 = vmatprep.subr.bf16.mxu0 0
        %3482 = vmatpush1.bf16.msra.mxu0 0
        %3483 = vmatprep.subr.bf16.mxu0 0
        %3484 = vmatpush1.bf16.msra.mxu0 0
        %3485 = vmatprep.subr.bf16.mxu0 0
        %3486 = vmatpush1.bf16.msra.mxu0 0
        %3487 = vmatprep.subr.bf16.mxu0 0
        %3488 = vmatpush1.bf16.msra.mxu0 0
        %3489 = vmatprep.mubr.bf16.mxu0 0
        %3490 = vmatmul.mubr.bf16.gmra.mrb[0].mxu0 %v3452
        %v3491 = vpop.f32.mrb[0].mxu0
        %v3492 = vadd.f32 0.0, %v3491
        %v3493 = vpop.f32.mrb[0].mxu0
        %v3494 = vpop.f32.mrb[0].mxu0
        %v3495 = vadd.f32 0.0, %v3494
        %v3496 = vpop.f32.mrb[0].mxu0
        %3497 = vdwg.mxu0
        %v3498 = vadd.f32 %v3367, %v3492
        %v3499 = vadd.f32 %v3368, %v3495
        %s3500 = scalar_lea.vmem [#allocation8], 192
        %v3501 = vld [vmem:[%s3500] sm:$0xf]
        %v3502 = vld [vmem:[%s3500 + $0x4] sm:$0xf]
        %v3503 = vld [vmem:[%s3500 + $0x8] sm:$0xf]
        %v3504 = vld [vmem:[%s3500 + $0xc] sm:$0xf]
        %v3505 = vld [vmem:[%s3500 + $0x10] sm:$0xf]
        %v3506 = vld [vmem:[%s3500 + $0x14] sm:$0xf]
        %v3507 = vld [vmem:[%s3500 + $0x18] sm:$0xf]
        %v3508 = vld [vmem:[%s3500 + $0x1c] sm:$0xf]
        %v3517 = vunpack.c.l.b16 %v3501
        %v3518 = vunpack.c.l.b16 %v3502
        %v3519 = vunpack.c.l.b16 %v3503
        %v3520 = vunpack.c.l.b16 %v3504
        %v3521 = vunpack.c.l.b16 %v3505
        %v3522 = vunpack.c.l.b16 %v3506
        %v3523 = vunpack.c.l.b16 %v3507
        %v3524 = vunpack.c.l.b16 %v3508
        %v3525 = vpack.c.b16 %v3518, %v3517
        %v3526 = vpack.c.b16 %v3520, %v3519
        %v3527 = vpack.c.b16 %v3522, %v3521
        %v3528 = vpack.c.b16 %v3524, %v3523
        %3533 = vmatprep.subr.bf16.mxu0 0
        %3534 = vmatpush1.bf16.msra.mxu0 %v3525
        %3535 = vmatprep.subr.bf16.mxu0 0
        %3536 = vmatpush1.bf16.msra.mxu0 %v3526
        %3537 = vmatprep.subr.bf16.mxu0 0
        %3538 = vmatpush1.bf16.msra.mxu0 %v3527
        %3539 = vmatprep.subr.bf16.mxu0 0
        %3540 = vmatpush1.bf16.msra.mxu0 %v3528
        %3541 = vmatprep.subr.bf16.mxu0 0
        %3542 = vmatpush1.bf16.msra.mxu0 0
        %3543 = vmatprep.subr.bf16.mxu0 0
        %3544 = vmatpush1.bf16.msra.mxu0 0
        %3545 = vmatprep.subr.bf16.mxu0 0
        %3546 = vmatpush1.bf16.msra.mxu0 0
        %3547 = vmatprep.subr.bf16.mxu0 0
        %3548 = vmatpush1.bf16.msra.mxu0 0
        %3549 = vmatprep.subr.bf16.mxu0 0
        %3550 = vmatpush1.bf16.msra.mxu0 0
        %3551 = vmatprep.subr.bf16.mxu0 0
        %3552 = vmatpush1.bf16.msra.mxu0 0
        %3553 = vmatprep.subr.bf16.mxu0 0
        %3554 = vmatpush1.bf16.msra.mxu0 0
        %3555 = vmatprep.subr.bf16.mxu0 0
        %3556 = vmatpush1.bf16.msra.mxu0 0
        %3557 = vmatprep.subr.bf16.mxu0 0
        %3558 = vmatpush1.bf16.msra.mxu0 0
        %3559 = vmatprep.subr.bf16.mxu0 0
        %3560 = vmatpush1.bf16.msra.mxu0 0
        %3561 = vmatprep.subr.bf16.mxu0 0
        %3562 = vmatpush1.bf16.msra.mxu0 0
        %3563 = vmatprep.subr.bf16.mxu0 0
        %3564 = vmatpush1.bf16.msra.mxu0 0
        %3565 = vmatprep.mubr.bf16.mxu0 0
        %3566 = vmatmul.mubr.bf16.gmra.mrb[0].mxu0 %v2748
        %v3567 = vpop.f32.mrb[0].mxu0
        %v3568 = vadd.f32 0.0, %v3567
        %v3569 = vpop.f32.mrb[0].mxu0
        %v3570 = vpop.f32.mrb[0].mxu0
        %v3571 = vpop.f32.mrb[0].mxu0
        %3572 = vdwg.mxu0
        %s3573 = scalar_lea.vmem [#allocation10], 48
        %v3574 = vld [vmem:[%s3573] sm:$0xf]
        %v3575 = vld [vmem:[%s3573 + $0x4] sm:$0xf]
        %v3576 = vpack.c.bf16 %v3568, %v3568
        %v3579 = vunpack.c.l.b16 %v3574
        %v3580 = vunpack.c.l.b16 %v3575
        %v3581 = vpack.c.b16 %v3580, %v3579
        %v3583 = vsel %vm2875, %v3581, 0
        %v3586 = vsel %vm2879, %v3576, 0
        %3588 = vmatprep.subr.bf16.mxu0 0
        %3589 = vmatpush1.bf16.msra.mxu0 %v3586
        %3590 = vmatprep.subr.bf16.mxu0 0
        %3591 = vmatpush1.bf16.msra.mxu0 0
        %3592 = vmatprep.subr.bf16.mxu0 0
        %3593 = vmatpush1.bf16.msra.mxu0 0
        %3594 = vmatprep.subr.bf16.mxu0 0
        %3595 = vmatpush1.bf16.msra.mxu0 0
        %3596 = vmatprep.subr.bf16.mxu0 0
        %3597 = vmatpush1.bf16.msra.mxu0 0
        %3598 = vmatprep.subr.bf16.mxu0 0
        %3599 = vmatpush1.bf16.msra.mxu0 0
        %3600 = vmatprep.subr.bf16.mxu0 0
        %3601 = vmatpush1.bf16.msra.mxu0 0
        %3602 = vmatprep.subr.bf16.mxu0 0
        %3603 = vmatpush1.bf16.msra.mxu0 0
        %3604 = vmatprep.subr.bf16.mxu0 0
        %3605 = vmatpush1.bf16.msra.mxu0 0
        %3606 = vmatprep.subr.bf16.mxu0 0
        %3607 = vmatpush1.bf16.msra.mxu0 0
        %3608 = vmatprep.subr.bf16.mxu0 0
        %3609 = vmatpush1.bf16.msra.mxu0 0
        %3610 = vmatprep.subr.bf16.mxu0 0
        %3611 = vmatpush1.bf16.msra.mxu0 0
        %3612 = vmatprep.subr.bf16.mxu0 0
        %3613 = vmatpush1.bf16.msra.mxu0 0
        %3614 = vmatprep.subr.bf16.mxu0 0
        %3615 = vmatpush1.bf16.msra.mxu0 0
        %3616 = vmatprep.subr.bf16.mxu0 0
        %3617 = vmatpush1.bf16.msra.mxu0 0
        %3618 = vmatprep.subr.bf16.mxu0 0
        %3619 = vmatpush1.bf16.msra.mxu0 0
        %3620 = vmatprep.mubr.bf16.mxu0 0
        %3621 = vmatmul.mubr.bf16.gmra.mrb[0].mxu0 %v3583
        %v3622 = vpop.f32.mrb[0].mxu0
        %v3623 = vadd.f32 0.0, %v3622
        %v3624 = vpop.f32.mrb[0].mxu0
        %v3625 = vpop.f32.mrb[0].mxu0
        %v3626 = vadd.f32 0.0, %v3625
        %v3627 = vpop.f32.mrb[0].mxu0
        %3628 = vdwg.mxu0
        %v3629 = vadd.f32 %v3498, %v3623
        %v3630 = vadd.f32 %v3499, %v3626
        %s3631 = scalar_lea.vmem [#allocation8], 224
        %v3632 = vld [vmem:[%s3631] sm:$0xf]
        %v3633 = vld [vmem:[%s3631 + $0x4] sm:$0xf]
        %v3634 = vld [vmem:[%s3631 + $0x8] sm:$0xf]
        %v3635 = vld [vmem:[%s3631 + $0xc] sm:$0xf]
        %v3636 = vld [vmem:[%s3631 + $0x10] sm:$0xf]
        %v3637 = vld [vmem:[%s3631 + $0x14] sm:$0xf]
        %v3638 = vld [vmem:[%s3631 + $0x18] sm:$0xf]
        %v3639 = vld [vmem:[%s3631 + $0x1c] sm:$0xf]
        %v3648 = vunpack.c.l.b16 %v3632
        %v3649 = vunpack.c.l.b16 %v3633
        %v3650 = vunpack.c.l.b16 %v3634
        %v3651 = vunpack.c.l.b16 %v3635
        %v3652 = vunpack.c.l.b16 %v3636
        %v3653 = vunpack.c.l.b16 %v3637
        %v3654 = vunpack.c.l.b16 %v3638
        %v3655 = vunpack.c.l.b16 %v3639
        %v3656 = vpack.c.b16 %v3649, %v3648
        %v3657 = vpack.c.b16 %v3651, %v3650
        %v3658 = vpack.c.b16 %v3653, %v3652
        %v3659 = vpack.c.b16 %v3655, %v3654
        %3664 = vmatprep.subr.bf16.mxu0 0
        %3665 = vmatpush1.bf16.msra.mxu0 %v3656
        %3666 = vmatprep.subr.bf16.mxu0 0
        %3667 = vmatpush1.bf16.msra.mxu0 %v3657
        %3668 = vmatprep.subr.bf16.mxu0 0
        %3669 = vmatpush1.bf16.msra.mxu0 %v3658
        %3670 = vmatprep.subr.bf16.mxu0 0
        %3671 = vmatpush1.bf16.msra.mxu0 %v3659
        %3672 = vmatprep.subr.bf16.mxu0 0
        %3673 = vmatpush1.bf16.msra.mxu0 0
        %3674 = vmatprep.subr.bf16.mxu0 0
        %3675 = vmatpush1.bf16.msra.mxu0 0
        %3676 = vmatprep.subr.bf16.mxu0 0
        %3677 = vmatpush1.bf16.msra.mxu0 0
        %3678 = vmatprep.subr.bf16.mxu0 0
        %3679 = vmatpush1.bf16.msra.mxu0 0
        %3680 = vmatprep.subr.bf16.mxu0 0
        %3681 = vmatpush1.bf16.msra.mxu0 0
        %3682 = vmatprep.subr.bf16.mxu0 0
        %3683 = vmatpush1.bf16.msra.mxu0 0
        %3684 = vmatprep.subr.bf16.mxu0 0
        %3685 = vmatpush1.bf16.msra.mxu0 0
        %3686 = vmatprep.subr.bf16.mxu0 0
        %3687 = vmatpush1.bf16.msra.mxu0 0
        %3688 = vmatprep.subr.bf16.mxu0 0
        %3689 = vmatpush1.bf16.msra.mxu0 0
        %3690 = vmatprep.subr.bf16.mxu0 0
        %3691 = vmatpush1.bf16.msra.mxu0 0
        %3692 = vmatprep.subr.bf16.mxu0 0
        %3693 = vmatpush1.bf16.msra.mxu0 0
        %3694 = vmatprep.subr.bf16.mxu0 0
        %3695 = vmatpush1.bf16.msra.mxu0 0
        %3696 = vmatprep.mubr.bf16.mxu0 0
        %3697 = vmatmul.mubr.bf16.gmra.mrb[0].mxu0 %v2748
        %v3698 = vpop.f32.mrb[0].mxu0
        %v3699 = vadd.f32 0.0, %v3698
        %v3700 = vpop.f32.mrb[0].mxu0
        %v3701 = vpop.f32.mrb[0].mxu0
        %v3702 = vpop.f32.mrb[0].mxu0
        %3703 = vdwg.mxu0
        %s3704 = scalar_lea.vmem [#allocation10], 56
        %v3705 = vld [vmem:[%s3704] sm:$0xf]
        %v3706 = vld [vmem:[%s3704 + $0x4] sm:$0xf]
        %v3707 = vpack.c.bf16 %v3699, %v3699
        %v3710 = vunpack.c.l.b16 %v3705
        %v3711 = vunpack.c.l.b16 %v3706
        %v3712 = vpack.c.b16 %v3711, %v3710
        %v3714 = vsel %vm2875, %v3712, 0
        %v3717 = vsel %vm2879, %v3707, 0
        %3719 = vmatprep.subr.bf16.mxu0 0
        %3720 = vmatpush1.bf16.msra.mxu0 %v3717
        %3721 = vmatprep.subr.bf16.mxu0 0
        %3722 = vmatpush1.bf16.msra.mxu0 0
        %3723 = vmatprep.subr.bf16.mxu0 0
        %3724 = vmatpush1.bf16.msra.mxu0 0
        %3725 = vmatprep.subr.bf16.mxu0 0
        %3726 = vmatpush1.bf16.msra.mxu0 0
        %3727 = vmatprep.subr.bf16.mxu0 0
        %3728 = vmatpush1.bf16.msra.mxu0 0
        %3729 = vmatprep.subr.bf16.mxu0 0
        %3730 = vmatpush1.bf16.msra.mxu0 0
        %3731 = vmatprep.subr.bf16.mxu0 0
        %3732 = vmatpush1.bf16.msra.mxu0 0
        %3733 = vmatprep.subr.bf16.mxu0 0
        %3734 = vmatpush1.bf16.msra.mxu0 0
        %3735 = vmatprep.subr.bf16.mxu0 0
        %3736 = vmatpush1.bf16.msra.mxu0 0
        %3737 = vmatprep.subr.bf16.mxu0 0
        %3738 = vmatpush1.bf16.msra.mxu0 0
        %3739 = vmatprep.subr.bf16.mxu0 0
        %3740 = vmatpush1.bf16.msra.mxu0 0
        %3741 = vmatprep.subr.bf16.mxu0 0
        %3742 = vmatpush1.bf16.msra.mxu0 0
        %3743 = vmatprep.subr.bf16.mxu0 0
        %3744 = vmatpush1.bf16.msra.mxu0 0
        %3745 = vmatprep.subr.bf16.mxu0 0
        %3746 = vmatpush1.bf16.msra.mxu0 0
        %3747 = vmatprep.subr.bf16.mxu0 0
        %3748 = vmatpush1.bf16.msra.mxu0 0
        %3749 = vmatprep.subr.bf16.mxu0 0
        %3750 = vmatpush1.bf16.msra.mxu0 0
        %3751 = vmatprep.mubr.bf16.mxu0 0
        %3752 = vmatmul.mubr.bf16.gmra.mrb[0].mxu0 %v3714
        %v3753 = vpop.f32.mrb[0].mxu0
        %v3754 = vadd.f32 0.0, %v3753
        %v3755 = vpop.f32.mrb[0].mxu0
        %v3756 = vpop.f32.mrb[0].mxu0
        %v3757 = vadd.f32 0.0, %v3756
        %v3758 = vpop.f32.mrb[0].mxu0
        %3759 = vdwg.mxu0
        %v3760 = vadd.f32 %v3629, %v3754
        %v3761 = vadd.f32 %v3630, %v3757
        %s3762 = scalar_lea.vmem [#allocation8], 256
        %v3763 = vld [vmem:[%s3762] sm:$0xf]
        %v3764 = vld [vmem:[%s3762 + $0x4] sm:$0xf]
        %v3765 = vld [vmem:[%s3762 + $0x8] sm:$0xf]
        %v3766 = vld [vmem:[%s3762 + $0xc] sm:$0xf]
        %v3767 = vld [vmem:[%s3762 + $0x10] sm:$0xf]
        %v3768 = vld [vmem:[%s3762 + $0x14] sm:$0xf]
        %v3769 = vld [vmem:[%s3762 + $0x18] sm:$0xf]
        %v3770 = vld [vmem:[%s3762 + $0x1c] sm:$0xf]
        %v3779 = vunpack.c.l.b16 %v3763
        %v3780 = vunpack.c.l.b16 %v3764
        %v3781 = vunpack.c.l.b16 %v3765
        %v3782 = vunpack.c.l.b16 %v3766
        %v3783 = vunpack.c.l.b16 %v3767
        %v3784 = vunpack.c.l.b16 %v3768
        %v3785 = vunpack.c.l.b16 %v3769
        %v3786 = vunpack.c.l.b16 %v3770
        %v3787 = vpack.c.b16 %v3780, %v3779
        %v3788 = vpack.c.b16 %v3782, %v3781
        %v3789 = vpack.c.b16 %v3784, %v3783
        %v3790 = vpack.c.b16 %v3786, %v3785
        %3795 = vmatprep.subr.bf16.mxu0 0
        %3796 = vmatpush1.bf16.msra.mxu0 %v3787
        %3797 = vmatprep.subr.bf16.mxu0 0
        %3798 = vmatpush1.bf16.msra.mxu0 %v3788
        %3799 = vmatprep.subr.bf16.mxu0 0
        %3800 = vmatpush1.bf16.msra.mxu0 %v3789
        %3801 = vmatprep.subr.bf16.mxu0 0
        %3802 = vmatpush1.bf16.msra.mxu0 %v3790
        %3803 = vmatprep.subr.bf16.mxu0 0
        %3804 = vmatpush1.bf16.msra.mxu0 0
        %3805 = vmatprep.subr.bf16.mxu0 0
        %3806 = vmatpush1.bf16.msra.mxu0 0
        %3807 = vmatprep.subr.bf16.mxu0 0
        %3808 = vmatpush1.bf16.msra.mxu0 0
        %3809 = vmatprep.subr.bf16.mxu0 0
        %3810 = vmatpush1.bf16.msra.mxu0 0
        %3811 = vmatprep.subr.bf16.mxu0 0
        %3812 = vmatpush1.bf16.msra.mxu0 0
        %3813 = vmatprep.subr.bf16.mxu0 0
        %3814 = vmatpush1.bf16.msra.mxu0 0
        %3815 = vmatprep.subr.bf16.mxu0 0
        %3816 = vmatpush1.bf16.msra.mxu0 0
        %3817 = vmatprep.subr.bf16.mxu0 0
        %3818 = vmatpush1.bf16.msra.mxu0 0
        %3819 = vmatprep.subr.bf16.mxu0 0
        %3820 = vmatpush1.bf16.msra.mxu0 0
        %3821 = vmatprep.subr.bf16.mxu0 0
        %3822 = vmatpush1.bf16.msra.mxu0 0
        %3823 = vmatprep.subr.bf16.mxu0 0
        %3824 = vmatpush1.bf16.msra.mxu0 0
        %3825 = vmatprep.subr.bf16.mxu0 0
        %3826 = vmatpush1.bf16.msra.mxu0 0
        %3827 = vmatprep.mubr.bf16.mxu0 0
        %3828 = vmatmul.mubr.bf16.gmra.mrb[0].mxu0 %v2748
        %v3829 = vpop.f32.mrb[0].mxu0
        %v3830 = vadd.f32 0.0, %v3829
        %v3831 = vpop.f32.mrb[0].mxu0
        %v3832 = vpop.f32.mrb[0].mxu0
        %v3833 = vpop.f32.mrb[0].mxu0
        %3834 = vdwg.mxu0
        %s3835 = scalar_lea.vmem [#allocation10], 64
        %v3836 = vld [vmem:[%s3835] sm:$0xf]
        %v3837 = vld [vmem:[%s3835 + $0x4] sm:$0xf]
        %v3838 = vpack.c.bf16 %v3830, %v3830
        %v3841 = vunpack.c.l.b16 %v3836
        %v3842 = vunpack.c.l.b16 %v3837
        %v3843 = vpack.c.b16 %v3842, %v3841
        %v3845 = vsel %vm2875, %v3843, 0
        %v3848 = vsel %vm2879, %v3838, 0
        %3850 = vmatprep.subr.bf16.mxu0 0
        %3851 = vmatpush1.bf16.msra.mxu0 %v3848
        %3852 = vmatprep.subr.bf16.mxu0 0
        %3853 = vmatpush1.bf16.msra.mxu0 0
        %3854 = vmatprep.subr.bf16.mxu0 0
        %3855 = vmatpush1.bf16.msra.mxu0 0
        %3856 = vmatprep.subr.bf16.mxu0 0
        %3857 = vmatpush1.bf16.msra.mxu0 0
        %3858 = vmatprep.subr.bf16.mxu0 0
        %3859 = vmatpush1.bf16.msra.mxu0 0
        %3860 = vmatprep.subr.bf16.mxu0 0
        %3861 = vmatpush1.bf16.msra.mxu0 0
        %3862 = vmatprep.subr.bf16.mxu0 0
        %3863 = vmatpush1.bf16.msra.mxu0 0
        %3864 = vmatprep.subr.bf16.mxu0 0
        %3865 = vmatpush1.bf16.msra.mxu0 0
        %3866 = vmatprep.subr.bf16.mxu0 0
        %3867 = vmatpush1.bf16.msra.mxu0 0
        %3868 = vmatprep.subr.bf16.mxu0 0
        %3869 = vmatpush1.bf16.msra.mxu0 0
        %3870 = vmatprep.subr.bf16.mxu0 0
        %3871 = vmatpush1.bf16.msra.mxu0 0
        %3872 = vmatprep.subr.bf16.mxu0 0
        %3873 = vmatpush1.bf16.msra.mxu0 0
        %3874 = vmatprep.subr.bf16.mxu0 0
        %3875 = vmatpush1.bf16.msra.mxu0 0
        %3876 = vmatprep.subr.bf16.mxu0 0
        %3877 = vmatpush1.bf16.msra.mxu0 0
        %3878 = vmatprep.subr.bf16.mxu0 0
        %3879 = vmatpush1.bf16.msra.mxu0 0
        %3880 = vmatprep.subr.bf16.mxu0 0
        %3881 = vmatpush1.bf16.msra.mxu0 0
        %3882 = vmatprep.mubr.bf16.mxu0 0
        %3883 = vmatmul.mubr.bf16.gmra.mrb[0].mxu0 %v3845
        %v3884 = vpop.f32.mrb[0].mxu0
        %v3885 = vadd.f32 0.0, %v3884
        %v3886 = vpop.f32.mrb[0].mxu0
        %v3887 = vpop.f32.mrb[0].mxu0
        %v3888 = vadd.f32 0.0, %v3887
        %v3889 = vpop.f32.mrb[0].mxu0
        %3890 = vdwg.mxu0
        %v3891 = vadd.f32 %v3760, %v3885
        %v3892 = vadd.f32 %v3761, %v3888
        %v3893 = vld [vmem:[#allocation11] sm:$0xff]
        %v3894 = vld [vmem:[#allocation11 + $0x8] sm:$0xff]
        %3896 = vset.pattern.permute.xlu0 0
        %3897 = vperm.xlu0 %3896, %v3893
        %v3898 = vpop.permute.xlu0 %3897
        %3901 = vset.pattern.permute.xlu0 0
        %3902 = vperm.xlu0 %3901, %v3894
        %v3903 = vpop.permute.xlu0 %3902
        %v3905 = vadd.f32 %v3891, %v3898
        %v3906 = vadd.f32 %v3892, %v3903
        %v3907 = vmax.f32 %v3905, 0.0
        %v3908 = vmax.f32 %v3906, 0.0
        %v3909 = vpack.c.bf16 %v3908, %v3907
        %v3910 = vld [vmem:[#allocation13] sm:$0xf]
        %v3911 = vld [vmem:[#allocation13 + $0x4] sm:$0xf]
        %s3912 = scalar_lea.vmem [#allocation13], 8
        %v3913 = vld [vmem:[%s3912] sm:$0xf]
        %v3914 = vld [vmem:[%s3912 + $0x4] sm:$0xf]
        %v3916 = vshrl.u32 %v3909, 16
        %v3920 = vunpack.c.l.b16 %v3913
        %v3921 = vunpack.c.l.b16 %v3914
        %v3922 = vpack.c.b16 %v3921, %v3920
        %vm3924 = vcmask 130048
        %v3926 = vsel %vm3924, %v3916, 0
        %3928 = vmatprep.subr.bf16.mxu0 0
        %3929 = vmatpush1.bf16.msra.mxu0 %v3922
        %3930 = vmatprep.subr.bf16.mxu0 0
        %3931 = vmatpush1.bf16.msra.mxu0 0
        %3932 = vmatprep.subr.bf16.mxu0 0
        %3933 = vmatpush1.bf16.msra.mxu0 0
        %3934 = vmatprep.subr.bf16.mxu0 0
        %3935 = vmatpush1.bf16.msra.mxu0 0
        %3936 = vmatprep.subr.bf16.mxu0 0
        %3937 = vmatpush1.bf16.msra.mxu0 0
        %3938 = vmatprep.subr.bf16.mxu0 0
        %3939 = vmatpush1.bf16.msra.mxu0 0
        %3940 = vmatprep.subr.bf16.mxu0 0
        %3941 = vmatpush1.bf16.msra.mxu0 0
        %3942 = vmatprep.subr.bf16.mxu0 0
        %3943 = vmatpush1.bf16.msra.mxu0 0
        %3944 = vmatprep.subr.bf16.mxu0 0
        %3945 = vmatpush1.bf16.msra.mxu0 0
        %3946 = vmatprep.subr.bf16.mxu0 0
        %3947 = vmatpush1.bf16.msra.mxu0 0
        %3948 = vmatprep.subr.bf16.mxu0 0
        %3949 = vmatpush1.bf16.msra.mxu0 0
        %3950 = vmatprep.subr.bf16.mxu0 0
        %3951 = vmatpush1.bf16.msra.mxu0 0
        %3952 = vmatprep.subr.bf16.mxu0 0
        %3953 = vmatpush1.bf16.msra.mxu0 0
        %3954 = vmatprep.subr.bf16.mxu0 0
        %3955 = vmatpush1.bf16.msra.mxu0 0
        %3956 = vmatprep.subr.bf16.mxu0 0
        %3957 = vmatpush1.bf16.msra.mxu0 0
        %3958 = vmatprep.subr.bf16.mxu0 0
        %3959 = vmatpush1.bf16.msra.mxu0 0
        %3960 = vmatprep.mubr.bf16.mxu0 0
        %3961 = vmatmul.mubr.bf16.gmra.mrb[0].mxu0 %v3926
        %v3962 = vpop.f32.mrb[0].mxu0
        %v3963 = vadd.f32 0.0, %v3962
        %v3964 = vpop.f32.mrb[0].mxu0
        %v3965 = vpop.f32.mrb[0].mxu0
        %v3966 = vpop.f32.mrb[0].mxu0
        %3967 = vdwg.mxu0
        %v3970 = vunpack.c.l.b16 %v3910
        %v3971 = vunpack.c.l.b16 %v3911
        %v3972 = vpack.c.b16 %v3971, %v3970
        %v3974 = vsel %vm3924, %v3909, 0
        %3976 = vmatprep.subr.bf16.mxu0 0
        %3977 = vmatpush1.bf16.msra.mxu0 %v3972
        %3978 = vmatprep.subr.bf16.mxu0 0
        %3979 = vmatpush1.bf16.msra.mxu0 0
        %3980 = vmatprep.subr.bf16.mxu0 0
        %3981 = vmatpush1.bf16.msra.mxu0 0
        %3982 = vmatprep.subr.bf16.mxu0 0
        %3983 = vmatpush1.bf16.msra.mxu0 0
        %3984 = vmatprep.subr.bf16.mxu0 0
        %3985 = vmatpush1.bf16.msra.mxu0 0
        %3986 = vmatprep.subr.bf16.mxu0 0
        %3987 = vmatpush1.bf16.msra.mxu0 0
        %3988 = vmatprep.subr.bf16.mxu0 0
        %3989 = vmatpush1.bf16.msra.mxu0 0
        %3990 = vmatprep.subr.bf16.mxu0 0
        %3991 = vmatpush1.bf16.msra.mxu0 0
        %3992 = vmatprep.subr.bf16.mxu0 0
        %3993 = vmatpush1.bf16.msra.mxu0 0
        %3994 = vmatprep.subr.bf16.mxu0 0
        %3995 = vmatpush1.bf16.msra.mxu0 0
        %3996 = vmatprep.subr.bf16.mxu0 0
        %3997 = vmatpush1.bf16.msra.mxu0 0
        %3998 = vmatprep.subr.bf16.mxu0 0
        %3999 = vmatpush1.bf16.msra.mxu0 0
        %4000 = vmatprep.subr.bf16.mxu0 0
        %4001 = vmatpush1.bf16.msra.mxu0 0
        %4002 = vmatprep.subr.bf16.mxu0 0
        %4003 = vmatpush1.bf16.msra.mxu0 0
        %4004 = vmatprep.subr.bf16.mxu0 0
        %4005 = vmatpush1.bf16.msra.mxu0 0
        %4006 = vmatprep.subr.bf16.mxu0 0
        %4007 = vmatpush1.bf16.msra.mxu0 0
        %4008 = vmatprep.mubr.bf16.mxu0 0
        %4009 = vmatmul.mubr.bf16.gmra.mrb[0].mxu0 %v3974
        %v4010 = vpop.f32.mrb[0].mxu0
        %v4011 = vadd.f32 %v3963, %v4010
        %v4012 = vpop.f32.mrb[0].mxu0
        %v4013 = vpop.f32.mrb[0].mxu0
        %v4014 = vpop.f32.mrb[0].mxu0
        %4015 = vdwg.mxu0
        %s4016 = scalar_lea.vmem [#allocation13], 16
        %v4017 = vld [vmem:[%s4016] sm:$0xf]
        %v4018 = vld [vmem:[%s4016 + $0x4] sm:$0xf]
        %v4020 = vrot.slane %v3909, 1
        %v4023 = vunpack.c.l.b16 %v4017
        %v4024 = vunpack.c.l.b16 %v4018
        %v4025 = vpack.c.b16 %v4024, %v4023
        %v4028 = vsel %vm3924, %v4020, 0
        %4030 = vmatprep.subr.bf16.mxu0 0
        %4031 = vmatpush1.bf16.msra.mxu0 %v4025
        %4032 = vmatprep.subr.bf16.mxu0 0
        %4033 = vmatpush1.bf16.msra.mxu0 0
        %4034 = vmatprep.subr.bf16.mxu0 0
        %4035 = vmatpush1.bf16.msra.mxu0 0
        %4036 = vmatprep.subr.bf16.mxu0 0
        %4037 = vmatpush1.bf16.msra.mxu0 0
        %4038 = vmatprep.subr.bf16.mxu0 0
        %4039 = vmatpush1.bf16.msra.mxu0 0
        %4040 = vmatprep.subr.bf16.mxu0 0
        %4041 = vmatpush1.bf16.msra.mxu0 0
        %4042 = vmatprep.subr.bf16.mxu0 0
        %4043 = vmatpush1.bf16.msra.mxu0 0
        %4044 = vmatprep.subr.bf16.mxu0 0
        %4045 = vmatpush1.bf16.msra.mxu0 0
        %4046 = vmatprep.subr.bf16.mxu0 0
        %4047 = vmatpush1.bf16.msra.mxu0 0
        %4048 = vmatprep.subr.bf16.mxu0 0
        %4049 = vmatpush1.bf16.msra.mxu0 0
        %4050 = vmatprep.subr.bf16.mxu0 0
        %4051 = vmatpush1.bf16.msra.mxu0 0
        %4052 = vmatprep.subr.bf16.mxu0 0
        %4053 = vmatpush1.bf16.msra.mxu0 0
        %4054 = vmatprep.subr.bf16.mxu0 0
        %4055 = vmatpush1.bf16.msra.mxu0 0
        %4056 = vmatprep.subr.bf16.mxu0 0
        %4057 = vmatpush1.bf16.msra.mxu0 0
        %4058 = vmatprep.subr.bf16.mxu0 0
        %4059 = vmatpush1.bf16.msra.mxu0 0
        %4060 = vmatprep.subr.bf16.mxu0 0
        %4061 = vmatpush1.bf16.msra.mxu0 0
        %4062 = vmatprep.mubr.bf16.mxu0 0
        %4063 = vmatmul.mubr.bf16.gmra.mrb[0].mxu0 %v4028
        %v4064 = vpop.f32.mrb[0].mxu0
        %v4065 = vadd.f32 0.0, %v4064
        %v4066 = vpop.f32.mrb[0].mxu0
        %v4067 = vpop.f32.mrb[0].mxu0
        %v4068 = vpop.f32.mrb[0].mxu0
        %4069 = vdwg.mxu0
        %v4070 = vadd.f32 %v4011, %v4065
        %s4071 = scalar_lea.vmem [#allocation13], 24
        %v4072 = vld [vmem:[%s4071] sm:$0xf]
        %v4073 = vld [vmem:[%s4071 + $0x4] sm:$0xf]
        %v4074 = vrot.slane %v3916, 1
        %v4077 = vunpack.c.l.b16 %v4072
        %v4078 = vunpack.c.l.b16 %v4073
        %v4079 = vpack.c.b16 %v4078, %v4077
        %v4082 = vsel %vm3924, %v4074, 0
        %4084 = vmatprep.subr.bf16.mxu0 0
        %4085 = vmatpush1.bf16.msra.mxu0 %v4079
        %4086 = vmatprep.subr.bf16.mxu0 0
        %4087 = vmatpush1.bf16.msra.mxu0 0
        %4088 = vmatprep.subr.bf16.mxu0 0
        %4089 = vmatpush1.bf16.msra.mxu0 0
        %4090 = vmatprep.subr.bf16.mxu0 0
        %4091 = vmatpush1.bf16.msra.mxu0 0
        %4092 = vmatprep.subr.bf16.mxu0 0
        %4093 = vmatpush1.bf16.msra.mxu0 0
        %4094 = vmatprep.subr.bf16.mxu0 0
        %4095 = vmatpush1.bf16.msra.mxu0 0
        %4096 = vmatprep.subr.bf16.mxu0 0
        %4097 = vmatpush1.bf16.msra.mxu0 0
        %4098 = vmatprep.subr.bf16.mxu0 0
        %4099 = vmatpush1.bf16.msra.mxu0 0
        %4100 = vmatprep.subr.bf16.mxu0 0
        %4101 = vmatpush1.bf16.msra.mxu0 0
        %4102 = vmatprep.subr.bf16.mxu0 0
        %4103 = vmatpush1.bf16.msra.mxu0 0
        %4104 = vmatprep.subr.bf16.mxu0 0
        %4105 = vmatpush1.bf16.msra.mxu0 0
        %4106 = vmatprep.subr.bf16.mxu0 0
        %4107 = vmatpush1.bf16.msra.mxu0 0
        %4108 = vmatprep.subr.bf16.mxu0 0
        %4109 = vmatpush1.bf16.msra.mxu0 0
        %4110 = vmatprep.subr.bf16.mxu0 0
        %4111 = vmatpush1.bf16.msra.mxu0 0
        %4112 = vmatprep.subr.bf16.mxu0 0
        %4113 = vmatpush1.bf16.msra.mxu0 0
        %4114 = vmatprep.subr.bf16.mxu0 0
        %4115 = vmatpush1.bf16.msra.mxu0 0
        %4116 = vmatprep.mubr.bf16.mxu0 0
        %4117 = vmatmul.mubr.bf16.gmra.mrb[0].mxu0 %v4082
        %v4118 = vpop.f32.mrb[0].mxu0
        %v4119 = vadd.f32 0.0, %v4118
        %v4120 = vpop.f32.mrb[0].mxu0
        %v4121 = vpop.f32.mrb[0].mxu0
        %v4122 = vpop.f32.mrb[0].mxu0
        %4123 = vdwg.mxu0
        %v4124 = vadd.f32 %v4070, %v4119
        %s4125 = scalar_lea.vmem [#allocation13], 32
        %v4126 = vld [vmem:[%s4125] sm:$0xf]
        %v4127 = vld [vmem:[%s4125 + $0x4] sm:$0xf]
        %v4128 = vrot.slane %v3909, 2
        %v4131 = vunpack.c.l.b16 %v4126
        %v4132 = vunpack.c.l.b16 %v4127
        %v4133 = vpack.c.b16 %v4132, %v4131
        %v4136 = vsel %vm3924, %v4128, 0
        %4138 = vmatprep.subr.bf16.mxu0 0
        %4139 = vmatpush1.bf16.msra.mxu0 %v4133
        %4140 = vmatprep.subr.bf16.mxu0 0
        %4141 = vmatpush1.bf16.msra.mxu0 0
        %4142 = vmatprep.subr.bf16.mxu0 0
        %4143 = vmatpush1.bf16.msra.mxu0 0
        %4144 = vmatprep.subr.bf16.mxu0 0
        %4145 = vmatpush1.bf16.msra.mxu0 0
        %4146 = vmatprep.subr.bf16.mxu0 0
        %4147 = vmatpush1.bf16.msra.mxu0 0
        %4148 = vmatprep.subr.bf16.mxu0 0
        %4149 = vmatpush1.bf16.msra.mxu0 0
        %4150 = vmatprep.subr.bf16.mxu0 0
        %4151 = vmatpush1.bf16.msra.mxu0 0
        %4152 = vmatprep.subr.bf16.mxu0 0
        %4153 = vmatpush1.bf16.msra.mxu0 0
        %4154 = vmatprep.subr.bf16.mxu0 0
        %4155 = vmatpush1.bf16.msra.mxu0 0
        %4156 = vmatprep.subr.bf16.mxu0 0
        %4157 = vmatpush1.bf16.msra.mxu0 0
        %4158 = vmatprep.subr.bf16.mxu0 0
        %4159 = vmatpush1.bf16.msra.mxu0 0
        %4160 = vmatprep.subr.bf16.mxu0 0
        %4161 = vmatpush1.bf16.msra.mxu0 0
        %4162 = vmatprep.subr.bf16.mxu0 0
        %4163 = vmatpush1.bf16.msra.mxu0 0
        %4164 = vmatprep.subr.bf16.mxu0 0
        %4165 = vmatpush1.bf16.msra.mxu0 0
        %4166 = vmatprep.subr.bf16.mxu0 0
        %4167 = vmatpush1.bf16.msra.mxu0 0
        %4168 = vmatprep.subr.bf16.mxu0 0
        %4169 = vmatpush1.bf16.msra.mxu0 0
        %4170 = vmatprep.mubr.bf16.mxu0 0
        %4171 = vmatmul.mubr.bf16.gmra.mrb[0].mxu0 %v4136
        %v4172 = vpop.f32.mrb[0].mxu0
        %v4173 = vadd.f32 0.0, %v4172
        %v4174 = vpop.f32.mrb[0].mxu0
        %v4175 = vpop.f32.mrb[0].mxu0
        %v4176 = vpop.f32.mrb[0].mxu0
        %4177 = vdwg.mxu0
        %v4178 = vadd.f32 %v4124, %v4173
        %s4179 = scalar_lea.vmem [#allocation13], 40
        %v4180 = vld [vmem:[%s4179] sm:$0xf]
        %v4181 = vld [vmem:[%s4179 + $0x4] sm:$0xf]
        %v4182 = vrot.slane %v3916, 2
        %v4185 = vunpack.c.l.b16 %v4180
        %v4186 = vunpack.c.l.b16 %v4181
        %v4187 = vpack.c.b16 %v4186, %v4185
        %v4190 = vsel %vm3924, %v4182, 0
        %4192 = vmatprep.subr.bf16.mxu0 0
        %4193 = vmatpush1.bf16.msra.mxu0 %v4187
        %4194 = vmatprep.subr.bf16.mxu0 0
        %4195 = vmatpush1.bf16.msra.mxu0 0
        %4196 = vmatprep.subr.bf16.mxu0 0
        %4197 = vmatpush1.bf16.msra.mxu0 0
        %4198 = vmatprep.subr.bf16.mxu0 0
        %4199 = vmatpush1.bf16.msra.mxu0 0
        %4200 = vmatprep.subr.bf16.mxu0 0
        %4201 = vmatpush1.bf16.msra.mxu0 0
        %4202 = vmatprep.subr.bf16.mxu0 0
        %4203 = vmatpush1.bf16.msra.mxu0 0
        %4204 = vmatprep.subr.bf16.mxu0 0
        %4205 = vmatpush1.bf16.msra.mxu0 0
        %4206 = vmatprep.subr.bf16.mxu0 0
        %4207 = vmatpush1.bf16.msra.mxu0 0
        %4208 = vmatprep.subr.bf16.mxu0 0
        %4209 = vmatpush1.bf16.msra.mxu0 0
        %4210 = vmatprep.subr.bf16.mxu0 0
        %4211 = vmatpush1.bf16.msra.mxu0 0
        %4212 = vmatprep.subr.bf16.mxu0 0
        %4213 = vmatpush1.bf16.msra.mxu0 0
        %4214 = vmatprep.subr.bf16.mxu0 0
        %4215 = vmatpush1.bf16.msra.mxu0 0
        %4216 = vmatprep.subr.bf16.mxu0 0
        %4217 = vmatpush1.bf16.msra.mxu0 0
        %4218 = vmatprep.subr.bf16.mxu0 0
        %4219 = vmatpush1.bf16.msra.mxu0 0
        %4220 = vmatprep.subr.bf16.mxu0 0
        %4221 = vmatpush1.bf16.msra.mxu0 0
        %4222 = vmatprep.subr.bf16.mxu0 0
        %4223 = vmatpush1.bf16.msra.mxu0 0
        %4224 = vmatprep.mubr.bf16.mxu0 0
        %4225 = vmatmul.mubr.bf16.gmra.mrb[0].mxu0 %v4190
        %v4226 = vpop.f32.mrb[0].mxu0
        %v4227 = vadd.f32 0.0, %v4226
        %v4228 = vpop.f32.mrb[0].mxu0
        %v4229 = vpop.f32.mrb[0].mxu0
        %v4230 = vpop.f32.mrb[0].mxu0
        %4231 = vdwg.mxu0
        %v4232 = vadd.f32 %v4178, %v4227
        %s4233 = scalar_lea.vmem [#allocation13], 48
        %v4234 = vld [vmem:[%s4233] sm:$0xf]
        %v4235 = vld [vmem:[%s4233 + $0x4] sm:$0xf]
        %v4236 = vrot.slane %v3909, 3
        %v4239 = vunpack.c.l.b16 %v4234
        %v4240 = vunpack.c.l.b16 %v4235
        %v4241 = vpack.c.b16 %v4240, %v4239
        %v4244 = vsel %vm3924, %v4236, 0
        %4246 = vmatprep.subr.bf16.mxu0 0
        %4247 = vmatpush1.bf16.msra.mxu0 %v4241
        %4248 = vmatprep.subr.bf16.mxu0 0
        %4249 = vmatpush1.bf16.msra.mxu0 0
        %4250 = vmatprep.subr.bf16.mxu0 0
        %4251 = vmatpush1.bf16.msra.mxu0 0
        %4252 = vmatprep.subr.bf16.mxu0 0
        %4253 = vmatpush1.bf16.msra.mxu0 0
        %4254 = vmatprep.subr.bf16.mxu0 0
        %4255 = vmatpush1.bf16.msra.mxu0 0
        %4256 = vmatprep.subr.bf16.mxu0 0
        %4257 = vmatpush1.bf16.msra.mxu0 0
        %4258 = vmatprep.subr.bf16.mxu0 0
        %4259 = vmatpush1.bf16.msra.mxu0 0
        %4260 = vmatprep.subr.bf16.mxu0 0
        %4261 = vmatpush1.bf16.msra.mxu0 0
        %4262 = vmatprep.subr.bf16.mxu0 0
        %4263 = vmatpush1.bf16.msra.mxu0 0
        %4264 = vmatprep.subr.bf16.mxu0 0
        %4265 = vmatpush1.bf16.msra.mxu0 0
        %4266 = vmatprep.subr.bf16.mxu0 0
        %4267 = vmatpush1.bf16.msra.mxu0 0
        %4268 = vmatprep.subr.bf16.mxu0 0
        %4269 = vmatpush1.bf16.msra.mxu0 0
        %4270 = vmatprep.subr.bf16.mxu0 0
        %4271 = vmatpush1.bf16.msra.mxu0 0
        %4272 = vmatprep.subr.bf16.mxu0 0
        %4273 = vmatpush1.bf16.msra.mxu0 0
        %4274 = vmatprep.subr.bf16.mxu0 0
        %4275 = vmatpush1.bf16.msra.mxu0 0
        %4276 = vmatprep.subr.bf16.mxu0 0
        %4277 = vmatpush1.bf16.msra.mxu0 0
        %4278 = vmatprep.mubr.bf16.mxu0 0
        %4279 = vmatmul.mubr.bf16.gmra.mrb[0].mxu0 %v4244
        %v4280 = vpop.f32.mrb[0].mxu0
        %v4281 = vadd.f32 0.0, %v4280
        %v4282 = vpop.f32.mrb[0].mxu0
        %v4283 = vpop.f32.mrb[0].mxu0
        %v4284 = vpop.f32.mrb[0].mxu0
        %4285 = vdwg.mxu0
        %v4286 = vadd.f32 %v4232, %v4281
        %s4287 = scalar_lea.vmem [#allocation13], 56
        %v4288 = vld [vmem:[%s4287] sm:$0xf]
        %v4289 = vld [vmem:[%s4287 + $0x4] sm:$0xf]
        %v4290 = vrot.slane %v3916, 3
        %v4293 = vunpack.c.l.b16 %v4288
        %v4294 = vunpack.c.l.b16 %v4289
        %v4295 = vpack.c.b16 %v4294, %v4293
        %v4298 = vsel %vm3924, %v4290, 0
        %4300 = vmatprep.subr.bf16.mxu0 0
        %4301 = vmatpush1.bf16.msra.mxu0 %v4295
        %4302 = vmatprep.subr.bf16.mxu0 0
        %4303 = vmatpush1.bf16.msra.mxu0 0
        %4304 = vmatprep.subr.bf16.mxu0 0
        %4305 = vmatpush1.bf16.msra.mxu0 0
        %4306 = vmatprep.subr.bf16.mxu0 0
        %4307 = vmatpush1.bf16.msra.mxu0 0
        %4308 = vmatprep.subr.bf16.mxu0 0
        %4309 = vmatpush1.bf16.msra.mxu0 0
        %4310 = vmatprep.subr.bf16.mxu0 0
        %4311 = vmatpush1.bf16.msra.mxu0 0
        %4312 = vmatprep.subr.bf16.mxu0 0
        %4313 = vmatpush1.bf16.msra.mxu0 0
        %4314 = vmatprep.subr.bf16.mxu0 0
        %4315 = vmatpush1.bf16.msra.mxu0 0
        %4316 = vmatprep.subr.bf16.mxu0 0
        %4317 = vmatpush1.bf16.msra.mxu0 0
        %4318 = vmatprep.subr.bf16.mxu0 0
        %4319 = vmatpush1.bf16.msra.mxu0 0
        %4320 = vmatprep.subr.bf16.mxu0 0
        %4321 = vmatpush1.bf16.msra.mxu0 0
        %4322 = vmatprep.subr.bf16.mxu0 0
        %4323 = vmatpush1.bf16.msra.mxu0 0
        %4324 = vmatprep.subr.bf16.mxu0 0
        %4325 = vmatpush1.bf16.msra.mxu0 0
        %4326 = vmatprep.subr.bf16.mxu0 0
        %4327 = vmatpush1.bf16.msra.mxu0 0
        %4328 = vmatprep.subr.bf16.mxu0 0
        %4329 = vmatpush1.bf16.msra.mxu0 0
        %4330 = vmatprep.subr.bf16.mxu0 0
        %4331 = vmatpush1.bf16.msra.mxu0 0
        %4332 = vmatprep.mubr.bf16.mxu0 0
        %4333 = vmatmul.mubr.bf16.gmra.mrb[0].mxu0 %v4298
        %v4334 = vpop.f32.mrb[0].mxu0
        %v4335 = vadd.f32 0.0, %v4334
        %v4336 = vpop.f32.mrb[0].mxu0
        %v4337 = vpop.f32.mrb[0].mxu0
        %v4338 = vpop.f32.mrb[0].mxu0
        %4339 = vdwg.mxu0
        %v4340 = vadd.f32 %v4286, %v4335
        %s4341 = scalar_lea.vmem [#allocation13], 64
        %v4342 = vld [vmem:[%s4341] sm:$0xf]
        %v4343 = vld [vmem:[%s4341 + $0x4] sm:$0xf]
        %v4344 = vrot.slane %v3909, 4
        %v4347 = vunpack.c.l.b16 %v4342
        %v4348 = vunpack.c.l.b16 %v4343
        %v4349 = vpack.c.b16 %v4348, %v4347
        %v4352 = vsel %vm3924, %v4344, 0
        %4354 = vmatprep.subr.bf16.mxu0 0
        %4355 = vmatpush1.bf16.msra.mxu0 %v4349
        %4356 = vmatprep.subr.bf16.mxu0 0
        %4357 = vmatpush1.bf16.msra.mxu0 0
        %4358 = vmatprep.subr.bf16.mxu0 0
        %4359 = vmatpush1.bf16.msra.mxu0 0
        %4360 = vmatprep.subr.bf16.mxu0 0
        %4361 = vmatpush1.bf16.msra.mxu0 0
        %4362 = vmatprep.subr.bf16.mxu0 0
        %4363 = vmatpush1.bf16.msra.mxu0 0
        %4364 = vmatprep.subr.bf16.mxu0 0
        %4365 = vmatpush1.bf16.msra.mxu0 0
        %4366 = vmatprep.subr.bf16.mxu0 0
        %4367 = vmatpush1.bf16.msra.mxu0 0
        %4368 = vmatprep.subr.bf16.mxu0 0
        %4369 = vmatpush1.bf16.msra.mxu0 0
        %4370 = vmatprep.subr.bf16.mxu0 0
        %4371 = vmatpush1.bf16.msra.mxu0 0
        %4372 = vmatprep.subr.bf16.mxu0 0
        %4373 = vmatpush1.bf16.msra.mxu0 0
        %4374 = vmatprep.subr.bf16.mxu0 0
        %4375 = vmatpush1.bf16.msra.mxu0 0
        %4376 = vmatprep.subr.bf16.mxu0 0
        %4377 = vmatpush1.bf16.msra.mxu0 0
        %4378 = vmatprep.subr.bf16.mxu0 0
        %4379 = vmatpush1.bf16.msra.mxu0 0
        %4380 = vmatprep.subr.bf16.mxu0 0
        %4381 = vmatpush1.bf16.msra.mxu0 0
        %4382 = vmatprep.subr.bf16.mxu0 0
        %4383 = vmatpush1.bf16.msra.mxu0 0
        %4384 = vmatprep.subr.bf16.mxu0 0
        %4385 = vmatpush1.bf16.msra.mxu0 0
        %4386 = vmatprep.mubr.bf16.mxu0 0
        %4387 = vmatmul.mubr.bf16.gmra.mrb[0].mxu0 %v4352
        %v4388 = vpop.f32.mrb[0].mxu0
        %v4389 = vadd.f32 0.0, %v4388
        %v4390 = vpop.f32.mrb[0].mxu0
        %v4391 = vpop.f32.mrb[0].mxu0
        %v4392 = vpop.f32.mrb[0].mxu0
        %4393 = vdwg.mxu0
        %v4394 = vadd.f32 %v4340, %v4389
        %s4395 = scalar_lea.vmem [#allocation13], 72
        %v4396 = vld [vmem:[%s4395] sm:$0xf]
        %v4397 = vld [vmem:[%s4395 + $0x4] sm:$0xf]
        %v4398 = vrot.slane %v3916, 4
        %v4401 = vunpack.c.l.b16 %v4396
        %v4402 = vunpack.c.l.b16 %v4397
        %v4403 = vpack.c.b16 %v4402, %v4401
        %v4406 = vsel %vm3924, %v4398, 0
        %4408 = vmatprep.subr.bf16.mxu0 0
        %4409 = vmatpush1.bf16.msra.mxu0 %v4403
        %4410 = vmatprep.subr.bf16.mxu0 0
        %4411 = vmatpush1.bf16.msra.mxu0 0
        %4412 = vmatprep.subr.bf16.mxu0 0
        %4413 = vmatpush1.bf16.msra.mxu0 0
        %4414 = vmatprep.subr.bf16.mxu0 0
        %4415 = vmatpush1.bf16.msra.mxu0 0
        %4416 = vmatprep.subr.bf16.mxu0 0
        %4417 = vmatpush1.bf16.msra.mxu0 0
        %4418 = vmatprep.subr.bf16.mxu0 0
        %4419 = vmatpush1.bf16.msra.mxu0 0
        %4420 = vmatprep.subr.bf16.mxu0 0
        %4421 = vmatpush1.bf16.msra.mxu0 0
        %4422 = vmatprep.subr.bf16.mxu0 0
        %4423 = vmatpush1.bf16.msra.mxu0 0
        %4424 = vmatprep.subr.bf16.mxu0 0
        %4425 = vmatpush1.bf16.msra.mxu0 0
        %4426 = vmatprep.subr.bf16.mxu0 0
        %4427 = vmatpush1.bf16.msra.mxu0 0
        %4428 = vmatprep.subr.bf16.mxu0 0
        %4429 = vmatpush1.bf16.msra.mxu0 0
        %4430 = vmatprep.subr.bf16.mxu0 0
        %4431 = vmatpush1.bf16.msra.mxu0 0
        %4432 = vmatprep.subr.bf16.mxu0 0
        %4433 = vmatpush1.bf16.msra.mxu0 0
        %4434 = vmatprep.subr.bf16.mxu0 0
        %4435 = vmatpush1.bf16.msra.mxu0 0
        %4436 = vmatprep.subr.bf16.mxu0 0
        %4437 = vmatpush1.bf16.msra.mxu0 0
        %4438 = vmatprep.subr.bf16.mxu0 0
        %4439 = vmatpush1.bf16.msra.mxu0 0
        %4440 = vmatprep.mubr.bf16.mxu0 0
        %4441 = vmatmul.mubr.bf16.gmra.mrb[0].mxu0 %v4406
        %v4442 = vpop.f32.mrb[0].mxu0
        %v4443 = vadd.f32 0.0, %v4442
        %v4444 = vpop.f32.mrb[0].mxu0
        %v4445 = vpop.f32.mrb[0].mxu0
        %v4446 = vpop.f32.mrb[0].mxu0
        %4447 = vdwg.mxu0
        %v4448 = vadd.f32 %v4394, %v4443
        %s4449 = scalar_lea.vmem [#allocation13], 80
        %v4450 = vld [vmem:[%s4449] sm:$0xf]
        %v4451 = vld [vmem:[%s4449 + $0x4] sm:$0xf]
        %v4452 = vrot.slane %v3909, 5
        %v4455 = vunpack.c.l.b16 %v4450
        %v4456 = vunpack.c.l.b16 %v4451
        %v4457 = vpack.c.b16 %v4456, %v4455
        %v4460 = vsel %vm3924, %v4452, 0
        %4462 = vmatprep.subr.bf16.mxu0 0
        %4463 = vmatpush1.bf16.msra.mxu0 %v4457
        %4464 = vmatprep.subr.bf16.mxu0 0
        %4465 = vmatpush1.bf16.msra.mxu0 0
        %4466 = vmatprep.subr.bf16.mxu0 0
        %4467 = vmatpush1.bf16.msra.mxu0 0
        %4468 = vmatprep.subr.bf16.mxu0 0
        %4469 = vmatpush1.bf16.msra.mxu0 0
        %4470 = vmatprep.subr.bf16.mxu0 0
        %4471 = vmatpush1.bf16.msra.mxu0 0
        %4472 = vmatprep.subr.bf16.mxu0 0
        %4473 = vmatpush1.bf16.msra.mxu0 0
        %4474 = vmatprep.subr.bf16.mxu0 0
        %4475 = vmatpush1.bf16.msra.mxu0 0
        %4476 = vmatprep.subr.bf16.mxu0 0
        %4477 = vmatpush1.bf16.msra.mxu0 0
        %4478 = vmatprep.subr.bf16.mxu0 0
        %4479 = vmatpush1.bf16.msra.mxu0 0
        %4480 = vmatprep.subr.bf16.mxu0 0
        %4481 = vmatpush1.bf16.msra.mxu0 0
        %4482 = vmatprep.subr.bf16.mxu0 0
        %4483 = vmatpush1.bf16.msra.mxu0 0
        %4484 = vmatprep.subr.bf16.mxu0 0
        %4485 = vmatpush1.bf16.msra.mxu0 0
        %4486 = vmatprep.subr.bf16.mxu0 0
        %4487 = vmatpush1.bf16.msra.mxu0 0
        %4488 = vmatprep.subr.bf16.mxu0 0
        %4489 = vmatpush1.bf16.msra.mxu0 0
        %4490 = vmatprep.subr.bf16.mxu0 0
        %4491 = vmatpush1.bf16.msra.mxu0 0
        %4492 = vmatprep.subr.bf16.mxu0 0
        %4493 = vmatpush1.bf16.msra.mxu0 0
        %4494 = vmatprep.mubr.bf16.mxu0 0
        %4495 = vmatmul.mubr.bf16.gmra.mrb[0].mxu0 %v4460
        %v4496 = vpop.f32.mrb[0].mxu0
        %v4497 = vadd.f32 0.0, %v4496
        %v4498 = vpop.f32.mrb[0].mxu0
        %v4499 = vpop.f32.mrb[0].mxu0
        %v4500 = vpop.f32.mrb[0].mxu0
        %4501 = vdwg.mxu0
        %v4502 = vadd.f32 %v4448, %v4497
        %s4503 = scalar_lea.vmem [#allocation13], 88
        %v4504 = vld [vmem:[%s4503] sm:$0xf]
        %v4505 = vld [vmem:[%s4503 + $0x4] sm:$0xf]
        %v4506 = vrot.slane %v3916, 5
        %v4509 = vunpack.c.l.b16 %v4504
        %v4510 = vunpack.c.l.b16 %v4505
        %v4511 = vpack.c.b16 %v4510, %v4509
        %v4514 = vsel %vm3924, %v4506, 0
        %4516 = vmatprep.subr.bf16.mxu0 0
        %4517 = vmatpush1.bf16.msra.mxu0 %v4511
        %4518 = vmatprep.subr.bf16.mxu0 0
        %4519 = vmatpush1.bf16.msra.mxu0 0
        %4520 = vmatprep.subr.bf16.mxu0 0
        %4521 = vmatpush1.bf16.msra.mxu0 0
        %4522 = vmatprep.subr.bf16.mxu0 0
        %4523 = vmatpush1.bf16.msra.mxu0 0
        %4524 = vmatprep.subr.bf16.mxu0 0
        %4525 = vmatpush1.bf16.msra.mxu0 0
        %4526 = vmatprep.subr.bf16.mxu0 0
        %4527 = vmatpush1.bf16.msra.mxu0 0
        %4528 = vmatprep.subr.bf16.mxu0 0
        %4529 = vmatpush1.bf16.msra.mxu0 0
        %4530 = vmatprep.subr.bf16.mxu0 0
        %4531 = vmatpush1.bf16.msra.mxu0 0
        %4532 = vmatprep.subr.bf16.mxu0 0
        %4533 = vmatpush1.bf16.msra.mxu0 0
        %4534 = vmatprep.subr.bf16.mxu0 0
        %4535 = vmatpush1.bf16.msra.mxu0 0
        %4536 = vmatprep.subr.bf16.mxu0 0
        %4537 = vmatpush1.bf16.msra.mxu0 0
        %4538 = vmatprep.subr.bf16.mxu0 0
        %4539 = vmatpush1.bf16.msra.mxu0 0
        %4540 = vmatprep.subr.bf16.mxu0 0
        %4541 = vmatpush1.bf16.msra.mxu0 0
        %4542 = vmatprep.subr.bf16.mxu0 0
        %4543 = vmatpush1.bf16.msra.mxu0 0
        %4544 = vmatprep.subr.bf16.mxu0 0
        %4545 = vmatpush1.bf16.msra.mxu0 0
        %4546 = vmatprep.subr.bf16.mxu0 0
        %4547 = vmatpush1.bf16.msra.mxu0 0
        %4548 = vmatprep.mubr.bf16.mxu0 0
        %4549 = vmatmul.mubr.bf16.gmra.mrb[0].mxu0 %v4514
        %v4550 = vpop.f32.mrb[0].mxu0
        %v4551 = vadd.f32 0.0, %v4550
        %v4552 = vpop.f32.mrb[0].mxu0
        %v4553 = vpop.f32.mrb[0].mxu0
        %v4554 = vpop.f32.mrb[0].mxu0
        %4555 = vdwg.mxu0
        %v4556 = vadd.f32 %v4502, %v4551
        %s4557 = scalar_lea.vmem [#allocation13], 96
        %v4558 = vld [vmem:[%s4557] sm:$0xf]
        %v4559 = vld [vmem:[%s4557 + $0x4] sm:$0xf]
        %v4560 = vrot.slane %v3909, 6
        %v4563 = vunpack.c.l.b16 %v4558
        %v4564 = vunpack.c.l.b16 %v4559
        %v4565 = vpack.c.b16 %v4564, %v4563
        %v4568 = vsel %vm3924, %v4560, 0
        %4570 = vmatprep.subr.bf16.mxu0 0
        %4571 = vmatpush1.bf16.msra.mxu0 %v4565
        %4572 = vmatprep.subr.bf16.mxu0 0
        %4573 = vmatpush1.bf16.msra.mxu0 0
        %4574 = vmatprep.subr.bf16.mxu0 0
        %4575 = vmatpush1.bf16.msra.mxu0 0
        %4576 = vmatprep.subr.bf16.mxu0 0
        %4577 = vmatpush1.bf16.msra.mxu0 0
        %4578 = vmatprep.subr.bf16.mxu0 0
        %4579 = vmatpush1.bf16.msra.mxu0 0
        %4580 = vmatprep.subr.bf16.mxu0 0
        %4581 = vmatpush1.bf16.msra.mxu0 0
        %4582 = vmatprep.subr.bf16.mxu0 0
        %4583 = vmatpush1.bf16.msra.mxu0 0
        %4584 = vmatprep.subr.bf16.mxu0 0
        %4585 = vmatpush1.bf16.msra.mxu0 0
        %4586 = vmatprep.subr.bf16.mxu0 0
        %4587 = vmatpush1.bf16.msra.mxu0 0
        %4588 = vmatprep.subr.bf16.mxu0 0
        %4589 = vmatpush1.bf16.msra.mxu0 0
        %4590 = vmatprep.subr.bf16.mxu0 0
        %4591 = vmatpush1.bf16.msra.mxu0 0
        %4592 = vmatprep.subr.bf16.mxu0 0
        %4593 = vmatpush1.bf16.msra.mxu0 0
        %4594 = vmatprep.subr.bf16.mxu0 0
        %4595 = vmatpush1.bf16.msra.mxu0 0
        %4596 = vmatprep.subr.bf16.mxu0 0
        %4597 = vmatpush1.bf16.msra.mxu0 0
        %4598 = vmatprep.subr.bf16.mxu0 0
        %4599 = vmatpush1.bf16.msra.mxu0 0
        %4600 = vmatprep.subr.bf16.mxu0 0
        %4601 = vmatpush1.bf16.msra.mxu0 0
        %4602 = vmatprep.mubr.bf16.mxu0 0
        %4603 = vmatmul.mubr.bf16.gmra.mrb[0].mxu0 %v4568
        %v4604 = vpop.f32.mrb[0].mxu0
        %v4605 = vadd.f32 0.0, %v4604
        %v4606 = vpop.f32.mrb[0].mxu0
        %v4607 = vpop.f32.mrb[0].mxu0
        %v4608 = vpop.f32.mrb[0].mxu0
        %4609 = vdwg.mxu0
        %v4610 = vadd.f32 %v4556, %v4605
        %s4611 = scalar_lea.vmem [#allocation13], 104
        %v4612 = vld [vmem:[%s4611] sm:$0xf]
        %v4613 = vld [vmem:[%s4611 + $0x4] sm:$0xf]
        %v4614 = vrot.slane %v3916, 6
        %v4617 = vunpack.c.l.b16 %v4612
        %v4618 = vunpack.c.l.b16 %v4613
        %v4619 = vpack.c.b16 %v4618, %v4617
        %v4622 = vsel %vm3924, %v4614, 0
        %4624 = vmatprep.subr.bf16.mxu0 0
        %4625 = vmatpush1.bf16.msra.mxu0 %v4619
        %4626 = vmatprep.subr.bf16.mxu0 0
        %4627 = vmatpush1.bf16.msra.mxu0 0
        %4628 = vmatprep.subr.bf16.mxu0 0
        %4629 = vmatpush1.bf16.msra.mxu0 0
        %4630 = vmatprep.subr.bf16.mxu0 0
        %4631 = vmatpush1.bf16.msra.mxu0 0
        %4632 = vmatprep.subr.bf16.mxu0 0
        %4633 = vmatpush1.bf16.msra.mxu0 0
        %4634 = vmatprep.subr.bf16.mxu0 0
        %4635 = vmatpush1.bf16.msra.mxu0 0
        %4636 = vmatprep.subr.bf16.mxu0 0
        %4637 = vmatpush1.bf16.msra.mxu0 0
        %4638 = vmatprep.subr.bf16.mxu0 0
        %4639 = vmatpush1.bf16.msra.mxu0 0
        %4640 = vmatprep.subr.bf16.mxu0 0
        %4641 = vmatpush1.bf16.msra.mxu0 0
        %4642 = vmatprep.subr.bf16.mxu0 0
        %4643 = vmatpush1.bf16.msra.mxu0 0
        %4644 = vmatprep.subr.bf16.mxu0 0
        %4645 = vmatpush1.bf16.msra.mxu0 0
        %4646 = vmatprep.subr.bf16.mxu0 0
        %4647 = vmatpush1.bf16.msra.mxu0 0
        %4648 = vmatprep.subr.bf16.mxu0 0
        %4649 = vmatpush1.bf16.msra.mxu0 0
        %4650 = vmatprep.subr.bf16.mxu0 0
        %4651 = vmatpush1.bf16.msra.mxu0 0
        %4652 = vmatprep.subr.bf16.mxu0 0
        %4653 = vmatpush1.bf16.msra.mxu0 0
        %4654 = vmatprep.subr.bf16.mxu0 0
        %4655 = vmatpush1.bf16.msra.mxu0 0
        %4656 = vmatprep.mubr.bf16.mxu0 0
        %4657 = vmatmul.mubr.bf16.gmra.mrb[0].mxu0 %v4622
        %v4658 = vpop.f32.mrb[0].mxu0
        %v4659 = vadd.f32 0.0, %v4658
        %v4660 = vpop.f32.mrb[0].mxu0
        %v4661 = vpop.f32.mrb[0].mxu0
        %v4662 = vpop.f32.mrb[0].mxu0
        %4663 = vdwg.mxu0
        %v4664 = vadd.f32 %v4610, %v4659
        %s4665 = scalar_lea.vmem [#allocation13], 112
        %v4666 = vld [vmem:[%s4665] sm:$0xf]
        %v4667 = vld [vmem:[%s4665 + $0x4] sm:$0xf]
        %v4668 = vrot.slane %v3909, 7
        %v4671 = vunpack.c.l.b16 %v4666
        %v4672 = vunpack.c.l.b16 %v4667
        %v4673 = vpack.c.b16 %v4672, %v4671
        %v4676 = vsel %vm3924, %v4668, 0
        %4678 = vmatprep.subr.bf16.mxu0 0
        %4679 = vmatpush1.bf16.msra.mxu0 %v4673
        %4680 = vmatprep.subr.bf16.mxu0 0
        %4681 = vmatpush1.bf16.msra.mxu0 0
        %4682 = vmatprep.subr.bf16.mxu0 0
        %4683 = vmatpush1.bf16.msra.mxu0 0
        %4684 = vmatprep.subr.bf16.mxu0 0
        %4685 = vmatpush1.bf16.msra.mxu0 0
        %4686 = vmatprep.subr.bf16.mxu0 0
        %4687 = vmatpush1.bf16.msra.mxu0 0
        %4688 = vmatprep.subr.bf16.mxu0 0
        %4689 = vmatpush1.bf16.msra.mxu0 0
        %4690 = vmatprep.subr.bf16.mxu0 0
        %4691 = vmatpush1.bf16.msra.mxu0 0
        %4692 = vmatprep.subr.bf16.mxu0 0
        %4693 = vmatpush1.bf16.msra.mxu0 0
        %4694 = vmatprep.subr.bf16.mxu0 0
        %4695 = vmatpush1.bf16.msra.mxu0 0
        %4696 = vmatprep.subr.bf16.mxu0 0
        %4697 = vmatpush1.bf16.msra.mxu0 0
        %4698 = vmatprep.subr.bf16.mxu0 0
        %4699 = vmatpush1.bf16.msra.mxu0 0
        %4700 = vmatprep.subr.bf16.mxu0 0
        %4701 = vmatpush1.bf16.msra.mxu0 0
        %4702 = vmatprep.subr.bf16.mxu0 0
        %4703 = vmatpush1.bf16.msra.mxu0 0
        %4704 = vmatprep.subr.bf16.mxu0 0
        %4705 = vmatpush1.bf16.msra.mxu0 0
        %4706 = vmatprep.subr.bf16.mxu0 0
        %4707 = vmatpush1.bf16.msra.mxu0 0
        %4708 = vmatprep.subr.bf16.mxu0 0
        %4709 = vmatpush1.bf16.msra.mxu0 0
        %4710 = vmatprep.mubr.bf16.mxu0 0
        %4711 = vmatmul.mubr.bf16.gmra.mrb[0].mxu0 %v4676
        %v4712 = vpop.f32.mrb[0].mxu0
        %v4713 = vadd.f32 0.0, %v4712
        %v4714 = vpop.f32.mrb[0].mxu0
        %v4715 = vpop.f32.mrb[0].mxu0
        %v4716 = vpop.f32.mrb[0].mxu0
        %4717 = vdwg.mxu0
        %v4718 = vadd.f32 %v4664, %v4713
        %s4719 = scalar_lea.vmem [#allocation13], 120
        %v4720 = vld [vmem:[%s4719] sm:$0xf]
        %v4721 = vld [vmem:[%s4719 + $0x4] sm:$0xf]
        %v4722 = vrot.slane %v3916, 7
        %v4725 = vunpack.c.l.b16 %v4720
        %v4726 = vunpack.c.l.b16 %v4721
        %v4727 = vpack.c.b16 %v4726, %v4725
        %v4730 = vsel %vm3924, %v4722, 0
        %4732 = vmatprep.subr.bf16.mxu0 0
        %4733 = vmatpush1.bf16.msra.mxu0 %v4727
        %4734 = vmatprep.subr.bf16.mxu0 0
        %4735 = vmatpush1.bf16.msra.mxu0 0
        %4736 = vmatprep.subr.bf16.mxu0 0
        %4737 = vmatpush1.bf16.msra.mxu0 0
        %4738 = vmatprep.subr.bf16.mxu0 0
        %4739 = vmatpush1.bf16.msra.mxu0 0
        %4740 = vmatprep.subr.bf16.mxu0 0
        %4741 = vmatpush1.bf16.msra.mxu0 0
        %4742 = vmatprep.subr.bf16.mxu0 0
        %4743 = vmatpush1.bf16.msra.mxu0 0
        %4744 = vmatprep.subr.bf16.mxu0 0
        %4745 = vmatpush1.bf16.msra.mxu0 0
        %4746 = vmatprep.subr.bf16.mxu0 0
        %4747 = vmatpush1.bf16.msra.mxu0 0
        %4748 = vmatprep.subr.bf16.mxu0 0
        %4749 = vmatpush1.bf16.msra.mxu0 0
        %4750 = vmatprep.subr.bf16.mxu0 0
        %4751 = vmatpush1.bf16.msra.mxu0 0
        %4752 = vmatprep.subr.bf16.mxu0 0
        %4753 = vmatpush1.bf16.msra.mxu0 0
        %4754 = vmatprep.subr.bf16.mxu0 0
        %4755 = vmatpush1.bf16.msra.mxu0 0
        %4756 = vmatprep.subr.bf16.mxu0 0
        %4757 = vmatpush1.bf16.msra.mxu0 0
        %4758 = vmatprep.subr.bf16.mxu0 0
        %4759 = vmatpush1.bf16.msra.mxu0 0
        %4760 = vmatprep.subr.bf16.mxu0 0
        %4761 = vmatpush1.bf16.msra.mxu0 0
        %4762 = vmatprep.subr.bf16.mxu0 0
        %4763 = vmatpush1.bf16.msra.mxu0 0
        %4764 = vmatprep.mubr.bf16.mxu0 0
        %4765 = vmatmul.mubr.bf16.gmra.mrb[0].mxu0 %v4730
        %v4766 = vpop.f32.mrb[0].mxu0
        %v4767 = vadd.f32 0.0, %v4766
        %v4768 = vpop.f32.mrb[0].mxu0
        %v4769 = vpop.f32.mrb[0].mxu0
        %v4770 = vpop.f32.mrb[0].mxu0
        %4771 = vdwg.mxu0
        %v4772 = vadd.f32 %v4718, %v4767
        %v4773 = vld [vmem:[%s8] sm:$0x1]
        %v4774 = vadd.f32 %v4772, %v4773
        %v4775 = vpack.c.bf16 %v4774, %v4774
        %v4776 = vld [vmem:[%s9] sm:$0xf]
        %v4777 = vld [vmem:[%s9 + $0x4] sm:$0xf]
        %v4778 = vld [vmem:[%s9 + $0x8] sm:$0xf]
        %v4779 = vld [vmem:[%s9 + $0xc] sm:$0xf]
        %v4780 = vld [vmem:[%s10] sm:$0x1]
        %v4785 = vunpack.c.l.b16 %v4776
        %v4786 = vunpack.c.l.b16 %v4777
        %v4787 = vunpack.c.l.b16 %v4778
        %v4788 = vunpack.c.l.b16 %v4779
        %v4789 = vpack.c.b16 %v4786, %v4785
        %v4790 = vpack.c.b16 %v4788, %v4787
        %vm4793 = vcmask 261120
        %v4795 = vsel %vm4793, %v4775, 0
        %4797 = vmatprep.subr.bf16.mxu0 0
        %4798 = vmatpush1.bf16.msra.mxu0 %v4789
        %4799 = vmatprep.subr.bf16.mxu0 0
        %4800 = vmatpush1.bf16.msra.mxu0 %v4790
        %4801 = vmatprep.subr.bf16.mxu0 0
        %4802 = vmatpush1.bf16.msra.mxu0 0
        %4803 = vmatprep.subr.bf16.mxu0 0
        %4804 = vmatpush1.bf16.msra.mxu0 0
        %4805 = vmatprep.subr.bf16.mxu0 0
        %4806 = vmatpush1.bf16.msra.mxu0 0
        %4807 = vmatprep.subr.bf16.mxu0 0
        %4808 = vmatpush1.bf16.msra.mxu0 0
        %4809 = vmatprep.subr.bf16.mxu0 0
        %4810 = vmatpush1.bf16.msra.mxu0 0
        %4811 = vmatprep.subr.bf16.mxu0 0
        %4812 = vmatpush1.bf16.msra.mxu0 0
        %4813 = vmatprep.subr.bf16.mxu0 0
        %4814 = vmatpush1.bf16.msra.mxu0 0
        %4815 = vmatprep.subr.bf16.mxu0 0
        %4816 = vmatpush1.bf16.msra.mxu0 0
        %4817 = vmatprep.subr.bf16.mxu0 0
        %4818 = vmatpush1.bf16.msra.mxu0 0
        %4819 = vmatprep.subr.bf16.mxu0 0
        %4820 = vmatpush1.bf16.msra.mxu0 0
        %4821 = vmatprep.subr.bf16.mxu0 0
        %4822 = vmatpush1.bf16.msra.mxu0 0
        %4823 = vmatprep.subr.bf16.mxu0 0
        %4824 = vmatpush1.bf16.msra.mxu0 0
        %4825 = vmatprep.subr.bf16.mxu0 0
        %4826 = vmatpush1.bf16.msra.mxu0 0
        %4827 = vmatprep.subr.bf16.mxu0 0
        %4828 = vmatpush1.bf16.msra.mxu0 0
        %4829 = vmatprep.mubr.bf16.mxu0 0
        %4830 = vmatmul.mubr.bf16.gmra.mrb[0].mxu0 %v4795
        %v4831 = vpop.f32.mrb[0].mxu0
        %v4832 = vadd.f32 %v4780, %v4831
        %v4833 = vpop.f32.mrb[0].mxu0
        %v4834 = vpop.f32.mrb[0].mxu0
        %v4835 = vpop.f32.mrb[0].mxu0
        %4836 = vdwg.mxu0
        %v4837 = vmax.f32 %v4832, 0.0
        %vm4838 = vcmask 122880
        %4839 = vst.msk [vmem:[#allocation2] sm:$0x1] %vm4838, %v4837
        %s4840 = scalar_lea.vmem %s9, 16
        %v4841 = vld [vmem:[%s4840] sm:$0xf]
        %v4842 = vld [vmem:[%s4840 + $0x4] sm:$0xf]
        %v4843 = vld [vmem:[%s4840 + $0x8] sm:$0xf]
        %v4844 = vld [vmem:[%s4840 + $0xc] sm:$0xf]
        %s4845 = scalar_lea.vmem %s10, 1
        %v4846 = vld [vmem:[%s4845] sm:$0x1]
        %v4851 = vunpack.c.l.b16 %v4841
        %v4852 = vunpack.c.l.b16 %v4842
        %v4853 = vunpack.c.l.b16 %v4843
        %v4854 = vunpack.c.l.b16 %v4844
        %v4855 = vpack.c.b16 %v4852, %v4851
        %v4856 = vpack.c.b16 %v4854, %v4853
        %4859 = vmatprep.subr.bf16.mxu0 0
        %4860 = vmatpush1.bf16.msra.mxu0 %v4855
        %4861 = vmatprep.subr.bf16.mxu0 0
        %4862 = vmatpush1.bf16.msra.mxu0 %v4856
        %4863 = vmatprep.subr.bf16.mxu0 0
        %4864 = vmatpush1.bf16.msra.mxu0 0
        %4865 = vmatprep.subr.bf16.mxu0 0
        %4866 = vmatpush1.bf16.msra.mxu0 0
        %4867 = vmatprep.subr.bf16.mxu0 0
        %4868 = vmatpush1.bf16.msra.mxu0 0
        %4869 = vmatprep.subr.bf16.mxu0 0
        %4870 = vmatpush1.bf16.msra.mxu0 0
        %4871 = vmatprep.subr.bf16.mxu0 0
        %4872 = vmatpush1.bf16.msra.mxu0 0
        %4873 = vmatprep.subr.bf16.mxu0 0
        %4874 = vmatpush1.bf16.msra.mxu0 0
        %4875 = vmatprep.subr.bf16.mxu0 0
        %4876 = vmatpush1.bf16.msra.mxu0 0
        %4877 = vmatprep.subr.bf16.mxu0 0
        %4878 = vmatpush1.bf16.msra.mxu0 0
        %4879 = vmatprep.subr.bf16.mxu0 0
        %4880 = vmatpush1.bf16.msra.mxu0 0
        %4881 = vmatprep.subr.bf16.mxu0 0
        %4882 = vmatpush1.bf16.msra.mxu0 0
        %4883 = vmatprep.subr.bf16.mxu0 0
        %4884 = vmatpush1.bf16.msra.mxu0 0
        %4885 = vmatprep.subr.bf16.mxu0 0
        %4886 = vmatpush1.bf16.msra.mxu0 0
        %4887 = vmatprep.subr.bf16.mxu0 0
        %4888 = vmatpush1.bf16.msra.mxu0 0
        %4889 = vmatprep.subr.bf16.mxu0 0
        %4890 = vmatpush1.bf16.msra.mxu0 0
        %4891 = vmatprep.mubr.bf16.mxu0 0
        %4892 = vmatmul.mubr.bf16.gmra.mrb[0].mxu0 %v4795
        %v4893 = vpop.f32.mrb[0].mxu0
        %v4894 = vadd.f32 %v4846, %v4893
        %v4895 = vpop.f32.mrb[0].mxu0
        %v4896 = vpop.f32.mrb[0].mxu0
        %v4897 = vpop.f32.mrb[0].mxu0
        %4898 = vdwg.mxu0
        %v4899 = vmax.f32 %v4894, 0.0
        %4900 = vst.msk [vmem:[#allocation2 + $0x1] sm:$0x1] %vm4838, %v4899
        %s4901 = scalar_lea.vmem %s9, 32
        %v4902 = vld [vmem:[%s4901] sm:$0xf]
        %v4903 = vld [vmem:[%s4901 + $0x4] sm:$0xf]
        %v4904 = vld [vmem:[%s4901 + $0x8] sm:$0xf]
        %v4905 = vld [vmem:[%s4901 + $0xc] sm:$0xf]
        %s4906 = scalar_lea.vmem %s10, 2
        %v4907 = vld [vmem:[%s4906] sm:$0x1]
        %v4912 = vunpack.c.l.b16 %v4902
        %v4913 = vunpack.c.l.b16 %v4903
        %v4914 = vunpack.c.l.b16 %v4904
        %v4915 = vunpack.c.l.b16 %v4905
        %v4916 = vpack.c.b16 %v4913, %v4912
        %v4917 = vpack.c.b16 %v4915, %v4914
        %4920 = vmatprep.subr.bf16.mxu0 0
        %4921 = vmatpush1.bf16.msra.mxu0 %v4916
        %4922 = vmatprep.subr.bf16.mxu0 0
        %4923 = vmatpush1.bf16.msra.mxu0 %v4917
        %4924 = vmatprep.subr.bf16.mxu0 0
        %4925 = vmatpush1.bf16.msra.mxu0 0
        %4926 = vmatprep.subr.bf16.mxu0 0
        %4927 = vmatpush1.bf16.msra.mxu0 0
        %4928 = vmatprep.subr.bf16.mxu0 0
        %4929 = vmatpush1.bf16.msra.mxu0 0
        %4930 = vmatprep.subr.bf16.mxu0 0
        %4931 = vmatpush1.bf16.msra.mxu0 0
        %4932 = vmatprep.subr.bf16.mxu0 0
        %4933 = vmatpush1.bf16.msra.mxu0 0
        %4934 = vmatprep.subr.bf16.mxu0 0
        %4935 = vmatpush1.bf16.msra.mxu0 0
        %4936 = vmatprep.subr.bf16.mxu0 0
        %4937 = vmatpush1.bf16.msra.mxu0 0
        %4938 = vmatprep.subr.bf16.mxu0 0
        %4939 = vmatpush1.bf16.msra.mxu0 0
        %4940 = vmatprep.subr.bf16.mxu0 0
        %4941 = vmatpush1.bf16.msra.mxu0 0
        %4942 = vmatprep.subr.bf16.mxu0 0
        %4943 = vmatpush1.bf16.msra.mxu0 0
        %4944 = vmatprep.subr.bf16.mxu0 0
        %4945 = vmatpush1.bf16.msra.mxu0 0
        %4946 = vmatprep.subr.bf16.mxu0 0
        %4947 = vmatpush1.bf16.msra.mxu0 0
        %4948 = vmatprep.subr.bf16.mxu0 0
        %4949 = vmatpush1.bf16.msra.mxu0 0
        %4950 = vmatprep.subr.bf16.mxu0 0
        %4951 = vmatpush1.bf16.msra.mxu0 0
        %4952 = vmatprep.mubr.bf16.mxu0 0
        %4953 = vmatmul.mubr.bf16.gmra.mrb[0].mxu0 %v4795
        %v4954 = vpop.f32.mrb[0].mxu0
        %v4955 = vadd.f32 %v4907, %v4954
        %v4956 = vpop.f32.mrb[0].mxu0
        %v4957 = vpop.f32.mrb[0].mxu0
        %v4958 = vpop.f32.mrb[0].mxu0
        %4959 = vdwg.mxu0
        %v4960 = vmax.f32 %v4955, 0.0
        %4961 = vst.msk [vmem:[#allocation2 + $0x2] sm:$0x1] %vm4838, %v4960
        %s4962 = scalar_lea.vmem %s9, 48
        %v4963 = vld [vmem:[%s4962] sm:$0xf]
        %v4964 = vld [vmem:[%s4962 + $0x4] sm:$0xf]
        %v4965 = vld [vmem:[%s4962 + $0x8] sm:$0xf]
        %v4966 = vld [vmem:[%s4962 + $0xc] sm:$0xf]
        %s4967 = scalar_lea.vmem %s10, 3
        %v4968 = vld [vmem:[%s4967] sm:$0x1]
        %v4973 = vunpack.c.l.b16 %v4963
        %v4974 = vunpack.c.l.b16 %v4964
        %v4975 = vunpack.c.l.b16 %v4965
        %v4976 = vunpack.c.l.b16 %v4966
        %v4977 = vpack.c.b16 %v4974, %v4973
        %v4978 = vpack.c.b16 %v4976, %v4975
        %4981 = vmatprep.subr.bf16.mxu0 0
        %4982 = vmatpush1.bf16.msra.mxu0 %v4977
        %4983 = vmatprep.subr.bf16.mxu0 0
        %4984 = vmatpush1.bf16.msra.mxu0 %v4978
        %4985 = vmatprep.subr.bf16.mxu0 0
        %4986 = vmatpush1.bf16.msra.mxu0 0
        %4987 = vmatprep.subr.bf16.mxu0 0
        %4988 = vmatpush1.bf16.msra.mxu0 0
        %4989 = vmatprep.subr.bf16.mxu0 0
        %4990 = vmatpush1.bf16.msra.mxu0 0
        %4991 = vmatprep.subr.bf16.mxu0 0
        %4992 = vmatpush1.bf16.msra.mxu0 0
        %4993 = vmatprep.subr.bf16.mxu0 0
        %4994 = vmatpush1.bf16.msra.mxu0 0
        %4995 = vmatprep.subr.bf16.mxu0 0
        %4996 = vmatpush1.bf16.msra.mxu0 0
        %4997 = vmatprep.subr.bf16.mxu0 0
        %4998 = vmatpush1.bf16.msra.mxu0 0
        %4999 = vmatprep.subr.bf16.mxu0 0
        %5000 = vmatpush1.bf16.msra.mxu0 0
        %5001 = vmatprep.subr.bf16.mxu0 0
        %5002 = vmatpush1.bf16.msra.mxu0 0
        %5003 = vmatprep.subr.bf16.mxu0 0
        %5004 = vmatpush1.bf16.msra.mxu0 0
        %5005 = vmatprep.subr.bf16.mxu0 0
        %5006 = vmatpush1.bf16.msra.mxu0 0
        %5007 = vmatprep.subr.bf16.mxu0 0
        %5008 = vmatpush1.bf16.msra.mxu0 0
        %5009 = vmatprep.subr.bf16.mxu0 0
        %5010 = vmatpush1.bf16.msra.mxu0 0
        %5011 = vmatprep.subr.bf16.mxu0 0
        %5012 = vmatpush1.bf16.msra.mxu0 0
        %5013 = vmatprep.mubr.bf16.mxu0 0
        %5014 = vmatmul.mubr.bf16.gmra.mrb[0].mxu0 %v4795
        %v5015 = vpop.f32.mrb[0].mxu0
        %v5016 = vadd.f32 %v4968, %v5015
        %v5017 = vpop.f32.mrb[0].mxu0
        %v5018 = vpop.f32.mrb[0].mxu0
        %v5019 = vpop.f32.mrb[0].mxu0
        %5020 = vdwg.mxu0
        %v5021 = vmax.f32 %v5016, 0.0
        %5022 = vst.msk [vmem:[#allocation2 + $0x3] sm:$0x1] %vm4838, %v5021
        %s5023 = scalar_lea.vmem %s9, 64
        %v5024 = vld [vmem:[%s5023] sm:$0xf]
        %v5025 = vld [vmem:[%s5023 + $0x4] sm:$0xf]
        %v5026 = vld [vmem:[%s5023 + $0x8] sm:$0xf]
        %v5027 = vld [vmem:[%s5023 + $0xc] sm:$0xf]
        %s5028 = scalar_lea.vmem %s10, 4
        %v5029 = vld [vmem:[%s5028] sm:$0x1]
        %v5034 = vunpack.c.l.b16 %v5024
        %v5035 = vunpack.c.l.b16 %v5025
        %v5036 = vunpack.c.l.b16 %v5026
        %v5037 = vunpack.c.l.b16 %v5027
        %v5038 = vpack.c.b16 %v5035, %v5034
        %v5039 = vpack.c.b16 %v5037, %v5036
        %5042 = vmatprep.subr.bf16.mxu0 0
        %5043 = vmatpush1.bf16.msra.mxu0 %v5038
        %5044 = vmatprep.subr.bf16.mxu0 0
        %5045 = vmatpush1.bf16.msra.mxu0 %v5039
        %5046 = vmatprep.subr.bf16.mxu0 0
        %5047 = vmatpush1.bf16.msra.mxu0 0
        %5048 = vmatprep.subr.bf16.mxu0 0
        %5049 = vmatpush1.bf16.msra.mxu0 0
        %5050 = vmatprep.subr.bf16.mxu0 0
        %5051 = vmatpush1.bf16.msra.mxu0 0
        %5052 = vmatprep.subr.bf16.mxu0 0
        %5053 = vmatpush1.bf16.msra.mxu0 0
        %5054 = vmatprep.subr.bf16.mxu0 0
        %5055 = vmatpush1.bf16.msra.mxu0 0
        %5056 = vmatprep.subr.bf16.mxu0 0
        %5057 = vmatpush1.bf16.msra.mxu0 0
        %5058 = vmatprep.subr.bf16.mxu0 0
        %5059 = vmatpush1.bf16.msra.mxu0 0
        %5060 = vmatprep.subr.bf16.mxu0 0
        %5061 = vmatpush1.bf16.msra.mxu0 0
        %5062 = vmatprep.subr.bf16.mxu0 0
        %5063 = vmatpush1.bf16.msra.mxu0 0
        %5064 = vmatprep.subr.bf16.mxu0 0
        %5065 = vmatpush1.bf16.msra.mxu0 0
        %5066 = vmatprep.subr.bf16.mxu0 0
        %5067 = vmatpush1.bf16.msra.mxu0 0
        %5068 = vmatprep.subr.bf16.mxu0 0
        %5069 = vmatpush1.bf16.msra.mxu0 0
        %5070 = vmatprep.subr.bf16.mxu0 0
        %5071 = vmatpush1.bf16.msra.mxu0 0
        %5072 = vmatprep.subr.bf16.mxu0 0
        %5073 = vmatpush1.bf16.msra.mxu0 0
        %5074 = vmatprep.mubr.bf16.mxu0 0
        %5075 = vmatmul.mubr.bf16.gmra.mrb[0].mxu0 %v4795
        %v5076 = vpop.f32.mrb[0].mxu0
        %v5077 = vadd.f32 %v5029, %v5076
        %v5078 = vpop.f32.mrb[0].mxu0
        %v5079 = vpop.f32.mrb[0].mxu0
        %v5080 = vpop.f32.mrb[0].mxu0
        %5081 = vdwg.mxu0
        %v5082 = vmax.f32 %v5077, 0.0
        %5083 = vst.msk [vmem:[#allocation2 + $0x4] sm:$0x1] %vm4838, %v5082
        %s5084 = scalar_lea.vmem %s9, 80
        %v5085 = vld [vmem:[%s5084] sm:$0xf]
        %v5086 = vld [vmem:[%s5084 + $0x4] sm:$0xf]
        %v5087 = vld [vmem:[%s5084 + $0x8] sm:$0xf]
        %v5088 = vld [vmem:[%s5084 + $0xc] sm:$0xf]
        %s5089 = scalar_lea.vmem %s10, 5
        %v5090 = vld [vmem:[%s5089] sm:$0x1]
        %v5095 = vunpack.c.l.b16 %v5085
        %v5096 = vunpack.c.l.b16 %v5086
        %v5097 = vunpack.c.l.b16 %v5087
        %v5098 = vunpack.c.l.b16 %v5088
        %v5099 = vpack.c.b16 %v5096, %v5095
        %v5100 = vpack.c.b16 %v5098, %v5097
        %5103 = vmatprep.subr.bf16.mxu0 0
        %5104 = vmatpush1.bf16.msra.mxu0 %v5099
        %5105 = vmatprep.subr.bf16.mxu0 0
        %5106 = vmatpush1.bf16.msra.mxu0 %v5100
        %5107 = vmatprep.subr.bf16.mxu0 0
        %5108 = vmatpush1.bf16.msra.mxu0 0
        %5109 = vmatprep.subr.bf16.mxu0 0
        %5110 = vmatpush1.bf16.msra.mxu0 0
        %5111 = vmatprep.subr.bf16.mxu0 0
        %5112 = vmatpush1.bf16.msra.mxu0 0
        %5113 = vmatprep.subr.bf16.mxu0 0
        %5114 = vmatpush1.bf16.msra.mxu0 0
        %5115 = vmatprep.subr.bf16.mxu0 0
        %5116 = vmatpush1.bf16.msra.mxu0 0
        %5117 = vmatprep.subr.bf16.mxu0 0
        %5118 = vmatpush1.bf16.msra.mxu0 0
        %5119 = vmatprep.subr.bf16.mxu0 0
        %5120 = vmatpush1.bf16.msra.mxu0 0
        %5121 = vmatprep.subr.bf16.mxu0 0
        %5122 = vmatpush1.bf16.msra.mxu0 0
        %5123 = vmatprep.subr.bf16.mxu0 0
        %5124 = vmatpush1.bf16.msra.mxu0 0
        %5125 = vmatprep.subr.bf16.mxu0 0
        %5126 = vmatpush1.bf16.msra.mxu0 0
        %5127 = vmatprep.subr.bf16.mxu0 0
        %5128 = vmatpush1.bf16.msra.mxu0 0
        %5129 = vmatprep.subr.bf16.mxu0 0
        %5130 = vmatpush1.bf16.msra.mxu0 0
        %5131 = vmatprep.subr.bf16.mxu0 0
        %5132 = vmatpush1.bf16.msra.mxu0 0
        %5133 = vmatprep.subr.bf16.mxu0 0
        %5134 = vmatpush1.bf16.msra.mxu0 0
        %5135 = vmatprep.mubr.bf16.mxu0 0
        %5136 = vmatmul.mubr.bf16.gmra.mrb[0].mxu0 %v4795
        %v5137 = vpop.f32.mrb[0].mxu0
        %v5138 = vadd.f32 %v5090, %v5137
        %v5139 = vpop.f32.mrb[0].mxu0
        %v5140 = vpop.f32.mrb[0].mxu0
        %v5141 = vpop.f32.mrb[0].mxu0
        %5142 = vdwg.mxu0
        %v5143 = vmax.f32 %v5138, 0.0
        %5144 = vst.msk [vmem:[#allocation2 + $0x5] sm:$0x1] %vm4838, %v5143
        %s5145 = scalar_lea.vmem %s9, 96
        %v5146 = vld [vmem:[%s5145] sm:$0xf]
        %v5147 = vld [vmem:[%s5145 + $0x4] sm:$0xf]
        %v5148 = vld [vmem:[%s5145 + $0x8] sm:$0xf]
        %v5149 = vld [vmem:[%s5145 + $0xc] sm:$0xf]
        %s5150 = scalar_lea.vmem %s10, 6
        %v5151 = vld [vmem:[%s5150] sm:$0x1]
        %v5156 = vunpack.c.l.b16 %v5146
        %v5157 = vunpack.c.l.b16 %v5147
        %v5158 = vunpack.c.l.b16 %v5148
        %v5159 = vunpack.c.l.b16 %v5149
        %v5160 = vpack.c.b16 %v5157, %v5156
        %v5161 = vpack.c.b16 %v5159, %v5158
        %5164 = vmatprep.subr.bf16.mxu0 0
        %5165 = vmatpush1.bf16.msra.mxu0 %v5160
        %5166 = vmatprep.subr.bf16.mxu0 0
        %5167 = vmatpush1.bf16.msra.mxu0 %v5161
        %5168 = vmatprep.subr.bf16.mxu0 0
        %5169 = vmatpush1.bf16.msra.mxu0 0
        %5170 = vmatprep.subr.bf16.mxu0 0
        %5171 = vmatpush1.bf16.msra.mxu0 0
        %5172 = vmatprep.subr.bf16.mxu0 0
        %5173 = vmatpush1.bf16.msra.mxu0 0
        %5174 = vmatprep.subr.bf16.mxu0 0
        %5175 = vmatpush1.bf16.msra.mxu0 0
        %5176 = vmatprep.subr.bf16.mxu0 0
        %5177 = vmatpush1.bf16.msra.mxu0 0
        %5178 = vmatprep.subr.bf16.mxu0 0
        %5179 = vmatpush1.bf16.msra.mxu0 0
        %5180 = vmatprep.subr.bf16.mxu0 0
        %5181 = vmatpush1.bf16.msra.mxu0 0
        %5182 = vmatprep.subr.bf16.mxu0 0
        %5183 = vmatpush1.bf16.msra.mxu0 0
        %5184 = vmatprep.subr.bf16.mxu0 0
        %5185 = vmatpush1.bf16.msra.mxu0 0
        %5186 = vmatprep.subr.bf16.mxu0 0
        %5187 = vmatpush1.bf16.msra.mxu0 0
        %5188 = vmatprep.subr.bf16.mxu0 0
        %5189 = vmatpush1.bf16.msra.mxu0 0
        %5190 = vmatprep.subr.bf16.mxu0 0
        %5191 = vmatpush1.bf16.msra.mxu0 0
        %5192 = vmatprep.subr.bf16.mxu0 0
        %5193 = vmatpush1.bf16.msra.mxu0 0
        %5194 = vmatprep.subr.bf16.mxu0 0
        %5195 = vmatpush1.bf16.msra.mxu0 0
        %5196 = vmatprep.mubr.bf16.mxu0 0
        %5197 = vmatmul.mubr.bf16.gmra.mrb[0].mxu0 %v4795
        %v5198 = vpop.f32.mrb[0].mxu0
        %v5199 = vadd.f32 %v5151, %v5198
        %v5200 = vpop.f32.mrb[0].mxu0
        %v5201 = vpop.f32.mrb[0].mxu0
        %v5202 = vpop.f32.mrb[0].mxu0
        %5203 = vdwg.mxu0
        %v5204 = vmax.f32 %v5199, 0.0
        %5205 = vst.msk [vmem:[#allocation2 + $0x6] sm:$0x1] %vm4838, %v5204
        %s5206 = scalar_lea.vmem %s9, 112
        %v5207 = vld [vmem:[%s5206] sm:$0xf]
        %v5208 = vld [vmem:[%s5206 + $0x4] sm:$0xf]
        %v5209 = vld [vmem:[%s5206 + $0x8] sm:$0xf]
        %v5210 = vld [vmem:[%s5206 + $0xc] sm:$0xf]
        %s5211 = scalar_lea.vmem %s10, 7
        %v5212 = vld [vmem:[%s5211] sm:$0x1]
        %v5217 = vunpack.c.l.b16 %v5207
        %v5218 = vunpack.c.l.b16 %v5208
        %v5219 = vunpack.c.l.b16 %v5209
        %v5220 = vunpack.c.l.b16 %v5210
        %v5221 = vpack.c.b16 %v5218, %v5217
        %v5222 = vpack.c.b16 %v5220, %v5219
        %5225 = vmatprep.subr.bf16.mxu0 0
        %5226 = vmatpush1.bf16.msra.mxu0 %v5221
        %5227 = vmatprep.subr.bf16.mxu0 0
        %5228 = vmatpush1.bf16.msra.mxu0 %v5222
        %5229 = vmatprep.subr.bf16.mxu0 0
        %5230 = vmatpush1.bf16.msra.mxu0 0
        %5231 = vmatprep.subr.bf16.mxu0 0
        %5232 = vmatpush1.bf16.msra.mxu0 0
        %5233 = vmatprep.subr.bf16.mxu0 0
        %5234 = vmatpush1.bf16.msra.mxu0 0
        %5235 = vmatprep.subr.bf16.mxu0 0
        %5236 = vmatpush1.bf16.msra.mxu0 0
        %5237 = vmatprep.subr.bf16.mxu0 0
        %5238 = vmatpush1.bf16.msra.mxu0 0
        %5239 = vmatprep.subr.bf16.mxu0 0
        %5240 = vmatpush1.bf16.msra.mxu0 0
        %5241 = vmatprep.subr.bf16.mxu0 0
        %5242 = vmatpush1.bf16.msra.mxu0 0
        %5243 = vmatprep.subr.bf16.mxu0 0
        %5244 = vmatpush1.bf16.msra.mxu0 0
        %5245 = vmatprep.subr.bf16.mxu0 0
        %5246 = vmatpush1.bf16.msra.mxu0 0
        %5247 = vmatprep.subr.bf16.mxu0 0
        %5248 = vmatpush1.bf16.msra.mxu0 0
        %5249 = vmatprep.subr.bf16.mxu0 0
        %5250 = vmatpush1.bf16.msra.mxu0 0
        %5251 = vmatprep.subr.bf16.mxu0 0
        %5252 = vmatpush1.bf16.msra.mxu0 0
        %5253 = vmatprep.subr.bf16.mxu0 0
        %5254 = vmatpush1.bf16.msra.mxu0 0
        %5255 = vmatprep.subr.bf16.mxu0 0
        %5256 = vmatpush1.bf16.msra.mxu0 0
        %5257 = vmatprep.mubr.bf16.mxu0 0
        %5258 = vmatmul.mubr.bf16.gmra.mrb[0].mxu0 %v4795
        %v5259 = vpop.f32.mrb[0].mxu0
        %v5260 = vadd.f32 %v5212, %v5259
        %v5261 = vpop.f32.mrb[0].mxu0
        %v5262 = vpop.f32.mrb[0].mxu0
        %v5263 = vpop.f32.mrb[0].mxu0
        %5264 = vdwg.mxu0
        %v5265 = vmax.f32 %v5260, 0.0
        %5266 = vst.msk [vmem:[#allocation2 + $0x7] sm:$0x1] %vm4838, %v5265
        %s5267 = scalar_lea.vmem %s9, 128
        %v5268 = vld [vmem:[%s5267] sm:$0xf]
        %v5269 = vld [vmem:[%s5267 + $0x4] sm:$0xf]
        %v5270 = vld [vmem:[%s5267 + $0x8] sm:$0xf]
        %v5271 = vld [vmem:[%s5267 + $0xc] sm:$0xf]
        %s5272 = scalar_lea.vmem %s10, 8
        %v5273 = vld [vmem:[%s5272] sm:$0x1]
        %v5278 = vunpack.c.l.b16 %v5268
        %v5279 = vunpack.c.l.b16 %v5269
        %v5280 = vunpack.c.l.b16 %v5270
        %v5281 = vunpack.c.l.b16 %v5271
        %v5282 = vpack.c.b16 %v5279, %v5278
        %v5283 = vpack.c.b16 %v5281, %v5280
        %5286 = vmatprep.subr.bf16.mxu0 0
        %5287 = vmatpush1.bf16.msra.mxu0 %v5282
        %5288 = vmatprep.subr.bf16.mxu0 0
        %5289 = vmatpush1.bf16.msra.mxu0 %v5283
        %5290 = vmatprep.subr.bf16.mxu0 0
        %5291 = vmatpush1.bf16.msra.mxu0 0
        %5292 = vmatprep.subr.bf16.mxu0 0
        %5293 = vmatpush1.bf16.msra.mxu0 0
        %5294 = vmatprep.subr.bf16.mxu0 0
        %5295 = vmatpush1.bf16.msra.mxu0 0
        %5296 = vmatprep.subr.bf16.mxu0 0
        %5297 = vmatpush1.bf16.msra.mxu0 0
        %5298 = vmatprep.subr.bf16.mxu0 0
        %5299 = vmatpush1.bf16.msra.mxu0 0
        %5300 = vmatprep.subr.bf16.mxu0 0
        %5301 = vmatpush1.bf16.msra.mxu0 0
        %5302 = vmatprep.subr.bf16.mxu0 0
        %5303 = vmatpush1.bf16.msra.mxu0 0
        %5304 = vmatprep.subr.bf16.mxu0 0
        %5305 = vmatpush1.bf16.msra.mxu0 0
        %5306 = vmatprep.subr.bf16.mxu0 0
        %5307 = vmatpush1.bf16.msra.mxu0 0
        %5308 = vmatprep.subr.bf16.mxu0 0
        %5309 = vmatpush1.bf16.msra.mxu0 0
        %5310 = vmatprep.subr.bf16.mxu0 0
        %5311 = vmatpush1.bf16.msra.mxu0 0
        %5312 = vmatprep.subr.bf16.mxu0 0
        %5313 = vmatpush1.bf16.msra.mxu0 0
        %5314 = vmatprep.subr.bf16.mxu0 0
        %5315 = vmatpush1.bf16.msra.mxu0 0
        %5316 = vmatprep.subr.bf16.mxu0 0
        %5317 = vmatpush1.bf16.msra.mxu0 0
        %5318 = vmatprep.mubr.bf16.mxu0 0
        %5319 = vmatmul.mubr.bf16.gmra.mrb[0].mxu0 %v4795
        %v5320 = vpop.f32.mrb[0].mxu0
        %v5321 = vadd.f32 %v5273, %v5320
        %v5322 = vpop.f32.mrb[0].mxu0
        %v5323 = vpop.f32.mrb[0].mxu0
        %v5324 = vpop.f32.mrb[0].mxu0
        %5325 = vdwg.mxu0
        %v5326 = vmax.f32 %v5321, 0.0
        %5327 = vst.msk [vmem:[#allocation2 + $0x8] sm:$0x1] %vm4838, %v5326
        %s5328 = scalar_lea.vmem %s9, 144
        %v5329 = vld [vmem:[%s5328] sm:$0xf]
        %v5330 = vld [vmem:[%s5328 + $0x4] sm:$0xf]
        %v5331 = vld [vmem:[%s5328 + $0x8] sm:$0xf]
        %v5332 = vld [vmem:[%s5328 + $0xc] sm:$0xf]
        %s5333 = scalar_lea.vmem %s10, 9
        %v5334 = vld [vmem:[%s5333] sm:$0x1]
        %v5339 = vunpack.c.l.b16 %v5329
        %v5340 = vunpack.c.l.b16 %v5330
        %v5341 = vunpack.c.l.b16 %v5331
        %v5342 = vunpack.c.l.b16 %v5332
        %v5343 = vpack.c.b16 %v5340, %v5339
        %v5344 = vpack.c.b16 %v5342, %v5341
        %5347 = vmatprep.subr.bf16.mxu0 0
        %5348 = vmatpush1.bf16.msra.mxu0 %v5343
        %5349 = vmatprep.subr.bf16.mxu0 0
        %5350 = vmatpush1.bf16.msra.mxu0 %v5344
        %5351 = vmatprep.subr.bf16.mxu0 0
        %5352 = vmatpush1.bf16.msra.mxu0 0
        %5353 = vmatprep.subr.bf16.mxu0 0
        %5354 = vmatpush1.bf16.msra.mxu0 0
        %5355 = vmatprep.subr.bf16.mxu0 0
        %5356 = vmatpush1.bf16.msra.mxu0 0
        %5357 = vmatprep.subr.bf16.mxu0 0
        %5358 = vmatpush1.bf16.msra.mxu0 0
        %5359 = vmatprep.subr.bf16.mxu0 0
        %5360 = vmatpush1.bf16.msra.mxu0 0
        %5361 = vmatprep.subr.bf16.mxu0 0
        %5362 = vmatpush1.bf16.msra.mxu0 0
        %5363 = vmatprep.subr.bf16.mxu0 0
        %5364 = vmatpush1.bf16.msra.mxu0 0
        %5365 = vmatprep.subr.bf16.mxu0 0
        %5366 = vmatpush1.bf16.msra.mxu0 0
        %5367 = vmatprep.subr.bf16.mxu0 0
        %5368 = vmatpush1.bf16.msra.mxu0 0
        %5369 = vmatprep.subr.bf16.mxu0 0
        %5370 = vmatpush1.bf16.msra.mxu0 0
        %5371 = vmatprep.subr.bf16.mxu0 0
        %5372 = vmatpush1.bf16.msra.mxu0 0
        %5373 = vmatprep.subr.bf16.mxu0 0
        %5374 = vmatpush1.bf16.msra.mxu0 0
        %5375 = vmatprep.subr.bf16.mxu0 0
        %5376 = vmatpush1.bf16.msra.mxu0 0
        %5377 = vmatprep.subr.bf16.mxu0 0
        %5378 = vmatpush1.bf16.msra.mxu0 0
        %5379 = vmatprep.mubr.bf16.mxu0 0
        %5380 = vmatmul.mubr.bf16.gmra.mrb[0].mxu0 %v4795
        %v5381 = vpop.f32.mrb[0].mxu0
        %v5382 = vadd.f32 %v5334, %v5381
        %v5383 = vpop.f32.mrb[0].mxu0
        %v5384 = vpop.f32.mrb[0].mxu0
        %v5385 = vpop.f32.mrb[0].mxu0
        %5386 = vdwg.mxu0
        %v5387 = vmax.f32 %v5382, 0.0
        %5388 = vst.msk [vmem:[#allocation2 + $0x9] sm:$0x1] %vm4838, %v5387
        %s5389 = scalar_lea.vmem %s9, 160
        %v5390 = vld [vmem:[%s5389] sm:$0xf]
        %v5391 = vld [vmem:[%s5389 + $0x4] sm:$0xf]
        %v5392 = vld [vmem:[%s5389 + $0x8] sm:$0xf]
        %v5393 = vld [vmem:[%s5389 + $0xc] sm:$0xf]
        %s5394 = scalar_lea.vmem %s10, 10
        %v5395 = vld [vmem:[%s5394] sm:$0x1]
        %v5400 = vunpack.c.l.b16 %v5390
        %v5401 = vunpack.c.l.b16 %v5391
        %v5402 = vunpack.c.l.b16 %v5392
        %v5403 = vunpack.c.l.b16 %v5393
        %v5404 = vpack.c.b16 %v5401, %v5400
        %v5405 = vpack.c.b16 %v5403, %v5402
        %5408 = vmatprep.subr.bf16.mxu0 0
        %5409 = vmatpush1.bf16.msra.mxu0 %v5404
        %5410 = vmatprep.subr.bf16.mxu0 0
        %5411 = vmatpush1.bf16.msra.mxu0 %v5405
        %5412 = vmatprep.subr.bf16.mxu0 0
        %5413 = vmatpush1.bf16.msra.mxu0 0
        %5414 = vmatprep.subr.bf16.mxu0 0
        %5415 = vmatpush1.bf16.msra.mxu0 0
        %5416 = vmatprep.subr.bf16.mxu0 0
        %5417 = vmatpush1.bf16.msra.mxu0 0
        %5418 = vmatprep.subr.bf16.mxu0 0
        %5419 = vmatpush1.bf16.msra.mxu0 0
        %5420 = vmatprep.subr.bf16.mxu0 0
        %5421 = vmatpush1.bf16.msra.mxu0 0
        %5422 = vmatprep.subr.bf16.mxu0 0
        %5423 = vmatpush1.bf16.msra.mxu0 0
        %5424 = vmatprep.subr.bf16.mxu0 0
        %5425 = vmatpush1.bf16.msra.mxu0 0
        %5426 = vmatprep.subr.bf16.mxu0 0
        %5427 = vmatpush1.bf16.msra.mxu0 0
        %5428 = vmatprep.subr.bf16.mxu0 0
        %5429 = vmatpush1.bf16.msra.mxu0 0
        %5430 = vmatprep.subr.bf16.mxu0 0
        %5431 = vmatpush1.bf16.msra.mxu0 0
        %5432 = vmatprep.subr.bf16.mxu0 0
        %5433 = vmatpush1.bf16.msra.mxu0 0
        %5434 = vmatprep.subr.bf16.mxu0 0
        %5435 = vmatpush1.bf16.msra.mxu0 0
        %5436 = vmatprep.subr.bf16.mxu0 0
        %5437 = vmatpush1.bf16.msra.mxu0 0
        %5438 = vmatprep.subr.bf16.mxu0 0
        %5439 = vmatpush1.bf16.msra.mxu0 0
        %5440 = vmatprep.mubr.bf16.mxu0 0
        %5441 = vmatmul.mubr.bf16.gmra.mrb[0].mxu0 %v4795
        %v5442 = vpop.f32.mrb[0].mxu0
        %v5443 = vadd.f32 %v5395, %v5442
        %v5444 = vpop.f32.mrb[0].mxu0
        %v5445 = vpop.f32.mrb[0].mxu0
        %v5446 = vpop.f32.mrb[0].mxu0
        %5447 = vdwg.mxu0
        %v5448 = vmax.f32 %v5443, 0.0
        %5449 = vst.msk [vmem:[#allocation2 + $0xa] sm:$0x1] %vm4838, %v5448
        %s5450 = scalar_lea.vmem %s9, 176
        %v5451 = vld [vmem:[%s5450] sm:$0xf]
        %v5452 = vld [vmem:[%s5450 + $0x4] sm:$0xf]
        %v5453 = vld [vmem:[%s5450 + $0x8] sm:$0xf]
        %v5454 = vld [vmem:[%s5450 + $0xc] sm:$0xf]
        %s5455 = scalar_lea.vmem %s10, 11
        %v5456 = vld [vmem:[%s5455] sm:$0x1]
        %v5461 = vunpack.c.l.b16 %v5451
        %v5462 = vunpack.c.l.b16 %v5452
        %v5463 = vunpack.c.l.b16 %v5453
        %v5464 = vunpack.c.l.b16 %v5454
        %v5465 = vpack.c.b16 %v5462, %v5461
        %v5466 = vpack.c.b16 %v5464, %v5463
        %5469 = vmatprep.subr.bf16.mxu0 0
        %5470 = vmatpush1.bf16.msra.mxu0 %v5465
        %5471 = vmatprep.subr.bf16.mxu0 0
        %5472 = vmatpush1.bf16.msra.mxu0 %v5466
        %5473 = vmatprep.subr.bf16.mxu0 0
        %5474 = vmatpush1.bf16.msra.mxu0 0
        %5475 = vmatprep.subr.bf16.mxu0 0
        %5476 = vmatpush1.bf16.msra.mxu0 0
        %5477 = vmatprep.subr.bf16.mxu0 0
        %5478 = vmatpush1.bf16.msra.mxu0 0
        %5479 = vmatprep.subr.bf16.mxu0 0
        %5480 = vmatpush1.bf16.msra.mxu0 0
        %5481 = vmatprep.subr.bf16.mxu0 0
        %5482 = vmatpush1.bf16.msra.mxu0 0
        %5483 = vmatprep.subr.bf16.mxu0 0
        %5484 = vmatpush1.bf16.msra.mxu0 0
        %5485 = vmatprep.subr.bf16.mxu0 0
        %5486 = vmatpush1.bf16.msra.mxu0 0
        %5487 = vmatprep.subr.bf16.mxu0 0
        %5488 = vmatpush1.bf16.msra.mxu0 0
        %5489 = vmatprep.subr.bf16.mxu0 0
        %5490 = vmatpush1.bf16.msra.mxu0 0
        %5491 = vmatprep.subr.bf16.mxu0 0
        %5492 = vmatpush1.bf16.msra.mxu0 0
        %5493 = vmatprep.subr.bf16.mxu0 0
        %5494 = vmatpush1.bf16.msra.mxu0 0
        %5495 = vmatprep.subr.bf16.mxu0 0
        %5496 = vmatpush1.bf16.msra.mxu0 0
        %5497 = vmatprep.subr.bf16.mxu0 0
        %5498 = vmatpush1.bf16.msra.mxu0 0
        %5499 = vmatprep.subr.bf16.mxu0 0
        %5500 = vmatpush1.bf16.msra.mxu0 0
        %5501 = vmatprep.mubr.bf16.mxu0 0
        %5502 = vmatmul.mubr.bf16.gmra.mrb[0].mxu0 %v4795
        %v5503 = vpop.f32.mrb[0].mxu0
        %v5504 = vadd.f32 %v5456, %v5503
        %v5505 = vpop.f32.mrb[0].mxu0
        %v5506 = vpop.f32.mrb[0].mxu0
        %v5507 = vpop.f32.mrb[0].mxu0
        %5508 = vdwg.mxu0
        %v5509 = vmax.f32 %v5504, 0.0
        %5510 = vst.msk [vmem:[#allocation2 + $0xb] sm:$0x1] %vm4838, %v5509
        %s5511 = scalar_lea.vmem %s9, 192
        %v5512 = vld [vmem:[%s5511] sm:$0xf]
        %v5513 = vld [vmem:[%s5511 + $0x4] sm:$0xf]
        %v5514 = vld [vmem:[%s5511 + $0x8] sm:$0xf]
        %v5515 = vld [vmem:[%s5511 + $0xc] sm:$0xf]
        %s5516 = scalar_lea.vmem %s10, 12
        %v5517 = vld [vmem:[%s5516] sm:$0x1]
        %v5522 = vunpack.c.l.b16 %v5512
        %v5523 = vunpack.c.l.b16 %v5513
        %v5524 = vunpack.c.l.b16 %v5514
        %v5525 = vunpack.c.l.b16 %v5515
        %v5526 = vpack.c.b16 %v5523, %v5522
        %v5527 = vpack.c.b16 %v5525, %v5524
        %5530 = vmatprep.subr.bf16.mxu0 0
        %5531 = vmatpush1.bf16.msra.mxu0 %v5526
        %5532 = vmatprep.subr.bf16.mxu0 0
        %5533 = vmatpush1.bf16.msra.mxu0 %v5527
        %5534 = vmatprep.subr.bf16.mxu0 0
        %5535 = vmatpush1.bf16.msra.mxu0 0
        %5536 = vmatprep.subr.bf16.mxu0 0
        %5537 = vmatpush1.bf16.msra.mxu0 0
        %5538 = vmatprep.subr.bf16.mxu0 0
        %5539 = vmatpush1.bf16.msra.mxu0 0
        %5540 = vmatprep.subr.bf16.mxu0 0
        %5541 = vmatpush1.bf16.msra.mxu0 0
        %5542 = vmatprep.subr.bf16.mxu0 0
        %5543 = vmatpush1.bf16.msra.mxu0 0
        %5544 = vmatprep.subr.bf16.mxu0 0
        %5545 = vmatpush1.bf16.msra.mxu0 0
        %5546 = vmatprep.subr.bf16.mxu0 0
        %5547 = vmatpush1.bf16.msra.mxu0 0
        %5548 = vmatprep.subr.bf16.mxu0 0
        %5549 = vmatpush1.bf16.msra.mxu0 0
        %5550 = vmatprep.subr.bf16.mxu0 0
        %5551 = vmatpush1.bf16.msra.mxu0 0
        %5552 = vmatprep.subr.bf16.mxu0 0
        %5553 = vmatpush1.bf16.msra.mxu0 0
        %5554 = vmatprep.subr.bf16.mxu0 0
        %5555 = vmatpush1.bf16.msra.mxu0 0
        %5556 = vmatprep.subr.bf16.mxu0 0
        %5557 = vmatpush1.bf16.msra.mxu0 0
        %5558 = vmatprep.subr.bf16.mxu0 0
        %5559 = vmatpush1.bf16.msra.mxu0 0
        %5560 = vmatprep.subr.bf16.mxu0 0
        %5561 = vmatpush1.bf16.msra.mxu0 0
        %5562 = vmatprep.mubr.bf16.mxu0 0
        %5563 = vmatmul.mubr.bf16.gmra.mrb[0].mxu0 %v4795
        %v5564 = vpop.f32.mrb[0].mxu0
        %v5565 = vadd.f32 %v5517, %v5564
        %v5566 = vpop.f32.mrb[0].mxu0
        %v5567 = vpop.f32.mrb[0].mxu0
        %v5568 = vpop.f32.mrb[0].mxu0
        %5569 = vdwg.mxu0
        %v5570 = vmax.f32 %v5565, 0.0
        %5571 = vst.msk [vmem:[#allocation2 + $0xc] sm:$0x1] %vm4838, %v5570
        %s5572 = scalar_lea.vmem %s9, 208
        %v5573 = vld [vmem:[%s5572] sm:$0xf]
        %v5574 = vld [vmem:[%s5572 + $0x4] sm:$0xf]
        %v5575 = vld [vmem:[%s5572 + $0x8] sm:$0xf]
        %v5576 = vld [vmem:[%s5572 + $0xc] sm:$0xf]
        %s5577 = scalar_lea.vmem %s10, 13
        %v5578 = vld [vmem:[%s5577] sm:$0x1]
        %v5583 = vunpack.c.l.b16 %v5573
        %v5584 = vunpack.c.l.b16 %v5574
        %v5585 = vunpack.c.l.b16 %v5575
        %v5586 = vunpack.c.l.b16 %v5576
        %v5587 = vpack.c.b16 %v5584, %v5583
        %v5588 = vpack.c.b16 %v5586, %v5585
        %5591 = vmatprep.subr.bf16.mxu0 0
        %5592 = vmatpush1.bf16.msra.mxu0 %v5587
        %5593 = vmatprep.subr.bf16.mxu0 0
        %5594 = vmatpush1.bf16.msra.mxu0 %v5588
        %5595 = vmatprep.subr.bf16.mxu0 0
        %5596 = vmatpush1.bf16.msra.mxu0 0
        %5597 = vmatprep.subr.bf16.mxu0 0
        %5598 = vmatpush1.bf16.msra.mxu0 0
        %5599 = vmatprep.subr.bf16.mxu0 0
        %5600 = vmatpush1.bf16.msra.mxu0 0
        %5601 = vmatprep.subr.bf16.mxu0 0
        %5602 = vmatpush1.bf16.msra.mxu0 0
        %5603 = vmatprep.subr.bf16.mxu0 0
        %5604 = vmatpush1.bf16.msra.mxu0 0
        %5605 = vmatprep.subr.bf16.mxu0 0
        %5606 = vmatpush1.bf16.msra.mxu0 0
        %5607 = vmatprep.subr.bf16.mxu0 0
        %5608 = vmatpush1.bf16.msra.mxu0 0
        %5609 = vmatprep.subr.bf16.mxu0 0
        %5610 = vmatpush1.bf16.msra.mxu0 0
        %5611 = vmatprep.subr.bf16.mxu0 0
        %5612 = vmatpush1.bf16.msra.mxu0 0
        %5613 = vmatprep.subr.bf16.mxu0 0
        %5614 = vmatpush1.bf16.msra.mxu0 0
        %5615 = vmatprep.subr.bf16.mxu0 0
        %5616 = vmatpush1.bf16.msra.mxu0 0
        %5617 = vmatprep.subr.bf16.mxu0 0
        %5618 = vmatpush1.bf16.msra.mxu0 0
        %5619 = vmatprep.subr.bf16.mxu0 0
        %5620 = vmatpush1.bf16.msra.mxu0 0
        %5621 = vmatprep.subr.bf16.mxu0 0
        %5622 = vmatpush1.bf16.msra.mxu0 0
        %5623 = vmatprep.mubr.bf16.mxu0 0
        %5624 = vmatmul.mubr.bf16.gmra.mrb[0].mxu0 %v4795
        %v5625 = vpop.f32.mrb[0].mxu0
        %v5626 = vadd.f32 %v5578, %v5625
        %v5627 = vpop.f32.mrb[0].mxu0
        %v5628 = vpop.f32.mrb[0].mxu0
        %v5629 = vpop.f32.mrb[0].mxu0
        %5630 = vdwg.mxu0
        %v5631 = vmax.f32 %v5626, 0.0
        %5632 = vst.msk [vmem:[#allocation2 + $0xd] sm:$0x1] %vm4838, %v5631
        %s5633 = scalar_lea.vmem %s9, 224
        %v5634 = vld [vmem:[%s5633] sm:$0xf]
        %v5635 = vld [vmem:[%s5633 + $0x4] sm:$0xf]
        %v5636 = vld [vmem:[%s5633 + $0x8] sm:$0xf]
        %v5637 = vld [vmem:[%s5633 + $0xc] sm:$0xf]
        %s5638 = scalar_lea.vmem %s10, 14
        %v5639 = vld [vmem:[%s5638] sm:$0x1]
        %v5644 = vunpack.c.l.b16 %v5634
        %v5645 = vunpack.c.l.b16 %v5635
        %v5646 = vunpack.c.l.b16 %v5636
        %v5647 = vunpack.c.l.b16 %v5637
        %v5648 = vpack.c.b16 %v5645, %v5644
        %v5649 = vpack.c.b16 %v5647, %v5646
        %5652 = vmatprep.subr.bf16.mxu0 0
        %5653 = vmatpush1.bf16.msra.mxu0 %v5648
        %5654 = vmatprep.subr.bf16.mxu0 0
        %5655 = vmatpush1.bf16.msra.mxu0 %v5649
        %5656 = vmatprep.subr.bf16.mxu0 0
        %5657 = vmatpush1.bf16.msra.mxu0 0
        %5658 = vmatprep.subr.bf16.mxu0 0
        %5659 = vmatpush1.bf16.msra.mxu0 0
        %5660 = vmatprep.subr.bf16.mxu0 0
        %5661 = vmatpush1.bf16.msra.mxu0 0
        %5662 = vmatprep.subr.bf16.mxu0 0
        %5663 = vmatpush1.bf16.msra.mxu0 0
        %5664 = vmatprep.subr.bf16.mxu0 0
        %5665 = vmatpush1.bf16.msra.mxu0 0
        %5666 = vmatprep.subr.bf16.mxu0 0
        %5667 = vmatpush1.bf16.msra.mxu0 0
        %5668 = vmatprep.subr.bf16.mxu0 0
        %5669 = vmatpush1.bf16.msra.mxu0 0
        %5670 = vmatprep.subr.bf16.mxu0 0
        %5671 = vmatpush1.bf16.msra.mxu0 0
        %5672 = vmatprep.subr.bf16.mxu0 0
        %5673 = vmatpush1.bf16.msra.mxu0 0
        %5674 = vmatprep.subr.bf16.mxu0 0
        %5675 = vmatpush1.bf16.msra.mxu0 0
        %5676 = vmatprep.subr.bf16.mxu0 0
        %5677 = vmatpush1.bf16.msra.mxu0 0
        %5678 = vmatprep.subr.bf16.mxu0 0
        %5679 = vmatpush1.bf16.msra.mxu0 0
        %5680 = vmatprep.subr.bf16.mxu0 0
        %5681 = vmatpush1.bf16.msra.mxu0 0
        %5682 = vmatprep.subr.bf16.mxu0 0
        %5683 = vmatpush1.bf16.msra.mxu0 0
        %5684 = vmatprep.mubr.bf16.mxu0 0
        %5685 = vmatmul.mubr.bf16.gmra.mrb[0].mxu0 %v4795
        %v5686 = vpop.f32.mrb[0].mxu0
        %v5687 = vadd.f32 %v5639, %v5686
        %v5688 = vpop.f32.mrb[0].mxu0
        %v5689 = vpop.f32.mrb[0].mxu0
        %v5690 = vpop.f32.mrb[0].mxu0
        %5691 = vdwg.mxu0
        %v5692 = vmax.f32 %v5687, 0.0
        %5693 = vst.msk [vmem:[#allocation2 + $0xe] sm:$0x1] %vm4838, %v5692
        %s5694 = scalar_lea.vmem %s9, 240
        %v5695 = vld [vmem:[%s5694] sm:$0xf]
        %v5696 = vld [vmem:[%s5694 + $0x4] sm:$0xf]
        %v5697 = vld [vmem:[%s5694 + $0x8] sm:$0xf]
        %v5698 = vld [vmem:[%s5694 + $0xc] sm:$0xf]
        %s5699 = scalar_lea.vmem %s10, 15
        %v5700 = vld [vmem:[%s5699] sm:$0x1]
        %v5705 = vunpack.c.l.b16 %v5695
        %v5706 = vunpack.c.l.b16 %v5696
        %v5707 = vunpack.c.l.b16 %v5697
        %v5708 = vunpack.c.l.b16 %v5698
        %v5709 = vpack.c.b16 %v5706, %v5705
        %v5710 = vpack.c.b16 %v5708, %v5707
        %5713 = vmatprep.subr.bf16.mxu0 0
        %5714 = vmatpush1.bf16.msra.mxu0 %v5709
        %5715 = vmatprep.subr.bf16.mxu0 0
        %5716 = vmatpush1.bf16.msra.mxu0 %v5710
        %5717 = vmatprep.subr.bf16.mxu0 0
        %5718 = vmatpush1.bf16.msra.mxu0 0
        %5719 = vmatprep.subr.bf16.mxu0 0
        %5720 = vmatpush1.bf16.msra.mxu0 0
        %5721 = vmatprep.subr.bf16.mxu0 0
        %5722 = vmatpush1.bf16.msra.mxu0 0
        %5723 = vmatprep.subr.bf16.mxu0 0
        %5724 = vmatpush1.bf16.msra.mxu0 0
        %5725 = vmatprep.subr.bf16.mxu0 0
        %5726 = vmatpush1.bf16.msra.mxu0 0
        %5727 = vmatprep.subr.bf16.mxu0 0
        %5728 = vmatpush1.bf16.msra.mxu0 0
        %5729 = vmatprep.subr.bf16.mxu0 0
        %5730 = vmatpush1.bf16.msra.mxu0 0
        %5731 = vmatprep.subr.bf16.mxu0 0
        %5732 = vmatpush1.bf16.msra.mxu0 0
        %5733 = vmatprep.subr.bf16.mxu0 0
        %5734 = vmatpush1.bf16.msra.mxu0 0
        %5735 = vmatprep.subr.bf16.mxu0 0
        %5736 = vmatpush1.bf16.msra.mxu0 0
        %5737 = vmatprep.subr.bf16.mxu0 0
        %5738 = vmatpush1.bf16.msra.mxu0 0
        %5739 = vmatprep.subr.bf16.mxu0 0
        %5740 = vmatpush1.bf16.msra.mxu0 0
        %5741 = vmatprep.subr.bf16.mxu0 0
        %5742 = vmatpush1.bf16.msra.mxu0 0
        %5743 = vmatprep.subr.bf16.mxu0 0
        %5744 = vmatpush1.bf16.msra.mxu0 0
        %5745 = vmatprep.mubr.bf16.mxu0 0
        %5746 = vmatmul.mubr.bf16.gmra.mrb[0].mxu0 %v4795
        %v5747 = vpop.f32.mrb[0].mxu0
        %v5748 = vadd.f32 %v5700, %v5747
        %v5749 = vpop.f32.mrb[0].mxu0
        %v5750 = vpop.f32.mrb[0].mxu0
        %v5751 = vpop.f32.mrb[0].mxu0
        %5752 = vdwg.mxu0
        %v5753 = vmax.f32 %v5748, 0.0
        %5754 = vst.msk [vmem:[#allocation2 + $0xf] sm:$0x1] %vm4838, %v5753
        %v5755 = vld [vmem:[#allocation2] sm:$0xff]
        %v5756 = vld [vmem:[#allocation2 + $0x8] sm:$0xff]
        %v5757 = vpack.c.bf16 %v5756, %v5755
        %v5758 = vld [vmem:[#allocation16] sm:$0xf]
        %v5760 = vsel %vm3924, %v5758, 0
        %5762 = vmatprep.subr.bf16.mxu0 0
        %5763 = vmatpush1.bf16.msra.mxu0 %v5757
        %5764 = vmatprep.subr.bf16.mxu0 0
        %5765 = vmatpush1.bf16.msra.mxu0 0
        %5766 = vmatprep.subr.bf16.mxu0 0
        %5767 = vmatpush1.bf16.msra.mxu0 0
        %5768 = vmatprep.subr.bf16.mxu0 0
        %5769 = vmatpush1.bf16.msra.mxu0 0
        %5770 = vmatprep.subr.bf16.mxu0 0
        %5771 = vmatpush1.bf16.msra.mxu0 0
        %5772 = vmatprep.subr.bf16.mxu0 0
        %5773 = vmatpush1.bf16.msra.mxu0 0
        %5774 = vmatprep.subr.bf16.mxu0 0
        %5775 = vmatpush1.bf16.msra.mxu0 0
        %5776 = vmatprep.subr.bf16.mxu0 0
        %5777 = vmatpush1.bf16.msra.mxu0 0
        %5778 = vmatprep.subr.bf16.mxu0 0
        %5779 = vmatpush1.bf16.msra.mxu0 0
        %5780 = vmatprep.subr.bf16.mxu0 0
        %5781 = vmatpush1.bf16.msra.mxu0 0
        %5782 = vmatprep.subr.bf16.mxu0 0
        %5783 = vmatpush1.bf16.msra.mxu0 0
        %5784 = vmatprep.subr.bf16.mxu0 0
        %5785 = vmatpush1.bf16.msra.mxu0 0
        %5786 = vmatprep.subr.bf16.mxu0 0
        %5787 = vmatpush1.bf16.msra.mxu0 0
        %5788 = vmatprep.subr.bf16.mxu0 0
        %5789 = vmatpush1.bf16.msra.mxu0 0
        %5790 = vmatprep.subr.bf16.mxu0 0
        %5791 = vmatpush1.bf16.msra.mxu0 0
        %5792 = vmatprep.subr.bf16.mxu0 0
        %5793 = vmatpush1.bf16.msra.mxu0 0
        %5794 = vmatprep.mubr.bf16.mxu0 0
        %5795 = vmatmul.mubr.bf16.gmra.mrb[0].mxu0 %v5760
        %v5796 = vpop.f32.mrb[0].mxu0
        %v5797 = vadd.f32 0.0, %v5796
        %v5798 = vpop.f32.mrb[0].mxu0
        %v5799 = vpop.f32.mrb[0].mxu0
        %v5800 = vpop.f32.mrb[0].mxu0
        %5801 = vdwg.mxu0
        %v5802 = vpack.c.bf16 %v5797, %v5797
        %v5803 = vld [vmem:[#allocation14] sm:$0xf]
        %v5804 = vld [vmem:[#allocation14 + $0x4] sm:$0xf]
        %s5805 = scalar_lea.vmem [#allocation16], 4
        %v5806 = vld [vmem:[%s5805] sm:$0xf]
        %v5808 = vsel %vm3924, %v5806, 0
        %5810 = vmatprep.subr.bf16.mxu0 0
        %5811 = vmatpush1.bf16.msra.mxu0 %v5757
        %5812 = vmatprep.subr.bf16.mxu0 0
        %5813 = vmatpush1.bf16.msra.mxu0 0
        %5814 = vmatprep.subr.bf16.mxu0 0
        %5815 = vmatpush1.bf16.msra.mxu0 0
        %5816 = vmatprep.subr.bf16.mxu0 0
        %5817 = vmatpush1.bf16.msra.mxu0 0
        %5818 = vmatprep.subr.bf16.mxu0 0
        %5819 = vmatpush1.bf16.msra.mxu0 0
        %5820 = vmatprep.subr.bf16.mxu0 0
        %5821 = vmatpush1.bf16.msra.mxu0 0
        %5822 = vmatprep.subr.bf16.mxu0 0
        %5823 = vmatpush1.bf16.msra.mxu0 0
        %5824 = vmatprep.subr.bf16.mxu0 0
        %5825 = vmatpush1.bf16.msra.mxu0 0
        %5826 = vmatprep.subr.bf16.mxu0 0
        %5827 = vmatpush1.bf16.msra.mxu0 0
        %5828 = vmatprep.subr.bf16.mxu0 0
        %5829 = vmatpush1.bf16.msra.mxu0 0
        %5830 = vmatprep.subr.bf16.mxu0 0
        %5831 = vmatpush1.bf16.msra.mxu0 0
        %5832 = vmatprep.subr.bf16.mxu0 0
        %5833 = vmatpush1.bf16.msra.mxu0 0
        %5834 = vmatprep.subr.bf16.mxu0 0
        %5835 = vmatpush1.bf16.msra.mxu0 0
        %5836 = vmatprep.subr.bf16.mxu0 0
        %5837 = vmatpush1.bf16.msra.mxu0 0
        %5838 = vmatprep.subr.bf16.mxu0 0
        %5839 = vmatpush1.bf16.msra.mxu0 0
        %5840 = vmatprep.subr.bf16.mxu0 0
        %5841 = vmatpush1.bf16.msra.mxu0 0
        %5842 = vmatprep.mubr.bf16.mxu0 0
        %5843 = vmatmul.mubr.bf16.gmra.mrb[0].mxu0 %v5808
        %v5844 = vpop.f32.mrb[0].mxu0
        %v5845 = vadd.f32 0.0, %v5844
        %v5846 = vpop.f32.mrb[0].mxu0
        %v5847 = vpop.f32.mrb[0].mxu0
        %v5848 = vpop.f32.mrb[0].mxu0
        %5849 = vdwg.mxu0
        %v5850 = vpack.c.bf16 %v5845, %v5845
        %s5851 = scalar_lea.vmem [#allocation14], 8
        %v5852 = vld [vmem:[%s5851] sm:$0xf]
        %v5853 = vld [vmem:[%s5851 + $0x4] sm:$0xf]
        %v5856 = vunpack.c.l.b16 %v5852
        %v5857 = vunpack.c.l.b16 %v5853
        %v5858 = vpack.c.b16 %v5857, %v5856
        %v5861 = vsel %vm3924, %v5850, 0
        %5863 = vmatprep.subr.bf16.mxu0 0
        %5864 = vmatpush1.bf16.msra.mxu0 %v5858
        %5865 = vmatprep.subr.bf16.mxu0 0
        %5866 = vmatpush1.bf16.msra.mxu0 0
        %5867 = vmatprep.subr.bf16.mxu0 0
        %5868 = vmatpush1.bf16.msra.mxu0 0
        %5869 = vmatprep.subr.bf16.mxu0 0
        %5870 = vmatpush1.bf16.msra.mxu0 0
        %5871 = vmatprep.subr.bf16.mxu0 0
        %5872 = vmatpush1.bf16.msra.mxu0 0
        %5873 = vmatprep.subr.bf16.mxu0 0
        %5874 = vmatpush1.bf16.msra.mxu0 0
        %5875 = vmatprep.subr.bf16.mxu0 0
        %5876 = vmatpush1.bf16.msra.mxu0 0
        %5877 = vmatprep.subr.bf16.mxu0 0
        %5878 = vmatpush1.bf16.msra.mxu0 0
        %5879 = vmatprep.subr.bf16.mxu0 0
        %5880 = vmatpush1.bf16.msra.mxu0 0
        %5881 = vmatprep.subr.bf16.mxu0 0
        %5882 = vmatpush1.bf16.msra.mxu0 0
        %5883 = vmatprep.subr.bf16.mxu0 0
        %5884 = vmatpush1.bf16.msra.mxu0 0
        %5885 = vmatprep.subr.bf16.mxu0 0
        %5886 = vmatpush1.bf16.msra.mxu0 0
        %5887 = vmatprep.subr.bf16.mxu0 0
        %5888 = vmatpush1.bf16.msra.mxu0 0
        %5889 = vmatprep.subr.bf16.mxu0 0
        %5890 = vmatpush1.bf16.msra.mxu0 0
        %5891 = vmatprep.subr.bf16.mxu0 0
        %5892 = vmatpush1.bf16.msra.mxu0 0
        %5893 = vmatprep.subr.bf16.mxu0 0
        %5894 = vmatpush1.bf16.msra.mxu0 0
        %5895 = vmatprep.mubr.bf16.mxu0 0
        %5896 = vmatmul.mubr.bf16.gmra.mrb[0].mxu0 %v5861
        %v5897 = vpop.f32.mrb[0].mxu0
        %v5898 = vadd.f32 0.0, %v5897
        %v5899 = vpop.f32.mrb[0].mxu0
        %v5900 = vpop.f32.mrb[0].mxu0
        %v5901 = vpop.f32.mrb[0].mxu0
        %5902 = vdwg.mxu0
        %v5905 = vunpack.c.l.b16 %v5803
        %v5906 = vunpack.c.l.b16 %v5804
        %v5907 = vpack.c.b16 %v5906, %v5905
        %v5910 = vsel %vm3924, %v5802, 0
        %5912 = vmatprep.subr.bf16.mxu0 0
        %5913 = vmatpush1.bf16.msra.mxu0 %v5907
        %5914 = vmatprep.subr.bf16.mxu0 0
        %5915 = vmatpush1.bf16.msra.mxu0 0
        %5916 = vmatprep.subr.bf16.mxu0 0
        %5917 = vmatpush1.bf16.msra.mxu0 0
        %5918 = vmatprep.subr.bf16.mxu0 0
        %5919 = vmatpush1.bf16.msra.mxu0 0
        %5920 = vmatprep.subr.bf16.mxu0 0
        %5921 = vmatpush1.bf16.msra.mxu0 0
        %5922 = vmatprep.subr.bf16.mxu0 0
        %5923 = vmatpush1.bf16.msra.mxu0 0
        %5924 = vmatprep.subr.bf16.mxu0 0
        %5925 = vmatpush1.bf16.msra.mxu0 0
        %5926 = vmatprep.subr.bf16.mxu0 0
        %5927 = vmatpush1.bf16.msra.mxu0 0
        %5928 = vmatprep.subr.bf16.mxu0 0
        %5929 = vmatpush1.bf16.msra.mxu0 0
        %5930 = vmatprep.subr.bf16.mxu0 0
        %5931 = vmatpush1.bf16.msra.mxu0 0
        %5932 = vmatprep.subr.bf16.mxu0 0
        %5933 = vmatpush1.bf16.msra.mxu0 0
        %5934 = vmatprep.subr.bf16.mxu0 0
        %5935 = vmatpush1.bf16.msra.mxu0 0
        %5936 = vmatprep.subr.bf16.mxu0 0
        %5937 = vmatpush1.bf16.msra.mxu0 0
        %5938 = vmatprep.subr.bf16.mxu0 0
        %5939 = vmatpush1.bf16.msra.mxu0 0
        %5940 = vmatprep.subr.bf16.mxu0 0
        %5941 = vmatpush1.bf16.msra.mxu0 0
        %5942 = vmatprep.subr.bf16.mxu0 0
        %5943 = vmatpush1.bf16.msra.mxu0 0
        %5944 = vmatprep.mubr.bf16.mxu0 0
        %5945 = vmatmul.mubr.bf16.gmra.mrb[0].mxu0 %v5910
        %v5946 = vpop.f32.mrb[0].mxu0
        %v5947 = vadd.f32 %v5898, %v5946
        %v5948 = vpop.f32.mrb[0].mxu0
        %v5949 = vpop.f32.mrb[0].mxu0
        %v5950 = vpop.f32.mrb[0].mxu0
        %5951 = vdwg.mxu0
        %s5952 = scalar_lea.vmem [#allocation16], 8
        %v5953 = vld [vmem:[%s5952] sm:$0xf]
        %v5955 = vsel %vm3924, %v5953, 0
        %5957 = vmatprep.subr.bf16.mxu0 0
        %5958 = vmatpush1.bf16.msra.mxu0 %v5757
        %5959 = vmatprep.subr.bf16.mxu0 0
        %5960 = vmatpush1.bf16.msra.mxu0 0
        %5961 = vmatprep.subr.bf16.mxu0 0
        %5962 = vmatpush1.bf16.msra.mxu0 0
        %5963 = vmatprep.subr.bf16.mxu0 0
        %5964 = vmatpush1.bf16.msra.mxu0 0
        %5965 = vmatprep.subr.bf16.mxu0 0
        %5966 = vmatpush1.bf16.msra.mxu0 0
        %5967 = vmatprep.subr.bf16.mxu0 0
        %5968 = vmatpush1.bf16.msra.mxu0 0
        %5969 = vmatprep.subr.bf16.mxu0 0
        %5970 = vmatpush1.bf16.msra.mxu0 0
        %5971 = vmatprep.subr.bf16.mxu0 0
        %5972 = vmatpush1.bf16.msra.mxu0 0
        %5973 = vmatprep.subr.bf16.mxu0 0
        %5974 = vmatpush1.bf16.msra.mxu0 0
        %5975 = vmatprep.subr.bf16.mxu0 0
        %5976 = vmatpush1.bf16.msra.mxu0 0
        %5977 = vmatprep.subr.bf16.mxu0 0
        %5978 = vmatpush1.bf16.msra.mxu0 0
        %5979 = vmatprep.subr.bf16.mxu0 0
        %5980 = vmatpush1.bf16.msra.mxu0 0
        %5981 = vmatprep.subr.bf16.mxu0 0
        %5982 = vmatpush1.bf16.msra.mxu0 0
        %5983 = vmatprep.subr.bf16.mxu0 0
        %5984 = vmatpush1.bf16.msra.mxu0 0
        %5985 = vmatprep.subr.bf16.mxu0 0
        %5986 = vmatpush1.bf16.msra.mxu0 0
        %5987 = vmatprep.subr.bf16.mxu0 0
        %5988 = vmatpush1.bf16.msra.mxu0 0
        %5989 = vmatprep.mubr.bf16.mxu0 0
        %5990 = vmatmul.mubr.bf16.gmra.mrb[0].mxu0 %v5955
        %v5991 = vpop.f32.mrb[0].mxu0
        %v5992 = vadd.f32 0.0, %v5991
        %v5993 = vpop.f32.mrb[0].mxu0
        %v5994 = vpop.f32.mrb[0].mxu0
        %v5995 = vpop.f32.mrb[0].mxu0
        %5996 = vdwg.mxu0
        %v5997 = vpack.c.bf16 %v5992, %v5992
        %s5998 = scalar_lea.vmem [#allocation14], 16
        %v5999 = vld [vmem:[%s5998] sm:$0xf]
        %v6000 = vld [vmem:[%s5998 + $0x4] sm:$0xf]
        %v6003 = vunpack.c.l.b16 %v5999
        %v6004 = vunpack.c.l.b16 %v6000
        %v6005 = vpack.c.b16 %v6004, %v6003
        %v6008 = vsel %vm3924, %v5997, 0
        %6010 = vmatprep.subr.bf16.mxu0 0
        %6011 = vmatpush1.bf16.msra.mxu0 %v6005
        %6012 = vmatprep.subr.bf16.mxu0 0
        %6013 = vmatpush1.bf16.msra.mxu0 0
        %6014 = vmatprep.subr.bf16.mxu0 0
        %6015 = vmatpush1.bf16.msra.mxu0 0
        %6016 = vmatprep.subr.bf16.mxu0 0
        %6017 = vmatpush1.bf16.msra.mxu0 0
        %6018 = vmatprep.subr.bf16.mxu0 0
        %6019 = vmatpush1.bf16.msra.mxu0 0
        %6020 = vmatprep.subr.bf16.mxu0 0
        %6021 = vmatpush1.bf16.msra.mxu0 0
        %6022 = vmatprep.subr.bf16.mxu0 0
        %6023 = vmatpush1.bf16.msra.mxu0 0
        %6024 = vmatprep.subr.bf16.mxu0 0
        %6025 = vmatpush1.bf16.msra.mxu0 0
        %6026 = vmatprep.subr.bf16.mxu0 0
        %6027 = vmatpush1.bf16.msra.mxu0 0
        %6028 = vmatprep.subr.bf16.mxu0 0
        %6029 = vmatpush1.bf16.msra.mxu0 0
        %6030 = vmatprep.subr.bf16.mxu0 0
        %6031 = vmatpush1.bf16.msra.mxu0 0
        %6032 = vmatprep.subr.bf16.mxu0 0
        %6033 = vmatpush1.bf16.msra.mxu0 0
        %6034 = vmatprep.subr.bf16.mxu0 0
        %6035 = vmatpush1.bf16.msra.mxu0 0
        %6036 = vmatprep.subr.bf16.mxu0 0
        %6037 = vmatpush1.bf16.msra.mxu0 0
        %6038 = vmatprep.subr.bf16.mxu0 0
        %6039 = vmatpush1.bf16.msra.mxu0 0
        %6040 = vmatprep.subr.bf16.mxu0 0
        %6041 = vmatpush1.bf16.msra.mxu0 0
        %6042 = vmatprep.mubr.bf16.mxu0 0
        %6043 = vmatmul.mubr.bf16.gmra.mrb[0].mxu0 %v6008
        %v6044 = vpop.f32.mrb[0].mxu0
        %v6045 = vadd.f32 0.0, %v6044
        %v6046 = vpop.f32.mrb[0].mxu0
        %v6047 = vpop.f32.mrb[0].mxu0
        %v6048 = vpop.f32.mrb[0].mxu0
        %6049 = vdwg.mxu0
        %v6050 = vadd.f32 %v5947, %v6045
        %s6051 = scalar_lea.vmem [#allocation16], 12
        %v6052 = vld [vmem:[%s6051] sm:$0xf]
        %v6054 = vsel %vm3924, %v6052, 0
        %6056 = vmatprep.subr.bf16.mxu0 0
        %6057 = vmatpush1.bf16.msra.mxu0 %v5757
        %6058 = vmatprep.subr.bf16.mxu0 0
        %6059 = vmatpush1.bf16.msra.mxu0 0
        %6060 = vmatprep.subr.bf16.mxu0 0
        %6061 = vmatpush1.bf16.msra.mxu0 0
        %6062 = vmatprep.subr.bf16.mxu0 0
        %6063 = vmatpush1.bf16.msra.mxu0 0
        %6064 = vmatprep.subr.bf16.mxu0 0
        %6065 = vmatpush1.bf16.msra.mxu0 0
        %6066 = vmatprep.subr.bf16.mxu0 0
        %6067 = vmatpush1.bf16.msra.mxu0 0
        %6068 = vmatprep.subr.bf16.mxu0 0
        %6069 = vmatpush1.bf16.msra.mxu0 0
        %6070 = vmatprep.subr.bf16.mxu0 0
        %6071 = vmatpush1.bf16.msra.mxu0 0
        %6072 = vmatprep.subr.bf16.mxu0 0
        %6073 = vmatpush1.bf16.msra.mxu0 0
        %6074 = vmatprep.subr.bf16.mxu0 0
        %6075 = vmatpush1.bf16.msra.mxu0 0
        %6076 = vmatprep.subr.bf16.mxu0 0
        %6077 = vmatpush1.bf16.msra.mxu0 0
        %6078 = vmatprep.subr.bf16.mxu0 0
        %6079 = vmatpush1.bf16.msra.mxu0 0
        %6080 = vmatprep.subr.bf16.mxu0 0
        %6081 = vmatpush1.bf16.msra.mxu0 0
        %6082 = vmatprep.subr.bf16.mxu0 0
        %6083 = vmatpush1.bf16.msra.mxu0 0
        %6084 = vmatprep.subr.bf16.mxu0 0
        %6085 = vmatpush1.bf16.msra.mxu0 0
        %6086 = vmatprep.subr.bf16.mxu0 0
        %6087 = vmatpush1.bf16.msra.mxu0 0
        %6088 = vmatprep.mubr.bf16.mxu0 0
        %6089 = vmatmul.mubr.bf16.gmra.mrb[0].mxu0 %v6054
        %v6090 = vpop.f32.mrb[0].mxu0
        %v6091 = vadd.f32 0.0, %v6090
        %v6092 = vpop.f32.mrb[0].mxu0
        %v6093 = vpop.f32.mrb[0].mxu0
        %v6094 = vpop.f32.mrb[0].mxu0
        %6095 = vdwg.mxu0
        %v6096 = vpack.c.bf16 %v6091, %v6091
        %s6097 = scalar_lea.vmem [#allocation14], 24
        %v6098 = vld [vmem:[%s6097] sm:$0xf]
        %v6099 = vld [vmem:[%s6097 + $0x4] sm:$0xf]
        %v6102 = vunpack.c.l.b16 %v6098
        %v6103 = vunpack.c.l.b16 %v6099
        %v6104 = vpack.c.b16 %v6103, %v6102
        %v6107 = vsel %vm3924, %v6096, 0
        %6109 = vmatprep.subr.bf16.mxu0 0
        %6110 = vmatpush1.bf16.msra.mxu0 %v6104
        %6111 = vmatprep.subr.bf16.mxu0 0
        %6112 = vmatpush1.bf16.msra.mxu0 0
        %6113 = vmatprep.subr.bf16.mxu0 0
        %6114 = vmatpush1.bf16.msra.mxu0 0
        %6115 = vmatprep.subr.bf16.mxu0 0
        %6116 = vmatpush1.bf16.msra.mxu0 0
        %6117 = vmatprep.subr.bf16.mxu0 0
        %6118 = vmatpush1.bf16.msra.mxu0 0
        %6119 = vmatprep.subr.bf16.mxu0 0
        %6120 = vmatpush1.bf16.msra.mxu0 0
        %6121 = vmatprep.subr.bf16.mxu0 0
        %6122 = vmatpush1.bf16.msra.mxu0 0
        %6123 = vmatprep.subr.bf16.mxu0 0
        %6124 = vmatpush1.bf16.msra.mxu0 0
        %6125 = vmatprep.subr.bf16.mxu0 0
        %6126 = vmatpush1.bf16.msra.mxu0 0
        %6127 = vmatprep.subr.bf16.mxu0 0
        %6128 = vmatpush1.bf16.msra.mxu0 0
        %6129 = vmatprep.subr.bf16.mxu0 0
        %6130 = vmatpush1.bf16.msra.mxu0 0
        %6131 = vmatprep.subr.bf16.mxu0 0
        %6132 = vmatpush1.bf16.msra.mxu0 0
        %6133 = vmatprep.subr.bf16.mxu0 0
        %6134 = vmatpush1.bf16.msra.mxu0 0
        %6135 = vmatprep.subr.bf16.mxu0 0
        %6136 = vmatpush1.bf16.msra.mxu0 0
        %6137 = vmatprep.subr.bf16.mxu0 0
        %6138 = vmatpush1.bf16.msra.mxu0 0
        %6139 = vmatprep.subr.bf16.mxu0 0
        %6140 = vmatpush1.bf16.msra.mxu0 0
        %6141 = vmatprep.mubr.bf16.mxu0 0
        %6142 = vmatmul.mubr.bf16.gmra.mrb[0].mxu0 %v6107
        %v6143 = vpop.f32.mrb[0].mxu0
        %v6144 = vadd.f32 0.0, %v6143
        %v6145 = vpop.f32.mrb[0].mxu0
        %v6146 = vpop.f32.mrb[0].mxu0
        %v6147 = vpop.f32.mrb[0].mxu0
        %6148 = vdwg.mxu0
        %v6149 = vadd.f32 %v6050, %v6144
        %s6150 = scalar_lea.vmem [#allocation16], 16
        %v6151 = vld [vmem:[%s6150] sm:$0xf]
        %v6153 = vsel %vm3924, %v6151, 0
        %6155 = vmatprep.subr.bf16.mxu0 0
        %6156 = vmatpush1.bf16.msra.mxu0 %v5757
        %6157 = vmatprep.subr.bf16.mxu0 0
        %6158 = vmatpush1.bf16.msra.mxu0 0
        %6159 = vmatprep.subr.bf16.mxu0 0
        %6160 = vmatpush1.bf16.msra.mxu0 0
        %6161 = vmatprep.subr.bf16.mxu0 0
        %6162 = vmatpush1.bf16.msra.mxu0 0
        %6163 = vmatprep.subr.bf16.mxu0 0
        %6164 = vmatpush1.bf16.msra.mxu0 0
        %6165 = vmatprep.subr.bf16.mxu0 0
        %6166 = vmatpush1.bf16.msra.mxu0 0
        %6167 = vmatprep.subr.bf16.mxu0 0
        %6168 = vmatpush1.bf16.msra.mxu0 0
        %6169 = vmatprep.subr.bf16.mxu0 0
        %6170 = vmatpush1.bf16.msra.mxu0 0
        %6171 = vmatprep.subr.bf16.mxu0 0
        %6172 = vmatpush1.bf16.msra.mxu0 0
        %6173 = vmatprep.subr.bf16.mxu0 0
        %6174 = vmatpush1.bf16.msra.mxu0 0
        %6175 = vmatprep.subr.bf16.mxu0 0
        %6176 = vmatpush1.bf16.msra.mxu0 0
        %6177 = vmatprep.subr.bf16.mxu0 0
        %6178 = vmatpush1.bf16.msra.mxu0 0
        %6179 = vmatprep.subr.bf16.mxu0 0
        %6180 = vmatpush1.bf16.msra.mxu0 0
        %6181 = vmatprep.subr.bf16.mxu0 0
        %6182 = vmatpush1.bf16.msra.mxu0 0
        %6183 = vmatprep.subr.bf16.mxu0 0
        %6184 = vmatpush1.bf16.msra.mxu0 0
        %6185 = vmatprep.subr.bf16.mxu0 0
        %6186 = vmatpush1.bf16.msra.mxu0 0
        %6187 = vmatprep.mubr.bf16.mxu0 0
        %6188 = vmatmul.mubr.bf16.gmra.mrb[0].mxu0 %v6153
        %v6189 = vpop.f32.mrb[0].mxu0
        %v6190 = vadd.f32 0.0, %v6189
        %v6191 = vpop.f32.mrb[0].mxu0
        %v6192 = vpop.f32.mrb[0].mxu0
        %v6193 = vpop.f32.mrb[0].mxu0
        %6194 = vdwg.mxu0
        %v6195 = vpack.c.bf16 %v6190, %v6190
        %s6196 = scalar_lea.vmem [#allocation14], 32
        %v6197 = vld [vmem:[%s6196] sm:$0xf]
        %v6198 = vld [vmem:[%s6196 + $0x4] sm:$0xf]
        %v6201 = vunpack.c.l.b16 %v6197
        %v6202 = vunpack.c.l.b16 %v6198
        %v6203 = vpack.c.b16 %v6202, %v6201
        %v6206 = vsel %vm3924, %v6195, 0
        %6208 = vmatprep.subr.bf16.mxu0 0
        %6209 = vmatpush1.bf16.msra.mxu0 %v6203
        %6210 = vmatprep.subr.bf16.mxu0 0
        %6211 = vmatpush1.bf16.msra.mxu0 0
        %6212 = vmatprep.subr.bf16.mxu0 0
        %6213 = vmatpush1.bf16.msra.mxu0 0
        %6214 = vmatprep.subr.bf16.mxu0 0
        %6215 = vmatpush1.bf16.msra.mxu0 0
        %6216 = vmatprep.subr.bf16.mxu0 0
        %6217 = vmatpush1.bf16.msra.mxu0 0
        %6218 = vmatprep.subr.bf16.mxu0 0
        %6219 = vmatpush1.bf16.msra.mxu0 0
        %6220 = vmatprep.subr.bf16.mxu0 0
        %6221 = vmatpush1.bf16.msra.mxu0 0
        %6222 = vmatprep.subr.bf16.mxu0 0
        %6223 = vmatpush1.bf16.msra.mxu0 0
        %6224 = vmatprep.subr.bf16.mxu0 0
        %6225 = vmatpush1.bf16.msra.mxu0 0
        %6226 = vmatprep.subr.bf16.mxu0 0
        %6227 = vmatpush1.bf16.msra.mxu0 0
        %6228 = vmatprep.subr.bf16.mxu0 0
        %6229 = vmatpush1.bf16.msra.mxu0 0
        %6230 = vmatprep.subr.bf16.mxu0 0
        %6231 = vmatpush1.bf16.msra.mxu0 0
        %6232 = vmatprep.subr.bf16.mxu0 0
        %6233 = vmatpush1.bf16.msra.mxu0 0
        %6234 = vmatprep.subr.bf16.mxu0 0
        %6235 = vmatpush1.bf16.msra.mxu0 0
        %6236 = vmatprep.subr.bf16.mxu0 0
        %6237 = vmatpush1.bf16.msra.mxu0 0
        %6238 = vmatprep.subr.bf16.mxu0 0
        %6239 = vmatpush1.bf16.msra.mxu0 0
        %6240 = vmatprep.mubr.bf16.mxu0 0
        %6241 = vmatmul.mubr.bf16.gmra.mrb[0].mxu0 %v6206
        %v6242 = vpop.f32.mrb[0].mxu0
        %v6243 = vadd.f32 0.0, %v6242
        %v6244 = vpop.f32.mrb[0].mxu0
        %v6245 = vpop.f32.mrb[0].mxu0
        %v6246 = vpop.f32.mrb[0].mxu0
        %6247 = vdwg.mxu0
        %v6248 = vadd.f32 %v6149, %v6243
        %s6249 = scalar_lea.vmem [#allocation16], 20
        %v6250 = vld [vmem:[%s6249] sm:$0xf]
        %v6252 = vsel %vm3924, %v6250, 0
        %6254 = vmatprep.subr.bf16.mxu0 0
        %6255 = vmatpush1.bf16.msra.mxu0 %v5757
        %6256 = vmatprep.subr.bf16.mxu0 0
        %6257 = vmatpush1.bf16.msra.mxu0 0
        %6258 = vmatprep.subr.bf16.mxu0 0
        %6259 = vmatpush1.bf16.msra.mxu0 0
        %6260 = vmatprep.subr.bf16.mxu0 0
        %6261 = vmatpush1.bf16.msra.mxu0 0
        %6262 = vmatprep.subr.bf16.mxu0 0
        %6263 = vmatpush1.bf16.msra.mxu0 0
        %6264 = vmatprep.subr.bf16.mxu0 0
        %6265 = vmatpush1.bf16.msra.mxu0 0
        %6266 = vmatprep.subr.bf16.mxu0 0
        %6267 = vmatpush1.bf16.msra.mxu0 0
        %6268 = vmatprep.subr.bf16.mxu0 0
        %6269 = vmatpush1.bf16.msra.mxu0 0
        %6270 = vmatprep.subr.bf16.mxu0 0
        %6271 = vmatpush1.bf16.msra.mxu0 0
        %6272 = vmatprep.subr.bf16.mxu0 0
        %6273 = vmatpush1.bf16.msra.mxu0 0
        %6274 = vmatprep.subr.bf16.mxu0 0
        %6275 = vmatpush1.bf16.msra.mxu0 0
        %6276 = vmatprep.subr.bf16.mxu0 0
        %6277 = vmatpush1.bf16.msra.mxu0 0
        %6278 = vmatprep.subr.bf16.mxu0 0
        %6279 = vmatpush1.bf16.msra.mxu0 0
        %6280 = vmatprep.subr.bf16.mxu0 0
        %6281 = vmatpush1.bf16.msra.mxu0 0
        %6282 = vmatprep.subr.bf16.mxu0 0
        %6283 = vmatpush1.bf16.msra.mxu0 0
        %6284 = vmatprep.subr.bf16.mxu0 0
        %6285 = vmatpush1.bf16.msra.mxu0 0
        %6286 = vmatprep.mubr.bf16.mxu0 0
        %6287 = vmatmul.mubr.bf16.gmra.mrb[0].mxu0 %v6252
        %v6288 = vpop.f32.mrb[0].mxu0
        %v6289 = vadd.f32 0.0, %v6288
        %v6290 = vpop.f32.mrb[0].mxu0
        %v6291 = vpop.f32.mrb[0].mxu0
        %v6292 = vpop.f32.mrb[0].mxu0
        %6293 = vdwg.mxu0
        %v6294 = vpack.c.bf16 %v6289, %v6289
        %s6295 = scalar_lea.vmem [#allocation14], 40
        %v6296 = vld [vmem:[%s6295] sm:$0xf]
        %v6297 = vld [vmem:[%s6295 + $0x4] sm:$0xf]
        %v6300 = vunpack.c.l.b16 %v6296
        %v6301 = vunpack.c.l.b16 %v6297
        %v6302 = vpack.c.b16 %v6301, %v6300
        %v6305 = vsel %vm3924, %v6294, 0
        %6307 = vmatprep.subr.bf16.mxu0 0
        %6308 = vmatpush1.bf16.msra.mxu0 %v6302
        %6309 = vmatprep.subr.bf16.mxu0 0
        %6310 = vmatpush1.bf16.msra.mxu0 0
        %6311 = vmatprep.subr.bf16.mxu0 0
        %6312 = vmatpush1.bf16.msra.mxu0 0
        %6313 = vmatprep.subr.bf16.mxu0 0
        %6314 = vmatpush1.bf16.msra.mxu0 0
        %6315 = vmatprep.subr.bf16.mxu0 0
        %6316 = vmatpush1.bf16.msra.mxu0 0
        %6317 = vmatprep.subr.bf16.mxu0 0
        %6318 = vmatpush1.bf16.msra.mxu0 0
        %6319 = vmatprep.subr.bf16.mxu0 0
        %6320 = vmatpush1.bf16.msra.mxu0 0
        %6321 = vmatprep.subr.bf16.mxu0 0
        %6322 = vmatpush1.bf16.msra.mxu0 0
        %6323 = vmatprep.subr.bf16.mxu0 0
        %6324 = vmatpush1.bf16.msra.mxu0 0
        %6325 = vmatprep.subr.bf16.mxu0 0
        %6326 = vmatpush1.bf16.msra.mxu0 0
        %6327 = vmatprep.subr.bf16.mxu0 0
        %6328 = vmatpush1.bf16.msra.mxu0 0
        %6329 = vmatprep.subr.bf16.mxu0 0
        %6330 = vmatpush1.bf16.msra.mxu0 0
        %6331 = vmatprep.subr.bf16.mxu0 0
        %6332 = vmatpush1.bf16.msra.mxu0 0
        %6333 = vmatprep.subr.bf16.mxu0 0
        %6334 = vmatpush1.bf16.msra.mxu0 0
        %6335 = vmatprep.subr.bf16.mxu0 0
        %6336 = vmatpush1.bf16.msra.mxu0 0
        %6337 = vmatprep.subr.bf16.mxu0 0
        %6338 = vmatpush1.bf16.msra.mxu0 0
        %6339 = vmatprep.mubr.bf16.mxu0 0
        %6340 = vmatmul.mubr.bf16.gmra.mrb[0].mxu0 %v6305
        %v6341 = vpop.f32.mrb[0].mxu0
        %v6342 = vadd.f32 0.0, %v6341
        %v6343 = vpop.f32.mrb[0].mxu0
        %v6344 = vpop.f32.mrb[0].mxu0
        %v6345 = vpop.f32.mrb[0].mxu0
        %6346 = vdwg.mxu0
        %v6347 = vadd.f32 %v6248, %v6342
        %s6348 = scalar_lea.vmem [#allocation16], 24
        %v6349 = vld [vmem:[%s6348] sm:$0xf]
        %v6351 = vsel %vm3924, %v6349, 0
        %6353 = vmatprep.subr.bf16.mxu0 0
        %6354 = vmatpush1.bf16.msra.mxu0 %v5757
        %6355 = vmatprep.subr.bf16.mxu0 0
        %6356 = vmatpush1.bf16.msra.mxu0 0
        %6357 = vmatprep.subr.bf16.mxu0 0
        %6358 = vmatpush1.bf16.msra.mxu0 0
        %6359 = vmatprep.subr.bf16.mxu0 0
        %6360 = vmatpush1.bf16.msra.mxu0 0
        %6361 = vmatprep.subr.bf16.mxu0 0
        %6362 = vmatpush1.bf16.msra.mxu0 0
        %6363 = vmatprep.subr.bf16.mxu0 0
        %6364 = vmatpush1.bf16.msra.mxu0 0
        %6365 = vmatprep.subr.bf16.mxu0 0
        %6366 = vmatpush1.bf16.msra.mxu0 0
        %6367 = vmatprep.subr.bf16.mxu0 0
        %6368 = vmatpush1.bf16.msra.mxu0 0
        %6369 = vmatprep.subr.bf16.mxu0 0
        %6370 = vmatpush1.bf16.msra.mxu0 0
        %6371 = vmatprep.subr.bf16.mxu0 0
        %6372 = vmatpush1.bf16.msra.mxu0 0
        %6373 = vmatprep.subr.bf16.mxu0 0
        %6374 = vmatpush1.bf16.msra.mxu0 0
        %6375 = vmatprep.subr.bf16.mxu0 0
        %6376 = vmatpush1.bf16.msra.mxu0 0
        %6377 = vmatprep.subr.bf16.mxu0 0
        %6378 = vmatpush1.bf16.msra.mxu0 0
        %6379 = vmatprep.subr.bf16.mxu0 0
        %6380 = vmatpush1.bf16.msra.mxu0 0
        %6381 = vmatprep.subr.bf16.mxu0 0
        %6382 = vmatpush1.bf16.msra.mxu0 0
        %6383 = vmatprep.subr.bf16.mxu0 0
        %6384 = vmatpush1.bf16.msra.mxu0 0
        %6385 = vmatprep.mubr.bf16.mxu0 0
        %6386 = vmatmul.mubr.bf16.gmra.mrb[0].mxu0 %v6351
        %v6387 = vpop.f32.mrb[0].mxu0
        %v6388 = vadd.f32 0.0, %v6387
        %v6389 = vpop.f32.mrb[0].mxu0
        %v6390 = vpop.f32.mrb[0].mxu0
        %v6391 = vpop.f32.mrb[0].mxu0
        %6392 = vdwg.mxu0
        %v6393 = vpack.c.bf16 %v6388, %v6388
        %s6394 = scalar_lea.vmem [#allocation14], 48
        %v6395 = vld [vmem:[%s6394] sm:$0xf]
        %v6396 = vld [vmem:[%s6394 + $0x4] sm:$0xf]
        %v6399 = vunpack.c.l.b16 %v6395
        %v6400 = vunpack.c.l.b16 %v6396
        %v6401 = vpack.c.b16 %v6400, %v6399
        %v6404 = vsel %vm3924, %v6393, 0
        %6406 = vmatprep.subr.bf16.mxu0 0
        %6407 = vmatpush1.bf16.msra.mxu0 %v6401
        %6408 = vmatprep.subr.bf16.mxu0 0
        %6409 = vmatpush1.bf16.msra.mxu0 0
        %6410 = vmatprep.subr.bf16.mxu0 0
        %6411 = vmatpush1.bf16.msra.mxu0 0
        %6412 = vmatprep.subr.bf16.mxu0 0
        %6413 = vmatpush1.bf16.msra.mxu0 0
        %6414 = vmatprep.subr.bf16.mxu0 0
        %6415 = vmatpush1.bf16.msra.mxu0 0
        %6416 = vmatprep.subr.bf16.mxu0 0
        %6417 = vmatpush1.bf16.msra.mxu0 0
        %6418 = vmatprep.subr.bf16.mxu0 0
        %6419 = vmatpush1.bf16.msra.mxu0 0
        %6420 = vmatprep.subr.bf16.mxu0 0
        %6421 = vmatpush1.bf16.msra.mxu0 0
        %6422 = vmatprep.subr.bf16.mxu0 0
        %6423 = vmatpush1.bf16.msra.mxu0 0
        %6424 = vmatprep.subr.bf16.mxu0 0
        %6425 = vmatpush1.bf16.msra.mxu0 0
        %6426 = vmatprep.subr.bf16.mxu0 0
        %6427 = vmatpush1.bf16.msra.mxu0 0
        %6428 = vmatprep.subr.bf16.mxu0 0
        %6429 = vmatpush1.bf16.msra.mxu0 0
        %6430 = vmatprep.subr.bf16.mxu0 0
        %6431 = vmatpush1.bf16.msra.mxu0 0
        %6432 = vmatprep.subr.bf16.mxu0 0
        %6433 = vmatpush1.bf16.msra.mxu0 0
        %6434 = vmatprep.subr.bf16.mxu0 0
        %6435 = vmatpush1.bf16.msra.mxu0 0
        %6436 = vmatprep.subr.bf16.mxu0 0
        %6437 = vmatpush1.bf16.msra.mxu0 0
        %6438 = vmatprep.mubr.bf16.mxu0 0
        %6439 = vmatmul.mubr.bf16.gmra.mrb[0].mxu0 %v6404
        %v6440 = vpop.f32.mrb[0].mxu0
        %v6441 = vadd.f32 0.0, %v6440
        %v6442 = vpop.f32.mrb[0].mxu0
        %v6443 = vpop.f32.mrb[0].mxu0
        %v6444 = vpop.f32.mrb[0].mxu0
        %6445 = vdwg.mxu0
        %v6446 = vadd.f32 %v6347, %v6441
        %s6447 = scalar_lea.vmem [#allocation16], 28
        %v6448 = vld [vmem:[%s6447] sm:$0xf]
        %v6450 = vsel %vm3924, %v6448, 0
        %6452 = vmatprep.subr.bf16.mxu0 0
        %6453 = vmatpush1.bf16.msra.mxu0 %v5757
        %6454 = vmatprep.subr.bf16.mxu0 0
        %6455 = vmatpush1.bf16.msra.mxu0 0
        %6456 = vmatprep.subr.bf16.mxu0 0
        %6457 = vmatpush1.bf16.msra.mxu0 0
        %6458 = vmatprep.subr.bf16.mxu0 0
        %6459 = vmatpush1.bf16.msra.mxu0 0
        %6460 = vmatprep.subr.bf16.mxu0 0
        %6461 = vmatpush1.bf16.msra.mxu0 0
        %6462 = vmatprep.subr.bf16.mxu0 0
        %6463 = vmatpush1.bf16.msra.mxu0 0
        %6464 = vmatprep.subr.bf16.mxu0 0
        %6465 = vmatpush1.bf16.msra.mxu0 0
        %6466 = vmatprep.subr.bf16.mxu0 0
        %6467 = vmatpush1.bf16.msra.mxu0 0
        %6468 = vmatprep.subr.bf16.mxu0 0
        %6469 = vmatpush1.bf16.msra.mxu0 0
        %6470 = vmatprep.subr.bf16.mxu0 0
        %6471 = vmatpush1.bf16.msra.mxu0 0
        %6472 = vmatprep.subr.bf16.mxu0 0
        %6473 = vmatpush1.bf16.msra.mxu0 0
        %6474 = vmatprep.subr.bf16.mxu0 0
        %6475 = vmatpush1.bf16.msra.mxu0 0
        %6476 = vmatprep.subr.bf16.mxu0 0
        %6477 = vmatpush1.bf16.msra.mxu0 0
        %6478 = vmatprep.subr.bf16.mxu0 0
        %6479 = vmatpush1.bf16.msra.mxu0 0
        %6480 = vmatprep.subr.bf16.mxu0 0
        %6481 = vmatpush1.bf16.msra.mxu0 0
        %6482 = vmatprep.subr.bf16.mxu0 0
        %6483 = vmatpush1.bf16.msra.mxu0 0
        %6484 = vmatprep.mubr.bf16.mxu0 0
        %6485 = vmatmul.mubr.bf16.gmra.mrb[0].mxu0 %v6450
        %v6486 = vpop.f32.mrb[0].mxu0
        %v6487 = vadd.f32 0.0, %v6486
        %v6488 = vpop.f32.mrb[0].mxu0
        %v6489 = vpop.f32.mrb[0].mxu0
        %v6490 = vpop.f32.mrb[0].mxu0
        %6491 = vdwg.mxu0
        %v6492 = vpack.c.bf16 %v6487, %v6487
        %s6493 = scalar_lea.vmem [#allocation14], 56
        %v6494 = vld [vmem:[%s6493] sm:$0xf]
        %v6495 = vld [vmem:[%s6493 + $0x4] sm:$0xf]
        %v6498 = vunpack.c.l.b16 %v6494
        %v6499 = vunpack.c.l.b16 %v6495
        %v6500 = vpack.c.b16 %v6499, %v6498
        %v6503 = vsel %vm3924, %v6492, 0
        %6505 = vmatprep.subr.bf16.mxu0 0
        %6506 = vmatpush1.bf16.msra.mxu0 %v6500
        %6507 = vmatprep.subr.bf16.mxu0 0
        %6508 = vmatpush1.bf16.msra.mxu0 0
        %6509 = vmatprep.subr.bf16.mxu0 0
        %6510 = vmatpush1.bf16.msra.mxu0 0
        %6511 = vmatprep.subr.bf16.mxu0 0
        %6512 = vmatpush1.bf16.msra.mxu0 0
        %6513 = vmatprep.subr.bf16.mxu0 0
        %6514 = vmatpush1.bf16.msra.mxu0 0
        %6515 = vmatprep.subr.bf16.mxu0 0
        %6516 = vmatpush1.bf16.msra.mxu0 0
        %6517 = vmatprep.subr.bf16.mxu0 0
        %6518 = vmatpush1.bf16.msra.mxu0 0
        %6519 = vmatprep.subr.bf16.mxu0 0
        %6520 = vmatpush1.bf16.msra.mxu0 0
        %6521 = vmatprep.subr.bf16.mxu0 0
        %6522 = vmatpush1.bf16.msra.mxu0 0
        %6523 = vmatprep.subr.bf16.mxu0 0
        %6524 = vmatpush1.bf16.msra.mxu0 0
        %6525 = vmatprep.subr.bf16.mxu0 0
        %6526 = vmatpush1.bf16.msra.mxu0 0
        %6527 = vmatprep.subr.bf16.mxu0 0
        %6528 = vmatpush1.bf16.msra.mxu0 0
        %6529 = vmatprep.subr.bf16.mxu0 0
        %6530 = vmatpush1.bf16.msra.mxu0 0
        %6531 = vmatprep.subr.bf16.mxu0 0
        %6532 = vmatpush1.bf16.msra.mxu0 0
        %6533 = vmatprep.subr.bf16.mxu0 0
        %6534 = vmatpush1.bf16.msra.mxu0 0
        %6535 = vmatprep.subr.bf16.mxu0 0
        %6536 = vmatpush1.bf16.msra.mxu0 0
        %6537 = vmatprep.mubr.bf16.mxu0 0
        %6538 = vmatmul.mubr.bf16.gmra.mrb[0].mxu0 %v6503
        %v6539 = vpop.f32.mrb[0].mxu0
        %v6540 = vadd.f32 0.0, %v6539
        %v6541 = vpop.f32.mrb[0].mxu0
        %v6542 = vpop.f32.mrb[0].mxu0
        %v6543 = vpop.f32.mrb[0].mxu0
        %6544 = vdwg.mxu0
        %v6545 = vadd.f32 %v6446, %v6540
        %s6546 = scalar_lea.vmem [#allocation16], 32
        %v6547 = vld [vmem:[%s6546] sm:$0xf]
        %v6549 = vsel %vm3924, %v6547, 0
        %6551 = vmatprep.subr.bf16.mxu0 0
        %6552 = vmatpush1.bf16.msra.mxu0 %v5757
        %6553 = vmatprep.subr.bf16.mxu0 0
        %6554 = vmatpush1.bf16.msra.mxu0 0
        %6555 = vmatprep.subr.bf16.mxu0 0
        %6556 = vmatpush1.bf16.msra.mxu0 0
        %6557 = vmatprep.subr.bf16.mxu0 0
        %6558 = vmatpush1.bf16.msra.mxu0 0
        %6559 = vmatprep.subr.bf16.mxu0 0
        %6560 = vmatpush1.bf16.msra.mxu0 0
        %6561 = vmatprep.subr.bf16.mxu0 0
        %6562 = vmatpush1.bf16.msra.mxu0 0
        %6563 = vmatprep.subr.bf16.mxu0 0
        %6564 = vmatpush1.bf16.msra.mxu0 0
        %6565 = vmatprep.subr.bf16.mxu0 0
        %6566 = vmatpush1.bf16.msra.mxu0 0
        %6567 = vmatprep.subr.bf16.mxu0 0
        %6568 = vmatpush1.bf16.msra.mxu0 0
        %6569 = vmatprep.subr.bf16.mxu0 0
        %6570 = vmatpush1.bf16.msra.mxu0 0
        %6571 = vmatprep.subr.bf16.mxu0 0
        %6572 = vmatpush1.bf16.msra.mxu0 0
        %6573 = vmatprep.subr.bf16.mxu0 0
        %6574 = vmatpush1.bf16.msra.mxu0 0
        %6575 = vmatprep.subr.bf16.mxu0 0
        %6576 = vmatpush1.bf16.msra.mxu0 0
        %6577 = vmatprep.subr.bf16.mxu0 0
        %6578 = vmatpush1.bf16.msra.mxu0 0
        %6579 = vmatprep.subr.bf16.mxu0 0
        %6580 = vmatpush1.bf16.msra.mxu0 0
        %6581 = vmatprep.subr.bf16.mxu0 0
        %6582 = vmatpush1.bf16.msra.mxu0 0
        %6583 = vmatprep.mubr.bf16.mxu0 0
        %6584 = vmatmul.mubr.bf16.gmra.mrb[0].mxu0 %v6549
        %v6585 = vpop.f32.mrb[0].mxu0
        %v6586 = vadd.f32 0.0, %v6585
        %v6587 = vpop.f32.mrb[0].mxu0
        %v6588 = vpop.f32.mrb[0].mxu0
        %v6589 = vpop.f32.mrb[0].mxu0
        %6590 = vdwg.mxu0
        %v6591 = vpack.c.bf16 %v6586, %v6586
        %s6592 = scalar_lea.vmem [#allocation14], 64
        %v6593 = vld [vmem:[%s6592] sm:$0xf]
        %v6594 = vld [vmem:[%s6592 + $0x4] sm:$0xf]
        %v6597 = vunpack.c.l.b16 %v6593
        %v6598 = vunpack.c.l.b16 %v6594
        %v6599 = vpack.c.b16 %v6598, %v6597
        %v6602 = vsel %vm3924, %v6591, 0
        %6604 = vmatprep.subr.bf16.mxu0 0
        %6605 = vmatpush1.bf16.msra.mxu0 %v6599
        %6606 = vmatprep.subr.bf16.mxu0 0
        %6607 = vmatpush1.bf16.msra.mxu0 0
        %6608 = vmatprep.subr.bf16.mxu0 0
        %6609 = vmatpush1.bf16.msra.mxu0 0
        %6610 = vmatprep.subr.bf16.mxu0 0
        %6611 = vmatpush1.bf16.msra.mxu0 0
        %6612 = vmatprep.subr.bf16.mxu0 0
        %6613 = vmatpush1.bf16.msra.mxu0 0
        %6614 = vmatprep.subr.bf16.mxu0 0
        %6615 = vmatpush1.bf16.msra.mxu0 0
        %6616 = vmatprep.subr.bf16.mxu0 0
        %6617 = vmatpush1.bf16.msra.mxu0 0
        %6618 = vmatprep.subr.bf16.mxu0 0
        %6619 = vmatpush1.bf16.msra.mxu0 0
        %6620 = vmatprep.subr.bf16.mxu0 0
        %6621 = vmatpush1.bf16.msra.mxu0 0
        %6622 = vmatprep.subr.bf16.mxu0 0
        %6623 = vmatpush1.bf16.msra.mxu0 0
        %6624 = vmatprep.subr.bf16.mxu0 0
        %6625 = vmatpush1.bf16.msra.mxu0 0
        %6626 = vmatprep.subr.bf16.mxu0 0
        %6627 = vmatpush1.bf16.msra.mxu0 0
        %6628 = vmatprep.subr.bf16.mxu0 0
        %6629 = vmatpush1.bf16.msra.mxu0 0
        %6630 = vmatprep.subr.bf16.mxu0 0
        %6631 = vmatpush1.bf16.msra.mxu0 0
        %6632 = vmatprep.subr.bf16.mxu0 0
        %6633 = vmatpush1.bf16.msra.mxu0 0
        %6634 = vmatprep.subr.bf16.mxu0 0
        %6635 = vmatpush1.bf16.msra.mxu0 0
        %6636 = vmatprep.mubr.bf16.mxu0 0
        %6637 = vmatmul.mubr.bf16.gmra.mrb[0].mxu0 %v6602
        %v6638 = vpop.f32.mrb[0].mxu0
        %v6639 = vadd.f32 0.0, %v6638
        %v6640 = vpop.f32.mrb[0].mxu0
        %v6641 = vpop.f32.mrb[0].mxu0
        %v6642 = vpop.f32.mrb[0].mxu0
        %6643 = vdwg.mxu0
        %v6644 = vadd.f32 %v6545, %v6639
        %v6645 = vld [vmem:[#allocation17] sm:$0xff]
        %6647 = vset.pattern.permute.xlu0 0
        %6648 = vperm.xlu0 %6647, %v6645
        %v6649 = vpop.permute.xlu0 %6648
        %v6651 = vadd.f32 %v6644, %v6649
        %v6652 = vmax.f32 %v6651, 0.0
        %v6653 = vpack.c.bf16 %v6652, %v6652
        %v6654 = vld [vmem:[#allocation20] sm:$0x3]
        %v6656 = vsel %vm2875, %v6654, 0
        %v6659 = vsel %vm2879, %v6653, 0
        %6661 = vmatprep.subr.bf16.mxu0 0
        %6662 = vmatpush1.bf16.msra.mxu0 %v6659
        %6663 = vmatprep.subr.bf16.mxu0 0
        %6664 = vmatpush1.bf16.msra.mxu0 0
        %6665 = vmatprep.subr.bf16.mxu0 0
        %6666 = vmatpush1.bf16.msra.mxu0 0
        %6667 = vmatprep.subr.bf16.mxu0 0
        %6668 = vmatpush1.bf16.msra.mxu0 0
        %6669 = vmatprep.subr.bf16.mxu0 0
        %6670 = vmatpush1.bf16.msra.mxu0 0
        %6671 = vmatprep.subr.bf16.mxu0 0
        %6672 = vmatpush1.bf16.msra.mxu0 0
        %6673 = vmatprep.subr.bf16.mxu0 0
        %6674 = vmatpush1.bf16.msra.mxu0 0
        %6675 = vmatprep.subr.bf16.mxu0 0
        %6676 = vmatpush1.bf16.msra.mxu0 0
        %6677 = vmatprep.subr.bf16.mxu0 0
        %6678 = vmatpush1.bf16.msra.mxu0 0
        %6679 = vmatprep.subr.bf16.mxu0 0
        %6680 = vmatpush1.bf16.msra.mxu0 0
        %6681 = vmatprep.subr.bf16.mxu0 0
        %6682 = vmatpush1.bf16.msra.mxu0 0
        %6683 = vmatprep.subr.bf16.mxu0 0
        %6684 = vmatpush1.bf16.msra.mxu0 0
        %6685 = vmatprep.subr.bf16.mxu0 0
        %6686 = vmatpush1.bf16.msra.mxu0 0
        %6687 = vmatprep.subr.bf16.mxu0 0
        %6688 = vmatpush1.bf16.msra.mxu0 0
        %6689 = vmatprep.subr.bf16.mxu0 0
        %6690 = vmatpush1.bf16.msra.mxu0 0
        %6691 = vmatprep.subr.bf16.mxu0 0
        %6692 = vmatpush1.bf16.msra.mxu0 0
        %6693 = vmatprep.mubr.bf16.mxu0 0
        %6694 = vmatmul.mubr.bf16.gmra.mrb[0].mxu0 %v6656
        %v6695 = vpop.f32.mrb[0].mxu0
        %v6696 = vadd.f32 0.0, %v6695
        %v6697 = vpop.f32.mrb[0].mxu0
        %v6698 = vpop.f32.mrb[0].mxu0
        %v6699 = vpop.f32.mrb[0].mxu0
        %6700 = vdwg.mxu0
        %v6701 = vpack.c.bf16 %v6696, %v6696
        %v6702 = vld [vmem:[#allocation19] sm:$0xff]
        %v6703 = vld [vmem:[#allocation19 + $0x8] sm:$0xff]
        %v6704 = vld [vmem:[#allocation19 + $0x10] sm:$0xff]
        %v6705 = vld [vmem:[#allocation19 + $0x18] sm:$0xff]
        %v6706 = vld [vmem:[#allocation19 + $0x20] sm:$0xff]
        %v6707 = vld [vmem:[#allocation19 + $0x28] sm:$0xff]
        %v6708 = vld [vmem:[#allocation19 + $0x30] sm:$0xff]
        %v6709 = vld [vmem:[#allocation19 + $0x38] sm:$0xff]
        %v6710 = vld [vmem:[#allocation19 + $0x40] sm:$0xff]
        %v6711 = vld [vmem:[#allocation19 + $0x48] sm:$0xff]
        %v6712 = vld [vmem:[#allocation19 + $0x50] sm:$0x11]
        %s6713 = scalar_lea.vmem [#allocation20], 2
        %v6714 = vld [vmem:[%s6713] sm:$0x3]
        %v6716 = vsel %vm2875, %v6714, 0
        %6718 = vmatprep.subr.bf16.mxu0 0
        %6719 = vmatpush1.bf16.msra.mxu0 %v6659
        %6720 = vmatprep.subr.bf16.mxu0 0
        %6721 = vmatpush1.bf16.msra.mxu0 0
        %6722 = vmatprep.subr.bf16.mxu0 0
        %6723 = vmatpush1.bf16.msra.mxu0 0
        %6724 = vmatprep.subr.bf16.mxu0 0
        %6725 = vmatpush1.bf16.msra.mxu0 0
        %6726 = vmatprep.subr.bf16.mxu0 0
        %6727 = vmatpush1.bf16.msra.mxu0 0
        %6728 = vmatprep.subr.bf16.mxu0 0
        %6729 = vmatpush1.bf16.msra.mxu0 0
        %6730 = vmatprep.subr.bf16.mxu0 0
        %6731 = vmatpush1.bf16.msra.mxu0 0
        %6732 = vmatprep.subr.bf16.mxu0 0
        %6733 = vmatpush1.bf16.msra.mxu0 0
        %6734 = vmatprep.subr.bf16.mxu0 0
        %6735 = vmatpush1.bf16.msra.mxu0 0
        %6736 = vmatprep.subr.bf16.mxu0 0
        %6737 = vmatpush1.bf16.msra.mxu0 0
        %6738 = vmatprep.subr.bf16.mxu0 0
        %6739 = vmatpush1.bf16.msra.mxu0 0
        %6740 = vmatprep.subr.bf16.mxu0 0
        %6741 = vmatpush1.bf16.msra.mxu0 0
        %6742 = vmatprep.subr.bf16.mxu0 0
        %6743 = vmatpush1.bf16.msra.mxu0 0
        %6744 = vmatprep.subr.bf16.mxu0 0
        %6745 = vmatpush1.bf16.msra.mxu0 0
        %6746 = vmatprep.subr.bf16.mxu0 0
        %6747 = vmatpush1.bf16.msra.mxu0 0
        %6748 = vmatprep.subr.bf16.mxu0 0
        %6749 = vmatpush1.bf16.msra.mxu0 0
        %6750 = vmatprep.mubr.bf16.mxu0 0
        %6751 = vmatmul.mubr.bf16.gmra.mrb[0].mxu0 %v6716
        %v6752 = vpop.f32.mrb[0].mxu0
        %v6753 = vadd.f32 0.0, %v6752
        %v6754 = vpop.f32.mrb[0].mxu0
        %v6755 = vpop.f32.mrb[0].mxu0
        %v6756 = vpop.f32.mrb[0].mxu0
        %6757 = vdwg.mxu0
        %v6758 = vpack.c.bf16 %v6753, %v6753
        %s6759 = scalar_lea.vmem [#allocation19], 88
        %v6760 = vld [vmem:[%s6759] sm:$0xff]
        %v6761 = vld [vmem:[%s6759 + $0x8] sm:$0xff]
        %v6762 = vld [vmem:[%s6759 + $0x10] sm:$0xff]
        %v6763 = vld [vmem:[%s6759 + $0x18] sm:$0xff]
        %v6764 = vld [vmem:[%s6759 + $0x20] sm:$0xff]
        %v6765 = vld [vmem:[%s6759 + $0x28] sm:$0xff]
        %v6766 = vld [vmem:[%s6759 + $0x30] sm:$0xff]
        %v6767 = vld [vmem:[%s6759 + $0x38] sm:$0xff]
        %v6768 = vld [vmem:[%s6759 + $0x40] sm:$0xff]
        %v6769 = vld [vmem:[%s6759 + $0x48] sm:$0xff]
        %v6770 = vld [vmem:[%s6759 + $0x50] sm:$0x11]
        %v6782 = vunpack.c.l.b16 %v6760
        %v6783 = vunpack.c.h.b16 %v6760
        %v6784 = vunpack.c.l.b16 %v6761
        %v6785 = vunpack.c.h.b16 %v6761
        %v6786 = vunpack.c.l.b16 %v6762
        %v6787 = vunpack.c.h.b16 %v6762
        %v6788 = vunpack.c.l.b16 %v6763
        %v6789 = vunpack.c.h.b16 %v6763
        %v6790 = vunpack.c.l.b16 %v6764
        %v6791 = vunpack.c.h.b16 %v6764
        %v6792 = vunpack.c.l.b16 %v6765
        %v6793 = vunpack.c.h.b16 %v6765
        %v6794 = vunpack.c.l.b16 %v6766
        %v6795 = vunpack.c.h.b16 %v6766
        %v6796 = vunpack.c.l.b16 %v6767
        %v6797 = vunpack.c.h.b16 %v6767
        %v6798 = vunpack.c.l.b16 %v6768
        %v6799 = vunpack.c.h.b16 %v6768
        %v6800 = vunpack.c.l.b16 %v6769
        %v6801 = vunpack.c.h.b16 %v6769
        %v6802 = vunpack.c.l.b16 %v6770
        %v6803 = vunpack.c.h.b16 %v6770
        %v6804 = vpack.c.b16 %v6784, %v6782
        %v6805 = vpack.c.b16 %v6785, %v6783
        %v6806 = vpack.c.b16 %v6788, %v6786
        %v6807 = vpack.c.b16 %v6789, %v6787
        %v6808 = vpack.c.b16 %v6792, %v6790
        %v6809 = vpack.c.b16 %v6793, %v6791
        %v6810 = vpack.c.b16 %v6796, %v6794
        %v6811 = vpack.c.b16 %v6797, %v6795
        %v6812 = vpack.c.b16 %v6800, %v6798
        %v6813 = vpack.c.b16 %v6801, %v6799
        %v6814 = vpack.c.b16 %v6802, %v6802
        %v6815 = vpack.c.b16 %v6803, %v6803
        %vm6826 = vcmask 662528
        %v6828 = vsel %vm6826, %v6758, 0
        %v6830 = vsel 0, 4294967295, 65535
        %v6831 = vsel %vm1079, %v6830, 0
        %v6833 = vand.u32 %v6814, %v6831
        %v6836 = vand.u32 %v6815, %v6831
        %6838 = vmatprep.subr.bf16.mxu0 %v6805
        %6839 = vmatpush1.bf16.msra.mxu0 %v6804
        %6840 = vmatprep.subr.bf16.mxu0 %v6807
        %6841 = vmatpush1.bf16.msra.mxu0 %v6806
        %6842 = vmatprep.subr.bf16.mxu0 %v6809
        %6843 = vmatpush1.bf16.msra.mxu0 %v6808
        %6844 = vmatprep.subr.bf16.mxu0 %v6811
        %6845 = vmatpush1.bf16.msra.mxu0 %v6810
        %6846 = vmatprep.subr.bf16.mxu0 %v6813
        %6847 = vmatpush1.bf16.msra.mxu0 %v6812
        %6848 = vmatprep.subr.bf16.mxu0 %v6836
        %6849 = vmatpush1.bf16.msra.mxu0 %v6833
        %6850 = vmatprep.subr.bf16.mxu0 0
        %6851 = vmatpush1.bf16.msra.mxu0 0
        %6852 = vmatprep.subr.bf16.mxu0 0
        %6853 = vmatpush1.bf16.msra.mxu0 0
        %6854 = vmatprep.subr.bf16.mxu0 0
        %6855 = vmatpush1.bf16.msra.mxu0 0
        %6856 = vmatprep.subr.bf16.mxu0 0
        %6857 = vmatpush1.bf16.msra.mxu0 0
        %6858 = vmatprep.subr.bf16.mxu0 0
        %6859 = vmatpush1.bf16.msra.mxu0 0
        %6860 = vmatprep.subr.bf16.mxu0 0
        %6861 = vmatpush1.bf16.msra.mxu0 0
        %6862 = vmatprep.subr.bf16.mxu0 0
        %6863 = vmatpush1.bf16.msra.mxu0 0
        %6864 = vmatprep.subr.bf16.mxu0 0
        %6865 = vmatpush1.bf16.msra.mxu0 0
        %6866 = vmatprep.subr.bf16.mxu0 0
        %6867 = vmatpush1.bf16.msra.mxu0 0
        %6868 = vmatprep.subr.bf16.mxu0 0
        %6869 = vmatpush1.bf16.msra.mxu0 0
        %6870 = vmatprep.mubr.bf16.mxu0 0
        %6871 = vmatmul.mubr.bf16.gmra.mrb[0].mxu0 %v6828
        %v6872 = vpop.f32.mrb[0].mxu0
        %v6873 = vadd.f32 0.0, %v6872
        %v6874 = vpop.f32.mrb[0].mxu0
        %v6875 = vadd.f32 0.0, %v6874
        %v6876 = vpop.f32.mrb[0].mxu0
        %v6877 = vpop.f32.mrb[0].mxu0
        %6878 = vdwg.mxu0
        %v6890 = vunpack.c.l.b16 %v6702
        %v6891 = vunpack.c.h.b16 %v6702
        %v6892 = vunpack.c.l.b16 %v6703
        %v6893 = vunpack.c.h.b16 %v6703
        %v6894 = vunpack.c.l.b16 %v6704
        %v6895 = vunpack.c.h.b16 %v6704
        %v6896 = vunpack.c.l.b16 %v6705
        %v6897 = vunpack.c.h.b16 %v6705
        %v6898 = vunpack.c.l.b16 %v6706
        %v6899 = vunpack.c.h.b16 %v6706
        %v6900 = vunpack.c.l.b16 %v6707
        %v6901 = vunpack.c.h.b16 %v6707
        %v6902 = vunpack.c.l.b16 %v6708
        %v6903 = vunpack.c.h.b16 %v6708
        %v6904 = vunpack.c.l.b16 %v6709
        %v6905 = vunpack.c.h.b16 %v6709
        %v6906 = vunpack.c.l.b16 %v6710
        %v6907 = vunpack.c.h.b16 %v6710
        %v6908 = vunpack.c.l.b16 %v6711
        %v6909 = vunpack.c.h.b16 %v6711
        %v6910 = vunpack.c.l.b16 %v6712
        %v6911 = vunpack.c.h.b16 %v6712
        %v6912 = vpack.c.b16 %v6892, %v6890
        %v6913 = vpack.c.b16 %v6893, %v6891
        %v6914 = vpack.c.b16 %v6896, %v6894
        %v6915 = vpack.c.b16 %v6897, %v6895
        %v6916 = vpack.c.b16 %v6900, %v6898
        %v6917 = vpack.c.b16 %v6901, %v6899
        %v6918 = vpack.c.b16 %v6904, %v6902
        %v6919 = vpack.c.b16 %v6905, %v6903
        %v6920 = vpack.c.b16 %v6908, %v6906
        %v6921 = vpack.c.b16 %v6909, %v6907
        %v6922 = vpack.c.b16 %v6910, %v6910
        %v6923 = vpack.c.b16 %v6911, %v6911
        %v6935 = vsel %vm6826, %v6701, 0
        %v6938 = vand.u32 %v6922, %v6831
        %v6941 = vand.u32 %v6923, %v6831
        %6943 = vmatprep.subr.bf16.mxu0 %v6913
        %6944 = vmatpush1.bf16.msra.mxu0 %v6912
        %6945 = vmatprep.subr.bf16.mxu0 %v6915
        %6946 = vmatpush1.bf16.msra.mxu0 %v6914
        %6947 = vmatprep.subr.bf16.mxu0 %v6917
        %6948 = vmatpush1.bf16.msra.mxu0 %v6916
        %6949 = vmatprep.subr.bf16.mxu0 %v6919
        %6950 = vmatpush1.bf16.msra.mxu0 %v6918
        %6951 = vmatprep.subr.bf16.mxu0 %v6921
        %6952 = vmatpush1.bf16.msra.mxu0 %v6920
        %6953 = vmatprep.subr.bf16.mxu0 %v6941
        %6954 = vmatpush1.bf16.msra.mxu0 %v6938
        %6955 = vmatprep.subr.bf16.mxu0 0
        %6956 = vmatpush1.bf16.msra.mxu0 0
        %6957 = vmatprep.subr.bf16.mxu0 0
        %6958 = vmatpush1.bf16.msra.mxu0 0
        %6959 = vmatprep.subr.bf16.mxu0 0
        %6960 = vmatpush1.bf16.msra.mxu0 0
        %6961 = vmatprep.subr.bf16.mxu0 0
        %6962 = vmatpush1.bf16.msra.mxu0 0
        %6963 = vmatprep.subr.bf16.mxu0 0
        %6964 = vmatpush1.bf16.msra.mxu0 0
        %6965 = vmatprep.subr.bf16.mxu0 0
        %6966 = vmatpush1.bf16.msra.mxu0 0
        %6967 = vmatprep.subr.bf16.mxu0 0
        %6968 = vmatpush1.bf16.msra.mxu0 0
        %6969 = vmatprep.subr.bf16.mxu0 0
        %6970 = vmatpush1.bf16.msra.mxu0 0
        %6971 = vmatprep.subr.bf16.mxu0 0
        %6972 = vmatpush1.bf16.msra.mxu0 0
        %6973 = vmatprep.subr.bf16.mxu0 0
        %6974 = vmatpush1.bf16.msra.mxu0 0
        %6975 = vmatprep.mubr.bf16.mxu0 0
        %6976 = vmatmul.mubr.bf16.gmra.mrb[0].mxu0 %v6935
        %v6977 = vpop.f32.mrb[0].mxu0
        %v6978 = vadd.f32 %v6873, %v6977
        %v6979 = vpop.f32.mrb[0].mxu0
        %v6980 = vadd.f32 %v6875, %v6979
        %v6981 = vpop.f32.mrb[0].mxu0
        %v6982 = vpop.f32.mrb[0].mxu0
        %6983 = vdwg.mxu0
        %s6984 = scalar_lea.vmem [#allocation20], 4
        %v6985 = vld [vmem:[%s6984] sm:$0x3]
        %v6987 = vsel %vm2875, %v6985, 0
        %6989 = vmatprep.subr.bf16.mxu0 0
        %6990 = vmatpush1.bf16.msra.mxu0 %v6659
        %6991 = vmatprep.subr.bf16.mxu0 0
        %6992 = vmatpush1.bf16.msra.mxu0 0
        %6993 = vmatprep.subr.bf16.mxu0 0
        %6994 = vmatpush1.bf16.msra.mxu0 0
        %6995 = vmatprep.subr.bf16.mxu0 0
        %6996 = vmatpush1.bf16.msra.mxu0 0
        %6997 = vmatprep.subr.bf16.mxu0 0
        %6998 = vmatpush1.bf16.msra.mxu0 0
        %6999 = vmatprep.subr.bf16.mxu0 0
        %7000 = vmatpush1.bf16.msra.mxu0 0
        %7001 = vmatprep.subr.bf16.mxu0 0
        %7002 = vmatpush1.bf16.msra.mxu0 0
        %7003 = vmatprep.subr.bf16.mxu0 0
        %7004 = vmatpush1.bf16.msra.mxu0 0
        %7005 = vmatprep.subr.bf16.mxu0 0
        %7006 = vmatpush1.bf16.msra.mxu0 0
        %7007 = vmatprep.subr.bf16.mxu0 0
        %7008 = vmatpush1.bf16.msra.mxu0 0
        %7009 = vmatprep.subr.bf16.mxu0 0
        %7010 = vmatpush1.bf16.msra.mxu0 0
        %7011 = vmatprep.subr.bf16.mxu0 0
        %7012 = vmatpush1.bf16.msra.mxu0 0
        %7013 = vmatprep.subr.bf16.mxu0 0
        %7014 = vmatpush1.bf16.msra.mxu0 0
        %7015 = vmatprep.subr.bf16.mxu0 0
        %7016 = vmatpush1.bf16.msra.mxu0 0
        %7017 = vmatprep.subr.bf16.mxu0 0
        %7018 = vmatpush1.bf16.msra.mxu0 0
        %7019 = vmatprep.subr.bf16.mxu0 0
        %7020 = vmatpush1.bf16.msra.mxu0 0
        %7021 = vmatprep.mubr.bf16.mxu0 0
        %7022 = vmatmul.mubr.bf16.gmra.mrb[0].mxu0 %v6987
        %v7023 = vpop.f32.mrb[0].mxu0
        %v7024 = vadd.f32 0.0, %v7023
        %v7025 = vpop.f32.mrb[0].mxu0
        %v7026 = vpop.f32.mrb[0].mxu0
        %v7027 = vpop.f32.mrb[0].mxu0
        %7028 = vdwg.mxu0
        %v7029 = vpack.c.bf16 %v7024, %v7024
        %s7030 = scalar_lea.vmem [#allocation19], 176
        %v7031 = vld [vmem:[%s7030] sm:$0xff]
        %v7032 = vld [vmem:[%s7030 + $0x8] sm:$0xff]
        %v7033 = vld [vmem:[%s7030 + $0x10] sm:$0xff]
        %v7034 = vld [vmem:[%s7030 + $0x18] sm:$0xff]
        %v7035 = vld [vmem:[%s7030 + $0x20] sm:$0xff]
        %v7036 = vld [vmem:[%s7030 + $0x28] sm:$0xff]
        %v7037 = vld [vmem:[%s7030 + $0x30] sm:$0xff]
        %v7038 = vld [vmem:[%s7030 + $0x38] sm:$0xff]
        %v7039 = vld [vmem:[%s7030 + $0x40] sm:$0xff]
        %v7040 = vld [vmem:[%s7030 + $0x48] sm:$0xff]
        %v7041 = vld [vmem:[%s7030 + $0x50] sm:$0x11]
        %v7053 = vunpack.c.l.b16 %v7031
        %v7054 = vunpack.c.h.b16 %v7031
        %v7055 = vunpack.c.l.b16 %v7032
        %v7056 = vunpack.c.h.b16 %v7032
        %v7057 = vunpack.c.l.b16 %v7033
        %v7058 = vunpack.c.h.b16 %v7033
        %v7059 = vunpack.c.l.b16 %v7034
        %v7060 = vunpack.c.h.b16 %v7034
        %v7061 = vunpack.c.l.b16 %v7035
        %v7062 = vunpack.c.h.b16 %v7035
        %v7063 = vunpack.c.l.b16 %v7036
        %v7064 = vunpack.c.h.b16 %v7036
        %v7065 = vunpack.c.l.b16 %v7037
        %v7066 = vunpack.c.h.b16 %v7037
        %v7067 = vunpack.c.l.b16 %v7038
        %v7068 = vunpack.c.h.b16 %v7038
        %v7069 = vunpack.c.l.b16 %v7039
        %v7070 = vunpack.c.h.b16 %v7039
        %v7071 = vunpack.c.l.b16 %v7040
        %v7072 = vunpack.c.h.b16 %v7040
        %v7073 = vunpack.c.l.b16 %v7041
        %v7074 = vunpack.c.h.b16 %v7041
        %v7075 = vpack.c.b16 %v7055, %v7053
        %v7076 = vpack.c.b16 %v7056, %v7054
        %v7077 = vpack.c.b16 %v7059, %v7057
        %v7078 = vpack.c.b16 %v7060, %v7058
        %v7079 = vpack.c.b16 %v7063, %v7061
        %v7080 = vpack.c.b16 %v7064, %v7062
        %v7081 = vpack.c.b16 %v7067, %v7065
        %v7082 = vpack.c.b16 %v7068, %v7066
        %v7083 = vpack.c.b16 %v7071, %v7069
        %v7084 = vpack.c.b16 %v7072, %v7070
        %v7085 = vpack.c.b16 %v7073, %v7073
        %v7086 = vpack.c.b16 %v7074, %v7074
        %v7098 = vsel %vm6826, %v7029, 0
        %v7101 = vand.u32 %v7085, %v6831
        %v7104 = vand.u32 %v7086, %v6831
        %7106 = vmatprep.subr.bf16.mxu0 %v7076
        %7107 = vmatpush1.bf16.msra.mxu0 %v7075
        %7108 = vmatprep.subr.bf16.mxu0 %v7078
        %7109 = vmatpush1.bf16.msra.mxu0 %v7077
        %7110 = vmatprep.subr.bf16.mxu0 %v7080
        %7111 = vmatpush1.bf16.msra.mxu0 %v7079
        %7112 = vmatprep.subr.bf16.mxu0 %v7082
        %7113 = vmatpush1.bf16.msra.mxu0 %v7081
        %7114 = vmatprep.subr.bf16.mxu0 %v7084
        %7115 = vmatpush1.bf16.msra.mxu0 %v7083
        %7116 = vmatprep.subr.bf16.mxu0 %v7104
        %7117 = vmatpush1.bf16.msra.mxu0 %v7101
        %7118 = vmatprep.subr.bf16.mxu0 0
        %7119 = vmatpush1.bf16.msra.mxu0 0
        %7120 = vmatprep.subr.bf16.mxu0 0
        %7121 = vmatpush1.bf16.msra.mxu0 0
        %7122 = vmatprep.subr.bf16.mxu0 0
        %7123 = vmatpush1.bf16.msra.mxu0 0
        %7124 = vmatprep.subr.bf16.mxu0 0
        %7125 = vmatpush1.bf16.msra.mxu0 0
        %7126 = vmatprep.subr.bf16.mxu0 0
        %7127 = vmatpush1.bf16.msra.mxu0 0
        %7128 = vmatprep.subr.bf16.mxu0 0
        %7129 = vmatpush1.bf16.msra.mxu0 0
        %7130 = vmatprep.subr.bf16.mxu0 0
        %7131 = vmatpush1.bf16.msra.mxu0 0
        %7132 = vmatprep.subr.bf16.mxu0 0
        %7133 = vmatpush1.bf16.msra.mxu0 0
        %7134 = vmatprep.subr.bf16.mxu0 0
        %7135 = vmatpush1.bf16.msra.mxu0 0
        %7136 = vmatprep.subr.bf16.mxu0 0
        %7137 = vmatpush1.bf16.msra.mxu0 0
        %7138 = vmatprep.mubr.bf16.mxu0 0
        %7139 = vmatmul.mubr.bf16.gmra.mrb[0].mxu0 %v7098
        %v7140 = vpop.f32.mrb[0].mxu0
        %v7141 = vadd.f32 0.0, %v7140
        %v7142 = vpop.f32.mrb[0].mxu0
        %v7143 = vadd.f32 0.0, %v7142
        %v7144 = vpop.f32.mrb[0].mxu0
        %v7145 = vpop.f32.mrb[0].mxu0
        %7146 = vdwg.mxu0
        %v7147 = vadd.f32 %v6978, %v7141
        %v7148 = vadd.f32 %v6980, %v7143
        %s7149 = scalar_lea.vmem [#allocation20], 6
        %v7150 = vld [vmem:[%s7149] sm:$0x3]
        %v7152 = vsel %vm2875, %v7150, 0
        %7154 = vmatprep.subr.bf16.mxu0 0
        %7155 = vmatpush1.bf16.msra.mxu0 %v6659
        %7156 = vmatprep.subr.bf16.mxu0 0
        %7157 = vmatpush1.bf16.msra.mxu0 0
        %7158 = vmatprep.subr.bf16.mxu0 0
        %7159 = vmatpush1.bf16.msra.mxu0 0
        %7160 = vmatprep.subr.bf16.mxu0 0
        %7161 = vmatpush1.bf16.msra.mxu0 0
        %7162 = vmatprep.subr.bf16.mxu0 0
        %7163 = vmatpush1.bf16.msra.mxu0 0
        %7164 = vmatprep.subr.bf16.mxu0 0
        %7165 = vmatpush1.bf16.msra.mxu0 0
        %7166 = vmatprep.subr.bf16.mxu0 0
        %7167 = vmatpush1.bf16.msra.mxu0 0
        %7168 = vmatprep.subr.bf16.mxu0 0
        %7169 = vmatpush1.bf16.msra.mxu0 0
        %7170 = vmatprep.subr.bf16.mxu0 0
        %7171 = vmatpush1.bf16.msra.mxu0 0
        %7172 = vmatprep.subr.bf16.mxu0 0
        %7173 = vmatpush1.bf16.msra.mxu0 0
        %7174 = vmatprep.subr.bf16.mxu0 0
        %7175 = vmatpush1.bf16.msra.mxu0 0
        %7176 = vmatprep.subr.bf16.mxu0 0
        %7177 = vmatpush1.bf16.msra.mxu0 0
        %7178 = vmatprep.subr.bf16.mxu0 0
        %7179 = vmatpush1.bf16.msra.mxu0 0
        %7180 = vmatprep.subr.bf16.mxu0 0
        %7181 = vmatpush1.bf16.msra.mxu0 0
        %7182 = vmatprep.subr.bf16.mxu0 0
        %7183 = vmatpush1.bf16.msra.mxu0 0
        %7184 = vmatprep.subr.bf16.mxu0 0
        %7185 = vmatpush1.bf16.msra.mxu0 0
        %7186 = vmatprep.mubr.bf16.mxu0 0
        %7187 = vmatmul.mubr.bf16.gmra.mrb[0].mxu0 %v7152
        %v7188 = vpop.f32.mrb[0].mxu0
        %v7189 = vadd.f32 0.0, %v7188
        %v7190 = vpop.f32.mrb[0].mxu0
        %v7191 = vpop.f32.mrb[0].mxu0
        %v7192 = vpop.f32.mrb[0].mxu0
        %7193 = vdwg.mxu0
        %v7194 = vpack.c.bf16 %v7189, %v7189
        %s7195 = scalar_lea.vmem [#allocation19], 264
        %v7196 = vld [vmem:[%s7195] sm:$0xff]
        %v7197 = vld [vmem:[%s7195 + $0x8] sm:$0xff]
        %v7198 = vld [vmem:[%s7195 + $0x10] sm:$0xff]
        %v7199 = vld [vmem:[%s7195 + $0x18] sm:$0xff]
        %v7200 = vld [vmem:[%s7195 + $0x20] sm:$0xff]
        %v7201 = vld [vmem:[%s7195 + $0x28] sm:$0xff]
        %v7202 = vld [vmem:[%s7195 + $0x30] sm:$0xff]
        %v7203 = vld [vmem:[%s7195 + $0x38] sm:$0xff]
        %v7204 = vld [vmem:[%s7195 + $0x40] sm:$0xff]
        %v7205 = vld [vmem:[%s7195 + $0x48] sm:$0xff]
        %v7206 = vld [vmem:[%s7195 + $0x50] sm:$0x11]
        %v7218 = vunpack.c.l.b16 %v7196
        %v7219 = vunpack.c.h.b16 %v7196
        %v7220 = vunpack.c.l.b16 %v7197
        %v7221 = vunpack.c.h.b16 %v7197
        %v7222 = vunpack.c.l.b16 %v7198
        %v7223 = vunpack.c.h.b16 %v7198
        %v7224 = vunpack.c.l.b16 %v7199
        %v7225 = vunpack.c.h.b16 %v7199
        %v7226 = vunpack.c.l.b16 %v7200
        %v7227 = vunpack.c.h.b16 %v7200
        %v7228 = vunpack.c.l.b16 %v7201
        %v7229 = vunpack.c.h.b16 %v7201
        %v7230 = vunpack.c.l.b16 %v7202
        %v7231 = vunpack.c.h.b16 %v7202
        %v7232 = vunpack.c.l.b16 %v7203
        %v7233 = vunpack.c.h.b16 %v7203
        %v7234 = vunpack.c.l.b16 %v7204
        %v7235 = vunpack.c.h.b16 %v7204
        %v7236 = vunpack.c.l.b16 %v7205
        %v7237 = vunpack.c.h.b16 %v7205
        %v7238 = vunpack.c.l.b16 %v7206
        %v7239 = vunpack.c.h.b16 %v7206
        %v7240 = vpack.c.b16 %v7220, %v7218
        %v7241 = vpack.c.b16 %v7221, %v7219
        %v7242 = vpack.c.b16 %v7224, %v7222
        %v7243 = vpack.c.b16 %v7225, %v7223
        %v7244 = vpack.c.b16 %v7228, %v7226
        %v7245 = vpack.c.b16 %v7229, %v7227
        %v7246 = vpack.c.b16 %v7232, %v7230
        %v7247 = vpack.c.b16 %v7233, %v7231
        %v7248 = vpack.c.b16 %v7236, %v7234
        %v7249 = vpack.c.b16 %v7237, %v7235
        %v7250 = vpack.c.b16 %v7238, %v7238
        %v7251 = vpack.c.b16 %v7239, %v7239
        %v7263 = vsel %vm6826, %v7194, 0
        %v7266 = vand.u32 %v7250, %v6831
        %v7269 = vand.u32 %v7251, %v6831
        %7271 = vmatprep.subr.bf16.mxu0 %v7241
        %7272 = vmatpush1.bf16.msra.mxu0 %v7240
        %7273 = vmatprep.subr.bf16.mxu0 %v7243
        %7274 = vmatpush1.bf16.msra.mxu0 %v7242
        %7275 = vmatprep.subr.bf16.mxu0 %v7245
        %7276 = vmatpush1.bf16.msra.mxu0 %v7244
        %7277 = vmatprep.subr.bf16.mxu0 %v7247
        %7278 = vmatpush1.bf16.msra.mxu0 %v7246
        %7279 = vmatprep.subr.bf16.mxu0 %v7249
        %7280 = vmatpush1.bf16.msra.mxu0 %v7248
        %7281 = vmatprep.subr.bf16.mxu0 %v7269
        %7282 = vmatpush1.bf16.msra.mxu0 %v7266
        %7283 = vmatprep.subr.bf16.mxu0 0
        %7284 = vmatpush1.bf16.msra.mxu0 0
        %7285 = vmatprep.subr.bf16.mxu0 0
        %7286 = vmatpush1.bf16.msra.mxu0 0
        %7287 = vmatprep.subr.bf16.mxu0 0
        %7288 = vmatpush1.bf16.msra.mxu0 0
        %7289 = vmatprep.subr.bf16.mxu0 0
        %7290 = vmatpush1.bf16.msra.mxu0 0
        %7291 = vmatprep.subr.bf16.mxu0 0
        %7292 = vmatpush1.bf16.msra.mxu0 0
        %7293 = vmatprep.subr.bf16.mxu0 0
        %7294 = vmatpush1.bf16.msra.mxu0 0
        %7295 = vmatprep.subr.bf16.mxu0 0
        %7296 = vmatpush1.bf16.msra.mxu0 0
        %7297 = vmatprep.subr.bf16.mxu0 0
        %7298 = vmatpush1.bf16.msra.mxu0 0
        %7299 = vmatprep.subr.bf16.mxu0 0
        %7300 = vmatpush1.bf16.msra.mxu0 0
        %7301 = vmatprep.subr.bf16.mxu0 0
        %7302 = vmatpush1.bf16.msra.mxu0 0
        %7303 = vmatprep.mubr.bf16.mxu0 0
        %7304 = vmatmul.mubr.bf16.gmra.mrb[0].mxu0 %v7263
        %v7305 = vpop.f32.mrb[0].mxu0
        %v7306 = vadd.f32 0.0, %v7305
        %v7307 = vpop.f32.mrb[0].mxu0
        %v7308 = vadd.f32 0.0, %v7307
        %v7309 = vpop.f32.mrb[0].mxu0
        %v7310 = vpop.f32.mrb[0].mxu0
        %7311 = vdwg.mxu0
        %v7312 = vadd.f32 %v7147, %v7306
        %v7313 = vadd.f32 %v7148, %v7308
        %v7314 = vld [vmem:[%s16] sm:$0x7]
        %7316 = vset.pattern.permute.xlu0 0
        %7317 = vperm.xlu0 %7316, %v7314
        %v7318 = vpop.permute.xlu0 %7317
        %v7320 = vadd.f32 %v7312, %v7318
        %v7321 = vadd.f32 %v7313, %v7318
        %v7322 = vxor.u32 %v7320, 2147483648
        %v7323 = vxor.u32 %v7321, 2147483648
        %v7324 = vmul.f32 %v7322, 1.442695
        %v7325 = vpow.pop %v7324
        %v7326 = vmul.f32 %v7323, 1.442695
        %v7327 = vpow.pop %v7326
        %v7328 = vadd.f32 %v7325, 1.0
        %v7329 = vadd.f32 %v7327, 1.0
        %v7330 = vrcp.pop %v7328
        %v7331 = vmul.f32 1.0, %v7330
        %v7332 = vrcp.pop %v7329
        %v7333 = vmul.f32 1.0, %v7332
        %v7336 = vcombine.low %v7331, %v7333
        %7338 = vst [vmem:[%s719] sm:$0x77] %v7336
        %p7339 = scmp.lt.s32.totalorder %s35, 1
        %s7340 = scalar_select %p7339, %s35, 1
        %s7341 = smul.addr %s7340, 2
        %s7342 = smul.addr %s7341, 4
        %s7343 = scalar_lea.vmem %s17, %s7342
        // Predicated region
        $region137: #{conv_autoencoder_forward.1} parent=87 // pred_check
          %p7344 = pneg %p415
        $region138: #{conv_autoencoder_forward.1} parent=87 // pred_check_branch
          %7346 = sbr.rel (%p7344) target = $region140
        $region139: #{conv_autoencoder_forward.1} parent=87 // pred_region
          _
        $region140: #{conv_autoencoder_forward.1} parent=87 // pred_fallthru
          _
      $region88: #{conv_autoencoder_forward.1} parent=5 // pred_fallthru
        _
      %p7347 = scmp.le.s32.totalorder 2, %s30
      // Predicated region
      $region141: #{conv_autoencoder_forward.1} parent=5 // pred_check
        %p7348 = pneg %p7347
      $region142: #{conv_autoencoder_forward.1} parent=5 // pred_check_branch
        %7350 = sbr.rel (%p7348) target = $region144
      $region143: #{conv_autoencoder_forward.1} parent=5 // pred_region
        %s7351 = ssub.s32 %s30, 2
        // Predicated region
        $region145: #{conv_autoencoder_forward.1} parent=143 // pred_check
          %p7352 = pneg %p421
        $region146: #{conv_autoencoder_forward.1} parent=143 // pred_check_branch
          %7354 = sbr.rel (%p7352) target = $region148
        $region147: #{conv_autoencoder_forward.1} parent=143 // pred_region
          %p7355 = scmp.lt.s32.totalorder %s36, 1
          %s7356 = scalar_select %p7355, %s36, 1
          %s7357 = smul.addr %s7356, 2
          %s7358 = smul.addr %s7357, 4
          %s7359 = scalar_lea.vmem %s17, %s7358
        $region148: #{conv_autoencoder_forward.1} parent=143 // pred_fallthru
          _
      $region144: #{conv_autoencoder_forward.1} parent=5 // pred_fallthru
        _
    $region6: #{conv_autoencoder_forward.1} parent=1 // loop_footer
      %s34 = sadd.s32 1, %s30
    $region7: #{conv_autoencoder_forward.1} parent=1 // loop_footer_branch
      %29 = sbr.rel target = $region3
    $region8: #{conv_autoencoder_forward.1} parent=1 // loop_exit
      _
    %7360 = vsyncpa [#allocation4], 1
    %s7361 = scalar_lea.sflag [#allocation4], 1
    %7362 = vsyncpa %s7361, 1
    %7363 = vsyncpa [#allocation6], 1
    %7364 = vsyncpa [#allocation9], 1
    %7365 = vsyncpa [#allocation12], 1
    %7366 = vsyncpa [#allocation15], 1
    %7367 = vsyncpa [#allocation18], 1
    %7368 = vsyncpa [#allocation21], 1

</llo_original>
